<compile_context>
chip_gen: v5e
topology: v5e:2x2
jax: 0.10.0
libtpu: 0.0.40
codegen_flags: <defaults>
</compile_context>

<pallas_src>
import functools

import jax
import jax.numpy as jnp
from jax.experimental import pallas as pl
from jax.experimental.pallas import tpu as pltpu

LRELU_SLOPE = 0.2
BN_EPS = 1e-5


def _leaky(x):
    return jnp.where(x > 0, x, LRELU_SLOPE * x)


# ----------------------------- fused Pallas kernel ----------------------------- #

def _make_kernel(N, N_pad, c1, c2, OH1, OH2):
    """Builds the fused discriminator kernel for fixed (static) shapes."""
    KS = 4                                      # conv kernel size (both convs), stride 2
    half = (OH1 + 1) // 2                       # size of the even-parity spatial group (7)
    W1N = ((OH1 * c1 + 127) // 128) * 128       # y1 lane width padded to vreg multiple (896)
    W1G = W1N // c1                             # number of c1-wide lane groups incl. pad (14)
    inv1 = 1.0 / float(N * OH1 * OH1)           # BN divisors use the REAL batch size
    inv2 = 1.0 / float(N * OH2 * OH2)

    def base(k):    # start of tap k's window in the parity-grouped (evens-then-odds) order
        return (k % 2) * half + k // 2

    def kernel(x1_ref, w1_ref, g1_ref, be1_ref,
               w2_ref, g2_ref, be2_ref,
               wfc1_ref, bfc1_ref, emb_ref, wfc2_ref, bfc2_ref,
               o_ref,
               y1_scr, x2_scr, fc_scr):
        # ---- block 1: Conv2d(1->c1,4,2) as one block-diagonal matmul (bias dropped:
        #      cancelled by train-mode BN) + BatchNorm (one-pass stats) + LeakyReLU ------
        y1 = jnp.dot(x1_ref[...], w1_ref[...],
                     preferred_element_type=jnp.float32)          # (13*Np, 896) f32
        s1 = jnp.sum(y1, axis=0, keepdims=True)                   # (1, 896)
        q1 = jnp.sum(y1 * y1, axis=0, keepdims=True)
        s1c = s1[:, 0:c1]                                         # fold grouped-w' lane groups
        q1c = q1[:, 0:c1]
        for g in range(1, OH1):
            s1c = s1c + s1[:, g * c1:(g + 1) * c1]
            q1c = q1c + q1[:, g * c1:(g + 1) * c1]
        mean1 = s1c * inv1
        var1 = jnp.maximum(q1c * inv1 - mean1 * mean1, 0.0)       # clamp: one-pass var >= 0
        scale1 = g1_ref[...] * jax.lax.rsqrt(var1 + BN_EPS)
        shift1 = be1_ref[...] - mean1 * scale1
        scale1_t = jnp.concatenate([scale1] * W1G, axis=1)        # (1, 896)
        shift1_t = jnp.concatenate([shift1] * W1G, axis=1)
        z1 = _leaky(y1 * scale1_t + shift1_t)
        if N != N_pad:
            # zero the padded-batch rows so conv2 / BN2 statistics stay exact
            row = jax.lax.broadcasted_iota(jnp.int32, (OH1 * N_pad, 1), 0)
            z1 = jnp.where((row % N_pad) < N, z1, 0.0)
        y1_scr[...] = z1.astype(jnp.bfloat16)                     # ONE aligned full-slab store

        # ---- block 2: conv2 im2col as 40 full-width (5*Np, 128) copies, then a single
        #      K = 1024 MXU matmul + BN2 + LeakyReLU ------------------------------------
        # x2 rows ordered (ow, oh, n); columns ordered (ki, kj-parity, kj-slot, ci).
        for ow in range(OH2):
            for ki in range(KS):
                hb = base(ki)
                for p in range(2):
                    g0 = ow + half * p            # grouped-w' start of the (kj=p, kj=p+2) pair
                    q = ki * 2 + p
                    x2_scr[ow * OH2 * N_pad:(ow + 1) * OH2 * N_pad,
                           q * 2 * c1:(q + 1) * 2 * c1] = (
                        y1_scr[hb * N_pad:(hb + OH2) * N_pad,
                               g0 * c1:(g0 + 2) * c1])
        y2 = jnp.dot(x2_scr[...], w2_ref[...],
                     preferred_element_type=jnp.float32)          # (25*Np, 128) f32
        s2 = jnp.sum(y2, axis=0, keepdims=True)
        q2 = jnp.sum(y2 * y2, axis=0, keepdims=True)
        mean2 = s2 * inv2
        var2 = jnp.maximum(q2 * inv2 - mean2 * mean2, 0.0)
        scale2 = g2_ref[...] * jax.lax.rsqrt(var2 + BN_EPS)
        shift2 = be2_ref[...] - mean2 * scale2
        z2 = _leaky(y2 * scale2 + shift2)

        # ---- final block: flatten (25 aligned 128-lane stores) + label emb chunk,
        #      one Linear(3328->64) matmul + LReLU + Dropout(identity) + Linear(64->1) ---
        for pidx in range(OH2 * OH2):
            fc_scr[:, pidx * c2:(pidx + 1) * c2] = (
                z2[pidx * N_pad:(pidx + 1) * N_pad, :].astype(jnp.bfloat16))
        fc_scr[:, OH2 * OH2 * c2:(OH2 * OH2 + 1) * c2] = emb_ref[...]
        h = jnp.dot(fc_scr[...], wfc1_ref[...],
                    preferred_element_type=jnp.float32) + bfc1_ref[...]
        h = _leaky(h)
        # TODO(synk): Dropout(0.25) is stochastic in PyTorch train mode; identity here
        # (eval-mode semantics) since the torch RNG stream cannot be reproduced bitwise.
        out = jnp.dot(h.astype(jnp.bfloat16), wfc2_ref[...],
                      preferred_element_type=jnp.float32) + bfc2_ref[...]
        o_ref[...] = out                                          # lane-dense (Np, 128); col 0 = score

    return kernel


# --------------------------------- wrapper ------------------------------------- #

def discriminator_forward(params, image, label, *, hidden_dim=16):
    N, C_in, H, W = image.shape
    assert C_in == 1 and H == W == 28, "kernel specialized for the (1, 28, 28) cWGAN critic"
    KS = 4
    c1, c2 = hidden_dim * 4, hidden_dim * 8                 # 64, 128
    OH1 = (H - KS) // 2 + 1                                  # 13
    OH2 = (OH1 - KS) // 2 + 1                                # 5
    n_img = c2 * OH2 * OH2                                   # 3200
    nlab = params["emb"].shape[1]
    assert 2 * c1 == c2 == 128 and nlab <= c2

    N_pad = ((N + 15) // 16) * 16                            # bf16 sublane-aligned batch
    K1 = OH1 * KS * KS                                       # 208
    K1p = ((K1 + 127) // 128) * 128                          # 256
    W1N = ((OH1 * c1 + 127) // 128) * 128                    # 896

    # conv1 patch extraction on the tiny 1-channel image (wrapper-side im2col).
    # Rows ordered (grouped h', n); lanes ordered (grouped w', 16 taps).  "grouped" =
    # even spatial indices first, then odd, so every stride-2 conv2 window later becomes
    # a contiguous 128-lane slice.
    x = image[:, 0].astype(jnp.float32)                                       # (N, 28, 28)
    cols = jnp.stack([x[:, i:i + 2 * OH1:2, j:j + 2 * OH1:2]
                      for i in range(KS) for j in range(KS)], axis=-1)        # (N, 13, 13, 16)
    perm = jnp.asarray(list(range(0, OH1, 2)) + list(range(1, OH1, 2)))
    cols = cols[:, perm][:, :, perm]
    cols = jnp.pad(cols, ((0, N_pad - N), (0, 0), (0, 0), (0, 0)))
    x1 = cols.transpose(1, 0, 2, 3).reshape(OH1 * N_pad, K1)
    x1 = jnp.pad(x1, ((0, 0), (0, K1p - K1))).astype(jnp.bfloat16)            # (13*Np, 256)

    # conv1 weight as a block-diagonal (one block per grouped-w' position): the single
    # conv1 matmul then directly yields y1 with lanes ordered (grouped w', channel).
    w1 = params["conv1_w"].reshape(c1, KS * KS).T                             # (16, 64)
    w1bd = jnp.kron(jnp.eye(OH1, dtype=w1.dtype), w1)                         # (208, 832)
    w1bd = jnp.pad(w1bd, ((0, K1p - K1), (0, W1N - OH1 * c1))).astype(jnp.bfloat16)

    # conv2 weight with K ordered (ki, kj-parity, kj-slot, ci) to match the kernel's
    # 128-lane im2col chunks (free one-time relayout).
    w2t = params["conv2_w"].transpose(2, 3, 1, 0)                             # (ki, kj, ci, co)
    w2t = w2t[:, jnp.asarray([0, 2, 1, 3])]
    w2 = w2t.reshape(KS * KS * c1, c2).astype(jnp.bfloat16)                   # (1024, 128)

    # fc1: image features reordered to (ow, oh, c) to match the kernel's flatten layout,
    # label-embedding columns appended as a zero-padded 128-lane chunk -> one matmul.
    w_img = params["fc1_w"][:, :n_img].reshape(64, c2, OH2, OH2)
    w_img = w_img.transpose(3, 2, 1, 0).reshape(n_img, 64)
    w_lab = jnp.pad(params["fc1_w"][:, n_img:].T, ((0, c2 - nlab), (0, 0)))
    wfc1 = jnp.concatenate([w_img, w_lab], axis=0).astype(jnp.bfloat16)       # (3328, 64)
    bfc1 = params["fc1_b"][None, :].astype(jnp.float32)

    # fc2 padded to a lane-dense (64, 128) slab; column 0 carries the critic score.
    wfc2 = jnp.zeros((64, c2), jnp.float32).at[:, 0].set(
        params["fc2_w"][0]).astype(jnp.bfloat16)
    bfc2 = jnp.zeros((1, c2), jnp.float32).at[0, 0].set(params["fc2_b"][0])

    emb = params["emb"][label]
    emb = jnp.pad(emb, ((0, N_pad - N), (0, c2 - nlab))).astype(jnp.bfloat16)  # (Np, 128)

    g1 = params["bn1_g"][None, :].astype(jnp.float32)
    be1 = params["bn1_b"][None, :].astype(jnp.float32)
    g2 = params["bn2_g"][None, :].astype(jnp.float32)
    be2 = params["bn2_b"][None, :].astype(jnp.float32)

    kernel = _make_kernel(N, N_pad, c1, c2, OH1, OH2)
    vmem = pl.BlockSpec(memory_space=pltpu.MemorySpace.VMEM)
    out = pl.pallas_call(
        kernel,
        out_shape=jax.ShapeDtypeStruct((N_pad, c2), jnp.float32),
        in_specs=[vmem] * 12,
        out_specs=vmem,
        scratch_shapes=[
            pltpu.VMEM((OH1 * N_pad, W1N), jnp.bfloat16),                 # y1 (post BN1+LReLU)
            pltpu.VMEM((OH2 * OH2 * N_pad, KS * KS * c1), jnp.bfloat16),  # conv2 im2col slab
            pltpu.VMEM((N_pad, (OH2 * OH2 + 1) * c2), jnp.bfloat16),      # flat feats + label emb
        ],
        compiler_params=pltpu.CompilerParams(
            vmem_limit_bytes=48 * 1024 * 1024),   # > v5e's 16 MiB default, < v7x's 64 MiB physical
    )(x1, w1bd, g1, be1, w2, g2, be2, wfc1, bfc1, emb, wfc2, bfc2)
    return out[:N, :1]


# --------------------------------- params -------------------------------------- #

def init_params(key, nlabels=10, im_shape=(1, 28, 28), hidden_dim=16):
    C_in, H, W = im_shape
    c1, c2 = hidden_dim * 4, hidden_dim * 8
    OH1 = (H - 4) // 2 + 1
    OH2 = (OH1 - 4) // 2 + 1
    n_features = c2 * OH2 * OH2
    ks = jax.random.split(key, 9)
    return {
        # conv weights ~ N(0, 0.02) per weights_init.  Conv biases are omitted: with a
        # training-mode BatchNorm directly after, the per-channel bias is exactly
        # cancelled by the batch-mean subtraction (dead parameter / dead compute).
        "conv1_w": 0.02 * jax.random.normal(ks[0], (c1, C_in, 4, 4), jnp.float32),
        "conv2_w": 0.02 * jax.random.normal(ks[1], (c2, c1, 4, 4), jnp.float32),
        # batchnorm: weight ~ N(1, 0.02), bias = 0 per weights_init
        "bn1_g": 1.0 + 0.02 * jax.random.normal(ks[2], (c1,), jnp.float32),
        "bn1_b": jnp.zeros((c1,), jnp.float32),
        "bn2_g": 1.0 + 0.02 * jax.random.normal(ks[3], (c2,), jnp.float32),
        "bn2_b": jnp.zeros((c2,), jnp.float32),
        # final block linears (PyTorch default init approximated with small normals)
        "fc1_w": 0.02 * jax.random.normal(ks[4], (64, n_features + nlabels), jnp.float32),
        "fc1_b": 0.01 * jax.random.normal(ks[5], (64,), jnp.float32),
        "fc2_w": 0.02 * jax.random.normal(ks[6], (1, 64), jnp.float32),
        "fc2_b": 0.01 * jax.random.normal(ks[7], (1,), jnp.float32),
        # label embedding ~ N(0, 1) (PyTorch Embedding default)
        "emb": jax.random.normal(ks[8], (nlabels, nlabels), jnp.float32),
    }


if __name__ == "__main__":
    key = jax.random.PRNGKey(0)
    k_param, k_img, k_lab = jax.random.split(key, 3)

    nlabels = 10
    batch = 2
    im_shape = (1, 28, 28)

    params = init_params(k_param, nlabels=nlabels, im_shape=im_shape, hidden_dim=16)
    image = jax.random.normal(k_img, (batch,) + im_shape, jnp.float32)
    label = jax.random.randint(k_lab, (batch,), 0, nlabels)

    fwd = jax.jit(functools.partial(discriminator_forward, hidden_dim=16))
    out = jax.block_until_ready(fwd(params, image, label))
    assert out.shape == (batch, 1)
    assert bool(jnp.all(jnp.isfinite(out)))
    print("KERNEL_OK")
</pallas_src>

<mosaic_0001>
module attributes {stable_mosaic.version = 11 : i64} {
  func.func @kernel(%arg0: memref<208x256xbf16, #tpu.memory_space<vmem>>, %arg1: memref<256x896xbf16, #tpu.memory_space<vmem>>, %arg2: memref<1x64xf32, #tpu.memory_space<vmem>>, %arg3: memref<1x64xf32, #tpu.memory_space<vmem>>, %arg4: memref<1024x128xbf16, #tpu.memory_space<vmem>>, %arg5: memref<1x128xf32, #tpu.memory_space<vmem>>, %arg6: memref<1x128xf32, #tpu.memory_space<vmem>>, %arg7: memref<3328x64xbf16, #tpu.memory_space<vmem>>, %arg8: memref<1x64xf32, #tpu.memory_space<vmem>>, %arg9: memref<16x128xbf16, #tpu.memory_space<vmem>>, %arg10: memref<64x128xbf16, #tpu.memory_space<vmem>>, %arg11: memref<1x128xf32, #tpu.memory_space<vmem>>, %arg12: memref<16x128xf32, #tpu.memory_space<vmem>>, %arg13: memref<208x896xbf16, #tpu.memory_space<vmem>>, %arg14: memref<400x1024xbf16, #tpu.memory_space<vmem>>, %arg15: memref<16x3328xbf16, #tpu.memory_space<vmem>>) attributes {dimension_semantics = [], scalar_prefetch = 0 : i64, scratch_operands = 3 : i64, tpu.core_type = #tpu.core_type<tc>} {
    %c0 = arith.constant 0 : index
    %c0_0 = arith.constant 0 : index
    %0 = vector.load %arg0[%c0, %c0_0] : memref<208x256xbf16, #tpu.memory_space<vmem>>, vector<208x256xbf16>
    %c0_1 = arith.constant 0 : index
    %c0_2 = arith.constant 0 : index
    %1 = vector.load %arg1[%c0_1, %c0_2] : memref<256x896xbf16, #tpu.memory_space<vmem>>, vector<256x896xbf16>
    %cst = arith.constant dense<0.000000e+00> : vector<208x896xf32>
    %2 = tpu.matmul %0, %1, %cst {dimension_numbers = #tpu.dot_dimension_numbers<[1], [0], [0], [1], [0, 0, 1, 1], [], []>} : vector<208x256xbf16>, vector<256x896xbf16>, vector<208x896xf32> -> vector<208x896xf32>
    %cst_3 = arith.constant dense<0.000000e+00> : vector<896xf32>
    %3 = vector.multi_reduction <add>, %2, %cst_3 [0] : vector<208x896xf32> to vector<896xf32>
    %4 = vector.shape_cast %3 : vector<896xf32> to vector<1x896xf32>
    %5 = arith.mulf %2, %2 : vector<208x896xf32>
    %cst_4 = arith.constant dense<0.000000e+00> : vector<896xf32>
    %6 = vector.multi_reduction <add>, %5, %cst_4 [0] : vector<208x896xf32> to vector<896xf32>
    %7 = vector.shape_cast %6 : vector<896xf32> to vector<1x896xf32>
    %8 = vector.extract_strided_slice %4 {offsets = [0, 0], sizes = [1, 64], strides = [1, 1]} : vector<1x896xf32> to vector<1x64xf32>
    %9 = vector.extract_strided_slice %7 {offsets = [0, 0], sizes = [1, 64], strides = [1, 1]} : vector<1x896xf32> to vector<1x64xf32>
    %10 = vector.extract_strided_slice %4 {offsets = [0, 64], sizes = [1, 64], strides = [1, 1]} : vector<1x896xf32> to vector<1x64xf32>
    %11 = arith.addf %8, %10 : vector<1x64xf32>
    %12 = vector.extract_strided_slice %7 {offsets = [0, 64], sizes = [1, 64], strides = [1, 1]} : vector<1x896xf32> to vector<1x64xf32>
    %13 = arith.addf %9, %12 : vector<1x64xf32>
    %14 = vector.extract_strided_slice %4 {offsets = [0, 128], sizes = [1, 64], strides = [1, 1]} : vector<1x896xf32> to vector<1x64xf32>
    %15 = arith.addf %11, %14 : vector<1x64xf32>
    %16 = vector.extract_strided_slice %7 {offsets = [0, 128], sizes = [1, 64], strides = [1, 1]} : vector<1x896xf32> to vector<1x64xf32>
    %17 = arith.addf %13, %16 : vector<1x64xf32>
    %18 = vector.extract_strided_slice %4 {offsets = [0, 192], sizes = [1, 64], strides = [1, 1]} : vector<1x896xf32> to vector<1x64xf32>
    %19 = arith.addf %15, %18 : vector<1x64xf32>
    %20 = vector.extract_strided_slice %7 {offsets = [0, 192], sizes = [1, 64], strides = [1, 1]} : vector<1x896xf32> to vector<1x64xf32>
    %21 = arith.addf %17, %20 : vector<1x64xf32>
    %22 = vector.extract_strided_slice %4 {offsets = [0, 256], sizes = [1, 64], strides = [1, 1]} : vector<1x896xf32> to vector<1x64xf32>
    %23 = arith.addf %19, %22 : vector<1x64xf32>
    %24 = vector.extract_strided_slice %7 {offsets = [0, 256], sizes = [1, 64], strides = [1, 1]} : vector<1x896xf32> to vector<1x64xf32>
    %25 = arith.addf %21, %24 : vector<1x64xf32>
    %26 = vector.extract_strided_slice %4 {offsets = [0, 320], sizes = [1, 64], strides = [1, 1]} : vector<1x896xf32> to vector<1x64xf32>
    %27 = arith.addf %23, %26 : vector<1x64xf32>
    %28 = vector.extract_strided_slice %7 {offsets = [0, 320], sizes = [1, 64], strides = [1, 1]} : vector<1x896xf32> to vector<1x64xf32>
    %29 = arith.addf %25, %28 : vector<1x64xf32>
    %30 = vector.extract_strided_slice %4 {offsets = [0, 384], sizes = [1, 64], strides = [1, 1]} : vector<1x896xf32> to vector<1x64xf32>
    %31 = arith.addf %27, %30 : vector<1x64xf32>
    %32 = vector.extract_strided_slice %7 {offsets = [0, 384], sizes = [1, 64], strides = [1, 1]} : vector<1x896xf32> to vector<1x64xf32>
    %33 = arith.addf %29, %32 : vector<1x64xf32>
    %34 = vector.extract_strided_slice %4 {offsets = [0, 448], sizes = [1, 64], strides = [1, 1]} : vector<1x896xf32> to vector<1x64xf32>
    %35 = arith.addf %31, %34 : vector<1x64xf32>
    %36 = vector.extract_strided_slice %7 {offsets = [0, 448], sizes = [1, 64], strides = [1, 1]} : vector<1x896xf32> to vector<1x64xf32>
    %37 = arith.addf %33, %36 : vector<1x64xf32>
    %38 = vector.extract_strided_slice %4 {offsets = [0, 512], sizes = [1, 64], strides = [1, 1]} : vector<1x896xf32> to vector<1x64xf32>
    %39 = arith.addf %35, %38 : vector<1x64xf32>
    %40 = vector.extract_strided_slice %7 {offsets = [0, 512], sizes = [1, 64], strides = [1, 1]} : vector<1x896xf32> to vector<1x64xf32>
    %41 = arith.addf %37, %40 : vector<1x64xf32>
    %42 = vector.extract_strided_slice %4 {offsets = [0, 576], sizes = [1, 64], strides = [1, 1]} : vector<1x896xf32> to vector<1x64xf32>
    %43 = arith.addf %39, %42 : vector<1x64xf32>
    %44 = vector.extract_strided_slice %7 {offsets = [0, 576], sizes = [1, 64], strides = [1, 1]} : vector<1x896xf32> to vector<1x64xf32>
    %45 = arith.addf %41, %44 : vector<1x64xf32>
    %46 = vector.extract_strided_slice %4 {offsets = [0, 640], sizes = [1, 64], strides = [1, 1]} : vector<1x896xf32> to vector<1x64xf32>
    %47 = arith.addf %43, %46 : vector<1x64xf32>
    %48 = vector.extract_strided_slice %7 {offsets = [0, 640], sizes = [1, 64], strides = [1, 1]} : vector<1x896xf32> to vector<1x64xf32>
    %49 = arith.addf %45, %48 : vector<1x64xf32>
    %50 = vector.extract_strided_slice %4 {offsets = [0, 704], sizes = [1, 64], strides = [1, 1]} : vector<1x896xf32> to vector<1x64xf32>
    %51 = arith.addf %47, %50 : vector<1x64xf32>
    %52 = vector.extract_strided_slice %7 {offsets = [0, 704], sizes = [1, 64], strides = [1, 1]} : vector<1x896xf32> to vector<1x64xf32>
    %53 = arith.addf %49, %52 : vector<1x64xf32>
    %54 = vector.extract_strided_slice %4 {offsets = [0, 768], sizes = [1, 64], strides = [1, 1]} : vector<1x896xf32> to vector<1x64xf32>
    %55 = arith.addf %51, %54 : vector<1x64xf32>
    %56 = vector.extract_strided_slice %7 {offsets = [0, 768], sizes = [1, 64], strides = [1, 1]} : vector<1x896xf32> to vector<1x64xf32>
    %57 = arith.addf %53, %56 : vector<1x64xf32>
    %cst_5 = arith.constant 2.958580e-03 : f32
    %58 = vector.broadcast %cst_5 : f32 to vector<1x64xf32>
    %59 = arith.mulf %55, %58 : vector<1x64xf32>
    %cst_6 = arith.constant 2.958580e-03 : f32
    %60 = vector.broadcast %cst_6 : f32 to vector<1x64xf32>
    %61 = arith.mulf %57, %60 : vector<1x64xf32>
    %62 = arith.mulf %59, %59 : vector<1x64xf32>
    %63 = arith.subf %61, %62 : vector<1x64xf32>
    %cst_7 = arith.constant 0.000000e+00 : f32
    %64 = vector.broadcast %cst_7 : f32 to vector<1x64xf32>
    %65 = arith.maximumf %63, %64 : vector<1x64xf32>
    %c0_8 = arith.constant 0 : index
    %c0_9 = arith.constant 0 : index
    %66 = vector.load %arg2[%c0_8, %c0_9] : memref<1x64xf32, #tpu.memory_space<vmem>>, vector<1x64xf32>
    %cst_10 = arith.constant 9.99999974E-6 : f32
    %67 = vector.broadcast %cst_10 : f32 to vector<1x64xf32>
    %68 = arith.addf %65, %67 : vector<1x64xf32>
    %69 = math.rsqrt %68 : vector<1x64xf32>
    %70 = arith.mulf %66, %69 : vector<1x64xf32>
    %c0_11 = arith.constant 0 : index
    %c0_12 = arith.constant 0 : index
    %71 = vector.load %arg3[%c0_11, %c0_12] : memref<1x64xf32, #tpu.memory_space<vmem>>, vector<1x64xf32>
    %72 = arith.mulf %59, %70 : vector<1x64xf32>
    %73 = arith.subf %71, %72 : vector<1x64xf32>
    %74 = tpu.concatenate %70, %70, %70, %70, %70, %70, %70, %70, %70, %70, %70, %70, %70, %70 in 1 : vector<1x64xf32>, vector<1x64xf32>, vector<1x64xf32>, vector<1x64xf32>, vector<1x64xf32>, vector<1x64xf32>, vector<1x64xf32>, vector<1x64xf32>, vector<1x64xf32>, vector<1x64xf32>, vector<1x64xf32>, vector<1x64xf32>, vector<1x64xf32>, vector<1x64xf32> -> vector<1x896xf32>
    %75 = tpu.concatenate %73, %73, %73, %73, %73, %73, %73, %73, %73, %73, %73, %73, %73, %73 in 1 : vector<1x64xf32>, vector<1x64xf32>, vector<1x64xf32>, vector<1x64xf32>, vector<1x64xf32>, vector<1x64xf32>, vector<1x64xf32>, vector<1x64xf32>, vector<1x64xf32>, vector<1x64xf32>, vector<1x64xf32>, vector<1x64xf32>, vector<1x64xf32>, vector<1x64xf32> -> vector<1x896xf32>
    %76 = vector.broadcast %74 : vector<1x896xf32> to vector<208x896xf32>
    %77 = arith.mulf %2, %76 : vector<208x896xf32>
    %78 = vector.broadcast %75 : vector<1x896xf32> to vector<208x896xf32>
    %79 = arith.addf %77, %78 : vector<208x896xf32>
    %cst_13 = arith.constant 0.000000e+00 : f32
    %80 = vector.broadcast %cst_13 : f32 to vector<208x896xf32>
    %81 = arith.cmpf ogt, %79, %80 : vector<208x896xf32>
    %cst_14 = arith.constant 2.000000e-01 : f32
    %82 = vector.broadcast %cst_14 : f32 to vector<208x896xf32>
    %83 = arith.mulf %82, %79 : vector<208x896xf32>
    %84 = arith.select %81, %79, %83 : vector<208x896xi1>, vector<208x896xf32>
    %85 = tpu.iota {dimensions = array<i32: 0>} : vector<208x1xi32>
    %c16_i32 = arith.constant 16 : i32
    %c0_i32 = arith.constant 0 : i32
    %86 = arith.cmpi eq, %c16_i32, %c0_i32 : i32
    %c1_i32 = arith.constant 1 : i32
    %87 = arith.select %86, %c1_i32, %c16_i32 : i32
    %88 = vector.broadcast %87 : i32 to vector<208x1xi32>
    %89 = arith.remsi %85, %88 : vector<208x1xi32>
    %c0_i32_15 = arith.constant 0 : i32
    %90 = vector.broadcast %c0_i32_15 : i32 to vector<208x1xi32>
    %91 = arith.cmpi ne, %89, %90 : vector<208x1xi32>
    %c0_i32_16 = arith.constant 0 : i32
    %92 = vector.broadcast %c0_i32_16 : i32 to vector<208x1xi32>
    %93 = arith.cmpi slt, %89, %92 : vector<208x1xi32>
    %c0_i32_17 = arith.constant 0 : i32
    %94 = arith.cmpi slt, %87, %c0_i32_17 : i32
    %95 = vector.broadcast %94 : i1 to vector<208x1xi1>
    %96 = vector.broadcast %95 : vector<208x1xi1> to vector<208x1xi1>
    %97 = arith.xori %93, %96 : vector<208x1xi1>
    %98 = arith.andi %97, %91 : vector<208x1xi1>
    %99 = vector.broadcast %87 : i32 to vector<208x1xi32>
    %100 = arith.addi %89, %99 : vector<208x1xi32>
    %101 = arith.select %98, %100, %89 : vector<208x1xi1>, vector<208x1xi32>
    %c2_i32 = arith.constant 2 : i32
    %102 = vector.broadcast %c2_i32 : i32 to vector<208x1xi32>
    %103 = arith.cmpi slt, %101, %102 : vector<208x1xi32>
    %cst_18 = arith.constant 0.000000e+00 : f32
    %104 = vector.shape_cast %103 : vector<208x1xi1> to vector<208x1xi1>
    %105 = vector.broadcast %104 : vector<208x1xi1> to vector<208x896xi1>
    %106 = vector.broadcast %cst_18 : f32 to vector<208x896xf32>
    %107 = arith.select %105, %84, %106 : vector<208x896xi1>, vector<208x896xf32>
    %108 = arith.truncf %107 : vector<208x896xf32> to vector<208x896xbf16>
    %c0_19 = arith.constant 0 : index
    %c0_20 = arith.constant 0 : index
    %109 = vector.load %arg13[%c0_19, %c0_20] : memref<208x896xbf16, #tpu.memory_space<vmem>>, vector<208x896xbf16>
    tpu.vector_store %arg13[%c0_19, %c0_20], %108 {strides = array<i32>} : memref<208x896xbf16, #tpu.memory_space<vmem>>, vector<208x896xbf16>,
    %c0_21 = arith.constant 0 : index
    %c0_22 = arith.constant 0 : index
    %110 = vector.load %arg13[%c0_21, %c0_22] : memref<208x896xbf16, #tpu.memory_space<vmem>>, vector<80x128xbf16>
    %c0_23 = arith.constant 0 : index
    %c0_24 = arith.constant 0 : index
    %111 = vector.load %arg14[%c0_23, %c0_24] : memref<400x1024xbf16, #tpu.memory_space<vmem>>, vector<80x128xbf16>
    tpu.vector_store %arg14[%c0_23, %c0_24], %110 {strides = array<i32>} : memref<400x1024xbf16, #tpu.memory_space<vmem>>, vector<80x128xbf16>,
    %c0_25 = arith.constant 0 : index
    %c448 = arith.constant 448 : index
    %112 = vector.load %arg13[%c0_25, %c448] : memref<208x896xbf16, #tpu.memory_space<vmem>>, vector<80x128xbf16>
    %c0_26 = arith.constant 0 : index
    %c128 = arith.constant 128 : index
    %113 = vector.load %arg14[%c0_26, %c128] : memref<400x1024xbf16, #tpu.memory_space<vmem>>, vector<80x128xbf16>
    tpu.vector_store %arg14[%c0_26, %c128], %112 {strides = array<i32>} : memref<400x1024xbf16, #tpu.memory_space<vmem>>, vector<80x128xbf16>,
    %c112 = arith.constant 112 : index
    %c0_27 = arith.constant 0 : index
    %114 = vector.load %arg13[%c112, %c0_27] : memref<208x896xbf16, #tpu.memory_space<vmem>>, vector<80x128xbf16>
    %c0_28 = arith.constant 0 : index
    %c256 = arith.constant 256 : index
    %115 = vector.load %arg14[%c0_28, %c256] : memref<400x1024xbf16, #tpu.memory_space<vmem>>, vector<80x128xbf16>
    tpu.vector_store %arg14[%c0_28, %c256], %114 {strides = array<i32>} : memref<400x1024xbf16, #tpu.memory_space<vmem>>, vector<80x128xbf16>,
    %c112_29 = arith.constant 112 : index
    %c448_30 = arith.constant 448 : index
    %116 = vector.load %arg13[%c112_29, %c448_30] : memref<208x896xbf16, #tpu.memory_space<vmem>>, vector<80x128xbf16>
    %c0_31 = arith.constant 0 : index
    %c384 = arith.constant 384 : index
    %117 = vector.load %arg14[%c0_31, %c384] : memref<400x1024xbf16, #tpu.memory_space<vmem>>, vector<80x128xbf16>
    tpu.vector_store %arg14[%c0_31, %c384], %116 {strides = array<i32>} : memref<400x1024xbf16, #tpu.memory_space<vmem>>, vector<80x128xbf16>,
    %c16 = arith.constant 16 : index
    %c0_32 = arith.constant 0 : index
    %118 = vector.load %arg13[%c16, %c0_32] : memref<208x896xbf16, #tpu.memory_space<vmem>>, vector<80x128xbf16>
    %c0_33 = arith.constant 0 : index
    %c512 = arith.constant 512 : index
    %119 = vector.load %arg14[%c0_33, %c512] : memref<400x1024xbf16, #tpu.memory_space<vmem>>, vector<80x128xbf16>
    tpu.vector_store %arg14[%c0_33, %c512], %118 {strides = array<i32>} : memref<400x1024xbf16, #tpu.memory_space<vmem>>, vector<80x128xbf16>,
    %c16_34 = arith.constant 16 : index
    %c448_35 = arith.constant 448 : index
    %120 = vector.load %arg13[%c16_34, %c448_35] : memref<208x896xbf16, #tpu.memory_space<vmem>>, vector<80x128xbf16>
    %c0_36 = arith.constant 0 : index
    %c640 = arith.constant 640 : index
    %121 = vector.load %arg14[%c0_36, %c640] : memref<400x1024xbf16, #tpu.memory_space<vmem>>, vector<80x128xbf16>
    tpu.vector_store %arg14[%c0_36, %c640], %120 {strides = array<i32>} : memref<400x1024xbf16, #tpu.memory_space<vmem>>, vector<80x128xbf16>,
    %c128_37 = arith.constant 128 : index
    %c0_38 = arith.constant 0 : index
    %122 = vector.load %arg13[%c128_37, %c0_38] : memref<208x896xbf16, #tpu.memory_space<vmem>>, vector<80x128xbf16>
    %c0_39 = arith.constant 0 : index
    %c768 = arith.constant 768 : index
    %123 = vector.load %arg14[%c0_39, %c768] : memref<400x1024xbf16, #tpu.memory_space<vmem>>, vector<80x128xbf16>
    tpu.vector_store %arg14[%c0_39, %c768], %122 {strides = array<i32>} : memref<400x1024xbf16, #tpu.memory_space<vmem>>, vector<80x128xbf16>,
    %c128_40 = arith.constant 128 : index
    %c448_41 = arith.constant 448 : index
    %124 = vector.load %arg13[%c128_40, %c448_41] : memref<208x896xbf16, #tpu.memory_space<vmem>>, vector<80x128xbf16>
    %c0_42 = arith.constant 0 : index
    %c896 = arith.constant 896 : index
    %125 = vector.load %arg14[%c0_42, %c896] : memref<400x1024xbf16, #tpu.memory_space<vmem>>, vector<80x128xbf16>
    tpu.vector_store %arg14[%c0_42, %c896], %124 {strides = array<i32>} : memref<400x1024xbf16, #tpu.memory_space<vmem>>, vector<80x128xbf16>,
    %c0_43 = arith.constant 0 : index
    %c64 = arith.constant 64 : index
    %126 = vector.load %arg13[%c0_43, %c64] : memref<208x896xbf16, #tpu.memory_space<vmem>>, vector<80x128xbf16>
    %c80 = arith.constant 80 : index
    %c0_44 = arith.constant 0 : index
    %127 = vector.load %arg14[%c80, %c0_44] : memref<400x1024xbf16, #tpu.memory_space<vmem>>, vector<80x128xbf16>
    tpu.vector_store %arg14[%c80, %c0_44], %126 {strides = array<i32>} : memref<400x1024xbf16, #tpu.memory_space<vmem>>, vector<80x128xbf16>,
    %c0_45 = arith.constant 0 : index
    %c512_46 = arith.constant 512 : index
    %128 = vector.load %arg13[%c0_45, %c512_46] : memref<208x896xbf16, #tpu.memory_space<vmem>>, vector<80x128xbf16>
    %c80_47 = arith.constant 80 : index
    %c128_48 = arith.constant 128 : index
    %129 = vector.load %arg14[%c80_47, %c128_48] : memref<400x1024xbf16, #tpu.memory_space<vmem>>, vector<80x128xbf16>
    tpu.vector_store %arg14[%c80_47, %c128_48], %128 {strides = array<i32>} : memref<400x1024xbf16, #tpu.memory_space<vmem>>, vector<80x128xbf16>,
    %c112_49 = arith.constant 112 : index
    %c64_50 = arith.constant 64 : index
    %130 = vector.load %arg13[%c112_49, %c64_50] : memref<208x896xbf16, #tpu.memory_space<vmem>>, vector<80x128xbf16>
    %c80_51 = arith.constant 80 : index
    %c256_52 = arith.constant 256 : index
    %131 = vector.load %arg14[%c80_51, %c256_52] : memref<400x1024xbf16, #tpu.memory_space<vmem>>, vector<80x128xbf16>
    tpu.vector_store %arg14[%c80_51, %c256_52], %130 {strides = array<i32>} : memref<400x1024xbf16, #tpu.memory_space<vmem>>, vector<80x128xbf16>,
    %c112_53 = arith.constant 112 : index
    %c512_54 = arith.constant 512 : index
    %132 = vector.load %arg13[%c112_53, %c512_54] : memref<208x896xbf16, #tpu.memory_space<vmem>>, vector<80x128xbf16>
    %c80_55 = arith.constant 80 : index
    %c384_56 = arith.constant 384 : index
    %133 = vector.load %arg14[%c80_55, %c384_56] : memref<400x1024xbf16, #tpu.memory_space<vmem>>, vector<80x128xbf16>
    tpu.vector_store %arg14[%c80_55, %c384_56], %132 {strides = array<i32>} : memref<400x1024xbf16, #tpu.memory_space<vmem>>, vector<80x128xbf16>,
    %c16_57 = arith.constant 16 : index
    %c64_58 = arith.constant 64 : index
    %134 = vector.load %arg13[%c16_57, %c64_58] : memref<208x896xbf16, #tpu.memory_space<vmem>>, vector<80x128xbf16>
    %c80_59 = arith.constant 80 : index
    %c512_60 = arith.constant 512 : index
    %135 = vector.load %arg14[%c80_59, %c512_60] : memref<400x1024xbf16, #tpu.memory_space<vmem>>, vector<80x128xbf16>
    tpu.vector_store %arg14[%c80_59, %c512_60], %134 {strides = array<i32>} : memref<400x1024xbf16, #tpu.memory_space<vmem>>, vector<80x128xbf16>,
    %c16_61 = arith.constant 16 : index
    %c512_62 = arith.constant 512 : index
    %136 = vector.load %arg13[%c16_61, %c512_62] : memref<208x896xbf16, #tpu.memory_space<vmem>>, vector<80x128xbf16>
    %c80_63 = arith.constant 80 : index
    %c640_64 = arith.constant 640 : index
    %137 = vector.load %arg14[%c80_63, %c640_64] : memref<400x1024xbf16, #tpu.memory_space<vmem>>, vector<80x128xbf16>
    tpu.vector_store %arg14[%c80_63, %c640_64], %136 {strides = array<i32>} : memref<400x1024xbf16, #tpu.memory_space<vmem>>, vector<80x128xbf16>,
    %c128_65 = arith.constant 128 : index
    %c64_66 = arith.constant 64 : index
    %138 = vector.load %arg13[%c128_65, %c64_66] : memref<208x896xbf16, #tpu.memory_space<vmem>>, vector<80x128xbf16>
    %c80_67 = arith.constant 80 : index
    %c768_68 = arith.constant 768 : index
    %139 = vector.load %arg14[%c80_67, %c768_68] : memref<400x1024xbf16, #tpu.memory_space<vmem>>, vector<80x128xbf16>
    tpu.vector_store %arg14[%c80_67, %c768_68], %138 {strides = array<i32>} : memref<400x1024xbf16, #tpu.memory_space<vmem>>, vector<80x128xbf16>,
    %c128_69 = arith.constant 128 : index
    %c512_70 = arith.constant 512 : index
    %140 = vector.load %arg13[%c128_69, %c512_70] : memref<208x896xbf16, #tpu.memory_space<vmem>>, vector<80x128xbf16>
    %c80_71 = arith.constant 80 : index
    %c896_72 = arith.constant 896 : index
    %141 = vector.load %arg14[%c80_71, %c896_72] : memref<400x1024xbf16, #tpu.memory_space<vmem>>, vector<80x128xbf16>
    tpu.vector_store %arg14[%c80_71, %c896_72], %140 {strides = array<i32>} : memref<400x1024xbf16, #tpu.memory_space<vmem>>, vector<80x128xbf16>,
    %c0_73 = arith.constant 0 : index
    %c128_74 = arith.constant 128 : index
    %142 = vector.load %arg13[%c0_73, %c128_74] : memref<208x896xbf16, #tpu.memory_space<vmem>>, vector<80x128xbf16>
    %c160 = arith.constant 160 : index
    %c0_75 = arith.constant 0 : index
    %143 = vector.load %arg14[%c160, %c0_75] : memref<400x1024xbf16, #tpu.memory_space<vmem>>, vector<80x128xbf16>
    tpu.vector_store %arg14[%c160, %c0_75], %142 {strides = array<i32>} : memref<400x1024xbf16, #tpu.memory_space<vmem>>, vector<80x128xbf16>,
    %c0_76 = arith.constant 0 : index
    %c576 = arith.constant 576 : index
    %144 = vector.load %arg13[%c0_76, %c576] : memref<208x896xbf16, #tpu.memory_space<vmem>>, vector<80x128xbf16>
    %c160_77 = arith.constant 160 : index
    %c128_78 = arith.constant 128 : index
    %145 = vector.load %arg14[%c160_77, %c128_78] : memref<400x1024xbf16, #tpu.memory_space<vmem>>, vector<80x128xbf16>
    tpu.vector_store %arg14[%c160_77, %c128_78], %144 {strides = array<i32>} : memref<400x1024xbf16, #tpu.memory_space<vmem>>, vector<80x128xbf16>,
    %c112_79 = arith.constant 112 : index
    %c128_80 = arith.constant 128 : index
    %146 = vector.load %arg13[%c112_79, %c128_80] : memref<208x896xbf16, #tpu.memory_space<vmem>>, vector<80x128xbf16>
    %c160_81 = arith.constant 160 : index
    %c256_82 = arith.constant 256 : index
    %147 = vector.load %arg14[%c160_81, %c256_82] : memref<400x1024xbf16, #tpu.memory_space<vmem>>, vector<80x128xbf16>
    tpu.vector_store %arg14[%c160_81, %c256_82], %146 {strides = array<i32>} : memref<400x1024xbf16, #tpu.memory_space<vmem>>, vector<80x128xbf16>,
    %c112_83 = arith.constant 112 : index
    %c576_84 = arith.constant 576 : index
    %148 = vector.load %arg13[%c112_83, %c576_84] : memref<208x896xbf16, #tpu.memory_space<vmem>>, vector<80x128xbf16>
    %c160_85 = arith.constant 160 : index
    %c384_86 = arith.constant 384 : index
    %149 = vector.load %arg14[%c160_85, %c384_86] : memref<400x1024xbf16, #tpu.memory_space<vmem>>, vector<80x128xbf16>
    tpu.vector_store %arg14[%c160_85, %c384_86], %148 {strides = array<i32>} : memref<400x1024xbf16, #tpu.memory_space<vmem>>, vector<80x128xbf16>,
    %c16_87 = arith.constant 16 : index
    %c128_88 = arith.constant 128 : index
    %150 = vector.load %arg13[%c16_87, %c128_88] : memref<208x896xbf16, #tpu.memory_space<vmem>>, vector<80x128xbf16>
    %c160_89 = arith.constant 160 : index
    %c512_90 = arith.constant 512 : index
    %151 = vector.load %arg14[%c160_89, %c512_90] : memref<400x1024xbf16, #tpu.memory_space<vmem>>, vector<80x128xbf16>
    tpu.vector_store %arg14[%c160_89, %c512_90], %150 {strides = array<i32>} : memref<400x1024xbf16, #tpu.memory_space<vmem>>, vector<80x128xbf16>,
    %c16_91 = arith.constant 16 : index
    %c576_92 = arith.constant 576 : index
    %152 = vector.load %arg13[%c16_91, %c576_92] : memref<208x896xbf16, #tpu.memory_space<vmem>>, vector<80x128xbf16>
    %c160_93 = arith.constant 160 : index
    %c640_94 = arith.constant 640 : index
    %153 = vector.load %arg14[%c160_93, %c640_94] : memref<400x1024xbf16, #tpu.memory_space<vmem>>, vector<80x128xbf16>
    tpu.vector_store %arg14[%c160_93, %c640_94], %152 {strides = array<i32>} : memref<400x1024xbf16, #tpu.memory_space<vmem>>, vector<80x128xbf16>,
    %c128_95 = arith.constant 128 : index
    %c128_96 = arith.constant 128 : index
    %154 = vector.load %arg13[%c128_95, %c128_96] : memref<208x896xbf16, #tpu.memory_space<vmem>>, vector<80x128xbf16>
    %c160_97 = arith.constant 160 : index
    %c768_98 = arith.constant 768 : index
    %155 = vector.load %arg14[%c160_97, %c768_98] : memref<400x1024xbf16, #tpu.memory_space<vmem>>, vector<80x128xbf16>
    tpu.vector_store %arg14[%c160_97, %c768_98], %154 {strides = array<i32>} : memref<400x1024xbf16, #tpu.memory_space<vmem>>, vector<80x128xbf16>,
    %c128_99 = arith.constant 128 : index
    %c576_100 = arith.constant 576 : index
    %156 = vector.load %arg13[%c128_99, %c576_100] : memref<208x896xbf16, #tpu.memory_space<vmem>>, vector<80x128xbf16>
    %c160_101 = arith.constant 160 : index
    %c896_102 = arith.constant 896 : index
    %157 = vector.load %arg14[%c160_101, %c896_102] : memref<400x1024xbf16, #tpu.memory_space<vmem>>, vector<80x128xbf16>
    tpu.vector_store %arg14[%c160_101, %c896_102], %156 {strides = array<i32>} : memref<400x1024xbf16, #tpu.memory_space<vmem>>, vector<80x128xbf16>,
    %c0_103 = arith.constant 0 : index
    %c192 = arith.constant 192 : index
    %158 = vector.load %arg13[%c0_103, %c192] : memref<208x896xbf16, #tpu.memory_space<vmem>>, vector<80x128xbf16>
    %c240 = arith.constant 240 : index
    %c0_104 = arith.constant 0 : index
    %159 = vector.load %arg14[%c240, %c0_104] : memref<400x1024xbf16, #tpu.memory_space<vmem>>, vector<80x128xbf16>
    tpu.vector_store %arg14[%c240, %c0_104], %158 {strides = array<i32>} : memref<400x1024xbf16, #tpu.memory_space<vmem>>, vector<80x128xbf16>,
    %c0_105 = arith.constant 0 : index
    %c640_106 = arith.constant 640 : index
    %160 = vector.load %arg13[%c0_105, %c640_106] : memref<208x896xbf16, #tpu.memory_space<vmem>>, vector<80x128xbf16>
    %c240_107 = arith.constant 240 : index
    %c128_108 = arith.constant 128 : index
    %161 = vector.load %arg14[%c240_107, %c128_108] : memref<400x1024xbf16, #tpu.memory_space<vmem>>, vector<80x128xbf16>
    tpu.vector_store %arg14[%c240_107, %c128_108], %160 {strides = array<i32>} : memref<400x1024xbf16, #tpu.memory_space<vmem>>, vector<80x128xbf16>,
    %c112_109 = arith.constant 112 : index
    %c192_110 = arith.constant 192 : index
    %162 = vector.load %arg13[%c112_109, %c192_110] : memref<208x896xbf16, #tpu.memory_space<vmem>>, vector<80x128xbf16>
    %c240_111 = arith.constant 240 : index
    %c256_112 = arith.constant 256 : index
    %163 = vector.load %arg14[%c240_111, %c256_112] : memref<400x1024xbf16, #tpu.memory_space<vmem>>, vector<80x128xbf16>
    tpu.vector_store %arg14[%c240_111, %c256_112], %162 {strides = array<i32>} : memref<400x1024xbf16, #tpu.memory_space<vmem>>, vector<80x128xbf16>,
    %c112_113 = arith.constant 112 : index
    %c640_114 = arith.constant 640 : index
    %164 = vector.load %arg13[%c112_113, %c640_114] : memref<208x896xbf16, #tpu.memory_space<vmem>>, vector<80x128xbf16>
    %c240_115 = arith.constant 240 : index
    %c384_116 = arith.constant 384 : index
    %165 = vector.load %arg14[%c240_115, %c384_116] : memref<400x1024xbf16, #tpu.memory_space<vmem>>, vector<80x128xbf16>
    tpu.vector_store %arg14[%c240_115, %c384_116], %164 {strides = array<i32>} : memref<400x1024xbf16, #tpu.memory_space<vmem>>, vector<80x128xbf16>,
    %c16_117 = arith.constant 16 : index
    %c192_118 = arith.constant 192 : index
    %166 = vector.load %arg13[%c16_117, %c192_118] : memref<208x896xbf16, #tpu.memory_space<vmem>>, vector<80x128xbf16>
    %c240_119 = arith.constant 240 : index
    %c512_120 = arith.constant 512 : index
    %167 = vector.load %arg14[%c240_119, %c512_120] : memref<400x1024xbf16, #tpu.memory_space<vmem>>, vector<80x128xbf16>
    tpu.vector_store %arg14[%c240_119, %c512_120], %166 {strides = array<i32>} : memref<400x1024xbf16, #tpu.memory_space<vmem>>, vector<80x128xbf16>,
    %c16_121 = arith.constant 16 : index
    %c640_122 = arith.constant 640 : index
    %168 = vector.load %arg13[%c16_121, %c640_122] : memref<208x896xbf16, #tpu.memory_space<vmem>>, vector<80x128xbf16>
    %c240_123 = arith.constant 240 : index
    %c640_124 = arith.constant 640 : index
    %169 = vector.load %arg14[%c240_123, %c640_124] : memref<400x1024xbf16, #tpu.memory_space<vmem>>, vector<80x128xbf16>
    tpu.vector_store %arg14[%c240_123, %c640_124], %168 {strides = array<i32>} : memref<400x1024xbf16, #tpu.memory_space<vmem>>, vector<80x128xbf16>,
    %c128_125 = arith.constant 128 : index
    %c192_126 = arith.constant 192 : index
    %170 = vector.load %arg13[%c128_125, %c192_126] : memref<208x896xbf16, #tpu.memory_space<vmem>>, vector<80x128xbf16>
    %c240_127 = arith.constant 240 : index
    %c768_128 = arith.constant 768 : index
    %171 = vector.load %arg14[%c240_127, %c768_128] : memref<400x1024xbf16, #tpu.memory_space<vmem>>, vector<80x128xbf16>
    tpu.vector_store %arg14[%c240_127, %c768_128], %170 {strides = array<i32>} : memref<400x1024xbf16, #tpu.memory_space<vmem>>, vector<80x128xbf16>,
    %c128_129 = arith.constant 128 : index
    %c640_130 = arith.constant 640 : index
    %172 = vector.load %arg13[%c128_129, %c640_130] : memref<208x896xbf16, #tpu.memory_space<vmem>>, vector<80x128xbf16>
    %c240_131 = arith.constant 240 : index
    %c896_132 = arith.constant 896 : index
    %173 = vector.load %arg14[%c240_131, %c896_132] : memref<400x1024xbf16, #tpu.memory_space<vmem>>, vector<80x128xbf16>
    tpu.vector_store %arg14[%c240_131, %c896_132], %172 {strides = array<i32>} : memref<400x1024xbf16, #tpu.memory_space<vmem>>, vector<80x128xbf16>,
    %c0_133 = arith.constant 0 : index
    %c256_134 = arith.constant 256 : index
    %174 = vector.load %arg13[%c0_133, %c256_134] : memref<208x896xbf16, #tpu.memory_space<vmem>>, vector<80x128xbf16>
    %c320 = arith.constant 320 : index
    %c0_135 = arith.constant 0 : index
    %175 = vector.load %arg14[%c320, %c0_135] : memref<400x1024xbf16, #tpu.memory_space<vmem>>, vector<80x128xbf16>
    tpu.vector_store %arg14[%c320, %c0_135], %174 {strides = array<i32>} : memref<400x1024xbf16, #tpu.memory_space<vmem>>, vector<80x128xbf16>,
    %c0_136 = arith.constant 0 : index
    %c704 = arith.constant 704 : index
    %176 = vector.load %arg13[%c0_136, %c704] : memref<208x896xbf16, #tpu.memory_space<vmem>>, vector<80x128xbf16>
    %c320_137 = arith.constant 320 : index
    %c128_138 = arith.constant 128 : index
    %177 = vector.load %arg14[%c320_137, %c128_138] : memref<400x1024xbf16, #tpu.memory_space<vmem>>, vector<80x128xbf16>
    tpu.vector_store %arg14[%c320_137, %c128_138], %176 {strides = array<i32>} : memref<400x1024xbf16, #tpu.memory_space<vmem>>, vector<80x128xbf16>,
    %c112_139 = arith.constant 112 : index
    %c256_140 = arith.constant 256 : index
    %178 = vector.load %arg13[%c112_139, %c256_140] : memref<208x896xbf16, #tpu.memory_space<vmem>>, vector<80x128xbf16>
    %c320_141 = arith.constant 320 : index
    %c256_142 = arith.constant 256 : index
    %179 = vector.load %arg14[%c320_141, %c256_142] : memref<400x1024xbf16, #tpu.memory_space<vmem>>, vector<80x128xbf16>
    tpu.vector_store %arg14[%c320_141, %c256_142], %178 {strides = array<i32>} : memref<400x1024xbf16, #tpu.memory_space<vmem>>, vector<80x128xbf16>,
    %c112_143 = arith.constant 112 : index
    %c704_144 = arith.constant 704 : index
    %180 = vector.load %arg13[%c112_143, %c704_144] : memref<208x896xbf16, #tpu.memory_space<vmem>>, vector<80x128xbf16>
    %c320_145 = arith.constant 320 : index
    %c384_146 = arith.constant 384 : index
    %181 = vector.load %arg14[%c320_145, %c384_146] : memref<400x1024xbf16, #tpu.memory_space<vmem>>, vector<80x128xbf16>
    tpu.vector_store %arg14[%c320_145, %c384_146], %180 {strides = array<i32>} : memref<400x1024xbf16, #tpu.memory_space<vmem>>, vector<80x128xbf16>,
    %c16_147 = arith.constant 16 : index
    %c256_148 = arith.constant 256 : index
    %182 = vector.load %arg13[%c16_147, %c256_148] : memref<208x896xbf16, #tpu.memory_space<vmem>>, vector<80x128xbf16>
    %c320_149 = arith.constant 320 : index
    %c512_150 = arith.constant 512 : index
    %183 = vector.load %arg14[%c320_149, %c512_150] : memref<400x1024xbf16, #tpu.memory_space<vmem>>, vector<80x128xbf16>
    tpu.vector_store %arg14[%c320_149, %c512_150], %182 {strides = array<i32>} : memref<400x1024xbf16, #tpu.memory_space<vmem>>, vector<80x128xbf16>,
    %c16_151 = arith.constant 16 : index
    %c704_152 = arith.constant 704 : index
    %184 = vector.load %arg13[%c16_151, %c704_152] : memref<208x896xbf16, #tpu.memory_space<vmem>>, vector<80x128xbf16>
    %c320_153 = arith.constant 320 : index
    %c640_154 = arith.constant 640 : index
    %185 = vector.load %arg14[%c320_153, %c640_154] : memref<400x1024xbf16, #tpu.memory_space<vmem>>, vector<80x128xbf16>
    tpu.vector_store %arg14[%c320_153, %c640_154], %184 {strides = array<i32>} : memref<400x1024xbf16, #tpu.memory_space<vmem>>, vector<80x128xbf16>,
    %c128_155 = arith.constant 128 : index
    %c256_156 = arith.constant 256 : index
    %186 = vector.load %arg13[%c128_155, %c256_156] : memref<208x896xbf16, #tpu.memory_space<vmem>>, vector<80x128xbf16>
    %c320_157 = arith.constant 320 : index
    %c768_158 = arith.constant 768 : index
    %187 = vector.load %arg14[%c320_157, %c768_158] : memref<400x1024xbf16, #tpu.memory_space<vmem>>, vector<80x128xbf16>
    tpu.vector_store %arg14[%c320_157, %c768_158], %186 {strides = array<i32>} : memref<400x1024xbf16, #tpu.memory_space<vmem>>, vector<80x128xbf16>,
    %c128_159 = arith.constant 128 : index
    %c704_160 = arith.constant 704 : index
    %188 = vector.load %arg13[%c128_159, %c704_160] : memref<208x896xbf16, #tpu.memory_space<vmem>>, vector<80x128xbf16>
    %c320_161 = arith.constant 320 : index
    %c896_162 = arith.constant 896 : index
    %189 = vector.load %arg14[%c320_161, %c896_162] : memref<400x1024xbf16, #tpu.memory_space<vmem>>, vector<80x128xbf16>
    tpu.vector_store %arg14[%c320_161, %c896_162], %188 {strides = array<i32>} : memref<400x1024xbf16, #tpu.memory_space<vmem>>, vector<80x128xbf16>,
    %c0_163 = arith.constant 0 : index
    %c0_164 = arith.constant 0 : index
    %190 = vector.load %arg14[%c0_163, %c0_164] : memref<400x1024xbf16, #tpu.memory_space<vmem>>, vector<400x1024xbf16>
    %c0_165 = arith.constant 0 : index
    %c0_166 = arith.constant 0 : index
    %191 = vector.load %arg4[%c0_165, %c0_166] : memref<1024x128xbf16, #tpu.memory_space<vmem>>, vector<1024x128xbf16>
    %cst_167 = arith.constant dense<0.000000e+00> : vector<400x128xf32>
    %192 = tpu.matmul %190, %191, %cst_167 {dimension_numbers = #tpu.dot_dimension_numbers<[1], [0], [0], [1], [0, 0, 1, 1], [], []>} : vector<400x1024xbf16>, vector<1024x128xbf16>, vector<400x128xf32> -> vector<400x128xf32>
    %cst_168 = arith.constant dense<0.000000e+00> : vector<128xf32>
    %193 = vector.multi_reduction <add>, %192, %cst_168 [0] : vector<400x128xf32> to vector<128xf32>
    %194 = vector.shape_cast %193 : vector<128xf32> to vector<1x128xf32>
    %195 = arith.mulf %192, %192 : vector<400x128xf32>
    %cst_169 = arith.constant dense<0.000000e+00> : vector<128xf32>
    %196 = vector.multi_reduction <add>, %195, %cst_169 [0] : vector<400x128xf32> to vector<128xf32>
    %197 = vector.shape_cast %196 : vector<128xf32> to vector<1x128xf32>
    %cst_170 = arith.constant 2.000000e-02 : f32
    %198 = vector.broadcast %cst_170 : f32 to vector<1x128xf32>
    %199 = arith.mulf %194, %198 : vector<1x128xf32>
    %cst_171 = arith.constant 2.000000e-02 : f32
    %200 = vector.broadcast %cst_171 : f32 to vector<1x128xf32>
    %201 = arith.mulf %197, %200 : vector<1x128xf32>
    %202 = arith.mulf %199, %199 : vector<1x128xf32>
    %203 = arith.subf %201, %202 : vector<1x128xf32>
    %cst_172 = arith.constant 0.000000e+00 : f32
    %204 = vector.broadcast %cst_172 : f32 to vector<1x128xf32>
    %205 = arith.maximumf %203, %204 : vector<1x128xf32>
    %c0_173 = arith.constant 0 : index
    %c0_174 = arith.constant 0 : index
    %206 = vector.load %arg5[%c0_173, %c0_174] : memref<1x128xf32, #tpu.memory_space<vmem>>, vector<1x128xf32>
    %cst_175 = arith.constant 9.99999974E-6 : f32
    %207 = vector.broadcast %cst_175 : f32 to vector<1x128xf32>
    %208 = arith.addf %205, %207 : vector<1x128xf32>
    %209 = math.rsqrt %208 : vector<1x128xf32>
    %210 = arith.mulf %206, %209 : vector<1x128xf32>
    %c0_176 = arith.constant 0 : index
    %c0_177 = arith.constant 0 : index
    %211 = vector.load %arg6[%c0_176, %c0_177] : memref<1x128xf32, #tpu.memory_space<vmem>>, vector<1x128xf32>
    %212 = arith.mulf %199, %210 : vector<1x128xf32>
    %213 = arith.subf %211, %212 : vector<1x128xf32>
    %214 = vector.broadcast %210 : vector<1x128xf32> to vector<400x128xf32>
    %215 = arith.mulf %192, %214 : vector<400x128xf32>
    %216 = vector.broadcast %213 : vector<1x128xf32> to vector<400x128xf32>
    %217 = arith.addf %215, %216 : vector<400x128xf32>
    %cst_178 = arith.constant 0.000000e+00 : f32
    %218 = vector.broadcast %cst_178 : f32 to vector<400x128xf32>
    %219 = arith.cmpf ogt, %217, %218 : vector<400x128xf32>
    %cst_179 = arith.constant 2.000000e-01 : f32
    %220 = vector.broadcast %cst_179 : f32 to vector<400x128xf32>
    %221 = arith.mulf %220, %217 : vector<400x128xf32>
    %222 = arith.select %219, %217, %221 : vector<400x128xi1>, vector<400x128xf32>
    %223 = vector.extract_strided_slice %222 {offsets = [0, 0], sizes = [16, 128], strides = [1, 1]} : vector<400x128xf32> to vector<16x128xf32>
    %224 = arith.truncf %223 : vector<16x128xf32> to vector<16x128xbf16>
    %c0_180 = arith.constant 0 : index
    %c0_181 = arith.constant 0 : index
    %225 = vector.load %arg15[%c0_180, %c0_181] : memref<16x3328xbf16, #tpu.memory_space<vmem>>, vector<16x128xbf16>
    tpu.vector_store %arg15[%c0_180, %c0_181], %224 {strides = array<i32>} : memref<16x3328xbf16, #tpu.memory_space<vmem>>, vector<16x128xbf16>,
    %226 = vector.extract_strided_slice %222 {offsets = [16, 0], sizes = [16, 128], strides = [1, 1]} : vector<400x128xf32> to vector<16x128xf32>
    %227 = arith.truncf %226 : vector<16x128xf32> to vector<16x128xbf16>
    %c0_182 = arith.constant 0 : index
    %c128_183 = arith.constant 128 : index
    %228 = vector.load %arg15[%c0_182, %c128_183] : memref<16x3328xbf16, #tpu.memory_space<vmem>>, vector<16x128xbf16>
    tpu.vector_store %arg15[%c0_182, %c128_183], %227 {strides = array<i32>} : memref<16x3328xbf16, #tpu.memory_space<vmem>>, vector<16x128xbf16>,
    %229 = vector.extract_strided_slice %222 {offsets = [32, 0], sizes = [16, 128], strides = [1, 1]} : vector<400x128xf32> to vector<16x128xf32>
    %230 = arith.truncf %229 : vector<16x128xf32> to vector<16x128xbf16>
    %c0_184 = arith.constant 0 : index
    %c256_185 = arith.constant 256 : index
    %231 = vector.load %arg15[%c0_184, %c256_185] : memref<16x3328xbf16, #tpu.memory_space<vmem>>, vector<16x128xbf16>
    tpu.vector_store %arg15[%c0_184, %c256_185], %230 {strides = array<i32>} : memref<16x3328xbf16, #tpu.memory_space<vmem>>, vector<16x128xbf16>,
    %232 = vector.extract_strided_slice %222 {offsets = [48, 0], sizes = [16, 128], strides = [1, 1]} : vector<400x128xf32> to vector<16x128xf32>
    %233 = arith.truncf %232 : vector<16x128xf32> to vector<16x128xbf16>
    %c0_186 = arith.constant 0 : index
    %c384_187 = arith.constant 384 : index
    %234 = vector.load %arg15[%c0_186, %c384_187] : memref<16x3328xbf16, #tpu.memory_space<vmem>>, vector<16x128xbf16>
    tpu.vector_store %arg15[%c0_186, %c384_187], %233 {strides = array<i32>} : memref<16x3328xbf16, #tpu.memory_space<vmem>>, vector<16x128xbf16>,
    %235 = vector.extract_strided_slice %222 {offsets = [64, 0], sizes = [16, 128], strides = [1, 1]} : vector<400x128xf32> to vector<16x128xf32>
    %236 = arith.truncf %235 : vector<16x128xf32> to vector<16x128xbf16>
    %c0_188 = arith.constant 0 : index
    %c512_189 = arith.constant 512 : index
    %237 = vector.load %arg15[%c0_188, %c512_189] : memref<16x3328xbf16, #tpu.memory_space<vmem>>, vector<16x128xbf16>
    tpu.vector_store %arg15[%c0_188, %c512_189], %236 {strides = array<i32>} : memref<16x3328xbf16, #tpu.memory_space<vmem>>, vector<16x128xbf16>,
    %238 = vector.extract_strided_slice %222 {offsets = [80, 0], sizes = [16, 128], strides = [1, 1]} : vector<400x128xf32> to vector<16x128xf32>
    %239 = arith.truncf %238 : vector<16x128xf32> to vector<16x128xbf16>
    %c0_190 = arith.constant 0 : index
    %c640_191 = arith.constant 640 : index
    %240 = vector.load %arg15[%c0_190, %c640_191] : memref<16x3328xbf16, #tpu.memory_space<vmem>>, vector<16x128xbf16>
    tpu.vector_store %arg15[%c0_190, %c640_191], %239 {strides = array<i32>} : memref<16x3328xbf16, #tpu.memory_space<vmem>>, vector<16x128xbf16>,
    %241 = vector.extract_strided_slice %222 {offsets = [96, 0], sizes = [16, 128], strides = [1, 1]} : vector<400x128xf32> to vector<16x128xf32>
    %242 = arith.truncf %241 : vector<16x128xf32> to vector<16x128xbf16>
    %c0_192 = arith.constant 0 : index
    %c768_193 = arith.constant 768 : index
    %243 = vector.load %arg15[%c0_192, %c768_193] : memref<16x3328xbf16, #tpu.memory_space<vmem>>, vector<16x128xbf16>
    tpu.vector_store %arg15[%c0_192, %c768_193], %242 {strides = array<i32>} : memref<16x3328xbf16, #tpu.memory_space<vmem>>, vector<16x128xbf16>,
    %244 = vector.extract_strided_slice %222 {offsets = [112, 0], sizes = [16, 128], strides = [1, 1]} : vector<400x128xf32> to vector<16x128xf32>
    %245 = arith.truncf %244 : vector<16x128xf32> to vector<16x128xbf16>
    %c0_194 = arith.constant 0 : index
    %c896_195 = arith.constant 896 : index
    %246 = vector.load %arg15[%c0_194, %c896_195] : memref<16x3328xbf16, #tpu.memory_space<vmem>>, vector<16x128xbf16>
    tpu.vector_store %arg15[%c0_194, %c896_195], %245 {strides = array<i32>} : memref<16x3328xbf16, #tpu.memory_space<vmem>>, vector<16x128xbf16>,
    %247 = vector.extract_strided_slice %222 {offsets = [128, 0], sizes = [16, 128], strides = [1, 1]} : vector<400x128xf32> to vector<16x128xf32>
    %248 = arith.truncf %247 : vector<16x128xf32> to vector<16x128xbf16>
    %c0_196 = arith.constant 0 : index
    %c1024 = arith.constant 1024 : index
    %249 = vector.load %arg15[%c0_196, %c1024] : memref<16x3328xbf16, #tpu.memory_space<vmem>>, vector<16x128xbf16>
    tpu.vector_store %arg15[%c0_196, %c1024], %248 {strides = array<i32>} : memref<16x3328xbf16, #tpu.memory_space<vmem>>, vector<16x128xbf16>,
    %250 = vector.extract_strided_slice %222 {offsets = [144, 0], sizes = [16, 128], strides = [1, 1]} : vector<400x128xf32> to vector<16x128xf32>
    %251 = arith.truncf %250 : vector<16x128xf32> to vector<16x128xbf16>
    %c0_197 = arith.constant 0 : index
    %c1152 = arith.constant 1152 : index
    %252 = vector.load %arg15[%c0_197, %c1152] : memref<16x3328xbf16, #tpu.memory_space<vmem>>, vector<16x128xbf16>
    tpu.vector_store %arg15[%c0_197, %c1152], %251 {strides = array<i32>} : memref<16x3328xbf16, #tpu.memory_space<vmem>>, vector<16x128xbf16>,
    %253 = vector.extract_strided_slice %222 {offsets = [160, 0], sizes = [16, 128], strides = [1, 1]} : vector<400x128xf32> to vector<16x128xf32>
    %254 = arith.truncf %253 : vector<16x128xf32> to vector<16x128xbf16>
    %c0_198 = arith.constant 0 : index
    %c1280 = arith.constant 1280 : index
    %255 = vector.load %arg15[%c0_198, %c1280] : memref<16x3328xbf16, #tpu.memory_space<vmem>>, vector<16x128xbf16>
    tpu.vector_store %arg15[%c0_198, %c1280], %254 {strides = array<i32>} : memref<16x3328xbf16, #tpu.memory_space<vmem>>, vector<16x128xbf16>,
    %256 = vector.extract_strided_slice %222 {offsets = [176, 0], sizes = [16, 128], strides = [1, 1]} : vector<400x128xf32> to vector<16x128xf32>
    %257 = arith.truncf %256 : vector<16x128xf32> to vector<16x128xbf16>
    %c0_199 = arith.constant 0 : index
    %c1408 = arith.constant 1408 : index
    %258 = vector.load %arg15[%c0_199, %c1408] : memref<16x3328xbf16, #tpu.memory_space<vmem>>, vector<16x128xbf16>
    tpu.vector_store %arg15[%c0_199, %c1408], %257 {strides = array<i32>} : memref<16x3328xbf16, #tpu.memory_space<vmem>>, vector<16x128xbf16>,
    %259 = vector.extract_strided_slice %222 {offsets = [192, 0], sizes = [16, 128], strides = [1, 1]} : vector<400x128xf32> to vector<16x128xf32>
    %260 = arith.truncf %259 : vector<16x128xf32> to vector<16x128xbf16>
    %c0_200 = arith.constant 0 : index
    %c1536 = arith.constant 1536 : index
    %261 = vector.load %arg15[%c0_200, %c1536] : memref<16x3328xbf16, #tpu.memory_space<vmem>>, vector<16x128xbf16>
    tpu.vector_store %arg15[%c0_200, %c1536], %260 {strides = array<i32>} : memref<16x3328xbf16, #tpu.memory_space<vmem>>, vector<16x128xbf16>,
    %262 = vector.extract_strided_slice %222 {offsets = [208, 0], sizes = [16, 128], strides = [1, 1]} : vector<400x128xf32> to vector<16x128xf32>
    %263 = arith.truncf %262 : vector<16x128xf32> to vector<16x128xbf16>
    %c0_201 = arith.constant 0 : index
    %c1664 = arith.constant 1664 : index
    %264 = vector.load %arg15[%c0_201, %c1664] : memref<16x3328xbf16, #tpu.memory_space<vmem>>, vector<16x128xbf16>
    tpu.vector_store %arg15[%c0_201, %c1664], %263 {strides = array<i32>} : memref<16x3328xbf16, #tpu.memory_space<vmem>>, vector<16x128xbf16>,
    %265 = vector.extract_strided_slice %222 {offsets = [224, 0], sizes = [16, 128], strides = [1, 1]} : vector<400x128xf32> to vector<16x128xf32>
    %266 = arith.truncf %265 : vector<16x128xf32> to vector<16x128xbf16>
    %c0_202 = arith.constant 0 : index
    %c1792 = arith.constant 1792 : index
    %267 = vector.load %arg15[%c0_202, %c1792] : memref<16x3328xbf16, #tpu.memory_space<vmem>>, vector<16x128xbf16>
    tpu.vector_store %arg15[%c0_202, %c1792], %266 {strides = array<i32>} : memref<16x3328xbf16, #tpu.memory_space<vmem>>, vector<16x128xbf16>,
    %268 = vector.extract_strided_slice %222 {offsets = [240, 0], sizes = [16, 128], strides = [1, 1]} : vector<400x128xf32> to vector<16x128xf32>
    %269 = arith.truncf %268 : vector<16x128xf32> to vector<16x128xbf16>
    %c0_203 = arith.constant 0 : index
    %c1920 = arith.constant 1920 : index
    %270 = vector.load %arg15[%c0_203, %c1920] : memref<16x3328xbf16, #tpu.memory_space<vmem>>, vector<16x128xbf16>
    tpu.vector_store %arg15[%c0_203, %c1920], %269 {strides = array<i32>} : memref<16x3328xbf16, #tpu.memory_space<vmem>>, vector<16x128xbf16>,
    %271 = vector.extract_strided_slice %222 {offsets = [256, 0], sizes = [16, 128], strides = [1, 1]} : vector<400x128xf32> to vector<16x128xf32>
    %272 = arith.truncf %271 : vector<16x128xf32> to vector<16x128xbf16>
    %c0_204 = arith.constant 0 : index
    %c2048 = arith.constant 2048 : index
    %273 = vector.load %arg15[%c0_204, %c2048] : memref<16x3328xbf16, #tpu.memory_space<vmem>>, vector<16x128xbf16>
    tpu.vector_store %arg15[%c0_204, %c2048], %272 {strides = array<i32>} : memref<16x3328xbf16, #tpu.memory_space<vmem>>, vector<16x128xbf16>,
    %274 = vector.extract_strided_slice %222 {offsets = [272, 0], sizes = [16, 128], strides = [1, 1]} : vector<400x128xf32> to vector<16x128xf32>
    %275 = arith.truncf %274 : vector<16x128xf32> to vector<16x128xbf16>
    %c0_205 = arith.constant 0 : index
    %c2176 = arith.constant 2176 : index
    %276 = vector.load %arg15[%c0_205, %c2176] : memref<16x3328xbf16, #tpu.memory_space<vmem>>, vector<16x128xbf16>
    tpu.vector_store %arg15[%c0_205, %c2176], %275 {strides = array<i32>} : memref<16x3328xbf16, #tpu.memory_space<vmem>>, vector<16x128xbf16>,
    %277 = vector.extract_strided_slice %222 {offsets = [288, 0], sizes = [16, 128], strides = [1, 1]} : vector<400x128xf32> to vector<16x128xf32>
    %278 = arith.truncf %277 : vector<16x128xf32> to vector<16x128xbf16>
    %c0_206 = arith.constant 0 : index
    %c2304 = arith.constant 2304 : index
    %279 = vector.load %arg15[%c0_206, %c2304] : memref<16x3328xbf16, #tpu.memory_space<vmem>>, vector<16x128xbf16>
    tpu.vector_store %arg15[%c0_206, %c2304], %278 {strides = array<i32>} : memref<16x3328xbf16, #tpu.memory_space<vmem>>, vector<16x128xbf16>,
    %280 = vector.extract_strided_slice %222 {offsets = [304, 0], sizes = [16, 128], strides = [1, 1]} : vector<400x128xf32> to vector<16x128xf32>
    %281 = arith.truncf %280 : vector<16x128xf32> to vector<16x128xbf16>
    %c0_207 = arith.constant 0 : index
    %c2432 = arith.constant 2432 : index
    %282 = vector.load %arg15[%c0_207, %c2432] : memref<16x3328xbf16, #tpu.memory_space<vmem>>, vector<16x128xbf16>
    tpu.vector_store %arg15[%c0_207, %c2432], %281 {strides = array<i32>} : memref<16x3328xbf16, #tpu.memory_space<vmem>>, vector<16x128xbf16>,
    %283 = vector.extract_strided_slice %222 {offsets = [320, 0], sizes = [16, 128], strides = [1, 1]} : vector<400x128xf32> to vector<16x128xf32>
    %284 = arith.truncf %283 : vector<16x128xf32> to vector<16x128xbf16>
    %c0_208 = arith.constant 0 : index
    %c2560 = arith.constant 2560 : index
    %285 = vector.load %arg15[%c0_208, %c2560] : memref<16x3328xbf16, #tpu.memory_space<vmem>>, vector<16x128xbf16>
    tpu.vector_store %arg15[%c0_208, %c2560], %284 {strides = array<i32>} : memref<16x3328xbf16, #tpu.memory_space<vmem>>, vector<16x128xbf16>,
    %286 = vector.extract_strided_slice %222 {offsets = [336, 0], sizes = [16, 128], strides = [1, 1]} : vector<400x128xf32> to vector<16x128xf32>
    %287 = arith.truncf %286 : vector<16x128xf32> to vector<16x128xbf16>
    %c0_209 = arith.constant 0 : index
    %c2688 = arith.constant 2688 : index
    %288 = vector.load %arg15[%c0_209, %c2688] : memref<16x3328xbf16, #tpu.memory_space<vmem>>, vector<16x128xbf16>
    tpu.vector_store %arg15[%c0_209, %c2688], %287 {strides = array<i32>} : memref<16x3328xbf16, #tpu.memory_space<vmem>>, vector<16x128xbf16>,
    %289 = vector.extract_strided_slice %222 {offsets = [352, 0], sizes = [16, 128], strides = [1, 1]} : vector<400x128xf32> to vector<16x128xf32>
    %290 = arith.truncf %289 : vector<16x128xf32> to vector<16x128xbf16>
    %c0_210 = arith.constant 0 : index
    %c2816 = arith.constant 2816 : index
    %291 = vector.load %arg15[%c0_210, %c2816] : memref<16x3328xbf16, #tpu.memory_space<vmem>>, vector<16x128xbf16>
    tpu.vector_store %arg15[%c0_210, %c2816], %290 {strides = array<i32>} : memref<16x3328xbf16, #tpu.memory_space<vmem>>, vector<16x128xbf16>,
    %292 = vector.extract_strided_slice %222 {offsets = [368, 0], sizes = [16, 128], strides = [1, 1]} : vector<400x128xf32> to vector<16x128xf32>
    %293 = arith.truncf %292 : vector<16x128xf32> to vector<16x128xbf16>
    %c0_211 = arith.constant 0 : index
    %c2944 = arith.constant 2944 : index
    %294 = vector.load %arg15[%c0_211, %c2944] : memref<16x3328xbf16, #tpu.memory_space<vmem>>, vector<16x128xbf16>
    tpu.vector_store %arg15[%c0_211, %c2944], %293 {strides = array<i32>} : memref<16x3328xbf16, #tpu.memory_space<vmem>>, vector<16x128xbf16>,
    %295 = vector.extract_strided_slice %222 {offsets = [384, 0], sizes = [16, 128], strides = [1, 1]} : vector<400x128xf32> to vector<16x128xf32>
    %296 = arith.truncf %295 : vector<16x128xf32> to vector<16x128xbf16>
    %c0_212 = arith.constant 0 : index
    %c3072 = arith.constant 3072 : index
    %297 = vector.load %arg15[%c0_212, %c3072] : memref<16x3328xbf16, #tpu.memory_space<vmem>>, vector<16x128xbf16>
    tpu.vector_store %arg15[%c0_212, %c3072], %296 {strides = array<i32>} : memref<16x3328xbf16, #tpu.memory_space<vmem>>, vector<16x128xbf16>,
    %c0_213 = arith.constant 0 : index
    %c0_214 = arith.constant 0 : index
    %298 = vector.load %arg9[%c0_213, %c0_214] : memref<16x128xbf16, #tpu.memory_space<vmem>>, vector<16x128xbf16>
    %c0_215 = arith.constant 0 : index
    %c3200 = arith.constant 3200 : index
    %299 = vector.load %arg15[%c0_215, %c3200] : memref<16x3328xbf16, #tpu.memory_space<vmem>>, vector<16x128xbf16>
    tpu.vector_store %arg15[%c0_215, %c3200], %298 {strides = array<i32>} : memref<16x3328xbf16, #tpu.memory_space<vmem>>, vector<16x128xbf16>,
    %c0_216 = arith.constant 0 : index
    %c0_217 = arith.constant 0 : index
    %300 = vector.load %arg15[%c0_216, %c0_217] : memref<16x3328xbf16, #tpu.memory_space<vmem>>, vector<16x3328xbf16>
    %c0_218 = arith.constant 0 : index
    %c0_219 = arith.constant 0 : index
    %301 = vector.load %arg7[%c0_218, %c0_219] : memref<3328x64xbf16, #tpu.memory_space<vmem>>, vector<3328x64xbf16>
    %cst_220 = arith.constant dense<0.000000e+00> : vector<16x64xf32>
    %302 = tpu.matmul %300, %301, %cst_220 {dimension_numbers = #tpu.dot_dimension_numbers<[1], [0], [0], [1], [0, 0, 1, 1], [], []>} : vector<16x3328xbf16>, vector<3328x64xbf16>, vector<16x64xf32> -> vector<16x64xf32>
    %c0_221 = arith.constant 0 : index
    %c0_222 = arith.constant 0 : index
    %303 = vector.load %arg8[%c0_221, %c0_222] : memref<1x64xf32, #tpu.memory_space<vmem>>, vector<1x64xf32>
    %304 = vector.broadcast %303 : vector<1x64xf32> to vector<16x64xf32>
    %305 = arith.addf %302, %304 : vector<16x64xf32>
    %cst_223 = arith.constant 0.000000e+00 : f32
    %306 = vector.broadcast %cst_223 : f32 to vector<16x64xf32>
    %307 = arith.cmpf ogt, %305, %306 : vector<16x64xf32>
    %cst_224 = arith.constant 2.000000e-01 : f32
    %308 = vector.broadcast %cst_224 : f32 to vector<16x64xf32>
    %309 = arith.mulf %308, %305 : vector<16x64xf32>
    %310 = arith.select %307, %305, %309 : vector<16x64xi1>, vector<16x64xf32>
    %311 = arith.truncf %310 : vector<16x64xf32> to vector<16x64xbf16>
    %c0_225 = arith.constant 0 : index
    %c0_226 = arith.constant 0 : index
    %312 = vector.load %arg10[%c0_225, %c0_226] : memref<64x128xbf16, #tpu.memory_space<vmem>>, vector<64x128xbf16>
    %cst_227 = arith.constant dense<0.000000e+00> : vector<16x128xf32>
    %313 = tpu.matmul %311, %312, %cst_227 {dimension_numbers = #tpu.dot_dimension_numbers<[1], [0], [0], [1], [0, 0, 1, 1], [], []>} : vector<16x64xbf16>, vector<64x128xbf16>, vector<16x128xf32> -> vector<16x128xf32>
    %c0_228 = arith.constant 0 : index
    %c0_229 = arith.constant 0 : index
    %314 = vector.load %arg11[%c0_228, %c0_229] : memref<1x128xf32, #tpu.memory_space<vmem>>, vector<1x128xf32>
    %315 = vector.broadcast %314 : vector<1x128xf32> to vector<16x128xf32>
    %316 = arith.addf %313, %315 : vector<16x128xf32>
    %c0_230 = arith.constant 0 : index
    %c0_231 = arith.constant 0 : index
    %317 = vector.load %arg12[%c0_230, %c0_231] : memref<16x128xf32, #tpu.memory_space<vmem>>, vector<16x128xf32>
    tpu.vector_store %arg12[%c0_230, %c0_231], %316 {strides = array<i32>} : memref<16x128xf32, #tpu.memory_space<vmem>>, vector<16x128xf32>,
    return
  }
}

</mosaic_0001>

<llo_original>
// kernel: discriminator_forward.1
$region0: #{discriminator_forward.1}
  #allocation0 [shape = 'u32[]', space=smem, size = 0x4, offset = 0x4, fixed_abs, tag = 'smem constant byte address 0x4 - core index']
  #allocation1 [shape = 'u32[72,128]{1,0:T(1,128)}', space=vmem, size = 0x9000, scoped, tag = 'internal scratch']
  #allocation2 [shape = 'bf16[208,896]{1,0:T(8,128)(2,1)}', space=vmem, size = 0x5b000, scoped, tag = 'scratch operand']
  #allocation3 [shape = 'bf16[400,1024]{1,0:T(8,128)(2,1)}', space=vmem, size = 0xc8000, scoped, tag = 'scratch operand']
  #allocation4 [shape = 'bf16[16,3328]{1,0:T(8,128)(2,1)}', space=vmem, size = 0x1a000, scoped, tag = 'scratch operand']
  %s0 = inlined_call_operand.vmem [shape: bf16[208,256], index: 0, kind: input, shape index: {}]
  %s1 = inlined_call_operand.vmem [shape: bf16[256,896], index: 1, kind: input, shape index: {}]
  %s2 = inlined_call_operand.vmem [shape: f32[1,64], index: 2, kind: input, shape index: {}]
  %s3 = inlined_call_operand.vmem [shape: f32[1,64], index: 3, kind: input, shape index: {}]
  %s4 = inlined_call_operand.vmem [shape: bf16[1024,128], index: 4, kind: input, shape index: {}]
  %s5 = inlined_call_operand.vmem [shape: f32[1,128], index: 5, kind: input, shape index: {}]
  %s6 = inlined_call_operand.vmem [shape: f32[1,128], index: 6, kind: input, shape index: {}]
  %s7 = inlined_call_operand.vmem [shape: bf16[3328,64], index: 7, kind: input, shape index: {}]
  %s8 = inlined_call_operand.vmem [shape: f32[1,64], index: 8, kind: input, shape index: {}]
  %s9 = inlined_call_operand.vmem [shape: bf16[16,128], index: 9, kind: input, shape index: {}]
  %s10 = inlined_call_operand.vmem [shape: bf16[64,128], index: 10, kind: input, shape index: {}]
  %s11 = inlined_call_operand.vmem [shape: f32[1,128], index: 11, kind: input, shape index: {}]
  %s12 = inlined_call_operand.vmem [shape: f32[16,128], index: 12, kind: output, shape index: {}]
  %s13 = sld [smem:[#allocation0]]
  $region58: #{discriminator_forward.1} parent=0
    _
  %s15 = ssub.s32 1, %s13
  %s16 = scalar_select 0, %s15, %s13
  // Predicated region
  $region2: #{discriminator_forward.1} parent=0 // pred_check
    _
  $region3: #{discriminator_forward.1} parent=0 // pred_check_branch
    %18 = sbr.rel (0) target = $region5
  $region4: #{discriminator_forward.1} parent=0 // pred_region
    _
  $region5: #{discriminator_forward.1} parent=0 // pred_fallthru
    _
  // Predicated region
  $region6: #{discriminator_forward.1} parent=0 // pred_check
    _
  $region7: #{discriminator_forward.1} parent=0 // pred_check_branch
    %20 = sbr.rel (0) target = $region9
  $region8: #{discriminator_forward.1} parent=0 // pred_region
    _
  $region9: #{discriminator_forward.1} parent=0 // pred_fallthru
    _
  // Predicated region
  $region10: #{discriminator_forward.1} parent=0 // pred_check
    _
  $region11: #{discriminator_forward.1} parent=0 // pred_check_branch
    %22 = sbr.rel (0) target = $region13
  $region12: #{discriminator_forward.1} parent=0 // pred_region
    _
  $region13: #{discriminator_forward.1} parent=0 // pred_fallthru
    _
  // Predicated region
  $region14: #{discriminator_forward.1} parent=0 // pred_check
    _
  $region15: #{discriminator_forward.1} parent=0 // pred_check_branch
    %24 = sbr.rel (0) target = $region17
  $region16: #{discriminator_forward.1} parent=0 // pred_region
    _
  $region17: #{discriminator_forward.1} parent=0 // pred_fallthru
    _
  // Predicated region
  $region18: #{discriminator_forward.1} parent=0 // pred_check
    _
  $region19: #{discriminator_forward.1} parent=0 // pred_check_branch
    %26 = sbr.rel (0) target = $region21
  $region20: #{discriminator_forward.1} parent=0 // pred_region
    _
  $region21: #{discriminator_forward.1} parent=0 // pred_fallthru
    _
  // Predicated region
  $region22: #{discriminator_forward.1} parent=0 // pred_check
    _
  $region23: #{discriminator_forward.1} parent=0 // pred_check_branch
    %28 = sbr.rel (0) target = $region25
  $region24: #{discriminator_forward.1} parent=0 // pred_region
    _
  $region25: #{discriminator_forward.1} parent=0 // pred_fallthru
    _
  // Predicated region
  $region26: #{discriminator_forward.1} parent=0 // pred_check
    _
  $region27: #{discriminator_forward.1} parent=0 // pred_check_branch
    %30 = sbr.rel (0) target = $region29
  $region28: #{discriminator_forward.1} parent=0 // pred_region
    _
  $region29: #{discriminator_forward.1} parent=0 // pred_fallthru
    _
  // Predicated region
  $region30: #{discriminator_forward.1} parent=0 // pred_check
    _
  $region31: #{discriminator_forward.1} parent=0 // pred_check_branch
    %32 = sbr.rel (0) target = $region33
  $region32: #{discriminator_forward.1} parent=0 // pred_region
    _
  $region33: #{discriminator_forward.1} parent=0 // pred_fallthru
    _
  // Predicated region
  $region34: #{discriminator_forward.1} parent=0 // pred_check
    _
  $region35: #{discriminator_forward.1} parent=0 // pred_check_branch
    %34 = sbr.rel (0) target = $region37
  $region36: #{discriminator_forward.1} parent=0 // pred_region
    _
  $region37: #{discriminator_forward.1} parent=0 // pred_fallthru
    _
  // Predicated region
  $region38: #{discriminator_forward.1} parent=0 // pred_check
    _
  $region39: #{discriminator_forward.1} parent=0 // pred_check_branch
    %36 = sbr.rel (0) target = $region41
  $region40: #{discriminator_forward.1} parent=0 // pred_region
    _
  $region41: #{discriminator_forward.1} parent=0 // pred_fallthru
    _
  // Predicated region
  $region42: #{discriminator_forward.1} parent=0 // pred_check
    _
  $region43: #{discriminator_forward.1} parent=0 // pred_check_branch
    %38 = sbr.rel (0) target = $region45
  $region44: #{discriminator_forward.1} parent=0 // pred_region
    _
  $region45: #{discriminator_forward.1} parent=0 // pred_fallthru
    _
  // Predicated region
  $region46: #{discriminator_forward.1} parent=0 // pred_check
    _
  $region47: #{discriminator_forward.1} parent=0 // pred_check_branch
    %40 = sbr.rel (0) target = $region49
  $region48: #{discriminator_forward.1} parent=0 // pred_region
    _
  $region49: #{discriminator_forward.1} parent=0 // pred_fallthru
    _
  %v42 = vld [vmem:[%s0] sm:$0xff]
  %v43 = vld [vmem:[%s0 + $0x8] sm:$0xff]
  %v44 = vld [vmem:[%s0 + $0x10] sm:$0xff]
  %v45 = vld [vmem:[%s0 + $0x18] sm:$0xff]
  %v46 = vld [vmem:[%s0 + $0x20] sm:$0xff]
  %v47 = vld [vmem:[%s0 + $0x28] sm:$0xff]
  %v48 = vld [vmem:[%s0 + $0x30] sm:$0xff]
  %v49 = vld [vmem:[%s0 + $0x38] sm:$0xff]
  %v50 = vld [vmem:[%s0 + $0x40] sm:$0xff]
  %v51 = vld [vmem:[%s0 + $0x48] sm:$0xff]
  %v52 = vld [vmem:[%s0 + $0x50] sm:$0xff]
  %v53 = vld [vmem:[%s0 + $0x58] sm:$0xff]
  %v54 = vld [vmem:[%s0 + $0x60] sm:$0xff]
  %v55 = vld [vmem:[%s0 + $0x68] sm:$0xff]
  %v56 = vld [vmem:[%s0 + $0x70] sm:$0xff]
  %v57 = vld [vmem:[%s0 + $0x78] sm:$0xff]
  %v58 = vld [vmem:[%s0 + $0x80] sm:$0xff]
  %v59 = vld [vmem:[%s0 + $0x88] sm:$0xff]
  %v60 = vld [vmem:[%s0 + $0x90] sm:$0xff]
  %v61 = vld [vmem:[%s0 + $0x98] sm:$0xff]
  %v62 = vld [vmem:[%s0 + $0xa0] sm:$0xff]
  %v63 = vld [vmem:[%s0 + $0xa8] sm:$0xff]
  %v64 = vld [vmem:[%s0 + $0xb0] sm:$0xff]
  %v65 = vld [vmem:[%s0 + $0xb8] sm:$0xff]
  %v66 = vld [vmem:[%s0 + $0xc0] sm:$0xff]
  %v67 = vld [vmem:[%s0 + $0xc8] sm:$0xff]
  %v68 = vld [vmem:[%s1] sm:$0xff]
  %v69 = vld [vmem:[%s1 + $0x8] sm:$0xff]
  %v70 = vld [vmem:[%s1 + $0x10] sm:$0xff]
  %v71 = vld [vmem:[%s1 + $0x18] sm:$0xf]
  %v72 = vld [vmem:[%s1 + $0x1c] sm:$0xff]
  %v73 = vld [vmem:[%s1 + $0x24] sm:$0xff]
  %v74 = vld [vmem:[%s1 + $0x2c] sm:$0xff]
  %v75 = vld [vmem:[%s1 + $0x34] sm:$0xf]
  %v76 = vld [vmem:[%s1 + $0x38] sm:$0xff]
  %v77 = vld [vmem:[%s1 + $0x40] sm:$0xff]
  %v78 = vld [vmem:[%s1 + $0x48] sm:$0xff]
  %v79 = vld [vmem:[%s1 + $0x50] sm:$0xf]
  %v80 = vld [vmem:[%s1 + $0x54] sm:$0xff]
  %v81 = vld [vmem:[%s1 + $0x5c] sm:$0xff]
  %v82 = vld [vmem:[%s1 + $0x64] sm:$0xff]
  %v83 = vld [vmem:[%s1 + $0x6c] sm:$0xf]
  %v84 = vld [vmem:[%s1 + $0x70] sm:$0xff]
  %v85 = vld [vmem:[%s1 + $0x78] sm:$0xff]
  %v86 = vld [vmem:[%s1 + $0x80] sm:$0xff]
  %v87 = vld [vmem:[%s1 + $0x88] sm:$0xf]
  %v88 = vld [vmem:[%s1 + $0x8c] sm:$0xff]
  %v89 = vld [vmem:[%s1 + $0x94] sm:$0xff]
  %v90 = vld [vmem:[%s1 + $0x9c] sm:$0xff]
  %v91 = vld [vmem:[%s1 + $0xa4] sm:$0xf]
  %v92 = vld [vmem:[%s1 + $0xa8] sm:$0xff]
  %v93 = vld [vmem:[%s1 + $0xb0] sm:$0xff]
  %v94 = vld [vmem:[%s1 + $0xb8] sm:$0xff]
  %v95 = vld [vmem:[%s1 + $0xc0] sm:$0xf]
  %v96 = vld [vmem:[%s1 + $0xc4] sm:$0xff]
  %v97 = vld [vmem:[%s1 + $0xcc] sm:$0xff]
  %v98 = vld [vmem:[%s1 + $0xd4] sm:$0xff]
  %v99 = vld [vmem:[%s1 + $0xdc] sm:$0xf]
  %v100 = vld [vmem:[%s1 + $0xe0] sm:$0xff]
  %v101 = vld [vmem:[%s1 + $0xe8] sm:$0xff]
  %v102 = vld [vmem:[%s1 + $0xf0] sm:$0xff]
  %v103 = vld [vmem:[%s1 + $0xf8] sm:$0xf]
  %v104 = vld [vmem:[%s1 + $0xfc] sm:$0xff]
  %v105 = vld [vmem:[%s1 + $0x104] sm:$0xff]
  %v106 = vld [vmem:[%s1 + $0x10c] sm:$0xff]
  %v107 = vld [vmem:[%s1 + $0x114] sm:$0xf]
  %v108 = vld [vmem:[%s1 + $0x118] sm:$0xff]
  %v109 = vld [vmem:[%s1 + $0x120] sm:$0xff]
  %v110 = vld [vmem:[%s1 + $0x128] sm:$0xff]
  %v111 = vld [vmem:[%s1 + $0x130] sm:$0xf]
  %v112 = vld [vmem:[%s1 + $0x134] sm:$0xff]
  %v113 = vld [vmem:[%s1 + $0x13c] sm:$0xff]
  %v114 = vld [vmem:[%s1 + $0x144] sm:$0xff]
  %v115 = vld [vmem:[%s1 + $0x14c] sm:$0xf]
  %v116 = vld [vmem:[%s1 + $0x150] sm:$0xff]
  %v117 = vld [vmem:[%s1 + $0x158] sm:$0xff]
  %v118 = vld [vmem:[%s1 + $0x160] sm:$0xff]
  %v119 = vld [vmem:[%s1 + $0x168] sm:$0xf]
  %v120 = vld [vmem:[%s1 + $0x16c] sm:$0xff]
  %v121 = vld [vmem:[%s1 + $0x174] sm:$0xff]
  %v122 = vld [vmem:[%s1 + $0x17c] sm:$0xff]
  %v123 = vld [vmem:[%s1 + $0x184] sm:$0xf]
  %v124 = vld [vmem:[%s1 + $0x188] sm:$0xff]
  %v125 = vld [vmem:[%s1 + $0x190] sm:$0xff]
  %v126 = vld [vmem:[%s1 + $0x198] sm:$0xff]
  %v127 = vld [vmem:[%s1 + $0x1a0] sm:$0xf]
  %v128 = vld [vmem:[%s1 + $0x1a4] sm:$0xff]
  %v129 = vld [vmem:[%s1 + $0x1ac] sm:$0xff]
  %v130 = vld [vmem:[%s1 + $0x1b4] sm:$0xff]
  %v131 = vld [vmem:[%s1 + $0x1bc] sm:$0xf]
  %v132 = vld [vmem:[%s1 + $0x1c0] sm:$0xff]
  %v133 = vld [vmem:[%s1 + $0x1c8] sm:$0xff]
  %v134 = vld [vmem:[%s1 + $0x1d0] sm:$0xff]
  %v135 = vld [vmem:[%s1 + $0x1d8] sm:$0xf]
  %v136 = vld [vmem:[%s1 + $0x1dc] sm:$0xff]
  %v137 = vld [vmem:[%s1 + $0x1e4] sm:$0xff]
  %v138 = vld [vmem:[%s1 + $0x1ec] sm:$0xff]
  %v139 = vld [vmem:[%s1 + $0x1f4] sm:$0xf]
  %v140 = vld [vmem:[%s1 + $0x1f8] sm:$0xff]
  %v141 = vld [vmem:[%s1 + $0x200] sm:$0xff]
  %v142 = vld [vmem:[%s1 + $0x208] sm:$0xff]
  %v143 = vld [vmem:[%s1 + $0x210] sm:$0xf]
  %v144 = vld [vmem:[%s1 + $0x214] sm:$0xff]
  %v145 = vld [vmem:[%s1 + $0x21c] sm:$0xff]
  %v146 = vld [vmem:[%s1 + $0x224] sm:$0xff]
  %v147 = vld [vmem:[%s1 + $0x22c] sm:$0xf]
  %v148 = vld [vmem:[%s1 + $0x230] sm:$0xff]
  %v149 = vld [vmem:[%s1 + $0x238] sm:$0xff]
  %v150 = vld [vmem:[%s1 + $0x240] sm:$0xff]
  %v151 = vld [vmem:[%s1 + $0x248] sm:$0xf]
  %v152 = vld [vmem:[%s1 + $0x24c] sm:$0xff]
  %v153 = vld [vmem:[%s1 + $0x254] sm:$0xff]
  %v154 = vld [vmem:[%s1 + $0x25c] sm:$0xff]
  %v155 = vld [vmem:[%s1 + $0x264] sm:$0xf]
  %v156 = vld [vmem:[%s1 + $0x268] sm:$0xff]
  %v157 = vld [vmem:[%s1 + $0x270] sm:$0xff]
  %v158 = vld [vmem:[%s1 + $0x278] sm:$0xff]
  %v159 = vld [vmem:[%s1 + $0x280] sm:$0xf]
  %v160 = vld [vmem:[%s1 + $0x284] sm:$0xff]
  %v161 = vld [vmem:[%s1 + $0x28c] sm:$0xff]
  %v162 = vld [vmem:[%s1 + $0x294] sm:$0xff]
  %v163 = vld [vmem:[%s1 + $0x29c] sm:$0xf]
  %v164 = vld [vmem:[%s1 + $0x2a0] sm:$0xff]
  %v165 = vld [vmem:[%s1 + $0x2a8] sm:$0xff]
  %v166 = vld [vmem:[%s1 + $0x2b0] sm:$0xff]
  %v167 = vld [vmem:[%s1 + $0x2b8] sm:$0xf]
  %v168 = vld [vmem:[%s1 + $0x2bc] sm:$0xff]
  %v169 = vld [vmem:[%s1 + $0x2c4] sm:$0xff]
  %v170 = vld [vmem:[%s1 + $0x2cc] sm:$0xff]
  %v171 = vld [vmem:[%s1 + $0x2d4] sm:$0xf]
  %v172 = vld [vmem:[%s1 + $0x2d8] sm:$0xff]
  %v173 = vld [vmem:[%s1 + $0x2e0] sm:$0xff]
  %v174 = vld [vmem:[%s1 + $0x2e8] sm:$0xff]
  %v175 = vld [vmem:[%s1 + $0x2f0] sm:$0xf]
  %v176 = vld [vmem:[%s1 + $0x2f4] sm:$0xff]
  %v177 = vld [vmem:[%s1 + $0x2fc] sm:$0xff]
  %v178 = vld [vmem:[%s1 + $0x304] sm:$0xff]
  %v179 = vld [vmem:[%s1 + $0x30c] sm:$0xf]
  %v180 = vld [vmem:[%s1 + $0x310] sm:$0xff]
  %v181 = vld [vmem:[%s1 + $0x318] sm:$0xff]
  %v182 = vld [vmem:[%s1 + $0x320] sm:$0xff]
  %v183 = vld [vmem:[%s1 + $0x328] sm:$0xf]
  %v184 = vld [vmem:[%s1 + $0x32c] sm:$0xff]
  %v185 = vld [vmem:[%s1 + $0x334] sm:$0xff]
  %v186 = vld [vmem:[%s1 + $0x33c] sm:$0xff]
  %v187 = vld [vmem:[%s1 + $0x344] sm:$0xf]
  %v188 = vld [vmem:[%s1 + $0x348] sm:$0xff]
  %v189 = vld [vmem:[%s1 + $0x350] sm:$0xff]
  %v190 = vld [vmem:[%s1 + $0x358] sm:$0xff]
  %v191 = vld [vmem:[%s1 + $0x360] sm:$0xf]
  %v192 = vld [vmem:[%s1 + $0x364] sm:$0xff]
  %v193 = vld [vmem:[%s1 + $0x36c] sm:$0xff]
  %v194 = vld [vmem:[%s1 + $0x374] sm:$0xff]
  %v195 = vld [vmem:[%s1 + $0x37c] sm:$0xf]
  %v222 = vunpack.c.l.b16 %v42
  %v223 = vunpack.c.h.b16 %v42
  %v224 = vunpack.c.l.b16 %v43
  %v225 = vunpack.c.h.b16 %v43
  %v226 = vunpack.c.l.b16 %v44
  %v227 = vunpack.c.h.b16 %v44
  %v228 = vunpack.c.l.b16 %v45
  %v229 = vunpack.c.h.b16 %v45
  %v230 = vunpack.c.l.b16 %v46
  %v231 = vunpack.c.h.b16 %v46
  %v232 = vunpack.c.l.b16 %v47
  %v233 = vunpack.c.h.b16 %v47
  %v234 = vunpack.c.l.b16 %v48
  %v235 = vunpack.c.h.b16 %v48
  %v236 = vunpack.c.l.b16 %v49
  %v237 = vunpack.c.h.b16 %v49
  %v238 = vunpack.c.l.b16 %v50
  %v239 = vunpack.c.h.b16 %v50
  %v240 = vunpack.c.l.b16 %v51
  %v241 = vunpack.c.h.b16 %v51
  %v242 = vunpack.c.l.b16 %v52
  %v243 = vunpack.c.h.b16 %v52
  %v244 = vunpack.c.l.b16 %v53
  %v245 = vunpack.c.h.b16 %v53
  %v246 = vunpack.c.l.b16 %v54
  %v247 = vunpack.c.h.b16 %v54
  %v248 = vunpack.c.l.b16 %v55
  %v249 = vunpack.c.h.b16 %v55
  %v250 = vunpack.c.l.b16 %v56
  %v251 = vunpack.c.h.b16 %v56
  %v252 = vunpack.c.l.b16 %v57
  %v253 = vunpack.c.h.b16 %v57
  %v254 = vunpack.c.l.b16 %v58
  %v255 = vunpack.c.h.b16 %v58
  %v256 = vunpack.c.l.b16 %v59
  %v257 = vunpack.c.h.b16 %v59
  %v258 = vunpack.c.l.b16 %v60
  %v259 = vunpack.c.h.b16 %v60
  %v260 = vunpack.c.l.b16 %v61
  %v261 = vunpack.c.h.b16 %v61
  %v262 = vunpack.c.l.b16 %v62
  %v263 = vunpack.c.h.b16 %v62
  %v264 = vunpack.c.l.b16 %v63
  %v265 = vunpack.c.h.b16 %v63
  %v266 = vunpack.c.l.b16 %v64
  %v267 = vunpack.c.h.b16 %v64
  %v268 = vunpack.c.l.b16 %v65
  %v269 = vunpack.c.h.b16 %v65
  %v270 = vunpack.c.l.b16 %v66
  %v271 = vunpack.c.h.b16 %v66
  %v272 = vunpack.c.l.b16 %v67
  %v273 = vunpack.c.h.b16 %v67
  %v274 = vpack.c.b16 %v224, %v222
  %v275 = vpack.c.b16 %v225, %v223
  %v276 = vpack.c.b16 %v228, %v226
  %v277 = vpack.c.b16 %v229, %v227
  %v278 = vpack.c.b16 %v232, %v230
  %v279 = vpack.c.b16 %v233, %v231
  %v280 = vpack.c.b16 %v236, %v234
  %v281 = vpack.c.b16 %v237, %v235
  %v282 = vpack.c.b16 %v240, %v238
  %v283 = vpack.c.b16 %v241, %v239
  %v284 = vpack.c.b16 %v244, %v242
  %v285 = vpack.c.b16 %v245, %v243
  %v286 = vpack.c.b16 %v248, %v246
  %v287 = vpack.c.b16 %v249, %v247
  %v288 = vpack.c.b16 %v252, %v250
  %v289 = vpack.c.b16 %v253, %v251
  %v290 = vpack.c.b16 %v256, %v254
  %v291 = vpack.c.b16 %v257, %v255
  %v292 = vpack.c.b16 %v260, %v258
  %v293 = vpack.c.b16 %v261, %v259
  %v294 = vpack.c.b16 %v264, %v262
  %v295 = vpack.c.b16 %v265, %v263
  %v296 = vpack.c.b16 %v268, %v266
  %v297 = vpack.c.b16 %v269, %v267
  %v298 = vpack.c.b16 %v272, %v270
  %v299 = vpack.c.b16 %v273, %v271
  %v454 = vunpack.c.l.b16 %v68
  %v455 = vunpack.c.h.b16 %v68
  %v456 = vunpack.c.l.b16 %v69
  %v457 = vunpack.c.h.b16 %v69
  %v458 = vunpack.c.l.b16 %v70
  %v459 = vunpack.c.h.b16 %v70
  %v460 = vunpack.c.l.b16 %v71
  %v461 = vunpack.c.l.b16 %v72
  %v462 = vunpack.c.h.b16 %v72
  %v463 = vunpack.c.l.b16 %v73
  %v464 = vunpack.c.h.b16 %v73
  %v465 = vunpack.c.l.b16 %v74
  %v466 = vunpack.c.h.b16 %v74
  %v467 = vunpack.c.l.b16 %v75
  %v468 = vunpack.c.l.b16 %v76
  %v469 = vunpack.c.h.b16 %v76
  %v470 = vunpack.c.l.b16 %v77
  %v471 = vunpack.c.h.b16 %v77
  %v472 = vunpack.c.l.b16 %v78
  %v473 = vunpack.c.h.b16 %v78
  %v474 = vunpack.c.l.b16 %v79
  %v475 = vunpack.c.l.b16 %v80
  %v476 = vunpack.c.h.b16 %v80
  %v477 = vunpack.c.l.b16 %v81
  %v478 = vunpack.c.h.b16 %v81
  %v479 = vunpack.c.l.b16 %v82
  %v480 = vunpack.c.h.b16 %v82
  %v481 = vunpack.c.l.b16 %v83
  %v482 = vunpack.c.l.b16 %v84
  %v483 = vunpack.c.h.b16 %v84
  %v484 = vunpack.c.l.b16 %v85
  %v485 = vunpack.c.h.b16 %v85
  %v486 = vunpack.c.l.b16 %v86
  %v487 = vunpack.c.h.b16 %v86
  %v488 = vunpack.c.l.b16 %v87
  %v489 = vunpack.c.l.b16 %v88
  %v490 = vunpack.c.h.b16 %v88
  %v491 = vunpack.c.l.b16 %v89
  %v492 = vunpack.c.h.b16 %v89
  %v493 = vunpack.c.l.b16 %v90
  %v494 = vunpack.c.h.b16 %v90
  %v495 = vunpack.c.l.b16 %v91
  %v496 = vunpack.c.l.b16 %v92
  %v497 = vunpack.c.h.b16 %v92
  %v498 = vunpack.c.l.b16 %v93
  %v499 = vunpack.c.h.b16 %v93
  %v500 = vunpack.c.l.b16 %v94
  %v501 = vunpack.c.h.b16 %v94
  %v502 = vunpack.c.l.b16 %v95
  %v503 = vunpack.c.l.b16 %v96
  %v504 = vunpack.c.h.b16 %v96
  %v505 = vunpack.c.l.b16 %v97
  %v506 = vunpack.c.h.b16 %v97
  %v507 = vunpack.c.l.b16 %v98
  %v508 = vunpack.c.h.b16 %v98
  %v509 = vunpack.c.l.b16 %v99
  %v510 = vunpack.c.l.b16 %v100
  %v511 = vunpack.c.h.b16 %v100
  %v512 = vunpack.c.l.b16 %v101
  %v513 = vunpack.c.h.b16 %v101
  %v514 = vunpack.c.l.b16 %v102
  %v515 = vunpack.c.h.b16 %v102
  %v516 = vunpack.c.l.b16 %v103
  %v517 = vunpack.c.l.b16 %v104
  %v518 = vunpack.c.h.b16 %v104
  %v519 = vunpack.c.l.b16 %v105
  %v520 = vunpack.c.h.b16 %v105
  %v521 = vunpack.c.l.b16 %v106
  %v522 = vunpack.c.h.b16 %v106
  %v523 = vunpack.c.l.b16 %v107
  %v524 = vunpack.c.l.b16 %v108
  %v525 = vunpack.c.h.b16 %v108
  %v526 = vunpack.c.l.b16 %v109
  %v527 = vunpack.c.h.b16 %v109
  %v528 = vunpack.c.l.b16 %v110
  %v529 = vunpack.c.h.b16 %v110
  %v530 = vunpack.c.l.b16 %v111
  %v531 = vunpack.c.l.b16 %v112
  %v532 = vunpack.c.h.b16 %v112
  %v533 = vunpack.c.l.b16 %v113
  %v534 = vunpack.c.h.b16 %v113
  %v535 = vunpack.c.l.b16 %v114
  %v536 = vunpack.c.h.b16 %v114
  %v537 = vunpack.c.l.b16 %v115
  %v538 = vunpack.c.l.b16 %v116
  %v539 = vunpack.c.h.b16 %v116
  %v540 = vunpack.c.l.b16 %v117
  %v541 = vunpack.c.h.b16 %v117
  %v542 = vunpack.c.l.b16 %v118
  %v543 = vunpack.c.h.b16 %v118
  %v544 = vunpack.c.l.b16 %v119
  %v545 = vunpack.c.l.b16 %v120
  %v546 = vunpack.c.h.b16 %v120
  %v547 = vunpack.c.l.b16 %v121
  %v548 = vunpack.c.h.b16 %v121
  %v549 = vunpack.c.l.b16 %v122
  %v550 = vunpack.c.h.b16 %v122
  %v551 = vunpack.c.l.b16 %v123
  %v552 = vunpack.c.l.b16 %v124
  %v553 = vunpack.c.h.b16 %v124
  %v554 = vunpack.c.l.b16 %v125
  %v555 = vunpack.c.h.b16 %v125
  %v556 = vunpack.c.l.b16 %v126
  %v557 = vunpack.c.h.b16 %v126
  %v558 = vunpack.c.l.b16 %v127
  %v559 = vunpack.c.l.b16 %v128
  %v560 = vunpack.c.h.b16 %v128
  %v561 = vunpack.c.l.b16 %v129
  %v562 = vunpack.c.h.b16 %v129
  %v563 = vunpack.c.l.b16 %v130
  %v564 = vunpack.c.h.b16 %v130
  %v565 = vunpack.c.l.b16 %v131
  %v566 = vunpack.c.l.b16 %v132
  %v567 = vunpack.c.h.b16 %v132
  %v568 = vunpack.c.l.b16 %v133
  %v569 = vunpack.c.h.b16 %v133
  %v570 = vunpack.c.l.b16 %v134
  %v571 = vunpack.c.h.b16 %v134
  %v572 = vunpack.c.l.b16 %v135
  %v573 = vunpack.c.l.b16 %v136
  %v574 = vunpack.c.h.b16 %v136
  %v575 = vunpack.c.l.b16 %v137
  %v576 = vunpack.c.h.b16 %v137
  %v577 = vunpack.c.l.b16 %v138
  %v578 = vunpack.c.h.b16 %v138
  %v579 = vunpack.c.l.b16 %v139
  %v580 = vunpack.c.l.b16 %v140
  %v581 = vunpack.c.h.b16 %v140
  %v582 = vunpack.c.l.b16 %v141
  %v583 = vunpack.c.h.b16 %v141
  %v584 = vunpack.c.l.b16 %v142
  %v585 = vunpack.c.h.b16 %v142
  %v586 = vunpack.c.l.b16 %v143
  %v587 = vunpack.c.l.b16 %v144
  %v588 = vunpack.c.h.b16 %v144
  %v589 = vunpack.c.l.b16 %v145
  %v590 = vunpack.c.h.b16 %v145
  %v591 = vunpack.c.l.b16 %v146
  %v592 = vunpack.c.h.b16 %v146
  %v593 = vunpack.c.l.b16 %v147
  %v594 = vunpack.c.l.b16 %v148
  %v595 = vunpack.c.h.b16 %v148
  %v596 = vunpack.c.l.b16 %v149
  %v597 = vunpack.c.h.b16 %v149
  %v598 = vunpack.c.l.b16 %v150
  %v599 = vunpack.c.h.b16 %v150
  %v600 = vunpack.c.l.b16 %v151
  %v601 = vunpack.c.l.b16 %v152
  %v602 = vunpack.c.h.b16 %v152
  %v603 = vunpack.c.l.b16 %v153
  %v604 = vunpack.c.h.b16 %v153
  %v605 = vunpack.c.l.b16 %v154
  %v606 = vunpack.c.h.b16 %v154
  %v607 = vunpack.c.l.b16 %v155
  %v608 = vunpack.c.l.b16 %v156
  %v609 = vunpack.c.h.b16 %v156
  %v610 = vunpack.c.l.b16 %v157
  %v611 = vunpack.c.h.b16 %v157
  %v612 = vunpack.c.l.b16 %v158
  %v613 = vunpack.c.h.b16 %v158
  %v614 = vunpack.c.l.b16 %v159
  %v615 = vunpack.c.l.b16 %v160
  %v616 = vunpack.c.h.b16 %v160
  %v617 = vunpack.c.l.b16 %v161
  %v618 = vunpack.c.h.b16 %v161
  %v619 = vunpack.c.l.b16 %v162
  %v620 = vunpack.c.h.b16 %v162
  %v621 = vunpack.c.l.b16 %v163
  %v622 = vunpack.c.l.b16 %v164
  %v623 = vunpack.c.h.b16 %v164
  %v624 = vunpack.c.l.b16 %v165
  %v625 = vunpack.c.h.b16 %v165
  %v626 = vunpack.c.l.b16 %v166
  %v627 = vunpack.c.h.b16 %v166
  %v628 = vunpack.c.l.b16 %v167
  %v629 = vunpack.c.l.b16 %v168
  %v630 = vunpack.c.h.b16 %v168
  %v631 = vunpack.c.l.b16 %v169
  %v632 = vunpack.c.h.b16 %v169
  %v633 = vunpack.c.l.b16 %v170
  %v634 = vunpack.c.h.b16 %v170
  %v635 = vunpack.c.l.b16 %v171
  %v636 = vunpack.c.l.b16 %v172
  %v637 = vunpack.c.h.b16 %v172
  %v638 = vunpack.c.l.b16 %v173
  %v639 = vunpack.c.h.b16 %v173
  %v640 = vunpack.c.l.b16 %v174
  %v641 = vunpack.c.h.b16 %v174
  %v642 = vunpack.c.l.b16 %v175
  %v643 = vunpack.c.l.b16 %v176
  %v644 = vunpack.c.h.b16 %v176
  %v645 = vunpack.c.l.b16 %v177
  %v646 = vunpack.c.h.b16 %v177
  %v647 = vunpack.c.l.b16 %v178
  %v648 = vunpack.c.h.b16 %v178
  %v649 = vunpack.c.l.b16 %v179
  %v650 = vunpack.c.l.b16 %v180
  %v651 = vunpack.c.h.b16 %v180
  %v652 = vunpack.c.l.b16 %v181
  %v653 = vunpack.c.h.b16 %v181
  %v654 = vunpack.c.l.b16 %v182
  %v655 = vunpack.c.h.b16 %v182
  %v656 = vunpack.c.l.b16 %v183
  %v657 = vunpack.c.l.b16 %v184
  %v658 = vunpack.c.h.b16 %v184
  %v659 = vunpack.c.l.b16 %v185
  %v660 = vunpack.c.h.b16 %v185
  %v661 = vunpack.c.l.b16 %v186
  %v662 = vunpack.c.h.b16 %v186
  %v663 = vunpack.c.l.b16 %v187
  %v664 = vunpack.c.l.b16 %v188
  %v665 = vunpack.c.h.b16 %v188
  %v666 = vunpack.c.l.b16 %v189
  %v667 = vunpack.c.h.b16 %v189
  %v668 = vunpack.c.l.b16 %v190
  %v669 = vunpack.c.h.b16 %v190
  %v670 = vunpack.c.l.b16 %v191
  %v671 = vunpack.c.l.b16 %v192
  %v672 = vunpack.c.h.b16 %v192
  %v673 = vunpack.c.l.b16 %v193
  %v674 = vunpack.c.h.b16 %v193
  %v675 = vunpack.c.l.b16 %v194
  %v676 = vunpack.c.h.b16 %v194
  %v677 = vunpack.c.l.b16 %v195
  %v678 = vpack.c.b16 %v461, %v454
  %v679 = vpack.c.b16 %v462, %v455
  %v680 = vpack.c.b16 %v463, %v456
  %v681 = vpack.c.b16 %v464, %v457
  %v682 = vpack.c.b16 %v465, %v458
  %v683 = vpack.c.b16 %v466, %v459
  %v684 = vpack.c.b16 %v467, %v460
  %v685 = vpack.c.b16 %v475, %v468
  %v686 = vpack.c.b16 %v476, %v469
  %v687 = vpack.c.b16 %v477, %v470
  %v688 = vpack.c.b16 %v478, %v471
  %v689 = vpack.c.b16 %v479, %v472
  %v690 = vpack.c.b16 %v480, %v473
  %v691 = vpack.c.b16 %v481, %v474
  %v692 = vpack.c.b16 %v489, %v482
  %v693 = vpack.c.b16 %v490, %v483
  %v694 = vpack.c.b16 %v491, %v484
  %v695 = vpack.c.b16 %v492, %v485
  %v696 = vpack.c.b16 %v493, %v486
  %v697 = vpack.c.b16 %v494, %v487
  %v698 = vpack.c.b16 %v495, %v488
  %v699 = vpack.c.b16 %v503, %v496
  %v700 = vpack.c.b16 %v504, %v497
  %v701 = vpack.c.b16 %v505, %v498
  %v702 = vpack.c.b16 %v506, %v499
  %v703 = vpack.c.b16 %v507, %v500
  %v704 = vpack.c.b16 %v508, %v501
  %v705 = vpack.c.b16 %v509, %v502
  %v706 = vpack.c.b16 %v517, %v510
  %v707 = vpack.c.b16 %v518, %v511
  %v708 = vpack.c.b16 %v519, %v512
  %v709 = vpack.c.b16 %v520, %v513
  %v710 = vpack.c.b16 %v521, %v514
  %v711 = vpack.c.b16 %v522, %v515
  %v712 = vpack.c.b16 %v523, %v516
  %v713 = vpack.c.b16 %v531, %v524
  %v714 = vpack.c.b16 %v532, %v525
  %v715 = vpack.c.b16 %v533, %v526
  %v716 = vpack.c.b16 %v534, %v527
  %v717 = vpack.c.b16 %v535, %v528
  %v718 = vpack.c.b16 %v536, %v529
  %v719 = vpack.c.b16 %v537, %v530
  %v720 = vpack.c.b16 %v545, %v538
  %v721 = vpack.c.b16 %v546, %v539
  %v722 = vpack.c.b16 %v547, %v540
  %v723 = vpack.c.b16 %v548, %v541
  %v724 = vpack.c.b16 %v549, %v542
  %v725 = vpack.c.b16 %v550, %v543
  %v726 = vpack.c.b16 %v551, %v544
  %v727 = vpack.c.b16 %v559, %v552
  %v728 = vpack.c.b16 %v560, %v553
  %v729 = vpack.c.b16 %v561, %v554
  %v730 = vpack.c.b16 %v562, %v555
  %v731 = vpack.c.b16 %v563, %v556
  %v732 = vpack.c.b16 %v564, %v557
  %v733 = vpack.c.b16 %v565, %v558
  %v734 = vpack.c.b16 %v573, %v566
  %v735 = vpack.c.b16 %v574, %v567
  %v736 = vpack.c.b16 %v575, %v568
  %v737 = vpack.c.b16 %v576, %v569
  %v738 = vpack.c.b16 %v577, %v570
  %v739 = vpack.c.b16 %v578, %v571
  %v740 = vpack.c.b16 %v579, %v572
  %v741 = vpack.c.b16 %v587, %v580
  %v742 = vpack.c.b16 %v588, %v581
  %v743 = vpack.c.b16 %v589, %v582
  %v744 = vpack.c.b16 %v590, %v583
  %v745 = vpack.c.b16 %v591, %v584
  %v746 = vpack.c.b16 %v592, %v585
  %v747 = vpack.c.b16 %v593, %v586
  %v748 = vpack.c.b16 %v601, %v594
  %v749 = vpack.c.b16 %v602, %v595
  %v750 = vpack.c.b16 %v603, %v596
  %v751 = vpack.c.b16 %v604, %v597
  %v752 = vpack.c.b16 %v605, %v598
  %v753 = vpack.c.b16 %v606, %v599
  %v754 = vpack.c.b16 %v607, %v600
  %v755 = vpack.c.b16 %v615, %v608
  %v756 = vpack.c.b16 %v616, %v609
  %v757 = vpack.c.b16 %v617, %v610
  %v758 = vpack.c.b16 %v618, %v611
  %v759 = vpack.c.b16 %v619, %v612
  %v760 = vpack.c.b16 %v620, %v613
  %v761 = vpack.c.b16 %v621, %v614
  %v762 = vpack.c.b16 %v629, %v622
  %v763 = vpack.c.b16 %v630, %v623
  %v764 = vpack.c.b16 %v631, %v624
  %v765 = vpack.c.b16 %v632, %v625
  %v766 = vpack.c.b16 %v633, %v626
  %v767 = vpack.c.b16 %v634, %v627
  %v768 = vpack.c.b16 %v635, %v628
  %v769 = vpack.c.b16 %v643, %v636
  %v770 = vpack.c.b16 %v644, %v637
  %v771 = vpack.c.b16 %v645, %v638
  %v772 = vpack.c.b16 %v646, %v639
  %v773 = vpack.c.b16 %v647, %v640
  %v774 = vpack.c.b16 %v648, %v641
  %v775 = vpack.c.b16 %v649, %v642
  %v776 = vpack.c.b16 %v657, %v650
  %v777 = vpack.c.b16 %v658, %v651
  %v778 = vpack.c.b16 %v659, %v652
  %v779 = vpack.c.b16 %v660, %v653
  %v780 = vpack.c.b16 %v661, %v654
  %v781 = vpack.c.b16 %v662, %v655
  %v782 = vpack.c.b16 %v663, %v656
  %v783 = vpack.c.b16 %v671, %v664
  %v784 = vpack.c.b16 %v672, %v665
  %v785 = vpack.c.b16 %v673, %v666
  %v786 = vpack.c.b16 %v674, %v667
  %v787 = vpack.c.b16 %v675, %v668
  %v788 = vpack.c.b16 %v676, %v669
  %v789 = vpack.c.b16 %v677, %v670
  %902 = vmatpush.bf16.msra.mxu0 %v727
  %903 = vmatpush.bf16.msra.mxu0 %v720
  %904 = vmatpush.bf16.msra.mxu0 %v713
  %905 = vmatpush.bf16.msra.mxu0 %v706
  %906 = vmatpush.bf16.msra.mxu0 %v699
  %907 = vmatpush.bf16.msra.mxu0 %v692
  %908 = vmatpush.bf16.msra.mxu0 %v685
  %909 = vmatpush.bf16.msra.mxu0 %v678
  %910 = vmatmul.bf16.gmra.mxu0 %v274
  %v911 = vpop.f32.mrf.mxu0
  %v912 = vadd.f32 0.0, %v911
  %v913 = vpop.f32.mrf.mxu0
  %v914 = vadd.f32 0.0, %v913
  %915 = vmatmul.bf16.gmra.mxu0 %v276
  %v916 = vpop.f32.mrf.mxu0
  %v917 = vadd.f32 0.0, %v916
  %v918 = vpop.f32.mrf.mxu0
  %v919 = vadd.f32 0.0, %v918
  %920 = vmatmul.bf16.gmra.mxu0 %v278
  %v921 = vpop.f32.mrf.mxu0
  %v922 = vadd.f32 0.0, %v921
  %v923 = vpop.f32.mrf.mxu0
  %v924 = vadd.f32 0.0, %v923
  %925 = vmatmul.bf16.gmra.mxu0 %v280
  %v926 = vpop.f32.mrf.mxu0
  %v927 = vadd.f32 0.0, %v926
  %v928 = vpop.f32.mrf.mxu0
  %v929 = vadd.f32 0.0, %v928
  %930 = vmatmul.bf16.gmra.mxu0 %v282
  %v931 = vpop.f32.mrf.mxu0
  %v932 = vadd.f32 0.0, %v931
  %v933 = vpop.f32.mrf.mxu0
  %v934 = vadd.f32 0.0, %v933
  %935 = vmatmul.bf16.gmra.mxu0 %v284
  %v936 = vpop.f32.mrf.mxu0
  %v937 = vadd.f32 0.0, %v936
  %v938 = vpop.f32.mrf.mxu0
  %v939 = vadd.f32 0.0, %v938
  %940 = vmatmul.bf16.gmra.mxu0 %v286
  %v941 = vpop.f32.mrf.mxu0
  %v942 = vadd.f32 0.0, %v941
  %v943 = vpop.f32.mrf.mxu0
  %v944 = vadd.f32 0.0, %v943
  %945 = vmatmul.bf16.gmra.mxu0 %v288
  %v946 = vpop.f32.mrf.mxu0
  %v947 = vadd.f32 0.0, %v946
  %v948 = vpop.f32.mrf.mxu0
  %v949 = vadd.f32 0.0, %v948
  %950 = vmatmul.bf16.gmra.mxu0 %v290
  %v951 = vpop.f32.mrf.mxu0
  %v952 = vadd.f32 0.0, %v951
  %v953 = vpop.f32.mrf.mxu0
  %v954 = vadd.f32 0.0, %v953
  %955 = vmatmul.bf16.gmra.mxu0 %v292
  %v956 = vpop.f32.mrf.mxu0
  %v957 = vadd.f32 0.0, %v956
  %v958 = vpop.f32.mrf.mxu0
  %v959 = vadd.f32 0.0, %v958
  %960 = vmatmul.bf16.gmra.mxu0 %v294
  %v961 = vpop.f32.mrf.mxu0
  %v962 = vadd.f32 0.0, %v961
  %v963 = vpop.f32.mrf.mxu0
  %v964 = vadd.f32 0.0, %v963
  %965 = vmatmul.bf16.gmra.mxu0 %v296
  %v966 = vpop.f32.mrf.mxu0
  %v967 = vadd.f32 0.0, %v966
  %v968 = vpop.f32.mrf.mxu0
  %v969 = vadd.f32 0.0, %v968
  %970 = vmatmul.bf16.gmra.mxu0 %v298
  %v971 = vpop.f32.mrf.mxu0
  %v972 = vadd.f32 0.0, %v971
  %v973 = vpop.f32.mrf.mxu0
  %v974 = vadd.f32 0.0, %v973
  %975 = vdwg.mxu0
  %976 = vmatpush.bf16.msra.mxu0 %v783
  %977 = vmatpush.bf16.msra.mxu0 %v776
  %978 = vmatpush.bf16.msra.mxu0 %v769
  %979 = vmatpush.bf16.msra.mxu0 %v762
  %980 = vmatpush.bf16.msra.mxu0 %v755
  %981 = vmatpush.bf16.msra.mxu0 %v748
  %982 = vmatpush.bf16.msra.mxu0 %v741
  %983 = vmatpush.bf16.msra.mxu0 %v734
  %984 = vmatmul.bf16.gmra.mxu0 %v275
  %v985 = vpop.f32.mrf.mxu0
  %v986 = vadd.f32 %v912, %v985
  %v987 = vpop.f32.mrf.mxu0
  %v988 = vadd.f32 %v914, %v987
  %989 = vmatmul.bf16.gmra.mxu0 %v277
  %v990 = vpop.f32.mrf.mxu0
  %v991 = vadd.f32 %v917, %v990
  %v992 = vpop.f32.mrf.mxu0
  %v993 = vadd.f32 %v919, %v992
  %994 = vmatmul.bf16.gmra.mxu0 %v279
  %v995 = vpop.f32.mrf.mxu0
  %v996 = vadd.f32 %v922, %v995
  %v997 = vpop.f32.mrf.mxu0
  %v998 = vadd.f32 %v924, %v997
  %999 = vmatmul.bf16.gmra.mxu0 %v281
  %v1000 = vpop.f32.mrf.mxu0
  %v1001 = vadd.f32 %v927, %v1000
  %v1002 = vpop.f32.mrf.mxu0
  %v1003 = vadd.f32 %v929, %v1002
  %1004 = vmatmul.bf16.gmra.mxu0 %v283
  %v1005 = vpop.f32.mrf.mxu0
  %v1006 = vadd.f32 %v932, %v1005
  %v1007 = vpop.f32.mrf.mxu0
  %v1008 = vadd.f32 %v934, %v1007
  %1009 = vmatmul.bf16.gmra.mxu0 %v285
  %v1010 = vpop.f32.mrf.mxu0
  %v1011 = vadd.f32 %v937, %v1010
  %v1012 = vpop.f32.mrf.mxu0
  %v1013 = vadd.f32 %v939, %v1012
  %1014 = vmatmul.bf16.gmra.mxu0 %v287
  %v1015 = vpop.f32.mrf.mxu0
  %v1016 = vadd.f32 %v942, %v1015
  %v1017 = vpop.f32.mrf.mxu0
  %v1018 = vadd.f32 %v944, %v1017
  %1019 = vmatmul.bf16.gmra.mxu0 %v289
  %v1020 = vpop.f32.mrf.mxu0
  %v1021 = vadd.f32 %v947, %v1020
  %v1022 = vpop.f32.mrf.mxu0
  %v1023 = vadd.f32 %v949, %v1022
  %1024 = vmatmul.bf16.gmra.mxu0 %v291
  %v1025 = vpop.f32.mrf.mxu0
  %v1026 = vadd.f32 %v952, %v1025
  %v1027 = vpop.f32.mrf.mxu0
  %v1028 = vadd.f32 %v954, %v1027
  %1029 = vmatmul.bf16.gmra.mxu0 %v293
  %v1030 = vpop.f32.mrf.mxu0
  %v1031 = vadd.f32 %v957, %v1030
  %v1032 = vpop.f32.mrf.mxu0
  %v1033 = vadd.f32 %v959, %v1032
  %1034 = vmatmul.bf16.gmra.mxu0 %v295
  %v1035 = vpop.f32.mrf.mxu0
  %v1036 = vadd.f32 %v962, %v1035
  %v1037 = vpop.f32.mrf.mxu0
  %v1038 = vadd.f32 %v964, %v1037
  %1039 = vmatmul.bf16.gmra.mxu0 %v297
  %v1040 = vpop.f32.mrf.mxu0
  %v1041 = vadd.f32 %v967, %v1040
  %v1042 = vpop.f32.mrf.mxu0
  %v1043 = vadd.f32 %v969, %v1042
  %1044 = vmatmul.bf16.gmra.mxu0 %v299
  %v1045 = vpop.f32.mrf.mxu0
  %v1046 = vadd.f32 %v972, %v1045
  %v1047 = vpop.f32.mrf.mxu0
  %v1048 = vadd.f32 %v974, %v1047
  %1049 = vdwg.mxu0
  %1050 = vmatpush.bf16.msra.mxu0 %v728
  %1051 = vmatpush.bf16.msra.mxu0 %v721
  %1052 = vmatpush.bf16.msra.mxu0 %v714
  %1053 = vmatpush.bf16.msra.mxu0 %v707
  %1054 = vmatpush.bf16.msra.mxu0 %v700
  %1055 = vmatpush.bf16.msra.mxu0 %v693
  %1056 = vmatpush.bf16.msra.mxu0 %v686
  %1057 = vmatpush.bf16.msra.mxu0 %v679
  %1058 = vmatmul.bf16.gmra.mxu0 %v274
  %v1059 = vpop.f32.mrf.mxu0
  %v1060 = vadd.f32 0.0, %v1059
  %v1061 = vpop.f32.mrf.mxu0
  %v1062 = vadd.f32 0.0, %v1061
  %1063 = vmatmul.bf16.gmra.mxu0 %v276
  %v1064 = vpop.f32.mrf.mxu0
  %v1065 = vadd.f32 0.0, %v1064
  %v1066 = vpop.f32.mrf.mxu0
  %v1067 = vadd.f32 0.0, %v1066
  %1068 = vmatmul.bf16.gmra.mxu0 %v278
  %v1069 = vpop.f32.mrf.mxu0
  %v1070 = vadd.f32 0.0, %v1069
  %v1071 = vpop.f32.mrf.mxu0
  %v1072 = vadd.f32 0.0, %v1071
  %1073 = vmatmul.bf16.gmra.mxu0 %v280
  %v1074 = vpop.f32.mrf.mxu0
  %v1075 = vadd.f32 0.0, %v1074
  %v1076 = vpop.f32.mrf.mxu0
  %v1077 = vadd.f32 0.0, %v1076
  %1078 = vmatmul.bf16.gmra.mxu0 %v282
  %v1079 = vpop.f32.mrf.mxu0
  %v1080 = vadd.f32 0.0, %v1079
  %v1081 = vpop.f32.mrf.mxu0
  %v1082 = vadd.f32 0.0, %v1081
  %1083 = vmatmul.bf16.gmra.mxu0 %v284
  %v1084 = vpop.f32.mrf.mxu0
  %v1085 = vadd.f32 0.0, %v1084
  %v1086 = vpop.f32.mrf.mxu0
  %v1087 = vadd.f32 0.0, %v1086
  %1088 = vmatmul.bf16.gmra.mxu0 %v286
  %v1089 = vpop.f32.mrf.mxu0
  %v1090 = vadd.f32 0.0, %v1089
  %v1091 = vpop.f32.mrf.mxu0
  %v1092 = vadd.f32 0.0, %v1091
  %1093 = vmatmul.bf16.gmra.mxu0 %v288
  %v1094 = vpop.f32.mrf.mxu0
  %v1095 = vadd.f32 0.0, %v1094
  %v1096 = vpop.f32.mrf.mxu0
  %v1097 = vadd.f32 0.0, %v1096
  %1098 = vmatmul.bf16.gmra.mxu0 %v290
  %v1099 = vpop.f32.mrf.mxu0
  %v1100 = vadd.f32 0.0, %v1099
  %v1101 = vpop.f32.mrf.mxu0
  %v1102 = vadd.f32 0.0, %v1101
  %1103 = vmatmul.bf16.gmra.mxu0 %v292
  %v1104 = vpop.f32.mrf.mxu0
  %v1105 = vadd.f32 0.0, %v1104
  %v1106 = vpop.f32.mrf.mxu0
  %v1107 = vadd.f32 0.0, %v1106
  %1108 = vmatmul.bf16.gmra.mxu0 %v294
  %v1109 = vpop.f32.mrf.mxu0
  %v1110 = vadd.f32 0.0, %v1109
  %v1111 = vpop.f32.mrf.mxu0
  %v1112 = vadd.f32 0.0, %v1111
  %1113 = vmatmul.bf16.gmra.mxu0 %v296
  %v1114 = vpop.f32.mrf.mxu0
  %v1115 = vadd.f32 0.0, %v1114
  %v1116 = vpop.f32.mrf.mxu0
  %v1117 = vadd.f32 0.0, %v1116
  %1118 = vmatmul.bf16.gmra.mxu0 %v298
  %v1119 = vpop.f32.mrf.mxu0
  %v1120 = vadd.f32 0.0, %v1119
  %v1121 = vpop.f32.mrf.mxu0
  %v1122 = vadd.f32 0.0, %v1121
  %1123 = vdwg.mxu0
  %1124 = vmatpush.bf16.msra.mxu0 %v784
  %1125 = vmatpush.bf16.msra.mxu0 %v777
  %1126 = vmatpush.bf16.msra.mxu0 %v770
  %1127 = vmatpush.bf16.msra.mxu0 %v763
  %1128 = vmatpush.bf16.msra.mxu0 %v756
  %1129 = vmatpush.bf16.msra.mxu0 %v749
  %1130 = vmatpush.bf16.msra.mxu0 %v742
  %1131 = vmatpush.bf16.msra.mxu0 %v735
  %1132 = vmatmul.bf16.gmra.mxu0 %v275
  %v1133 = vpop.f32.mrf.mxu0
  %v1134 = vadd.f32 %v1060, %v1133
  %v1135 = vpop.f32.mrf.mxu0
  %v1136 = vadd.f32 %v1062, %v1135
  %1137 = vmatmul.bf16.gmra.mxu0 %v277
  %v1138 = vpop.f32.mrf.mxu0
  %v1139 = vadd.f32 %v1065, %v1138
  %v1140 = vpop.f32.mrf.mxu0
  %v1141 = vadd.f32 %v1067, %v1140
  %1142 = vmatmul.bf16.gmra.mxu0 %v279
  %v1143 = vpop.f32.mrf.mxu0
  %v1144 = vadd.f32 %v1070, %v1143
  %v1145 = vpop.f32.mrf.mxu0
  %v1146 = vadd.f32 %v1072, %v1145
  %1147 = vmatmul.bf16.gmra.mxu0 %v281
  %v1148 = vpop.f32.mrf.mxu0
  %v1149 = vadd.f32 %v1075, %v1148
  %v1150 = vpop.f32.mrf.mxu0
  %v1151 = vadd.f32 %v1077, %v1150
  %1152 = vmatmul.bf16.gmra.mxu0 %v283
  %v1153 = vpop.f32.mrf.mxu0
  %v1154 = vadd.f32 %v1080, %v1153
  %v1155 = vpop.f32.mrf.mxu0
  %v1156 = vadd.f32 %v1082, %v1155
  %1157 = vmatmul.bf16.gmra.mxu0 %v285
  %v1158 = vpop.f32.mrf.mxu0
  %v1159 = vadd.f32 %v1085, %v1158
  %v1160 = vpop.f32.mrf.mxu0
  %v1161 = vadd.f32 %v1087, %v1160
  %1162 = vmatmul.bf16.gmra.mxu0 %v287
  %v1163 = vpop.f32.mrf.mxu0
  %v1164 = vadd.f32 %v1090, %v1163
  %v1165 = vpop.f32.mrf.mxu0
  %v1166 = vadd.f32 %v1092, %v1165
  %1167 = vmatmul.bf16.gmra.mxu0 %v289
  %v1168 = vpop.f32.mrf.mxu0
  %v1169 = vadd.f32 %v1095, %v1168
  %v1170 = vpop.f32.mrf.mxu0
  %v1171 = vadd.f32 %v1097, %v1170
  %1172 = vmatmul.bf16.gmra.mxu0 %v291
  %v1173 = vpop.f32.mrf.mxu0
  %v1174 = vadd.f32 %v1100, %v1173
  %v1175 = vpop.f32.mrf.mxu0
  %v1176 = vadd.f32 %v1102, %v1175
  %1177 = vmatmul.bf16.gmra.mxu0 %v293
  %v1178 = vpop.f32.mrf.mxu0
  %v1179 = vadd.f32 %v1105, %v1178
  %v1180 = vpop.f32.mrf.mxu0
  %v1181 = vadd.f32 %v1107, %v1180
  %1182 = vmatmul.bf16.gmra.mxu0 %v295
  %v1183 = vpop.f32.mrf.mxu0
  %v1184 = vadd.f32 %v1110, %v1183
  %v1185 = vpop.f32.mrf.mxu0
  %v1186 = vadd.f32 %v1112, %v1185
  %1187 = vmatmul.bf16.gmra.mxu0 %v297
  %v1188 = vpop.f32.mrf.mxu0
  %v1189 = vadd.f32 %v1115, %v1188
  %v1190 = vpop.f32.mrf.mxu0
  %v1191 = vadd.f32 %v1117, %v1190
  %1192 = vmatmul.bf16.gmra.mxu0 %v299
  %v1193 = vpop.f32.mrf.mxu0
  %v1194 = vadd.f32 %v1120, %v1193
  %v1195 = vpop.f32.mrf.mxu0
  %v1196 = vadd.f32 %v1122, %v1195
  %1197 = vdwg.mxu0
  %1198 = vmatpush.bf16.msra.mxu0 %v729
  %1199 = vmatpush.bf16.msra.mxu0 %v722
  %1200 = vmatpush.bf16.msra.mxu0 %v715
  %1201 = vmatpush.bf16.msra.mxu0 %v708
  %1202 = vmatpush.bf16.msra.mxu0 %v701
  %1203 = vmatpush.bf16.msra.mxu0 %v694
  %1204 = vmatpush.bf16.msra.mxu0 %v687
  %1205 = vmatpush.bf16.msra.mxu0 %v680
  %1206 = vmatmul.bf16.gmra.mxu0 %v274
  %v1207 = vpop.f32.mrf.mxu0
  %v1208 = vadd.f32 0.0, %v1207
  %v1209 = vpop.f32.mrf.mxu0
  %v1210 = vadd.f32 0.0, %v1209
  %1211 = vmatmul.bf16.gmra.mxu0 %v276
  %v1212 = vpop.f32.mrf.mxu0
  %v1213 = vadd.f32 0.0, %v1212
  %v1214 = vpop.f32.mrf.mxu0
  %v1215 = vadd.f32 0.0, %v1214
  %1216 = vmatmul.bf16.gmra.mxu0 %v278
  %v1217 = vpop.f32.mrf.mxu0
  %v1218 = vadd.f32 0.0, %v1217
  %v1219 = vpop.f32.mrf.mxu0
  %v1220 = vadd.f32 0.0, %v1219
  %1221 = vmatmul.bf16.gmra.mxu0 %v280
  %v1222 = vpop.f32.mrf.mxu0
  %v1223 = vadd.f32 0.0, %v1222
  %v1224 = vpop.f32.mrf.mxu0
  %v1225 = vadd.f32 0.0, %v1224
  %1226 = vmatmul.bf16.gmra.mxu0 %v282
  %v1227 = vpop.f32.mrf.mxu0
  %v1228 = vadd.f32 0.0, %v1227
  %v1229 = vpop.f32.mrf.mxu0
  %v1230 = vadd.f32 0.0, %v1229
  %1231 = vmatmul.bf16.gmra.mxu0 %v284
  %v1232 = vpop.f32.mrf.mxu0
  %v1233 = vadd.f32 0.0, %v1232
  %v1234 = vpop.f32.mrf.mxu0
  %v1235 = vadd.f32 0.0, %v1234
  %1236 = vmatmul.bf16.gmra.mxu0 %v286
  %v1237 = vpop.f32.mrf.mxu0
  %v1238 = vadd.f32 0.0, %v1237
  %v1239 = vpop.f32.mrf.mxu0
  %v1240 = vadd.f32 0.0, %v1239
  %1241 = vmatmul.bf16.gmra.mxu0 %v288
  %v1242 = vpop.f32.mrf.mxu0
  %v1243 = vadd.f32 0.0, %v1242
  %v1244 = vpop.f32.mrf.mxu0
  %v1245 = vadd.f32 0.0, %v1244
  %1246 = vmatmul.bf16.gmra.mxu0 %v290
  %v1247 = vpop.f32.mrf.mxu0
  %v1248 = vadd.f32 0.0, %v1247
  %v1249 = vpop.f32.mrf.mxu0
  %v1250 = vadd.f32 0.0, %v1249
  %1251 = vmatmul.bf16.gmra.mxu0 %v292
  %v1252 = vpop.f32.mrf.mxu0
  %v1253 = vadd.f32 0.0, %v1252
  %v1254 = vpop.f32.mrf.mxu0
  %v1255 = vadd.f32 0.0, %v1254
  %1256 = vmatmul.bf16.gmra.mxu0 %v294
  %v1257 = vpop.f32.mrf.mxu0
  %v1258 = vadd.f32 0.0, %v1257
  %v1259 = vpop.f32.mrf.mxu0
  %v1260 = vadd.f32 0.0, %v1259
  %1261 = vmatmul.bf16.gmra.mxu0 %v296
  %v1262 = vpop.f32.mrf.mxu0
  %v1263 = vadd.f32 0.0, %v1262
  %v1264 = vpop.f32.mrf.mxu0
  %v1265 = vadd.f32 0.0, %v1264
  %1266 = vmatmul.bf16.gmra.mxu0 %v298
  %v1267 = vpop.f32.mrf.mxu0
  %v1268 = vadd.f32 0.0, %v1267
  %v1269 = vpop.f32.mrf.mxu0
  %v1270 = vadd.f32 0.0, %v1269
  %1271 = vdwg.mxu0
  %1272 = vmatpush.bf16.msra.mxu0 %v785
  %1273 = vmatpush.bf16.msra.mxu0 %v778
  %1274 = vmatpush.bf16.msra.mxu0 %v771
  %1275 = vmatpush.bf16.msra.mxu0 %v764
  %1276 = vmatpush.bf16.msra.mxu0 %v757
  %1277 = vmatpush.bf16.msra.mxu0 %v750
  %1278 = vmatpush.bf16.msra.mxu0 %v743
  %1279 = vmatpush.bf16.msra.mxu0 %v736
  %1280 = vmatmul.bf16.gmra.mxu0 %v275
  %v1281 = vpop.f32.mrf.mxu0
  %v1282 = vadd.f32 %v1208, %v1281
  %v1283 = vpop.f32.mrf.mxu0
  %v1284 = vadd.f32 %v1210, %v1283
  %1285 = vmatmul.bf16.gmra.mxu0 %v277
  %v1286 = vpop.f32.mrf.mxu0
  %v1287 = vadd.f32 %v1213, %v1286
  %v1288 = vpop.f32.mrf.mxu0
  %v1289 = vadd.f32 %v1215, %v1288
  %1290 = vmatmul.bf16.gmra.mxu0 %v279
  %v1291 = vpop.f32.mrf.mxu0
  %v1292 = vadd.f32 %v1218, %v1291
  %v1293 = vpop.f32.mrf.mxu0
  %v1294 = vadd.f32 %v1220, %v1293
  %1295 = vmatmul.bf16.gmra.mxu0 %v281
  %v1296 = vpop.f32.mrf.mxu0
  %v1297 = vadd.f32 %v1223, %v1296
  %v1298 = vpop.f32.mrf.mxu0
  %v1299 = vadd.f32 %v1225, %v1298
  %1300 = vmatmul.bf16.gmra.mxu0 %v283
  %v1301 = vpop.f32.mrf.mxu0
  %v1302 = vadd.f32 %v1228, %v1301
  %v1303 = vpop.f32.mrf.mxu0
  %v1304 = vadd.f32 %v1230, %v1303
  %1305 = vmatmul.bf16.gmra.mxu0 %v285
  %v1306 = vpop.f32.mrf.mxu0
  %v1307 = vadd.f32 %v1233, %v1306
  %v1308 = vpop.f32.mrf.mxu0
  %v1309 = vadd.f32 %v1235, %v1308
  %1310 = vmatmul.bf16.gmra.mxu0 %v287
  %v1311 = vpop.f32.mrf.mxu0
  %v1312 = vadd.f32 %v1238, %v1311
  %v1313 = vpop.f32.mrf.mxu0
  %v1314 = vadd.f32 %v1240, %v1313
  %1315 = vmatmul.bf16.gmra.mxu0 %v289
  %v1316 = vpop.f32.mrf.mxu0
  %v1317 = vadd.f32 %v1243, %v1316
  %v1318 = vpop.f32.mrf.mxu0
  %v1319 = vadd.f32 %v1245, %v1318
  %1320 = vmatmul.bf16.gmra.mxu0 %v291
  %v1321 = vpop.f32.mrf.mxu0
  %v1322 = vadd.f32 %v1248, %v1321
  %v1323 = vpop.f32.mrf.mxu0
  %v1324 = vadd.f32 %v1250, %v1323
  %1325 = vmatmul.bf16.gmra.mxu0 %v293
  %v1326 = vpop.f32.mrf.mxu0
  %v1327 = vadd.f32 %v1253, %v1326
  %v1328 = vpop.f32.mrf.mxu0
  %v1329 = vadd.f32 %v1255, %v1328
  %1330 = vmatmul.bf16.gmra.mxu0 %v295
  %v1331 = vpop.f32.mrf.mxu0
  %v1332 = vadd.f32 %v1258, %v1331
  %v1333 = vpop.f32.mrf.mxu0
  %v1334 = vadd.f32 %v1260, %v1333
  %1335 = vmatmul.bf16.gmra.mxu0 %v297
  %v1336 = vpop.f32.mrf.mxu0
  %v1337 = vadd.f32 %v1263, %v1336
  %v1338 = vpop.f32.mrf.mxu0
  %v1339 = vadd.f32 %v1265, %v1338
  %1340 = vmatmul.bf16.gmra.mxu0 %v299
  %v1341 = vpop.f32.mrf.mxu0
  %v1342 = vadd.f32 %v1268, %v1341
  %v1343 = vpop.f32.mrf.mxu0
  %v1344 = vadd.f32 %v1270, %v1343
  %1345 = vdwg.mxu0
  %1346 = vmatpush.bf16.msra.mxu0 %v730
  %1347 = vmatpush.bf16.msra.mxu0 %v723
  %1348 = vmatpush.bf16.msra.mxu0 %v716
  %1349 = vmatpush.bf16.msra.mxu0 %v709
  %1350 = vmatpush.bf16.msra.mxu0 %v702
  %1351 = vmatpush.bf16.msra.mxu0 %v695
  %1352 = vmatpush.bf16.msra.mxu0 %v688
  %1353 = vmatpush.bf16.msra.mxu0 %v681
  %1354 = vmatmul.bf16.gmra.mxu0 %v274
  %v1355 = vpop.f32.mrf.mxu0
  %v1356 = vadd.f32 0.0, %v1355
  %v1357 = vpop.f32.mrf.mxu0
  %v1358 = vadd.f32 0.0, %v1357
  %1359 = vmatmul.bf16.gmra.mxu0 %v276
  %v1360 = vpop.f32.mrf.mxu0
  %v1361 = vadd.f32 0.0, %v1360
  %v1362 = vpop.f32.mrf.mxu0
  %v1363 = vadd.f32 0.0, %v1362
  %1364 = vmatmul.bf16.gmra.mxu0 %v278
  %v1365 = vpop.f32.mrf.mxu0
  %v1366 = vadd.f32 0.0, %v1365
  %v1367 = vpop.f32.mrf.mxu0
  %v1368 = vadd.f32 0.0, %v1367
  %1369 = vmatmul.bf16.gmra.mxu0 %v280
  %v1370 = vpop.f32.mrf.mxu0
  %v1371 = vadd.f32 0.0, %v1370
  %v1372 = vpop.f32.mrf.mxu0
  %v1373 = vadd.f32 0.0, %v1372
  %1374 = vmatmul.bf16.gmra.mxu0 %v282
  %v1375 = vpop.f32.mrf.mxu0
  %v1376 = vadd.f32 0.0, %v1375
  %v1377 = vpop.f32.mrf.mxu0
  %v1378 = vadd.f32 0.0, %v1377
  %1379 = vmatmul.bf16.gmra.mxu0 %v284
  %v1380 = vpop.f32.mrf.mxu0
  %v1381 = vadd.f32 0.0, %v1380
  %v1382 = vpop.f32.mrf.mxu0
  %v1383 = vadd.f32 0.0, %v1382
  %1384 = vmatmul.bf16.gmra.mxu0 %v286
  %v1385 = vpop.f32.mrf.mxu0
  %v1386 = vadd.f32 0.0, %v1385
  %v1387 = vpop.f32.mrf.mxu0
  %v1388 = vadd.f32 0.0, %v1387
  %1389 = vmatmul.bf16.gmra.mxu0 %v288
  %v1390 = vpop.f32.mrf.mxu0
  %v1391 = vadd.f32 0.0, %v1390
  %v1392 = vpop.f32.mrf.mxu0
  %v1393 = vadd.f32 0.0, %v1392
  %1394 = vmatmul.bf16.gmra.mxu0 %v290
  %v1395 = vpop.f32.mrf.mxu0
  %v1396 = vadd.f32 0.0, %v1395
  %v1397 = vpop.f32.mrf.mxu0
  %v1398 = vadd.f32 0.0, %v1397
  %1399 = vmatmul.bf16.gmra.mxu0 %v292
  %v1400 = vpop.f32.mrf.mxu0
  %v1401 = vadd.f32 0.0, %v1400
  %v1402 = vpop.f32.mrf.mxu0
  %v1403 = vadd.f32 0.0, %v1402
  %1404 = vmatmul.bf16.gmra.mxu0 %v294
  %v1405 = vpop.f32.mrf.mxu0
  %v1406 = vadd.f32 0.0, %v1405
  %v1407 = vpop.f32.mrf.mxu0
  %v1408 = vadd.f32 0.0, %v1407
  %1409 = vmatmul.bf16.gmra.mxu0 %v296
  %v1410 = vpop.f32.mrf.mxu0
  %v1411 = vadd.f32 0.0, %v1410
  %v1412 = vpop.f32.mrf.mxu0
  %v1413 = vadd.f32 0.0, %v1412
  %1414 = vmatmul.bf16.gmra.mxu0 %v298
  %v1415 = vpop.f32.mrf.mxu0
  %v1416 = vadd.f32 0.0, %v1415
  %v1417 = vpop.f32.mrf.mxu0
  %v1418 = vadd.f32 0.0, %v1417
  %1419 = vdwg.mxu0
  %1420 = vmatpush.bf16.msra.mxu0 %v786
  %1421 = vmatpush.bf16.msra.mxu0 %v779
  %1422 = vmatpush.bf16.msra.mxu0 %v772
  %1423 = vmatpush.bf16.msra.mxu0 %v765
  %1424 = vmatpush.bf16.msra.mxu0 %v758
  %1425 = vmatpush.bf16.msra.mxu0 %v751
  %1426 = vmatpush.bf16.msra.mxu0 %v744
  %1427 = vmatpush.bf16.msra.mxu0 %v737
  %1428 = vmatmul.bf16.gmra.mxu0 %v275
  %v1429 = vpop.f32.mrf.mxu0
  %v1430 = vadd.f32 %v1356, %v1429
  %v1431 = vpop.f32.mrf.mxu0
  %v1432 = vadd.f32 %v1358, %v1431
  %1433 = vmatmul.bf16.gmra.mxu0 %v277
  %v1434 = vpop.f32.mrf.mxu0
  %v1435 = vadd.f32 %v1361, %v1434
  %v1436 = vpop.f32.mrf.mxu0
  %v1437 = vadd.f32 %v1363, %v1436
  %1438 = vmatmul.bf16.gmra.mxu0 %v279
  %v1439 = vpop.f32.mrf.mxu0
  %v1440 = vadd.f32 %v1366, %v1439
  %v1441 = vpop.f32.mrf.mxu0
  %v1442 = vadd.f32 %v1368, %v1441
  %1443 = vmatmul.bf16.gmra.mxu0 %v281
  %v1444 = vpop.f32.mrf.mxu0
  %v1445 = vadd.f32 %v1371, %v1444
  %v1446 = vpop.f32.mrf.mxu0
  %v1447 = vadd.f32 %v1373, %v1446
  %1448 = vmatmul.bf16.gmra.mxu0 %v283
  %v1449 = vpop.f32.mrf.mxu0
  %v1450 = vadd.f32 %v1376, %v1449
  %v1451 = vpop.f32.mrf.mxu0
  %v1452 = vadd.f32 %v1378, %v1451
  %1453 = vmatmul.bf16.gmra.mxu0 %v285
  %v1454 = vpop.f32.mrf.mxu0
  %v1455 = vadd.f32 %v1381, %v1454
  %v1456 = vpop.f32.mrf.mxu0
  %v1457 = vadd.f32 %v1383, %v1456
  %1458 = vmatmul.bf16.gmra.mxu0 %v287
  %v1459 = vpop.f32.mrf.mxu0
  %v1460 = vadd.f32 %v1386, %v1459
  %v1461 = vpop.f32.mrf.mxu0
  %v1462 = vadd.f32 %v1388, %v1461
  %1463 = vmatmul.bf16.gmra.mxu0 %v289
  %v1464 = vpop.f32.mrf.mxu0
  %v1465 = vadd.f32 %v1391, %v1464
  %v1466 = vpop.f32.mrf.mxu0
  %v1467 = vadd.f32 %v1393, %v1466
  %1468 = vmatmul.bf16.gmra.mxu0 %v291
  %v1469 = vpop.f32.mrf.mxu0
  %v1470 = vadd.f32 %v1396, %v1469
  %v1471 = vpop.f32.mrf.mxu0
  %v1472 = vadd.f32 %v1398, %v1471
  %1473 = vmatmul.bf16.gmra.mxu0 %v293
  %v1474 = vpop.f32.mrf.mxu0
  %v1475 = vadd.f32 %v1401, %v1474
  %v1476 = vpop.f32.mrf.mxu0
  %v1477 = vadd.f32 %v1403, %v1476
  %1478 = vmatmul.bf16.gmra.mxu0 %v295
  %v1479 = vpop.f32.mrf.mxu0
  %v1480 = vadd.f32 %v1406, %v1479
  %v1481 = vpop.f32.mrf.mxu0
  %v1482 = vadd.f32 %v1408, %v1481
  %1483 = vmatmul.bf16.gmra.mxu0 %v297
  %v1484 = vpop.f32.mrf.mxu0
  %v1485 = vadd.f32 %v1411, %v1484
  %v1486 = vpop.f32.mrf.mxu0
  %v1487 = vadd.f32 %v1413, %v1486
  %1488 = vmatmul.bf16.gmra.mxu0 %v299
  %v1489 = vpop.f32.mrf.mxu0
  %v1490 = vadd.f32 %v1416, %v1489
  %v1491 = vpop.f32.mrf.mxu0
  %v1492 = vadd.f32 %v1418, %v1491
  %1493 = vdwg.mxu0
  %1494 = vmatpush.bf16.msra.mxu0 %v731
  %1495 = vmatpush.bf16.msra.mxu0 %v724
  %1496 = vmatpush.bf16.msra.mxu0 %v717
  %1497 = vmatpush.bf16.msra.mxu0 %v710
  %1498 = vmatpush.bf16.msra.mxu0 %v703
  %1499 = vmatpush.bf16.msra.mxu0 %v696
  %1500 = vmatpush.bf16.msra.mxu0 %v689
  %1501 = vmatpush.bf16.msra.mxu0 %v682
  %1502 = vmatmul.bf16.gmra.mxu0 %v274
  %v1503 = vpop.f32.mrf.mxu0
  %v1504 = vadd.f32 0.0, %v1503
  %v1505 = vpop.f32.mrf.mxu0
  %v1506 = vadd.f32 0.0, %v1505
  %1507 = vmatmul.bf16.gmra.mxu0 %v276
  %v1508 = vpop.f32.mrf.mxu0
  %v1509 = vadd.f32 0.0, %v1508
  %v1510 = vpop.f32.mrf.mxu0
  %v1511 = vadd.f32 0.0, %v1510
  %1512 = vmatmul.bf16.gmra.mxu0 %v278
  %v1513 = vpop.f32.mrf.mxu0
  %v1514 = vadd.f32 0.0, %v1513
  %v1515 = vpop.f32.mrf.mxu0
  %v1516 = vadd.f32 0.0, %v1515
  %1517 = vmatmul.bf16.gmra.mxu0 %v280
  %v1518 = vpop.f32.mrf.mxu0
  %v1519 = vadd.f32 0.0, %v1518
  %v1520 = vpop.f32.mrf.mxu0
  %v1521 = vadd.f32 0.0, %v1520
  %1522 = vmatmul.bf16.gmra.mxu0 %v282
  %v1523 = vpop.f32.mrf.mxu0
  %v1524 = vadd.f32 0.0, %v1523
  %v1525 = vpop.f32.mrf.mxu0
  %v1526 = vadd.f32 0.0, %v1525
  %1527 = vmatmul.bf16.gmra.mxu0 %v284
  %v1528 = vpop.f32.mrf.mxu0
  %v1529 = vadd.f32 0.0, %v1528
  %v1530 = vpop.f32.mrf.mxu0
  %v1531 = vadd.f32 0.0, %v1530
  %1532 = vmatmul.bf16.gmra.mxu0 %v286
  %v1533 = vpop.f32.mrf.mxu0
  %v1534 = vadd.f32 0.0, %v1533
  %v1535 = vpop.f32.mrf.mxu0
  %v1536 = vadd.f32 0.0, %v1535
  %1537 = vmatmul.bf16.gmra.mxu0 %v288
  %v1538 = vpop.f32.mrf.mxu0
  %v1539 = vadd.f32 0.0, %v1538
  %v1540 = vpop.f32.mrf.mxu0
  %v1541 = vadd.f32 0.0, %v1540
  %1542 = vmatmul.bf16.gmra.mxu0 %v290
  %v1543 = vpop.f32.mrf.mxu0
  %v1544 = vadd.f32 0.0, %v1543
  %v1545 = vpop.f32.mrf.mxu0
  %v1546 = vadd.f32 0.0, %v1545
  %1547 = vmatmul.bf16.gmra.mxu0 %v292
  %v1548 = vpop.f32.mrf.mxu0
  %v1549 = vadd.f32 0.0, %v1548
  %v1550 = vpop.f32.mrf.mxu0
  %v1551 = vadd.f32 0.0, %v1550
  %1552 = vmatmul.bf16.gmra.mxu0 %v294
  %v1553 = vpop.f32.mrf.mxu0
  %v1554 = vadd.f32 0.0, %v1553
  %v1555 = vpop.f32.mrf.mxu0
  %v1556 = vadd.f32 0.0, %v1555
  %1557 = vmatmul.bf16.gmra.mxu0 %v296
  %v1558 = vpop.f32.mrf.mxu0
  %v1559 = vadd.f32 0.0, %v1558
  %v1560 = vpop.f32.mrf.mxu0
  %v1561 = vadd.f32 0.0, %v1560
  %1562 = vmatmul.bf16.gmra.mxu0 %v298
  %v1563 = vpop.f32.mrf.mxu0
  %v1564 = vadd.f32 0.0, %v1563
  %v1565 = vpop.f32.mrf.mxu0
  %v1566 = vadd.f32 0.0, %v1565
  %1567 = vdwg.mxu0
  %1568 = vmatpush.bf16.msra.mxu0 %v787
  %1569 = vmatpush.bf16.msra.mxu0 %v780
  %1570 = vmatpush.bf16.msra.mxu0 %v773
  %1571 = vmatpush.bf16.msra.mxu0 %v766
  %1572 = vmatpush.bf16.msra.mxu0 %v759
  %1573 = vmatpush.bf16.msra.mxu0 %v752
  %1574 = vmatpush.bf16.msra.mxu0 %v745
  %1575 = vmatpush.bf16.msra.mxu0 %v738
  %1576 = vmatmul.bf16.gmra.mxu0 %v275
  %v1577 = vpop.f32.mrf.mxu0
  %v1578 = vadd.f32 %v1504, %v1577
  %v1579 = vpop.f32.mrf.mxu0
  %v1580 = vadd.f32 %v1506, %v1579
  %1581 = vmatmul.bf16.gmra.mxu0 %v277
  %v1582 = vpop.f32.mrf.mxu0
  %v1583 = vadd.f32 %v1509, %v1582
  %v1584 = vpop.f32.mrf.mxu0
  %v1585 = vadd.f32 %v1511, %v1584
  %1586 = vmatmul.bf16.gmra.mxu0 %v279
  %v1587 = vpop.f32.mrf.mxu0
  %v1588 = vadd.f32 %v1514, %v1587
  %v1589 = vpop.f32.mrf.mxu0
  %v1590 = vadd.f32 %v1516, %v1589
  %1591 = vmatmul.bf16.gmra.mxu0 %v281
  %v1592 = vpop.f32.mrf.mxu0
  %v1593 = vadd.f32 %v1519, %v1592
  %v1594 = vpop.f32.mrf.mxu0
  %v1595 = vadd.f32 %v1521, %v1594
  %1596 = vmatmul.bf16.gmra.mxu0 %v283
  %v1597 = vpop.f32.mrf.mxu0
  %v1598 = vadd.f32 %v1524, %v1597
  %v1599 = vpop.f32.mrf.mxu0
  %v1600 = vadd.f32 %v1526, %v1599
  %1601 = vmatmul.bf16.gmra.mxu0 %v285
  %v1602 = vpop.f32.mrf.mxu0
  %v1603 = vadd.f32 %v1529, %v1602
  %v1604 = vpop.f32.mrf.mxu0
  %v1605 = vadd.f32 %v1531, %v1604
  %1606 = vmatmul.bf16.gmra.mxu0 %v287
  %v1607 = vpop.f32.mrf.mxu0
  %v1608 = vadd.f32 %v1534, %v1607
  %v1609 = vpop.f32.mrf.mxu0
  %v1610 = vadd.f32 %v1536, %v1609
  %1611 = vmatmul.bf16.gmra.mxu0 %v289
  %v1612 = vpop.f32.mrf.mxu0
  %v1613 = vadd.f32 %v1539, %v1612
  %v1614 = vpop.f32.mrf.mxu0
  %v1615 = vadd.f32 %v1541, %v1614
  %1616 = vmatmul.bf16.gmra.mxu0 %v291
  %v1617 = vpop.f32.mrf.mxu0
  %v1618 = vadd.f32 %v1544, %v1617
  %v1619 = vpop.f32.mrf.mxu0
  %v1620 = vadd.f32 %v1546, %v1619
  %1621 = vmatmul.bf16.gmra.mxu0 %v293
  %v1622 = vpop.f32.mrf.mxu0
  %v1623 = vadd.f32 %v1549, %v1622
  %v1624 = vpop.f32.mrf.mxu0
  %v1625 = vadd.f32 %v1551, %v1624
  %1626 = vmatmul.bf16.gmra.mxu0 %v295
  %v1627 = vpop.f32.mrf.mxu0
  %v1628 = vadd.f32 %v1554, %v1627
  %v1629 = vpop.f32.mrf.mxu0
  %v1630 = vadd.f32 %v1556, %v1629
  %1631 = vmatmul.bf16.gmra.mxu0 %v297
  %v1632 = vpop.f32.mrf.mxu0
  %v1633 = vadd.f32 %v1559, %v1632
  %v1634 = vpop.f32.mrf.mxu0
  %v1635 = vadd.f32 %v1561, %v1634
  %1636 = vmatmul.bf16.gmra.mxu0 %v299
  %v1637 = vpop.f32.mrf.mxu0
  %v1638 = vadd.f32 %v1564, %v1637
  %v1639 = vpop.f32.mrf.mxu0
  %v1640 = vadd.f32 %v1566, %v1639
  %1641 = vdwg.mxu0
  %1642 = vmatpush.bf16.msra.mxu0 %v732
  %1643 = vmatpush.bf16.msra.mxu0 %v725
  %1644 = vmatpush.bf16.msra.mxu0 %v718
  %1645 = vmatpush.bf16.msra.mxu0 %v711
  %1646 = vmatpush.bf16.msra.mxu0 %v704
  %1647 = vmatpush.bf16.msra.mxu0 %v697
  %1648 = vmatpush.bf16.msra.mxu0 %v690
  %1649 = vmatpush.bf16.msra.mxu0 %v683
  %1650 = vmatmul.bf16.gmra.mxu0 %v274
  %v1651 = vpop.f32.mrf.mxu0
  %v1652 = vadd.f32 0.0, %v1651
  %v1653 = vpop.f32.mrf.mxu0
  %v1654 = vadd.f32 0.0, %v1653
  %1655 = vmatmul.bf16.gmra.mxu0 %v276
  %v1656 = vpop.f32.mrf.mxu0
  %v1657 = vadd.f32 0.0, %v1656
  %v1658 = vpop.f32.mrf.mxu0
  %v1659 = vadd.f32 0.0, %v1658
  %1660 = vmatmul.bf16.gmra.mxu0 %v278
  %v1661 = vpop.f32.mrf.mxu0
  %v1662 = vadd.f32 0.0, %v1661
  %v1663 = vpop.f32.mrf.mxu0
  %v1664 = vadd.f32 0.0, %v1663
  %1665 = vmatmul.bf16.gmra.mxu0 %v280
  %v1666 = vpop.f32.mrf.mxu0
  %v1667 = vadd.f32 0.0, %v1666
  %v1668 = vpop.f32.mrf.mxu0
  %v1669 = vadd.f32 0.0, %v1668
  %1670 = vmatmul.bf16.gmra.mxu0 %v282
  %v1671 = vpop.f32.mrf.mxu0
  %v1672 = vadd.f32 0.0, %v1671
  %v1673 = vpop.f32.mrf.mxu0
  %v1674 = vadd.f32 0.0, %v1673
  %1675 = vmatmul.bf16.gmra.mxu0 %v284
  %v1676 = vpop.f32.mrf.mxu0
  %v1677 = vadd.f32 0.0, %v1676
  %v1678 = vpop.f32.mrf.mxu0
  %v1679 = vadd.f32 0.0, %v1678
  %1680 = vmatmul.bf16.gmra.mxu0 %v286
  %v1681 = vpop.f32.mrf.mxu0
  %v1682 = vadd.f32 0.0, %v1681
  %v1683 = vpop.f32.mrf.mxu0
  %v1684 = vadd.f32 0.0, %v1683
  %1685 = vmatmul.bf16.gmra.mxu0 %v288
  %v1686 = vpop.f32.mrf.mxu0
  %v1687 = vadd.f32 0.0, %v1686
  %v1688 = vpop.f32.mrf.mxu0
  %v1689 = vadd.f32 0.0, %v1688
  %1690 = vmatmul.bf16.gmra.mxu0 %v290
  %v1691 = vpop.f32.mrf.mxu0
  %v1692 = vadd.f32 0.0, %v1691
  %v1693 = vpop.f32.mrf.mxu0
  %v1694 = vadd.f32 0.0, %v1693
  %1695 = vmatmul.bf16.gmra.mxu0 %v292
  %v1696 = vpop.f32.mrf.mxu0
  %v1697 = vadd.f32 0.0, %v1696
  %v1698 = vpop.f32.mrf.mxu0
  %v1699 = vadd.f32 0.0, %v1698
  %1700 = vmatmul.bf16.gmra.mxu0 %v294
  %v1701 = vpop.f32.mrf.mxu0
  %v1702 = vadd.f32 0.0, %v1701
  %v1703 = vpop.f32.mrf.mxu0
  %v1704 = vadd.f32 0.0, %v1703
  %1705 = vmatmul.bf16.gmra.mxu0 %v296
  %v1706 = vpop.f32.mrf.mxu0
  %v1707 = vadd.f32 0.0, %v1706
  %v1708 = vpop.f32.mrf.mxu0
  %v1709 = vadd.f32 0.0, %v1708
  %1710 = vmatmul.bf16.gmra.mxu0 %v298
  %v1711 = vpop.f32.mrf.mxu0
  %v1712 = vadd.f32 0.0, %v1711
  %v1713 = vpop.f32.mrf.mxu0
  %v1714 = vadd.f32 0.0, %v1713
  %1715 = vdwg.mxu0
  %1716 = vmatpush.bf16.msra.mxu0 %v788
  %1717 = vmatpush.bf16.msra.mxu0 %v781
  %1718 = vmatpush.bf16.msra.mxu0 %v774
  %1719 = vmatpush.bf16.msra.mxu0 %v767
  %1720 = vmatpush.bf16.msra.mxu0 %v760
  %1721 = vmatpush.bf16.msra.mxu0 %v753
  %1722 = vmatpush.bf16.msra.mxu0 %v746
  %1723 = vmatpush.bf16.msra.mxu0 %v739
  %1724 = vmatmul.bf16.gmra.mxu0 %v275
  %v1725 = vpop.f32.mrf.mxu0
  %v1726 = vadd.f32 %v1652, %v1725
  %v1727 = vpop.f32.mrf.mxu0
  %v1728 = vadd.f32 %v1654, %v1727
  %1729 = vmatmul.bf16.gmra.mxu0 %v277
  %v1730 = vpop.f32.mrf.mxu0
  %v1731 = vadd.f32 %v1657, %v1730
  %v1732 = vpop.f32.mrf.mxu0
  %v1733 = vadd.f32 %v1659, %v1732
  %1734 = vmatmul.bf16.gmra.mxu0 %v279
  %v1735 = vpop.f32.mrf.mxu0
  %v1736 = vadd.f32 %v1662, %v1735
  %v1737 = vpop.f32.mrf.mxu0
  %v1738 = vadd.f32 %v1664, %v1737
  %1739 = vmatmul.bf16.gmra.mxu0 %v281
  %v1740 = vpop.f32.mrf.mxu0
  %v1741 = vadd.f32 %v1667, %v1740
  %v1742 = vpop.f32.mrf.mxu0
  %v1743 = vadd.f32 %v1669, %v1742
  %1744 = vmatmul.bf16.gmra.mxu0 %v283
  %v1745 = vpop.f32.mrf.mxu0
  %v1746 = vadd.f32 %v1672, %v1745
  %v1747 = vpop.f32.mrf.mxu0
  %v1748 = vadd.f32 %v1674, %v1747
  %1749 = vmatmul.bf16.gmra.mxu0 %v285
  %v1750 = vpop.f32.mrf.mxu0
  %v1751 = vadd.f32 %v1677, %v1750
  %v1752 = vpop.f32.mrf.mxu0
  %v1753 = vadd.f32 %v1679, %v1752
  %1754 = vmatmul.bf16.gmra.mxu0 %v287
  %v1755 = vpop.f32.mrf.mxu0
  %v1756 = vadd.f32 %v1682, %v1755
  %v1757 = vpop.f32.mrf.mxu0
  %v1758 = vadd.f32 %v1684, %v1757
  %1759 = vmatmul.bf16.gmra.mxu0 %v289
  %v1760 = vpop.f32.mrf.mxu0
  %v1761 = vadd.f32 %v1687, %v1760
  %v1762 = vpop.f32.mrf.mxu0
  %v1763 = vadd.f32 %v1689, %v1762
  %1764 = vmatmul.bf16.gmra.mxu0 %v291
  %v1765 = vpop.f32.mrf.mxu0
  %v1766 = vadd.f32 %v1692, %v1765
  %v1767 = vpop.f32.mrf.mxu0
  %v1768 = vadd.f32 %v1694, %v1767
  %1769 = vmatmul.bf16.gmra.mxu0 %v293
  %v1770 = vpop.f32.mrf.mxu0
  %v1771 = vadd.f32 %v1697, %v1770
  %v1772 = vpop.f32.mrf.mxu0
  %v1773 = vadd.f32 %v1699, %v1772
  %1774 = vmatmul.bf16.gmra.mxu0 %v295
  %v1775 = vpop.f32.mrf.mxu0
  %v1776 = vadd.f32 %v1702, %v1775
  %v1777 = vpop.f32.mrf.mxu0
  %v1778 = vadd.f32 %v1704, %v1777
  %1779 = vmatmul.bf16.gmra.mxu0 %v297
  %v1780 = vpop.f32.mrf.mxu0
  %v1781 = vadd.f32 %v1707, %v1780
  %v1782 = vpop.f32.mrf.mxu0
  %v1783 = vadd.f32 %v1709, %v1782
  %1784 = vmatmul.bf16.gmra.mxu0 %v299
  %v1785 = vpop.f32.mrf.mxu0
  %v1786 = vadd.f32 %v1712, %v1785
  %v1787 = vpop.f32.mrf.mxu0
  %v1788 = vadd.f32 %v1714, %v1787
  %1789 = vdwg.mxu0
  %1790 = vmatpush.bf16.msra.mxu0 %v733
  %1791 = vmatpush.bf16.msra.mxu0 %v726
  %1792 = vmatpush.bf16.msra.mxu0 %v719
  %1793 = vmatpush.bf16.msra.mxu0 %v712
  %1794 = vmatpush.bf16.msra.mxu0 %v705
  %1795 = vmatpush.bf16.msra.mxu0 %v698
  %1796 = vmatpush.bf16.msra.mxu0 %v691
  %1797 = vmatpush.bf16.msra.mxu0 %v684
  %1798 = vmatmul.bf16.gmra.mxu0 %v274
  %v1799 = vpop.f32.mrf.mxu0
  %v1800 = vadd.f32 0.0, %v1799
  %v1801 = vpop.f32.mrf.mxu0
  %v1802 = vadd.f32 0.0, %v1801
  %1803 = vmatmul.bf16.gmra.mxu0 %v276
  %v1804 = vpop.f32.mrf.mxu0
  %v1805 = vadd.f32 0.0, %v1804
  %v1806 = vpop.f32.mrf.mxu0
  %v1807 = vadd.f32 0.0, %v1806
  %1808 = vmatmul.bf16.gmra.mxu0 %v278
  %v1809 = vpop.f32.mrf.mxu0
  %v1810 = vadd.f32 0.0, %v1809
  %v1811 = vpop.f32.mrf.mxu0
  %v1812 = vadd.f32 0.0, %v1811
  %1813 = vmatmul.bf16.gmra.mxu0 %v280
  %v1814 = vpop.f32.mrf.mxu0
  %v1815 = vadd.f32 0.0, %v1814
  %v1816 = vpop.f32.mrf.mxu0
  %v1817 = vadd.f32 0.0, %v1816
  %1818 = vmatmul.bf16.gmra.mxu0 %v282
  %v1819 = vpop.f32.mrf.mxu0
  %v1820 = vadd.f32 0.0, %v1819
  %v1821 = vpop.f32.mrf.mxu0
  %v1822 = vadd.f32 0.0, %v1821
  %1823 = vmatmul.bf16.gmra.mxu0 %v284
  %v1824 = vpop.f32.mrf.mxu0
  %v1825 = vadd.f32 0.0, %v1824
  %v1826 = vpop.f32.mrf.mxu0
  %v1827 = vadd.f32 0.0, %v1826
  %1828 = vmatmul.bf16.gmra.mxu0 %v286
  %v1829 = vpop.f32.mrf.mxu0
  %v1830 = vadd.f32 0.0, %v1829
  %v1831 = vpop.f32.mrf.mxu0
  %v1832 = vadd.f32 0.0, %v1831
  %1833 = vmatmul.bf16.gmra.mxu0 %v288
  %v1834 = vpop.f32.mrf.mxu0
  %v1835 = vadd.f32 0.0, %v1834
  %v1836 = vpop.f32.mrf.mxu0
  %v1837 = vadd.f32 0.0, %v1836
  %1838 = vmatmul.bf16.gmra.mxu0 %v290
  %v1839 = vpop.f32.mrf.mxu0
  %v1840 = vadd.f32 0.0, %v1839
  %v1841 = vpop.f32.mrf.mxu0
  %v1842 = vadd.f32 0.0, %v1841
  %1843 = vmatmul.bf16.gmra.mxu0 %v292
  %v1844 = vpop.f32.mrf.mxu0
  %v1845 = vadd.f32 0.0, %v1844
  %v1846 = vpop.f32.mrf.mxu0
  %v1847 = vadd.f32 0.0, %v1846
  %1848 = vmatmul.bf16.gmra.mxu0 %v294
  %v1849 = vpop.f32.mrf.mxu0
  %v1850 = vadd.f32 0.0, %v1849
  %v1851 = vpop.f32.mrf.mxu0
  %v1852 = vadd.f32 0.0, %v1851
  %1853 = vmatmul.bf16.gmra.mxu0 %v296
  %v1854 = vpop.f32.mrf.mxu0
  %v1855 = vadd.f32 0.0, %v1854
  %v1856 = vpop.f32.mrf.mxu0
  %v1857 = vadd.f32 0.0, %v1856
  %1858 = vmatmul.bf16.gmra.mxu0 %v298
  %v1859 = vpop.f32.mrf.mxu0
  %v1860 = vadd.f32 0.0, %v1859
  %v1861 = vpop.f32.mrf.mxu0
  %v1862 = vadd.f32 0.0, %v1861
  %1863 = vdwg.mxu0
  %1864 = vmatpush.bf16.msra.mxu0 %v789
  %1865 = vmatpush.bf16.msra.mxu0 %v782
  %1866 = vmatpush.bf16.msra.mxu0 %v775
  %1867 = vmatpush.bf16.msra.mxu0 %v768
  %1868 = vmatpush.bf16.msra.mxu0 %v761
  %1869 = vmatpush.bf16.msra.mxu0 %v754
  %1870 = vmatpush.bf16.msra.mxu0 %v747
  %1871 = vmatpush.bf16.msra.mxu0 %v740
  %1872 = vmatmul.bf16.gmra.mxu0 %v275
  %v1873 = vpop.f32.mrf.mxu0
  %v1874 = vadd.f32 %v1800, %v1873
  %v1875 = vpop.f32.mrf.mxu0
  %v1876 = vadd.f32 %v1802, %v1875
  %1877 = vmatmul.bf16.gmra.mxu0 %v277
  %v1878 = vpop.f32.mrf.mxu0
  %v1879 = vadd.f32 %v1805, %v1878
  %v1880 = vpop.f32.mrf.mxu0
  %v1881 = vadd.f32 %v1807, %v1880
  %1882 = vmatmul.bf16.gmra.mxu0 %v279
  %v1883 = vpop.f32.mrf.mxu0
  %v1884 = vadd.f32 %v1810, %v1883
  %v1885 = vpop.f32.mrf.mxu0
  %v1886 = vadd.f32 %v1812, %v1885
  %1887 = vmatmul.bf16.gmra.mxu0 %v281
  %v1888 = vpop.f32.mrf.mxu0
  %v1889 = vadd.f32 %v1815, %v1888
  %v1890 = vpop.f32.mrf.mxu0
  %v1891 = vadd.f32 %v1817, %v1890
  %1892 = vmatmul.bf16.gmra.mxu0 %v283
  %v1893 = vpop.f32.mrf.mxu0
  %v1894 = vadd.f32 %v1820, %v1893
  %v1895 = vpop.f32.mrf.mxu0
  %v1896 = vadd.f32 %v1822, %v1895
  %1897 = vmatmul.bf16.gmra.mxu0 %v285
  %v1898 = vpop.f32.mrf.mxu0
  %v1899 = vadd.f32 %v1825, %v1898
  %v1900 = vpop.f32.mrf.mxu0
  %v1901 = vadd.f32 %v1827, %v1900
  %1902 = vmatmul.bf16.gmra.mxu0 %v287
  %v1903 = vpop.f32.mrf.mxu0
  %v1904 = vadd.f32 %v1830, %v1903
  %v1905 = vpop.f32.mrf.mxu0
  %v1906 = vadd.f32 %v1832, %v1905
  %1907 = vmatmul.bf16.gmra.mxu0 %v289
  %v1908 = vpop.f32.mrf.mxu0
  %v1909 = vadd.f32 %v1835, %v1908
  %v1910 = vpop.f32.mrf.mxu0
  %v1911 = vadd.f32 %v1837, %v1910
  %1912 = vmatmul.bf16.gmra.mxu0 %v291
  %v1913 = vpop.f32.mrf.mxu0
  %v1914 = vadd.f32 %v1840, %v1913
  %v1915 = vpop.f32.mrf.mxu0
  %v1916 = vadd.f32 %v1842, %v1915
  %1917 = vmatmul.bf16.gmra.mxu0 %v293
  %v1918 = vpop.f32.mrf.mxu0
  %v1919 = vadd.f32 %v1845, %v1918
  %v1920 = vpop.f32.mrf.mxu0
  %v1921 = vadd.f32 %v1847, %v1920
  %1922 = vmatmul.bf16.gmra.mxu0 %v295
  %v1923 = vpop.f32.mrf.mxu0
  %v1924 = vadd.f32 %v1850, %v1923
  %v1925 = vpop.f32.mrf.mxu0
  %v1926 = vadd.f32 %v1852, %v1925
  %1927 = vmatmul.bf16.gmra.mxu0 %v297
  %v1928 = vpop.f32.mrf.mxu0
  %v1929 = vadd.f32 %v1855, %v1928
  %v1930 = vpop.f32.mrf.mxu0
  %v1931 = vadd.f32 %v1857, %v1930
  %1932 = vmatmul.bf16.gmra.mxu0 %v299
  %v1933 = vpop.f32.mrf.mxu0
  %v1934 = vadd.f32 %v1860, %v1933
  %v1935 = vpop.f32.mrf.mxu0
  %v1936 = vadd.f32 %v1862, %v1935
  %1937 = vdwg.mxu0
  %v1938 = vadd.f32 %v986, %v988
  %v1939 = vadd.f32 %v1938, %v991
  %v1940 = vadd.f32 %v1939, %v993
  %v1941 = vadd.f32 %v1940, %v996
  %v1942 = vadd.f32 %v1941, %v998
  %v1943 = vadd.f32 %v1942, %v1001
  %v1944 = vadd.f32 %v1943, %v1003
  %v1945 = vadd.f32 %v1944, %v1006
  %v1946 = vadd.f32 %v1945, %v1008
  %v1947 = vadd.f32 %v1946, %v1011
  %v1948 = vadd.f32 %v1947, %v1013
  %v1949 = vadd.f32 %v1948, %v1016
  %v1950 = vadd.f32 %v1949, %v1018
  %v1951 = vadd.f32 %v1950, %v1021
  %v1952 = vadd.f32 %v1951, %v1023
  %v1953 = vadd.f32 %v1952, %v1026
  %v1954 = vadd.f32 %v1953, %v1028
  %v1955 = vadd.f32 %v1954, %v1031
  %v1956 = vadd.f32 %v1955, %v1033
  %v1957 = vadd.f32 %v1956, %v1036
  %v1958 = vadd.f32 %v1957, %v1038
  %v1959 = vadd.f32 %v1958, %v1041
  %v1960 = vadd.f32 %v1959, %v1043
  %v1961 = vadd.f32 %v1960, %v1046
  %v1962 = vadd.f32 %v1961, %v1048
  %v1963 = vrot.slane %v1962, 4
  %v1964 = vadd.f32 %v1962, %v1963
  %v1965 = vrot.slane %v1964, 2
  %v1966 = vadd.f32 %v1964, %v1965
  %v1967 = vrot.slane %v1966, 1
  %v1968 = vadd.f32 %v1966, %v1967
  %v1969 = vadd.f32 %v1134, %v1136
  %v1970 = vadd.f32 %v1969, %v1139
  %v1971 = vadd.f32 %v1970, %v1141
  %v1972 = vadd.f32 %v1971, %v1144
  %v1973 = vadd.f32 %v1972, %v1146
  %v1974 = vadd.f32 %v1973, %v1149
  %v1975 = vadd.f32 %v1974, %v1151
  %v1976 = vadd.f32 %v1975, %v1154
  %v1977 = vadd.f32 %v1976, %v1156
  %v1978 = vadd.f32 %v1977, %v1159
  %v1979 = vadd.f32 %v1978, %v1161
  %v1980 = vadd.f32 %v1979, %v1164
  %v1981 = vadd.f32 %v1980, %v1166
  %v1982 = vadd.f32 %v1981, %v1169
  %v1983 = vadd.f32 %v1982, %v1171
  %v1984 = vadd.f32 %v1983, %v1174
  %v1985 = vadd.f32 %v1984, %v1176
  %v1986 = vadd.f32 %v1985, %v1179
  %v1987 = vadd.f32 %v1986, %v1181
  %v1988 = vadd.f32 %v1987, %v1184
  %v1989 = vadd.f32 %v1988, %v1186
  %v1990 = vadd.f32 %v1989, %v1189
  %v1991 = vadd.f32 %v1990, %v1191
  %v1992 = vadd.f32 %v1991, %v1194
  %v1993 = vadd.f32 %v1992, %v1196
  %v1994 = vrot.slane %v1993, 4
  %v1995 = vadd.f32 %v1993, %v1994
  %v1996 = vrot.slane %v1995, 2
  %v1997 = vadd.f32 %v1995, %v1996
  %v1998 = vrot.slane %v1997, 1
  %v1999 = vadd.f32 %v1997, %v1998
  %v2000 = vadd.f32 %v1282, %v1284
  %v2001 = vadd.f32 %v2000, %v1287
  %v2002 = vadd.f32 %v2001, %v1289
  %v2003 = vadd.f32 %v2002, %v1292
  %v2004 = vadd.f32 %v2003, %v1294
  %v2005 = vadd.f32 %v2004, %v1297
  %v2006 = vadd.f32 %v2005, %v1299
  %v2007 = vadd.f32 %v2006, %v1302
  %v2008 = vadd.f32 %v2007, %v1304
  %v2009 = vadd.f32 %v2008, %v1307
  %v2010 = vadd.f32 %v2009, %v1309
  %v2011 = vadd.f32 %v2010, %v1312
  %v2012 = vadd.f32 %v2011, %v1314
  %v2013 = vadd.f32 %v2012, %v1317
  %v2014 = vadd.f32 %v2013, %v1319
  %v2015 = vadd.f32 %v2014, %v1322
  %v2016 = vadd.f32 %v2015, %v1324
  %v2017 = vadd.f32 %v2016, %v1327
  %v2018 = vadd.f32 %v2017, %v1329
  %v2019 = vadd.f32 %v2018, %v1332
  %v2020 = vadd.f32 %v2019, %v1334
  %v2021 = vadd.f32 %v2020, %v1337
  %v2022 = vadd.f32 %v2021, %v1339
  %v2023 = vadd.f32 %v2022, %v1342
  %v2024 = vadd.f32 %v2023, %v1344
  %v2025 = vrot.slane %v2024, 4
  %v2026 = vadd.f32 %v2024, %v2025
  %v2027 = vrot.slane %v2026, 2
  %v2028 = vadd.f32 %v2026, %v2027
  %v2029 = vrot.slane %v2028, 1
  %v2030 = vadd.f32 %v2028, %v2029
  %v2031 = vadd.f32 %v1430, %v1432
  %v2032 = vadd.f32 %v2031, %v1435
  %v2033 = vadd.f32 %v2032, %v1437
  %v2034 = vadd.f32 %v2033, %v1440
  %v2035 = vadd.f32 %v2034, %v1442
  %v2036 = vadd.f32 %v2035, %v1445
  %v2037 = vadd.f32 %v2036, %v1447
  %v2038 = vadd.f32 %v2037, %v1450
  %v2039 = vadd.f32 %v2038, %v1452
  %v2040 = vadd.f32 %v2039, %v1455
  %v2041 = vadd.f32 %v2040, %v1457
  %v2042 = vadd.f32 %v2041, %v1460
  %v2043 = vadd.f32 %v2042, %v1462
  %v2044 = vadd.f32 %v2043, %v1465
  %v2045 = vadd.f32 %v2044, %v1467
  %v2046 = vadd.f32 %v2045, %v1470
  %v2047 = vadd.f32 %v2046, %v1472
  %v2048 = vadd.f32 %v2047, %v1475
  %v2049 = vadd.f32 %v2048, %v1477
  %v2050 = vadd.f32 %v2049, %v1480
  %v2051 = vadd.f32 %v2050, %v1482
  %v2052 = vadd.f32 %v2051, %v1485
  %v2053 = vadd.f32 %v2052, %v1487
  %v2054 = vadd.f32 %v2053, %v1490
  %v2055 = vadd.f32 %v2054, %v1492
  %v2056 = vrot.slane %v2055, 4
  %v2057 = vadd.f32 %v2055, %v2056
  %v2058 = vrot.slane %v2057, 2
  %v2059 = vadd.f32 %v2057, %v2058
  %v2060 = vrot.slane %v2059, 1
  %v2061 = vadd.f32 %v2059, %v2060
  %v2062 = vadd.f32 %v1578, %v1580
  %v2063 = vadd.f32 %v2062, %v1583
  %v2064 = vadd.f32 %v2063, %v1585
  %v2065 = vadd.f32 %v2064, %v1588
  %v2066 = vadd.f32 %v2065, %v1590
  %v2067 = vadd.f32 %v2066, %v1593
  %v2068 = vadd.f32 %v2067, %v1595
  %v2069 = vadd.f32 %v2068, %v1598
  %v2070 = vadd.f32 %v2069, %v1600
  %v2071 = vadd.f32 %v2070, %v1603
  %v2072 = vadd.f32 %v2071, %v1605
  %v2073 = vadd.f32 %v2072, %v1608
  %v2074 = vadd.f32 %v2073, %v1610
  %v2075 = vadd.f32 %v2074, %v1613
  %v2076 = vadd.f32 %v2075, %v1615
  %v2077 = vadd.f32 %v2076, %v1618
  %v2078 = vadd.f32 %v2077, %v1620
  %v2079 = vadd.f32 %v2078, %v1623
  %v2080 = vadd.f32 %v2079, %v1625
  %v2081 = vadd.f32 %v2080, %v1628
  %v2082 = vadd.f32 %v2081, %v1630
  %v2083 = vadd.f32 %v2082, %v1633
  %v2084 = vadd.f32 %v2083, %v1635
  %v2085 = vadd.f32 %v2084, %v1638
  %v2086 = vadd.f32 %v2085, %v1640
  %v2087 = vrot.slane %v2086, 4
  %v2088 = vadd.f32 %v2086, %v2087
  %v2089 = vrot.slane %v2088, 2
  %v2090 = vadd.f32 %v2088, %v2089
  %v2091 = vrot.slane %v2090, 1
  %v2092 = vadd.f32 %v2090, %v2091
  %v2093 = vadd.f32 %v1726, %v1728
  %v2094 = vadd.f32 %v2093, %v1731
  %v2095 = vadd.f32 %v2094, %v1733
  %v2096 = vadd.f32 %v2095, %v1736
  %v2097 = vadd.f32 %v2096, %v1738
  %v2098 = vadd.f32 %v2097, %v1741
  %v2099 = vadd.f32 %v2098, %v1743
  %v2100 = vadd.f32 %v2099, %v1746
  %v2101 = vadd.f32 %v2100, %v1748
  %v2102 = vadd.f32 %v2101, %v1751
  %v2103 = vadd.f32 %v2102, %v1753
  %v2104 = vadd.f32 %v2103, %v1756
  %v2105 = vadd.f32 %v2104, %v1758
  %v2106 = vadd.f32 %v2105, %v1761
  %v2107 = vadd.f32 %v2106, %v1763
  %v2108 = vadd.f32 %v2107, %v1766
  %v2109 = vadd.f32 %v2108, %v1768
  %v2110 = vadd.f32 %v2109, %v1771
  %v2111 = vadd.f32 %v2110, %v1773
  %v2112 = vadd.f32 %v2111, %v1776
  %v2113 = vadd.f32 %v2112, %v1778
  %v2114 = vadd.f32 %v2113, %v1781
  %v2115 = vadd.f32 %v2114, %v1783
  %v2116 = vadd.f32 %v2115, %v1786
  %v2117 = vadd.f32 %v2116, %v1788
  %v2118 = vrot.slane %v2117, 4
  %v2119 = vadd.f32 %v2117, %v2118
  %v2120 = vrot.slane %v2119, 2
  %v2121 = vadd.f32 %v2119, %v2120
  %v2122 = vrot.slane %v2121, 1
  %v2123 = vadd.f32 %v2121, %v2122
  %v2124 = vadd.f32 %v1874, %v1876
  %v2125 = vadd.f32 %v2124, %v1879
  %v2126 = vadd.f32 %v2125, %v1881
  %v2127 = vadd.f32 %v2126, %v1884
  %v2128 = vadd.f32 %v2127, %v1886
  %v2129 = vadd.f32 %v2128, %v1889
  %v2130 = vadd.f32 %v2129, %v1891
  %v2131 = vadd.f32 %v2130, %v1894
  %v2132 = vadd.f32 %v2131, %v1896
  %v2133 = vadd.f32 %v2132, %v1899
  %v2134 = vadd.f32 %v2133, %v1901
  %v2135 = vadd.f32 %v2134, %v1904
  %v2136 = vadd.f32 %v2135, %v1906
  %v2137 = vadd.f32 %v2136, %v1909
  %v2138 = vadd.f32 %v2137, %v1911
  %v2139 = vadd.f32 %v2138, %v1914
  %v2140 = vadd.f32 %v2139, %v1916
  %v2141 = vadd.f32 %v2140, %v1919
  %v2142 = vadd.f32 %v2141, %v1921
  %v2143 = vadd.f32 %v2142, %v1924
  %v2144 = vadd.f32 %v2143, %v1926
  %v2145 = vadd.f32 %v2144, %v1929
  %v2146 = vadd.f32 %v2145, %v1931
  %v2147 = vadd.f32 %v2146, %v1934
  %v2148 = vadd.f32 %v2147, %v1936
  %v2149 = vrot.slane %v2148, 4
  %v2150 = vadd.f32 %v2148, %v2149
  %v2151 = vrot.slane %v2150, 2
  %v2152 = vadd.f32 %v2150, %v2151
  %v2153 = vrot.slane %v2152, 1
  %v2154 = vadd.f32 %v2152, %v2153
  %v2155 = vmul.f32 %v986, %v986
  %v2156 = vmul.f32 %v1134, %v1134
  %v2157 = vmul.f32 %v1282, %v1282
  %v2158 = vmul.f32 %v1430, %v1430
  %v2159 = vmul.f32 %v1578, %v1578
  %v2160 = vmul.f32 %v1726, %v1726
  %v2161 = vmul.f32 %v1874, %v1874
  %v2162 = vmul.f32 %v988, %v988
  %v2163 = vmul.f32 %v1136, %v1136
  %v2164 = vmul.f32 %v1284, %v1284
  %v2165 = vmul.f32 %v1432, %v1432
  %v2166 = vmul.f32 %v1580, %v1580
  %v2167 = vmul.f32 %v1728, %v1728
  %v2168 = vmul.f32 %v1876, %v1876
  %v2169 = vmul.f32 %v991, %v991
  %v2170 = vmul.f32 %v1139, %v1139
  %v2171 = vmul.f32 %v1287, %v1287
  %v2172 = vmul.f32 %v1435, %v1435
  %v2173 = vmul.f32 %v1583, %v1583
  %v2174 = vmul.f32 %v1731, %v1731
  %v2175 = vmul.f32 %v1879, %v1879
  %v2176 = vmul.f32 %v993, %v993
  %v2177 = vmul.f32 %v1141, %v1141
  %v2178 = vmul.f32 %v1289, %v1289
  %v2179 = vmul.f32 %v1437, %v1437
  %v2180 = vmul.f32 %v1585, %v1585
  %v2181 = vmul.f32 %v1733, %v1733
  %v2182 = vmul.f32 %v1881, %v1881
  %v2183 = vmul.f32 %v996, %v996
  %v2184 = vmul.f32 %v1144, %v1144
  %v2185 = vmul.f32 %v1292, %v1292
  %v2186 = vmul.f32 %v1440, %v1440
  %v2187 = vmul.f32 %v1588, %v1588
  %v2188 = vmul.f32 %v1736, %v1736
  %v2189 = vmul.f32 %v1884, %v1884
  %v2190 = vmul.f32 %v998, %v998
  %v2191 = vmul.f32 %v1146, %v1146
  %v2192 = vmul.f32 %v1294, %v1294
  %v2193 = vmul.f32 %v1442, %v1442
  %v2194 = vmul.f32 %v1590, %v1590
  %v2195 = vmul.f32 %v1738, %v1738
  %v2196 = vmul.f32 %v1886, %v1886
  %v2197 = vmul.f32 %v1001, %v1001
  %v2198 = vmul.f32 %v1149, %v1149
  %v2199 = vmul.f32 %v1297, %v1297
  %v2200 = vmul.f32 %v1445, %v1445
  %v2201 = vmul.f32 %v1593, %v1593
  %v2202 = vmul.f32 %v1741, %v1741
  %v2203 = vmul.f32 %v1889, %v1889
  %v2204 = vmul.f32 %v1003, %v1003
  %v2205 = vmul.f32 %v1151, %v1151
  %v2206 = vmul.f32 %v1299, %v1299
  %v2207 = vmul.f32 %v1447, %v1447
  %v2208 = vmul.f32 %v1595, %v1595
  %v2209 = vmul.f32 %v1743, %v1743
  %v2210 = vmul.f32 %v1891, %v1891
  %v2211 = vmul.f32 %v1006, %v1006
  %v2212 = vmul.f32 %v1154, %v1154
  %v2213 = vmul.f32 %v1302, %v1302
  %v2214 = vmul.f32 %v1450, %v1450
  %v2215 = vmul.f32 %v1598, %v1598
  %v2216 = vmul.f32 %v1746, %v1746
  %v2217 = vmul.f32 %v1894, %v1894
  %v2218 = vmul.f32 %v1008, %v1008
  %v2219 = vmul.f32 %v1156, %v1156
  %v2220 = vmul.f32 %v1304, %v1304
  %v2221 = vmul.f32 %v1452, %v1452
  %v2222 = vmul.f32 %v1600, %v1600
  %v2223 = vmul.f32 %v1748, %v1748
  %v2224 = vmul.f32 %v1896, %v1896
  %v2225 = vmul.f32 %v1011, %v1011
  %v2226 = vmul.f32 %v1159, %v1159
  %v2227 = vmul.f32 %v1307, %v1307
  %v2228 = vmul.f32 %v1455, %v1455
  %v2229 = vmul.f32 %v1603, %v1603
  %v2230 = vmul.f32 %v1751, %v1751
  %v2231 = vmul.f32 %v1899, %v1899
  %v2232 = vmul.f32 %v1013, %v1013
  %v2233 = vmul.f32 %v1161, %v1161
  %v2234 = vmul.f32 %v1309, %v1309
  %v2235 = vmul.f32 %v1457, %v1457
  %v2236 = vmul.f32 %v1605, %v1605
  %v2237 = vmul.f32 %v1753, %v1753
  %v2238 = vmul.f32 %v1901, %v1901
  %v2239 = vmul.f32 %v1016, %v1016
  %v2240 = vmul.f32 %v1164, %v1164
  %v2241 = vmul.f32 %v1312, %v1312
  %v2242 = vmul.f32 %v1460, %v1460
  %v2243 = vmul.f32 %v1608, %v1608
  %v2244 = vmul.f32 %v1756, %v1756
  %v2245 = vmul.f32 %v1904, %v1904
  %v2246 = vmul.f32 %v1018, %v1018
  %v2247 = vmul.f32 %v1166, %v1166
  %v2248 = vmul.f32 %v1314, %v1314
  %v2249 = vmul.f32 %v1462, %v1462
  %v2250 = vmul.f32 %v1610, %v1610
  %v2251 = vmul.f32 %v1758, %v1758
  %v2252 = vmul.f32 %v1906, %v1906
  %v2253 = vmul.f32 %v1021, %v1021
  %v2254 = vmul.f32 %v1169, %v1169
  %v2255 = vmul.f32 %v1317, %v1317
  %v2256 = vmul.f32 %v1465, %v1465
  %v2257 = vmul.f32 %v1613, %v1613
  %v2258 = vmul.f32 %v1761, %v1761
  %v2259 = vmul.f32 %v1909, %v1909
  %v2260 = vmul.f32 %v1023, %v1023
  %v2261 = vmul.f32 %v1171, %v1171
  %v2262 = vmul.f32 %v1319, %v1319
  %v2263 = vmul.f32 %v1467, %v1467
  %v2264 = vmul.f32 %v1615, %v1615
  %v2265 = vmul.f32 %v1763, %v1763
  %v2266 = vmul.f32 %v1911, %v1911
  %v2267 = vmul.f32 %v1026, %v1026
  %v2268 = vmul.f32 %v1174, %v1174
  %v2269 = vmul.f32 %v1322, %v1322
  %v2270 = vmul.f32 %v1470, %v1470
  %v2271 = vmul.f32 %v1618, %v1618
  %v2272 = vmul.f32 %v1766, %v1766
  %v2273 = vmul.f32 %v1914, %v1914
  %v2274 = vmul.f32 %v1028, %v1028
  %v2275 = vmul.f32 %v1176, %v1176
  %v2276 = vmul.f32 %v1324, %v1324
  %v2277 = vmul.f32 %v1472, %v1472
  %v2278 = vmul.f32 %v1620, %v1620
  %v2279 = vmul.f32 %v1768, %v1768
  %v2280 = vmul.f32 %v1916, %v1916
  %v2281 = vmul.f32 %v1031, %v1031
  %v2282 = vmul.f32 %v1179, %v1179
  %v2283 = vmul.f32 %v1327, %v1327
  %v2284 = vmul.f32 %v1475, %v1475
  %v2285 = vmul.f32 %v1623, %v1623
  %v2286 = vmul.f32 %v1771, %v1771
  %v2287 = vmul.f32 %v1919, %v1919
  %v2288 = vmul.f32 %v1033, %v1033
  %v2289 = vmul.f32 %v1181, %v1181
  %v2290 = vmul.f32 %v1329, %v1329
  %v2291 = vmul.f32 %v1477, %v1477
  %v2292 = vmul.f32 %v1625, %v1625
  %v2293 = vmul.f32 %v1773, %v1773
  %v2294 = vmul.f32 %v1921, %v1921
  %v2295 = vmul.f32 %v1036, %v1036
  %v2296 = vmul.f32 %v1184, %v1184
  %v2297 = vmul.f32 %v1332, %v1332
  %v2298 = vmul.f32 %v1480, %v1480
  %v2299 = vmul.f32 %v1628, %v1628
  %v2300 = vmul.f32 %v1776, %v1776
  %v2301 = vmul.f32 %v1924, %v1924
  %v2302 = vmul.f32 %v1038, %v1038
  %v2303 = vmul.f32 %v1186, %v1186
  %v2304 = vmul.f32 %v1334, %v1334
  %v2305 = vmul.f32 %v1482, %v1482
  %v2306 = vmul.f32 %v1630, %v1630
  %v2307 = vmul.f32 %v1778, %v1778
  %v2308 = vmul.f32 %v1926, %v1926
  %v2309 = vmul.f32 %v1041, %v1041
  %v2310 = vmul.f32 %v1189, %v1189
  %v2311 = vmul.f32 %v1337, %v1337
  %v2312 = vmul.f32 %v1485, %v1485
  %v2313 = vmul.f32 %v1633, %v1633
  %v2314 = vmul.f32 %v1781, %v1781
  %v2315 = vmul.f32 %v1929, %v1929
  %v2316 = vmul.f32 %v1043, %v1043
  %v2317 = vmul.f32 %v1191, %v1191
  %v2318 = vmul.f32 %v1339, %v1339
  %v2319 = vmul.f32 %v1487, %v1487
  %v2320 = vmul.f32 %v1635, %v1635
  %v2321 = vmul.f32 %v1783, %v1783
  %v2322 = vmul.f32 %v1931, %v1931
  %v2323 = vmul.f32 %v1046, %v1046
  %v2324 = vmul.f32 %v1194, %v1194
  %v2325 = vmul.f32 %v1342, %v1342
  %v2326 = vmul.f32 %v1490, %v1490
  %v2327 = vmul.f32 %v1638, %v1638
  %v2328 = vmul.f32 %v1786, %v1786
  %v2329 = vmul.f32 %v1934, %v1934
  %v2330 = vmul.f32 %v1048, %v1048
  %v2331 = vmul.f32 %v1196, %v1196
  %v2332 = vmul.f32 %v1344, %v1344
  %v2333 = vmul.f32 %v1492, %v1492
  %v2334 = vmul.f32 %v1640, %v1640
  %v2335 = vmul.f32 %v1788, %v1788
  %v2336 = vmul.f32 %v1936, %v1936
  %v2337 = vadd.f32 %v2155, %v2162
  %v2338 = vadd.f32 %v2337, %v2169
  %v2339 = vadd.f32 %v2338, %v2176
  %v2340 = vadd.f32 %v2339, %v2183
  %v2341 = vadd.f32 %v2340, %v2190
  %v2342 = vadd.f32 %v2341, %v2197
  %v2343 = vadd.f32 %v2342, %v2204
  %v2344 = vadd.f32 %v2343, %v2211
  %v2345 = vadd.f32 %v2344, %v2218
  %v2346 = vadd.f32 %v2345, %v2225
  %v2347 = vadd.f32 %v2346, %v2232
  %v2348 = vadd.f32 %v2347, %v2239
  %v2349 = vadd.f32 %v2348, %v2246
  %v2350 = vadd.f32 %v2349, %v2253
  %v2351 = vadd.f32 %v2350, %v2260
  %v2352 = vadd.f32 %v2351, %v2267
  %v2353 = vadd.f32 %v2352, %v2274
  %v2354 = vadd.f32 %v2353, %v2281
  %v2355 = vadd.f32 %v2354, %v2288
  %v2356 = vadd.f32 %v2355, %v2295
  %v2357 = vadd.f32 %v2356, %v2302
  %v2358 = vadd.f32 %v2357, %v2309
  %v2359 = vadd.f32 %v2358, %v2316
  %v2360 = vadd.f32 %v2359, %v2323
  %v2361 = vadd.f32 %v2360, %v2330
  %v2362 = vrot.slane %v2361, 4
  %v2363 = vadd.f32 %v2361, %v2362
  %v2364 = vrot.slane %v2363, 2
  %v2365 = vadd.f32 %v2363, %v2364
  %v2366 = vrot.slane %v2365, 1
  %v2367 = vadd.f32 %v2365, %v2366
  %v2368 = vadd.f32 %v2156, %v2163
  %v2369 = vadd.f32 %v2368, %v2170
  %v2370 = vadd.f32 %v2369, %v2177
  %v2371 = vadd.f32 %v2370, %v2184
  %v2372 = vadd.f32 %v2371, %v2191
  %v2373 = vadd.f32 %v2372, %v2198
  %v2374 = vadd.f32 %v2373, %v2205
  %v2375 = vadd.f32 %v2374, %v2212
  %v2376 = vadd.f32 %v2375, %v2219
  %v2377 = vadd.f32 %v2376, %v2226
  %v2378 = vadd.f32 %v2377, %v2233
  %v2379 = vadd.f32 %v2378, %v2240
  %v2380 = vadd.f32 %v2379, %v2247
  %v2381 = vadd.f32 %v2380, %v2254
  %v2382 = vadd.f32 %v2381, %v2261
  %v2383 = vadd.f32 %v2382, %v2268
  %v2384 = vadd.f32 %v2383, %v2275
  %v2385 = vadd.f32 %v2384, %v2282
  %v2386 = vadd.f32 %v2385, %v2289
  %v2387 = vadd.f32 %v2386, %v2296
  %v2388 = vadd.f32 %v2387, %v2303
  %v2389 = vadd.f32 %v2388, %v2310
  %v2390 = vadd.f32 %v2389, %v2317
  %v2391 = vadd.f32 %v2390, %v2324
  %v2392 = vadd.f32 %v2391, %v2331
  %v2393 = vrot.slane %v2392, 4
  %v2394 = vadd.f32 %v2392, %v2393
  %v2395 = vrot.slane %v2394, 2
  %v2396 = vadd.f32 %v2394, %v2395
  %v2397 = vrot.slane %v2396, 1
  %v2398 = vadd.f32 %v2396, %v2397
  %v2399 = vadd.f32 %v2157, %v2164
  %v2400 = vadd.f32 %v2399, %v2171
  %v2401 = vadd.f32 %v2400, %v2178
  %v2402 = vadd.f32 %v2401, %v2185
  %v2403 = vadd.f32 %v2402, %v2192
  %v2404 = vadd.f32 %v2403, %v2199
  %v2405 = vadd.f32 %v2404, %v2206
  %v2406 = vadd.f32 %v2405, %v2213
  %v2407 = vadd.f32 %v2406, %v2220
  %v2408 = vadd.f32 %v2407, %v2227
  %v2409 = vadd.f32 %v2408, %v2234
  %v2410 = vadd.f32 %v2409, %v2241
  %v2411 = vadd.f32 %v2410, %v2248
  %v2412 = vadd.f32 %v2411, %v2255
  %v2413 = vadd.f32 %v2412, %v2262
  %v2414 = vadd.f32 %v2413, %v2269
  %v2415 = vadd.f32 %v2414, %v2276
  %v2416 = vadd.f32 %v2415, %v2283
  %v2417 = vadd.f32 %v2416, %v2290
  %v2418 = vadd.f32 %v2417, %v2297
  %v2419 = vadd.f32 %v2418, %v2304
  %v2420 = vadd.f32 %v2419, %v2311
  %v2421 = vadd.f32 %v2420, %v2318
  %v2422 = vadd.f32 %v2421, %v2325
  %v2423 = vadd.f32 %v2422, %v2332
  %v2424 = vrot.slane %v2423, 4
  %v2425 = vadd.f32 %v2423, %v2424
  %v2426 = vrot.slane %v2425, 2
  %v2427 = vadd.f32 %v2425, %v2426
  %v2428 = vrot.slane %v2427, 1
  %v2429 = vadd.f32 %v2427, %v2428
  %v2430 = vadd.f32 %v2158, %v2165
  %v2431 = vadd.f32 %v2430, %v2172
  %v2432 = vadd.f32 %v2431, %v2179
  %v2433 = vadd.f32 %v2432, %v2186
  %v2434 = vadd.f32 %v2433, %v2193
  %v2435 = vadd.f32 %v2434, %v2200
  %v2436 = vadd.f32 %v2435, %v2207
  %v2437 = vadd.f32 %v2436, %v2214
  %v2438 = vadd.f32 %v2437, %v2221
  %v2439 = vadd.f32 %v2438, %v2228
  %v2440 = vadd.f32 %v2439, %v2235
  %v2441 = vadd.f32 %v2440, %v2242
  %v2442 = vadd.f32 %v2441, %v2249
  %v2443 = vadd.f32 %v2442, %v2256
  %v2444 = vadd.f32 %v2443, %v2263
  %v2445 = vadd.f32 %v2444, %v2270
  %v2446 = vadd.f32 %v2445, %v2277
  %v2447 = vadd.f32 %v2446, %v2284
  %v2448 = vadd.f32 %v2447, %v2291
  %v2449 = vadd.f32 %v2448, %v2298
  %v2450 = vadd.f32 %v2449, %v2305
  %v2451 = vadd.f32 %v2450, %v2312
  %v2452 = vadd.f32 %v2451, %v2319
  %v2453 = vadd.f32 %v2452, %v2326
  %v2454 = vadd.f32 %v2453, %v2333
  %v2455 = vrot.slane %v2454, 4
  %v2456 = vadd.f32 %v2454, %v2455
  %v2457 = vrot.slane %v2456, 2
  %v2458 = vadd.f32 %v2456, %v2457
  %v2459 = vrot.slane %v2458, 1
  %v2460 = vadd.f32 %v2458, %v2459
  %v2461 = vadd.f32 %v2159, %v2166
  %v2462 = vadd.f32 %v2461, %v2173
  %v2463 = vadd.f32 %v2462, %v2180
  %v2464 = vadd.f32 %v2463, %v2187
  %v2465 = vadd.f32 %v2464, %v2194
  %v2466 = vadd.f32 %v2465, %v2201
  %v2467 = vadd.f32 %v2466, %v2208
  %v2468 = vadd.f32 %v2467, %v2215
  %v2469 = vadd.f32 %v2468, %v2222
  %v2470 = vadd.f32 %v2469, %v2229
  %v2471 = vadd.f32 %v2470, %v2236
  %v2472 = vadd.f32 %v2471, %v2243
  %v2473 = vadd.f32 %v2472, %v2250
  %v2474 = vadd.f32 %v2473, %v2257
  %v2475 = vadd.f32 %v2474, %v2264
  %v2476 = vadd.f32 %v2475, %v2271
  %v2477 = vadd.f32 %v2476, %v2278
  %v2478 = vadd.f32 %v2477, %v2285
  %v2479 = vadd.f32 %v2478, %v2292
  %v2480 = vadd.f32 %v2479, %v2299
  %v2481 = vadd.f32 %v2480, %v2306
  %v2482 = vadd.f32 %v2481, %v2313
  %v2483 = vadd.f32 %v2482, %v2320
  %v2484 = vadd.f32 %v2483, %v2327
  %v2485 = vadd.f32 %v2484, %v2334
  %v2486 = vrot.slane %v2485, 4
  %v2487 = vadd.f32 %v2485, %v2486
  %v2488 = vrot.slane %v2487, 2
  %v2489 = vadd.f32 %v2487, %v2488
  %v2490 = vrot.slane %v2489, 1
  %v2491 = vadd.f32 %v2489, %v2490
  %v2492 = vadd.f32 %v2160, %v2167
  %v2493 = vadd.f32 %v2492, %v2174
  %v2494 = vadd.f32 %v2493, %v2181
  %v2495 = vadd.f32 %v2494, %v2188
  %v2496 = vadd.f32 %v2495, %v2195
  %v2497 = vadd.f32 %v2496, %v2202
  %v2498 = vadd.f32 %v2497, %v2209
  %v2499 = vadd.f32 %v2498, %v2216
  %v2500 = vadd.f32 %v2499, %v2223
  %v2501 = vadd.f32 %v2500, %v2230
  %v2502 = vadd.f32 %v2501, %v2237
  %v2503 = vadd.f32 %v2502, %v2244
  %v2504 = vadd.f32 %v2503, %v2251
  %v2505 = vadd.f32 %v2504, %v2258
  %v2506 = vadd.f32 %v2505, %v2265
  %v2507 = vadd.f32 %v2506, %v2272
  %v2508 = vadd.f32 %v2507, %v2279
  %v2509 = vadd.f32 %v2508, %v2286
  %v2510 = vadd.f32 %v2509, %v2293
  %v2511 = vadd.f32 %v2510, %v2300
  %v2512 = vadd.f32 %v2511, %v2307
  %v2513 = vadd.f32 %v2512, %v2314
  %v2514 = vadd.f32 %v2513, %v2321
  %v2515 = vadd.f32 %v2514, %v2328
  %v2516 = vadd.f32 %v2515, %v2335
  %v2517 = vrot.slane %v2516, 4
  %v2518 = vadd.f32 %v2516, %v2517
  %v2519 = vrot.slane %v2518, 2
  %v2520 = vadd.f32 %v2518, %v2519
  %v2521 = vrot.slane %v2520, 1
  %v2522 = vadd.f32 %v2520, %v2521
  %v2523 = vadd.f32 %v2161, %v2168
  %v2524 = vadd.f32 %v2523, %v2175
  %v2525 = vadd.f32 %v2524, %v2182
  %v2526 = vadd.f32 %v2525, %v2189
  %v2527 = vadd.f32 %v2526, %v2196
  %v2528 = vadd.f32 %v2527, %v2203
  %v2529 = vadd.f32 %v2528, %v2210
  %v2530 = vadd.f32 %v2529, %v2217
  %v2531 = vadd.f32 %v2530, %v2224
  %v2532 = vadd.f32 %v2531, %v2231
  %v2533 = vadd.f32 %v2532, %v2238
  %v2534 = vadd.f32 %v2533, %v2245
  %v2535 = vadd.f32 %v2534, %v2252
  %v2536 = vadd.f32 %v2535, %v2259
  %v2537 = vadd.f32 %v2536, %v2266
  %v2538 = vadd.f32 %v2537, %v2273
  %v2539 = vadd.f32 %v2538, %v2280
  %v2540 = vadd.f32 %v2539, %v2287
  %v2541 = vadd.f32 %v2540, %v2294
  %v2542 = vadd.f32 %v2541, %v2301
  %v2543 = vadd.f32 %v2542, %v2308
  %v2544 = vadd.f32 %v2543, %v2315
  %v2545 = vadd.f32 %v2544, %v2322
  %v2546 = vadd.f32 %v2545, %v2329
  %v2547 = vadd.f32 %v2546, %v2336
  %v2548 = vrot.slane %v2547, 4
  %v2549 = vadd.f32 %v2547, %v2548
  %v2550 = vrot.slane %v2549, 2
  %v2551 = vadd.f32 %v2549, %v2550
  %v2552 = vrot.slane %v2551, 1
  %v2553 = vadd.f32 %v2551, %v2552
  %2555 = vrot.lane.b32.xlu0 %v1968, 64
  %v2556 = vpop.permute.xlu0 %2555
  %v2558 = vadd.f32 %v1968, %v2556
  %2560 = vrot.lane.b32.xlu0 %v2367, 64
  %v2561 = vpop.permute.xlu0 %2560
  %v2563 = vadd.f32 %v2367, %v2561
  %v2564 = vadd.f32 %v2558, %v1999
  %v2565 = vadd.f32 %v2563, %v2398
  %2567 = vrot.lane.b32.xlu0 %v1999, 64
  %v2568 = vpop.permute.xlu0 %2567
  %v2570 = vadd.f32 %v2564, %v2568
  %2572 = vrot.lane.b32.xlu0 %v2398, 64
  %v2573 = vpop.permute.xlu0 %2572
  %v2575 = vadd.f32 %v2565, %v2573
  %v2576 = vadd.f32 %v2570, %v2030
  %v2577 = vadd.f32 %v2575, %v2429
  %2579 = vrot.lane.b32.xlu0 %v2030, 64
  %v2580 = vpop.permute.xlu0 %2579
  %v2582 = vadd.f32 %v2576, %v2580
  %2584 = vrot.lane.b32.xlu0 %v2429, 64
  %v2585 = vpop.permute.xlu0 %2584
  %v2587 = vadd.f32 %v2577, %v2585
  %v2588 = vadd.f32 %v2582, %v2061
  %v2589 = vadd.f32 %v2587, %v2460
  %2591 = vrot.lane.b32.xlu0 %v2061, 64
  %v2592 = vpop.permute.xlu0 %2591
  %v2594 = vadd.f32 %v2588, %v2592
  %2596 = vrot.lane.b32.xlu0 %v2460, 64
  %v2597 = vpop.permute.xlu0 %2596
  %v2599 = vadd.f32 %v2589, %v2597
  %v2600 = vadd.f32 %v2594, %v2092
  %v2601 = vadd.f32 %v2599, %v2491
  %2603 = vrot.lane.b32.xlu0 %v2092, 64
  %v2604 = vpop.permute.xlu0 %2603
  %v2606 = vadd.f32 %v2600, %v2604
  %2608 = vrot.lane.b32.xlu0 %v2491, 64
  %v2609 = vpop.permute.xlu0 %2608
  %v2611 = vadd.f32 %v2601, %v2609
  %v2612 = vadd.f32 %v2606, %v2123
  %v2613 = vadd.f32 %v2611, %v2522
  %2615 = vrot.lane.b32.xlu0 %v2123, 64
  %v2616 = vpop.permute.xlu0 %2615
  %v2618 = vadd.f32 %v2612, %v2616
  %2620 = vrot.lane.b32.xlu0 %v2522, 64
  %v2621 = vpop.permute.xlu0 %2620
  %v2623 = vadd.f32 %v2613, %v2621
  %v2624 = vadd.f32 %v2618, %v2154
  %v2625 = vadd.f32 %v2623, %v2553
  %v2626 = vmul.f32 %v2624, 0.00295858
  %v2627 = vmul.f32 %v2625, 0.00295858
  %v2628 = vmul.f32 %v2626, %v2626
  %v2629 = vsub.f32 %v2627, %v2628
  %v2630 = vmax.f32 %v2629, 0.0
  %v2631 = vld [vmem:[%s2] sm:$0x1]
  %v2632 = vadd.f32 %v2630, 1e-05
  %v2633 = vrsqrt.pop %v2632
  %v2634 = vmul.f32 %v2633, %v2632
  %v2635 = vmul.f32 %v2634, %v2633
  %v2636 = vmul.f32 0.5, %v2635
  %v2637 = vsub.f32 1.5, %v2636
  %v2638 = vmul.f32 %v2633, %v2637
  %vm2639 = vweird.f32 %v2632
  %vm2640 = vweird.f32 %v2633
  %vm2641 = vmor %vm2639, %vm2640
  %v2642 = vsel %vm2641, %v2633, %v2638
  %v2643 = vmul.f32 %v2631, %v2642
  %v2644 = vld [vmem:[%s3] sm:$0x1]
  %v2645 = vmul.f32 %v2626, %v2643
  %v2646 = vsub.f32 %v2644, %v2645
  %v2648 = vperm.slane %v2643, 0
  %2649 = vrot.lane.b32.xlu0 %v2648, 64
  %v2650 = vpop.permute.xlu0 %2649
  %vm2652 = vcmask 523264
  %v2653 = vsel %vm2652, %v2643, %v2650
  %v2655 = vperm.slane %v2646, 0
  %2656 = vrot.lane.b32.xlu0 %v2655, 64
  %v2657 = vpop.permute.xlu0 %2656
  %v2659 = vsel %vm2652, %v2646, %v2657
  %v2660 = vperm.slane %v2653, 0
  %v2661 = vmul.f32 %v986, %v2660
  %v2662 = vmul.f32 %v1134, %v2660
  %v2663 = vmul.f32 %v1282, %v2660
  %v2664 = vmul.f32 %v1430, %v2660
  %v2665 = vmul.f32 %v1578, %v2660
  %v2666 = vmul.f32 %v1726, %v2660
  %v2667 = vmul.f32 %v1874, %v2660
  %v2668 = vmul.f32 %v988, %v2660
  %v2669 = vmul.f32 %v1136, %v2660
  %v2670 = vmul.f32 %v1284, %v2660
  %v2671 = vmul.f32 %v1432, %v2660
  %v2672 = vmul.f32 %v1580, %v2660
  %v2673 = vmul.f32 %v1728, %v2660
  %v2674 = vmul.f32 %v1876, %v2660
  %v2675 = vmul.f32 %v991, %v2660
  %v2676 = vmul.f32 %v1139, %v2660
  %v2677 = vmul.f32 %v1287, %v2660
  %v2678 = vmul.f32 %v1435, %v2660
  %v2679 = vmul.f32 %v1583, %v2660
  %v2680 = vmul.f32 %v1731, %v2660
  %v2681 = vmul.f32 %v1879, %v2660
  %v2682 = vmul.f32 %v993, %v2660
  %v2683 = vmul.f32 %v1141, %v2660
  %v2684 = vmul.f32 %v1289, %v2660
  %v2685 = vmul.f32 %v1437, %v2660
  %v2686 = vmul.f32 %v1585, %v2660
  %v2687 = vmul.f32 %v1733, %v2660
  %v2688 = vmul.f32 %v1881, %v2660
  %v2689 = vmul.f32 %v996, %v2660
  %v2690 = vmul.f32 %v1144, %v2660
  %v2691 = vmul.f32 %v1292, %v2660
  %v2692 = vmul.f32 %v1440, %v2660
  %v2693 = vmul.f32 %v1588, %v2660
  %v2694 = vmul.f32 %v1736, %v2660
  %v2695 = vmul.f32 %v1884, %v2660
  %v2696 = vmul.f32 %v998, %v2660
  %v2697 = vmul.f32 %v1146, %v2660
  %v2698 = vmul.f32 %v1294, %v2660
  %v2699 = vmul.f32 %v1442, %v2660
  %v2700 = vmul.f32 %v1590, %v2660
  %v2701 = vmul.f32 %v1738, %v2660
  %v2702 = vmul.f32 %v1886, %v2660
  %v2703 = vmul.f32 %v1001, %v2660
  %v2704 = vmul.f32 %v1149, %v2660
  %v2705 = vmul.f32 %v1297, %v2660
  %v2706 = vmul.f32 %v1445, %v2660
  %v2707 = vmul.f32 %v1593, %v2660
  %v2708 = vmul.f32 %v1741, %v2660
  %v2709 = vmul.f32 %v1889, %v2660
  %v2710 = vmul.f32 %v1003, %v2660
  %v2711 = vmul.f32 %v1151, %v2660
  %v2712 = vmul.f32 %v1299, %v2660
  %v2713 = vmul.f32 %v1447, %v2660
  %v2714 = vmul.f32 %v1595, %v2660
  %v2715 = vmul.f32 %v1743, %v2660
  %v2716 = vmul.f32 %v1891, %v2660
  %v2717 = vmul.f32 %v1006, %v2660
  %v2718 = vmul.f32 %v1154, %v2660
  %v2719 = vmul.f32 %v1302, %v2660
  %v2720 = vmul.f32 %v1450, %v2660
  %v2721 = vmul.f32 %v1598, %v2660
  %v2722 = vmul.f32 %v1746, %v2660
  %v2723 = vmul.f32 %v1894, %v2660
  %v2724 = vmul.f32 %v1008, %v2660
  %v2725 = vmul.f32 %v1156, %v2660
  %v2726 = vmul.f32 %v1304, %v2660
  %v2727 = vmul.f32 %v1452, %v2660
  %v2728 = vmul.f32 %v1600, %v2660
  %v2729 = vmul.f32 %v1748, %v2660
  %v2730 = vmul.f32 %v1896, %v2660
  %v2731 = vmul.f32 %v1011, %v2660
  %v2732 = vmul.f32 %v1159, %v2660
  %v2733 = vmul.f32 %v1307, %v2660
  %v2734 = vmul.f32 %v1455, %v2660
  %v2735 = vmul.f32 %v1603, %v2660
  %v2736 = vmul.f32 %v1751, %v2660
  %v2737 = vmul.f32 %v1899, %v2660
  %v2738 = vmul.f32 %v1013, %v2660
  %v2739 = vmul.f32 %v1161, %v2660
  %v2740 = vmul.f32 %v1309, %v2660
  %v2741 = vmul.f32 %v1457, %v2660
  %v2742 = vmul.f32 %v1605, %v2660
  %v2743 = vmul.f32 %v1753, %v2660
  %v2744 = vmul.f32 %v1901, %v2660
  %v2745 = vmul.f32 %v1016, %v2660
  %v2746 = vmul.f32 %v1164, %v2660
  %v2747 = vmul.f32 %v1312, %v2660
  %v2748 = vmul.f32 %v1460, %v2660
  %v2749 = vmul.f32 %v1608, %v2660
  %v2750 = vmul.f32 %v1756, %v2660
  %v2751 = vmul.f32 %v1904, %v2660
  %v2752 = vmul.f32 %v1018, %v2660
  %v2753 = vmul.f32 %v1166, %v2660
  %v2754 = vmul.f32 %v1314, %v2660
  %v2755 = vmul.f32 %v1462, %v2660
  %v2756 = vmul.f32 %v1610, %v2660
  %v2757 = vmul.f32 %v1758, %v2660
  %v2758 = vmul.f32 %v1906, %v2660
  %v2759 = vmul.f32 %v1021, %v2660
  %v2760 = vmul.f32 %v1169, %v2660
  %v2761 = vmul.f32 %v1317, %v2660
  %v2762 = vmul.f32 %v1465, %v2660
  %v2763 = vmul.f32 %v1613, %v2660
  %v2764 = vmul.f32 %v1761, %v2660
  %v2765 = vmul.f32 %v1909, %v2660
  %v2766 = vmul.f32 %v1023, %v2660
  %v2767 = vmul.f32 %v1171, %v2660
  %v2768 = vmul.f32 %v1319, %v2660
  %v2769 = vmul.f32 %v1467, %v2660
  %v2770 = vmul.f32 %v1615, %v2660
  %v2771 = vmul.f32 %v1763, %v2660
  %v2772 = vmul.f32 %v1911, %v2660
  %v2773 = vmul.f32 %v1026, %v2660
  %v2774 = vmul.f32 %v1174, %v2660
  %v2775 = vmul.f32 %v1322, %v2660
  %v2776 = vmul.f32 %v1470, %v2660
  %v2777 = vmul.f32 %v1618, %v2660
  %v2778 = vmul.f32 %v1766, %v2660
  %v2779 = vmul.f32 %v1914, %v2660
  %v2780 = vmul.f32 %v1028, %v2660
  %v2781 = vmul.f32 %v1176, %v2660
  %v2782 = vmul.f32 %v1324, %v2660
  %v2783 = vmul.f32 %v1472, %v2660
  %v2784 = vmul.f32 %v1620, %v2660
  %v2785 = vmul.f32 %v1768, %v2660
  %v2786 = vmul.f32 %v1916, %v2660
  %v2787 = vmul.f32 %v1031, %v2660
  %v2788 = vmul.f32 %v1179, %v2660
  %v2789 = vmul.f32 %v1327, %v2660
  %v2790 = vmul.f32 %v1475, %v2660
  %v2791 = vmul.f32 %v1623, %v2660
  %v2792 = vmul.f32 %v1771, %v2660
  %v2793 = vmul.f32 %v1919, %v2660
  %v2794 = vmul.f32 %v1033, %v2660
  %v2795 = vmul.f32 %v1181, %v2660
  %v2796 = vmul.f32 %v1329, %v2660
  %v2797 = vmul.f32 %v1477, %v2660
  %v2798 = vmul.f32 %v1625, %v2660
  %v2799 = vmul.f32 %v1773, %v2660
  %v2800 = vmul.f32 %v1921, %v2660
  %v2801 = vmul.f32 %v1036, %v2660
  %v2802 = vmul.f32 %v1184, %v2660
  %v2803 = vmul.f32 %v1332, %v2660
  %v2804 = vmul.f32 %v1480, %v2660
  %v2805 = vmul.f32 %v1628, %v2660
  %v2806 = vmul.f32 %v1776, %v2660
  %v2807 = vmul.f32 %v1924, %v2660
  %v2808 = vmul.f32 %v1038, %v2660
  %v2809 = vmul.f32 %v1186, %v2660
  %v2810 = vmul.f32 %v1334, %v2660
  %v2811 = vmul.f32 %v1482, %v2660
  %v2812 = vmul.f32 %v1630, %v2660
  %v2813 = vmul.f32 %v1778, %v2660
  %v2814 = vmul.f32 %v1926, %v2660
  %v2815 = vmul.f32 %v1041, %v2660
  %v2816 = vmul.f32 %v1189, %v2660
  %v2817 = vmul.f32 %v1337, %v2660
  %v2818 = vmul.f32 %v1485, %v2660
  %v2819 = vmul.f32 %v1633, %v2660
  %v2820 = vmul.f32 %v1781, %v2660
  %v2821 = vmul.f32 %v1929, %v2660
  %v2822 = vmul.f32 %v1043, %v2660
  %v2823 = vmul.f32 %v1191, %v2660
  %v2824 = vmul.f32 %v1339, %v2660
  %v2825 = vmul.f32 %v1487, %v2660
  %v2826 = vmul.f32 %v1635, %v2660
  %v2827 = vmul.f32 %v1783, %v2660
  %v2828 = vmul.f32 %v1931, %v2660
  %v2829 = vmul.f32 %v1046, %v2660
  %v2830 = vmul.f32 %v1194, %v2660
  %v2831 = vmul.f32 %v1342, %v2660
  %v2832 = vmul.f32 %v1490, %v2660
  %v2833 = vmul.f32 %v1638, %v2660
  %v2834 = vmul.f32 %v1786, %v2660
  %v2835 = vmul.f32 %v1934, %v2660
  %v2836 = vmul.f32 %v1048, %v2660
  %v2837 = vmul.f32 %v1196, %v2660
  %v2838 = vmul.f32 %v1344, %v2660
  %v2839 = vmul.f32 %v1492, %v2660
  %v2840 = vmul.f32 %v1640, %v2660
  %v2841 = vmul.f32 %v1788, %v2660
  %v2842 = vmul.f32 %v1936, %v2660
  %v2843 = vperm.slane %v2659, 0
  %v2844 = vadd.f32 %v2661, %v2843
  %v2845 = vadd.f32 %v2662, %v2843
  %v2846 = vadd.f32 %v2663, %v2843
  %v2847 = vadd.f32 %v2664, %v2843
  %v2848 = vadd.f32 %v2665, %v2843
  %v2849 = vadd.f32 %v2666, %v2843
  %v2850 = vadd.f32 %v2667, %v2843
  %v2851 = vadd.f32 %v2668, %v2843
  %v2852 = vadd.f32 %v2669, %v2843
  %v2853 = vadd.f32 %v2670, %v2843
  %v2854 = vadd.f32 %v2671, %v2843
  %v2855 = vadd.f32 %v2672, %v2843
  %v2856 = vadd.f32 %v2673, %v2843
  %v2857 = vadd.f32 %v2674, %v2843
  %v2858 = vadd.f32 %v2675, %v2843
  %v2859 = vadd.f32 %v2676, %v2843
  %v2860 = vadd.f32 %v2677, %v2843
  %v2861 = vadd.f32 %v2678, %v2843
  %v2862 = vadd.f32 %v2679, %v2843
  %v2863 = vadd.f32 %v2680, %v2843
  %v2864 = vadd.f32 %v2681, %v2843
  %v2865 = vadd.f32 %v2682, %v2843
  %v2866 = vadd.f32 %v2683, %v2843
  %v2867 = vadd.f32 %v2684, %v2843
  %v2868 = vadd.f32 %v2685, %v2843
  %v2869 = vadd.f32 %v2686, %v2843
  %v2870 = vadd.f32 %v2687, %v2843
  %v2871 = vadd.f32 %v2688, %v2843
  %v2872 = vadd.f32 %v2689, %v2843
  %v2873 = vadd.f32 %v2690, %v2843
  %v2874 = vadd.f32 %v2691, %v2843
  %v2875 = vadd.f32 %v2692, %v2843
  %v2876 = vadd.f32 %v2693, %v2843
  %v2877 = vadd.f32 %v2694, %v2843
  %v2878 = vadd.f32 %v2695, %v2843
  %v2879 = vadd.f32 %v2696, %v2843
  %v2880 = vadd.f32 %v2697, %v2843
  %v2881 = vadd.f32 %v2698, %v2843
  %v2882 = vadd.f32 %v2699, %v2843
  %v2883 = vadd.f32 %v2700, %v2843
  %v2884 = vadd.f32 %v2701, %v2843
  %v2885 = vadd.f32 %v2702, %v2843
  %v2886 = vadd.f32 %v2703, %v2843
  %v2887 = vadd.f32 %v2704, %v2843
  %v2888 = vadd.f32 %v2705, %v2843
  %v2889 = vadd.f32 %v2706, %v2843
  %v2890 = vadd.f32 %v2707, %v2843
  %v2891 = vadd.f32 %v2708, %v2843
  %v2892 = vadd.f32 %v2709, %v2843
  %v2893 = vadd.f32 %v2710, %v2843
  %v2894 = vadd.f32 %v2711, %v2843
  %v2895 = vadd.f32 %v2712, %v2843
  %v2896 = vadd.f32 %v2713, %v2843
  %v2897 = vadd.f32 %v2714, %v2843
  %v2898 = vadd.f32 %v2715, %v2843
  %v2899 = vadd.f32 %v2716, %v2843
  %v2900 = vadd.f32 %v2717, %v2843
  %v2901 = vadd.f32 %v2718, %v2843
  %v2902 = vadd.f32 %v2719, %v2843
  %v2903 = vadd.f32 %v2720, %v2843
  %v2904 = vadd.f32 %v2721, %v2843
  %v2905 = vadd.f32 %v2722, %v2843
  %v2906 = vadd.f32 %v2723, %v2843
  %v2907 = vadd.f32 %v2724, %v2843
  %v2908 = vadd.f32 %v2725, %v2843
  %v2909 = vadd.f32 %v2726, %v2843
  %v2910 = vadd.f32 %v2727, %v2843
  %v2911 = vadd.f32 %v2728, %v2843
  %v2912 = vadd.f32 %v2729, %v2843
  %v2913 = vadd.f32 %v2730, %v2843
  %v2914 = vadd.f32 %v2731, %v2843
  %v2915 = vadd.f32 %v2732, %v2843
  %v2916 = vadd.f32 %v2733, %v2843
  %v2917 = vadd.f32 %v2734, %v2843
  %v2918 = vadd.f32 %v2735, %v2843
  %v2919 = vadd.f32 %v2736, %v2843
  %v2920 = vadd.f32 %v2737, %v2843
  %v2921 = vadd.f32 %v2738, %v2843
  %v2922 = vadd.f32 %v2739, %v2843
  %v2923 = vadd.f32 %v2740, %v2843
  %v2924 = vadd.f32 %v2741, %v2843
  %v2925 = vadd.f32 %v2742, %v2843
  %v2926 = vadd.f32 %v2743, %v2843
  %v2927 = vadd.f32 %v2744, %v2843
  %v2928 = vadd.f32 %v2745, %v2843
  %v2929 = vadd.f32 %v2746, %v2843
  %v2930 = vadd.f32 %v2747, %v2843
  %v2931 = vadd.f32 %v2748, %v2843
  %v2932 = vadd.f32 %v2749, %v2843
  %v2933 = vadd.f32 %v2750, %v2843
  %v2934 = vadd.f32 %v2751, %v2843
  %v2935 = vadd.f32 %v2752, %v2843
  %v2936 = vadd.f32 %v2753, %v2843
  %v2937 = vadd.f32 %v2754, %v2843
  %v2938 = vadd.f32 %v2755, %v2843
  %v2939 = vadd.f32 %v2756, %v2843
  %v2940 = vadd.f32 %v2757, %v2843
  %v2941 = vadd.f32 %v2758, %v2843
  %v2942 = vadd.f32 %v2759, %v2843
  %v2943 = vadd.f32 %v2760, %v2843
  %v2944 = vadd.f32 %v2761, %v2843
  %v2945 = vadd.f32 %v2762, %v2843
  %v2946 = vadd.f32 %v2763, %v2843
  %v2947 = vadd.f32 %v2764, %v2843
  %v2948 = vadd.f32 %v2765, %v2843
  %v2949 = vadd.f32 %v2766, %v2843
  %v2950 = vadd.f32 %v2767, %v2843
  %v2951 = vadd.f32 %v2768, %v2843
  %v2952 = vadd.f32 %v2769, %v2843
  %v2953 = vadd.f32 %v2770, %v2843
  %v2954 = vadd.f32 %v2771, %v2843
  %v2955 = vadd.f32 %v2772, %v2843
  %v2956 = vadd.f32 %v2773, %v2843
  %v2957 = vadd.f32 %v2774, %v2843
  %v2958 = vadd.f32 %v2775, %v2843
  %v2959 = vadd.f32 %v2776, %v2843
  %v2960 = vadd.f32 %v2777, %v2843
  %v2961 = vadd.f32 %v2778, %v2843
  %v2962 = vadd.f32 %v2779, %v2843
  %v2963 = vadd.f32 %v2780, %v2843
  %v2964 = vadd.f32 %v2781, %v2843
  %v2965 = vadd.f32 %v2782, %v2843
  %v2966 = vadd.f32 %v2783, %v2843
  %v2967 = vadd.f32 %v2784, %v2843
  %v2968 = vadd.f32 %v2785, %v2843
  %v2969 = vadd.f32 %v2786, %v2843
  %v2970 = vadd.f32 %v2787, %v2843
  %v2971 = vadd.f32 %v2788, %v2843
  %v2972 = vadd.f32 %v2789, %v2843
  %v2973 = vadd.f32 %v2790, %v2843
  %v2974 = vadd.f32 %v2791, %v2843
  %v2975 = vadd.f32 %v2792, %v2843
  %v2976 = vadd.f32 %v2793, %v2843
  %v2977 = vadd.f32 %v2794, %v2843
  %v2978 = vadd.f32 %v2795, %v2843
  %v2979 = vadd.f32 %v2796, %v2843
  %v2980 = vadd.f32 %v2797, %v2843
  %v2981 = vadd.f32 %v2798, %v2843
  %v2982 = vadd.f32 %v2799, %v2843
  %v2983 = vadd.f32 %v2800, %v2843
  %v2984 = vadd.f32 %v2801, %v2843
  %v2985 = vadd.f32 %v2802, %v2843
  %v2986 = vadd.f32 %v2803, %v2843
  %v2987 = vadd.f32 %v2804, %v2843
  %v2988 = vadd.f32 %v2805, %v2843
  %v2989 = vadd.f32 %v2806, %v2843
  %v2990 = vadd.f32 %v2807, %v2843
  %v2991 = vadd.f32 %v2808, %v2843
  %v2992 = vadd.f32 %v2809, %v2843
  %v2993 = vadd.f32 %v2810, %v2843
  %v2994 = vadd.f32 %v2811, %v2843
  %v2995 = vadd.f32 %v2812, %v2843
  %v2996 = vadd.f32 %v2813, %v2843
  %v2997 = vadd.f32 %v2814, %v2843
  %v2998 = vadd.f32 %v2815, %v2843
  %v2999 = vadd.f32 %v2816, %v2843
  %v3000 = vadd.f32 %v2817, %v2843
  %v3001 = vadd.f32 %v2818, %v2843
  %v3002 = vadd.f32 %v2819, %v2843
  %v3003 = vadd.f32 %v2820, %v2843
  %v3004 = vadd.f32 %v2821, %v2843
  %v3005 = vadd.f32 %v2822, %v2843
  %v3006 = vadd.f32 %v2823, %v2843
  %v3007 = vadd.f32 %v2824, %v2843
  %v3008 = vadd.f32 %v2825, %v2843
  %v3009 = vadd.f32 %v2826, %v2843
  %v3010 = vadd.f32 %v2827, %v2843
  %v3011 = vadd.f32 %v2828, %v2843
  %v3012 = vadd.f32 %v2829, %v2843
  %v3013 = vadd.f32 %v2830, %v2843
  %v3014 = vadd.f32 %v2831, %v2843
  %v3015 = vadd.f32 %v2832, %v2843
  %v3016 = vadd.f32 %v2833, %v2843
  %v3017 = vadd.f32 %v2834, %v2843
  %v3018 = vadd.f32 %v2835, %v2843
  %v3019 = vadd.f32 %v2836, %v2843
  %v3020 = vadd.f32 %v2837, %v2843
  %v3021 = vadd.f32 %v2838, %v2843
  %v3022 = vadd.f32 %v2839, %v2843
  %v3023 = vadd.f32 %v2840, %v2843
  %v3024 = vadd.f32 %v2841, %v2843
  %v3025 = vadd.f32 %v2842, %v2843
  %vm3026 = vcmp.gt.f32.partialorder %v2844, 0.0
  %vm3027 = vcmp.gt.f32.partialorder %v2845, 0.0
  %vm3028 = vcmp.gt.f32.partialorder %v2846, 0.0
  %vm3029 = vcmp.gt.f32.partialorder %v2847, 0.0
  %vm3030 = vcmp.gt.f32.partialorder %v2848, 0.0
  %vm3031 = vcmp.gt.f32.partialorder %v2849, 0.0
  %vm3032 = vcmp.gt.f32.partialorder %v2850, 0.0
  %vm3033 = vcmp.gt.f32.partialorder %v2851, 0.0
  %vm3034 = vcmp.gt.f32.partialorder %v2852, 0.0
  %vm3035 = vcmp.gt.f32.partialorder %v2853, 0.0
  %vm3036 = vcmp.gt.f32.partialorder %v2854, 0.0
  %vm3037 = vcmp.gt.f32.partialorder %v2855, 0.0
  %vm3038 = vcmp.gt.f32.partialorder %v2856, 0.0
  %vm3039 = vcmp.gt.f32.partialorder %v2857, 0.0
  %vm3040 = vcmp.gt.f32.partialorder %v2858, 0.0
  %vm3041 = vcmp.gt.f32.partialorder %v2859, 0.0
  %vm3042 = vcmp.gt.f32.partialorder %v2860, 0.0
  %vm3043 = vcmp.gt.f32.partialorder %v2861, 0.0
  %vm3044 = vcmp.gt.f32.partialorder %v2862, 0.0
  %vm3045 = vcmp.gt.f32.partialorder %v2863, 0.0
  %vm3046 = vcmp.gt.f32.partialorder %v2864, 0.0
  %vm3047 = vcmp.gt.f32.partialorder %v2865, 0.0
  %vm3048 = vcmp.gt.f32.partialorder %v2866, 0.0
  %vm3049 = vcmp.gt.f32.partialorder %v2867, 0.0
  %vm3050 = vcmp.gt.f32.partialorder %v2868, 0.0
  %vm3051 = vcmp.gt.f32.partialorder %v2869, 0.0
  %vm3052 = vcmp.gt.f32.partialorder %v2870, 0.0
  %vm3053 = vcmp.gt.f32.partialorder %v2871, 0.0
  %vm3054 = vcmp.gt.f32.partialorder %v2872, 0.0
  %vm3055 = vcmp.gt.f32.partialorder %v2873, 0.0
  %vm3056 = vcmp.gt.f32.partialorder %v2874, 0.0
  %vm3057 = vcmp.gt.f32.partialorder %v2875, 0.0
  %vm3058 = vcmp.gt.f32.partialorder %v2876, 0.0
  %vm3059 = vcmp.gt.f32.partialorder %v2877, 0.0
  %vm3060 = vcmp.gt.f32.partialorder %v2878, 0.0
  %vm3061 = vcmp.gt.f32.partialorder %v2879, 0.0
  %vm3062 = vcmp.gt.f32.partialorder %v2880, 0.0
  %vm3063 = vcmp.gt.f32.partialorder %v2881, 0.0
  %vm3064 = vcmp.gt.f32.partialorder %v2882, 0.0
  %vm3065 = vcmp.gt.f32.partialorder %v2883, 0.0
  %vm3066 = vcmp.gt.f32.partialorder %v2884, 0.0
  %vm3067 = vcmp.gt.f32.partialorder %v2885, 0.0
  %vm3068 = vcmp.gt.f32.partialorder %v2886, 0.0
  %vm3069 = vcmp.gt.f32.partialorder %v2887, 0.0
  %vm3070 = vcmp.gt.f32.partialorder %v2888, 0.0
  %vm3071 = vcmp.gt.f32.partialorder %v2889, 0.0
  %vm3072 = vcmp.gt.f32.partialorder %v2890, 0.0
  %vm3073 = vcmp.gt.f32.partialorder %v2891, 0.0
  %vm3074 = vcmp.gt.f32.partialorder %v2892, 0.0
  %vm3075 = vcmp.gt.f32.partialorder %v2893, 0.0
  %vm3076 = vcmp.gt.f32.partialorder %v2894, 0.0
  %vm3077 = vcmp.gt.f32.partialorder %v2895, 0.0
  %vm3078 = vcmp.gt.f32.partialorder %v2896, 0.0
  %vm3079 = vcmp.gt.f32.partialorder %v2897, 0.0
  %vm3080 = vcmp.gt.f32.partialorder %v2898, 0.0
  %vm3081 = vcmp.gt.f32.partialorder %v2899, 0.0
  %vm3082 = vcmp.gt.f32.partialorder %v2900, 0.0
  %vm3083 = vcmp.gt.f32.partialorder %v2901, 0.0
  %vm3084 = vcmp.gt.f32.partialorder %v2902, 0.0
  %vm3085 = vcmp.gt.f32.partialorder %v2903, 0.0
  %vm3086 = vcmp.gt.f32.partialorder %v2904, 0.0
  %vm3087 = vcmp.gt.f32.partialorder %v2905, 0.0
  %vm3088 = vcmp.gt.f32.partialorder %v2906, 0.0
  %vm3089 = vcmp.gt.f32.partialorder %v2907, 0.0
  %vm3090 = vcmp.gt.f32.partialorder %v2908, 0.0
  %vm3091 = vcmp.gt.f32.partialorder %v2909, 0.0
  %vm3092 = vcmp.gt.f32.partialorder %v2910, 0.0
  %vm3093 = vcmp.gt.f32.partialorder %v2911, 0.0
  %vm3094 = vcmp.gt.f32.partialorder %v2912, 0.0
  %vm3095 = vcmp.gt.f32.partialorder %v2913, 0.0
  %vm3096 = vcmp.gt.f32.partialorder %v2914, 0.0
  %vm3097 = vcmp.gt.f32.partialorder %v2915, 0.0
  %vm3098 = vcmp.gt.f32.partialorder %v2916, 0.0
  %vm3099 = vcmp.gt.f32.partialorder %v2917, 0.0
  %vm3100 = vcmp.gt.f32.partialorder %v2918, 0.0
  %vm3101 = vcmp.gt.f32.partialorder %v2919, 0.0
  %vm3102 = vcmp.gt.f32.partialorder %v2920, 0.0
  %vm3103 = vcmp.gt.f32.partialorder %v2921, 0.0
  %vm3104 = vcmp.gt.f32.partialorder %v2922, 0.0
  %vm3105 = vcmp.gt.f32.partialorder %v2923, 0.0
  %vm3106 = vcmp.gt.f32.partialorder %v2924, 0.0
  %vm3107 = vcmp.gt.f32.partialorder %v2925, 0.0
  %vm3108 = vcmp.gt.f32.partialorder %v2926, 0.0
  %vm3109 = vcmp.gt.f32.partialorder %v2927, 0.0
  %vm3110 = vcmp.gt.f32.partialorder %v2928, 0.0
  %vm3111 = vcmp.gt.f32.partialorder %v2929, 0.0
  %vm3112 = vcmp.gt.f32.partialorder %v2930, 0.0
  %vm3113 = vcmp.gt.f32.partialorder %v2931, 0.0
  %vm3114 = vcmp.gt.f32.partialorder %v2932, 0.0
  %vm3115 = vcmp.gt.f32.partialorder %v2933, 0.0
  %vm3116 = vcmp.gt.f32.partialorder %v2934, 0.0
  %vm3117 = vcmp.gt.f32.partialorder %v2935, 0.0
  %vm3118 = vcmp.gt.f32.partialorder %v2936, 0.0
  %vm3119 = vcmp.gt.f32.partialorder %v2937, 0.0
  %vm3120 = vcmp.gt.f32.partialorder %v2938, 0.0
  %vm3121 = vcmp.gt.f32.partialorder %v2939, 0.0
  %vm3122 = vcmp.gt.f32.partialorder %v2940, 0.0
  %vm3123 = vcmp.gt.f32.partialorder %v2941, 0.0
  %vm3124 = vcmp.gt.f32.partialorder %v2942, 0.0
  %vm3125 = vcmp.gt.f32.partialorder %v2943, 0.0
  %vm3126 = vcmp.gt.f32.partialorder %v2944, 0.0
  %vm3127 = vcmp.gt.f32.partialorder %v2945, 0.0
  %vm3128 = vcmp.gt.f32.partialorder %v2946, 0.0
  %vm3129 = vcmp.gt.f32.partialorder %v2947, 0.0
  %vm3130 = vcmp.gt.f32.partialorder %v2948, 0.0
  %vm3131 = vcmp.gt.f32.partialorder %v2949, 0.0
  %vm3132 = vcmp.gt.f32.partialorder %v2950, 0.0
  %vm3133 = vcmp.gt.f32.partialorder %v2951, 0.0
  %vm3134 = vcmp.gt.f32.partialorder %v2952, 0.0
  %vm3135 = vcmp.gt.f32.partialorder %v2953, 0.0
  %vm3136 = vcmp.gt.f32.partialorder %v2954, 0.0
  %vm3137 = vcmp.gt.f32.partialorder %v2955, 0.0
  %vm3138 = vcmp.gt.f32.partialorder %v2956, 0.0
  %vm3139 = vcmp.gt.f32.partialorder %v2957, 0.0
  %vm3140 = vcmp.gt.f32.partialorder %v2958, 0.0
  %vm3141 = vcmp.gt.f32.partialorder %v2959, 0.0
  %vm3142 = vcmp.gt.f32.partialorder %v2960, 0.0
  %vm3143 = vcmp.gt.f32.partialorder %v2961, 0.0
  %vm3144 = vcmp.gt.f32.partialorder %v2962, 0.0
  %vm3145 = vcmp.gt.f32.partialorder %v2963, 0.0
  %vm3146 = vcmp.gt.f32.partialorder %v2964, 0.0
  %vm3147 = vcmp.gt.f32.partialorder %v2965, 0.0
  %vm3148 = vcmp.gt.f32.partialorder %v2966, 0.0
  %vm3149 = vcmp.gt.f32.partialorder %v2967, 0.0
  %vm3150 = vcmp.gt.f32.partialorder %v2968, 0.0
  %vm3151 = vcmp.gt.f32.partialorder %v2969, 0.0
  %vm3152 = vcmp.gt.f32.partialorder %v2970, 0.0
  %vm3153 = vcmp.gt.f32.partialorder %v2971, 0.0
  %vm3154 = vcmp.gt.f32.partialorder %v2972, 0.0
  %vm3155 = vcmp.gt.f32.partialorder %v2973, 0.0
  %vm3156 = vcmp.gt.f32.partialorder %v2974, 0.0
  %vm3157 = vcmp.gt.f32.partialorder %v2975, 0.0
  %vm3158 = vcmp.gt.f32.partialorder %v2976, 0.0
  %vm3159 = vcmp.gt.f32.partialorder %v2977, 0.0
  %vm3160 = vcmp.gt.f32.partialorder %v2978, 0.0
  %vm3161 = vcmp.gt.f32.partialorder %v2979, 0.0
  %vm3162 = vcmp.gt.f32.partialorder %v2980, 0.0
  %vm3163 = vcmp.gt.f32.partialorder %v2981, 0.0
  %vm3164 = vcmp.gt.f32.partialorder %v2982, 0.0
  %vm3165 = vcmp.gt.f32.partialorder %v2983, 0.0
  %vm3166 = vcmp.gt.f32.partialorder %v2984, 0.0
  %vm3167 = vcmp.gt.f32.partialorder %v2985, 0.0
  %vm3168 = vcmp.gt.f32.partialorder %v2986, 0.0
  %vm3169 = vcmp.gt.f32.partialorder %v2987, 0.0
  %vm3170 = vcmp.gt.f32.partialorder %v2988, 0.0
  %vm3171 = vcmp.gt.f32.partialorder %v2989, 0.0
  %vm3172 = vcmp.gt.f32.partialorder %v2990, 0.0
  %vm3173 = vcmp.gt.f32.partialorder %v2991, 0.0
  %vm3174 = vcmp.gt.f32.partialorder %v2992, 0.0
  %vm3175 = vcmp.gt.f32.partialorder %v2993, 0.0
  %vm3176 = vcmp.gt.f32.partialorder %v2994, 0.0
  %vm3177 = vcmp.gt.f32.partialorder %v2995, 0.0
  %vm3178 = vcmp.gt.f32.partialorder %v2996, 0.0
  %vm3179 = vcmp.gt.f32.partialorder %v2997, 0.0
  %vm3180 = vcmp.gt.f32.partialorder %v2998, 0.0
  %vm3181 = vcmp.gt.f32.partialorder %v2999, 0.0
  %vm3182 = vcmp.gt.f32.partialorder %v3000, 0.0
  %vm3183 = vcmp.gt.f32.partialorder %v3001, 0.0
  %vm3184 = vcmp.gt.f32.partialorder %v3002, 0.0
  %vm3185 = vcmp.gt.f32.partialorder %v3003, 0.0
  %vm3186 = vcmp.gt.f32.partialorder %v3004, 0.0
  %vm3187 = vcmp.gt.f32.partialorder %v3005, 0.0
  %vm3188 = vcmp.gt.f32.partialorder %v3006, 0.0
  %vm3189 = vcmp.gt.f32.partialorder %v3007, 0.0
  %vm3190 = vcmp.gt.f32.partialorder %v3008, 0.0
  %vm3191 = vcmp.gt.f32.partialorder %v3009, 0.0
  %vm3192 = vcmp.gt.f32.partialorder %v3010, 0.0
  %vm3193 = vcmp.gt.f32.partialorder %v3011, 0.0
  %vm3194 = vcmp.gt.f32.partialorder %v3012, 0.0
  %vm3195 = vcmp.gt.f32.partialorder %v3013, 0.0
  %vm3196 = vcmp.gt.f32.partialorder %v3014, 0.0
  %vm3197 = vcmp.gt.f32.partialorder %v3015, 0.0
  %vm3198 = vcmp.gt.f32.partialorder %v3016, 0.0
  %vm3199 = vcmp.gt.f32.partialorder %v3017, 0.0
  %vm3200 = vcmp.gt.f32.partialorder %v3018, 0.0
  %vm3201 = vcmp.gt.f32.partialorder %v3019, 0.0
  %vm3202 = vcmp.gt.f32.partialorder %v3020, 0.0
  %vm3203 = vcmp.gt.f32.partialorder %v3021, 0.0
  %vm3204 = vcmp.gt.f32.partialorder %v3022, 0.0
  %vm3205 = vcmp.gt.f32.partialorder %v3023, 0.0
  %vm3206 = vcmp.gt.f32.partialorder %v3024, 0.0
  %vm3207 = vcmp.gt.f32.partialorder %v3025, 0.0
  %v3208 = vmul.f32 %v2844, 0.2
  %v3209 = vmul.f32 %v2845, 0.2
  %v3210 = vmul.f32 %v2846, 0.2
  %v3211 = vmul.f32 %v2847, 0.2
  %v3212 = vmul.f32 %v2848, 0.2
  %v3213 = vmul.f32 %v2849, 0.2
  %v3214 = vmul.f32 %v2850, 0.2
  %v3215 = vmul.f32 %v2851, 0.2
  %v3216 = vmul.f32 %v2852, 0.2
  %v3217 = vmul.f32 %v2853, 0.2
  %v3218 = vmul.f32 %v2854, 0.2
  %v3219 = vmul.f32 %v2855, 0.2
  %v3220 = vmul.f32 %v2856, 0.2
  %v3221 = vmul.f32 %v2857, 0.2
  %v3222 = vmul.f32 %v2858, 0.2
  %v3223 = vmul.f32 %v2859, 0.2
  %v3224 = vmul.f32 %v2860, 0.2
  %v3225 = vmul.f32 %v2861, 0.2
  %v3226 = vmul.f32 %v2862, 0.2
  %v3227 = vmul.f32 %v2863, 0.2
  %v3228 = vmul.f32 %v2864, 0.2
  %v3229 = vmul.f32 %v2865, 0.2
  %v3230 = vmul.f32 %v2866, 0.2
  %v3231 = vmul.f32 %v2867, 0.2
  %v3232 = vmul.f32 %v2868, 0.2
  %v3233 = vmul.f32 %v2869, 0.2
  %v3234 = vmul.f32 %v2870, 0.2
  %v3235 = vmul.f32 %v2871, 0.2
  %v3236 = vmul.f32 %v2872, 0.2
  %v3237 = vmul.f32 %v2873, 0.2
  %v3238 = vmul.f32 %v2874, 0.2
  %v3239 = vmul.f32 %v2875, 0.2
  %v3240 = vmul.f32 %v2876, 0.2
  %v3241 = vmul.f32 %v2877, 0.2
  %v3242 = vmul.f32 %v2878, 0.2
  %v3243 = vmul.f32 %v2879, 0.2
  %v3244 = vmul.f32 %v2880, 0.2
  %v3245 = vmul.f32 %v2881, 0.2
  %v3246 = vmul.f32 %v2882, 0.2
  %v3247 = vmul.f32 %v2883, 0.2
  %v3248 = vmul.f32 %v2884, 0.2
  %v3249 = vmul.f32 %v2885, 0.2
  %v3250 = vmul.f32 %v2886, 0.2
  %v3251 = vmul.f32 %v2887, 0.2
  %v3252 = vmul.f32 %v2888, 0.2
  %v3253 = vmul.f32 %v2889, 0.2
  %v3254 = vmul.f32 %v2890, 0.2
  %v3255 = vmul.f32 %v2891, 0.2
  %v3256 = vmul.f32 %v2892, 0.2
  %v3257 = vmul.f32 %v2893, 0.2
  %v3258 = vmul.f32 %v2894, 0.2
  %v3259 = vmul.f32 %v2895, 0.2
  %v3260 = vmul.f32 %v2896, 0.2
  %v3261 = vmul.f32 %v2897, 0.2
  %v3262 = vmul.f32 %v2898, 0.2
  %v3263 = vmul.f32 %v2899, 0.2
  %v3264 = vmul.f32 %v2900, 0.2
  %v3265 = vmul.f32 %v2901, 0.2
  %v3266 = vmul.f32 %v2902, 0.2
  %v3267 = vmul.f32 %v2903, 0.2
  %v3268 = vmul.f32 %v2904, 0.2
  %v3269 = vmul.f32 %v2905, 0.2
  %v3270 = vmul.f32 %v2906, 0.2
  %v3271 = vmul.f32 %v2907, 0.2
  %v3272 = vmul.f32 %v2908, 0.2
  %v3273 = vmul.f32 %v2909, 0.2
  %v3274 = vmul.f32 %v2910, 0.2
  %v3275 = vmul.f32 %v2911, 0.2
  %v3276 = vmul.f32 %v2912, 0.2
  %v3277 = vmul.f32 %v2913, 0.2
  %v3278 = vmul.f32 %v2914, 0.2
  %v3279 = vmul.f32 %v2915, 0.2
  %v3280 = vmul.f32 %v2916, 0.2
  %v3281 = vmul.f32 %v2917, 0.2
  %v3282 = vmul.f32 %v2918, 0.2
  %v3283 = vmul.f32 %v2919, 0.2
  %v3284 = vmul.f32 %v2920, 0.2
  %v3285 = vmul.f32 %v2921, 0.2
  %v3286 = vmul.f32 %v2922, 0.2
  %v3287 = vmul.f32 %v2923, 0.2
  %v3288 = vmul.f32 %v2924, 0.2
  %v3289 = vmul.f32 %v2925, 0.2
  %v3290 = vmul.f32 %v2926, 0.2
  %v3291 = vmul.f32 %v2927, 0.2
  %v3292 = vmul.f32 %v2928, 0.2
  %v3293 = vmul.f32 %v2929, 0.2
  %v3294 = vmul.f32 %v2930, 0.2
  %v3295 = vmul.f32 %v2931, 0.2
  %v3296 = vmul.f32 %v2932, 0.2
  %v3297 = vmul.f32 %v2933, 0.2
  %v3298 = vmul.f32 %v2934, 0.2
  %v3299 = vmul.f32 %v2935, 0.2
  %v3300 = vmul.f32 %v2936, 0.2
  %v3301 = vmul.f32 %v2937, 0.2
  %v3302 = vmul.f32 %v2938, 0.2
  %v3303 = vmul.f32 %v2939, 0.2
  %v3304 = vmul.f32 %v2940, 0.2
  %v3305 = vmul.f32 %v2941, 0.2
  %v3306 = vmul.f32 %v2942, 0.2
  %v3307 = vmul.f32 %v2943, 0.2
  %v3308 = vmul.f32 %v2944, 0.2
  %v3309 = vmul.f32 %v2945, 0.2
  %v3310 = vmul.f32 %v2946, 0.2
  %v3311 = vmul.f32 %v2947, 0.2
  %v3312 = vmul.f32 %v2948, 0.2
  %v3313 = vmul.f32 %v2949, 0.2
  %v3314 = vmul.f32 %v2950, 0.2
  %v3315 = vmul.f32 %v2951, 0.2
  %v3316 = vmul.f32 %v2952, 0.2
  %v3317 = vmul.f32 %v2953, 0.2
  %v3318 = vmul.f32 %v2954, 0.2
  %v3319 = vmul.f32 %v2955, 0.2
  %v3320 = vmul.f32 %v2956, 0.2
  %v3321 = vmul.f32 %v2957, 0.2
  %v3322 = vmul.f32 %v2958, 0.2
  %v3323 = vmul.f32 %v2959, 0.2
  %v3324 = vmul.f32 %v2960, 0.2
  %v3325 = vmul.f32 %v2961, 0.2
  %v3326 = vmul.f32 %v2962, 0.2
  %v3327 = vmul.f32 %v2963, 0.2
  %v3328 = vmul.f32 %v2964, 0.2
  %v3329 = vmul.f32 %v2965, 0.2
  %v3330 = vmul.f32 %v2966, 0.2
  %v3331 = vmul.f32 %v2967, 0.2
  %v3332 = vmul.f32 %v2968, 0.2
  %v3333 = vmul.f32 %v2969, 0.2
  %v3334 = vmul.f32 %v2970, 0.2
  %v3335 = vmul.f32 %v2971, 0.2
  %v3336 = vmul.f32 %v2972, 0.2
  %v3337 = vmul.f32 %v2973, 0.2
  %v3338 = vmul.f32 %v2974, 0.2
  %v3339 = vmul.f32 %v2975, 0.2
  %v3340 = vmul.f32 %v2976, 0.2
  %v3341 = vmul.f32 %v2977, 0.2
  %v3342 = vmul.f32 %v2978, 0.2
  %v3343 = vmul.f32 %v2979, 0.2
  %v3344 = vmul.f32 %v2980, 0.2
  %v3345 = vmul.f32 %v2981, 0.2
  %v3346 = vmul.f32 %v2982, 0.2
  %v3347 = vmul.f32 %v2983, 0.2
  %v3348 = vmul.f32 %v2984, 0.2
  %v3349 = vmul.f32 %v2985, 0.2
  %v3350 = vmul.f32 %v2986, 0.2
  %v3351 = vmul.f32 %v2987, 0.2
  %v3352 = vmul.f32 %v2988, 0.2
  %v3353 = vmul.f32 %v2989, 0.2
  %v3354 = vmul.f32 %v2990, 0.2
  %v3355 = vmul.f32 %v2991, 0.2
  %v3356 = vmul.f32 %v2992, 0.2
  %v3357 = vmul.f32 %v2993, 0.2
  %v3358 = vmul.f32 %v2994, 0.2
  %v3359 = vmul.f32 %v2995, 0.2
  %v3360 = vmul.f32 %v2996, 0.2
  %v3361 = vmul.f32 %v2997, 0.2
  %v3362 = vmul.f32 %v2998, 0.2
  %v3363 = vmul.f32 %v2999, 0.2
  %v3364 = vmul.f32 %v3000, 0.2
  %v3365 = vmul.f32 %v3001, 0.2
  %v3366 = vmul.f32 %v3002, 0.2
  %v3367 = vmul.f32 %v3003, 0.2
  %v3368 = vmul.f32 %v3004, 0.2
  %v3369 = vmul.f32 %v3005, 0.2
  %v3370 = vmul.f32 %v3006, 0.2
  %v3371 = vmul.f32 %v3007, 0.2
  %v3372 = vmul.f32 %v3008, 0.2
  %v3373 = vmul.f32 %v3009, 0.2
  %v3374 = vmul.f32 %v3010, 0.2
  %v3375 = vmul.f32 %v3011, 0.2
  %v3376 = vmul.f32 %v3012, 0.2
  %v3377 = vmul.f32 %v3013, 0.2
  %v3378 = vmul.f32 %v3014, 0.2
  %v3379 = vmul.f32 %v3015, 0.2
  %v3380 = vmul.f32 %v3016, 0.2
  %v3381 = vmul.f32 %v3017, 0.2
  %v3382 = vmul.f32 %v3018, 0.2
  %v3383 = vmul.f32 %v3019, 0.2
  %v3384 = vmul.f32 %v3020, 0.2
  %v3385 = vmul.f32 %v3021, 0.2
  %v3386 = vmul.f32 %v3022, 0.2
  %v3387 = vmul.f32 %v3023, 0.2
  %v3388 = vmul.f32 %v3024, 0.2
  %v3389 = vmul.f32 %v3025, 0.2
  %v3390 = vsel %vm3026, %v2844, %v3208
  %v3391 = vsel %vm3027, %v2845, %v3209
  %v3392 = vsel %vm3028, %v2846, %v3210
  %v3393 = vsel %vm3029, %v2847, %v3211
  %v3394 = vsel %vm3030, %v2848, %v3212
  %v3395 = vsel %vm3031, %v2849, %v3213
  %v3396 = vsel %vm3032, %v2850, %v3214
  %v3397 = vsel %vm3033, %v2851, %v3215
  %v3398 = vsel %vm3034, %v2852, %v3216
  %v3399 = vsel %vm3035, %v2853, %v3217
  %v3400 = vsel %vm3036, %v2854, %v3218
  %v3401 = vsel %vm3037, %v2855, %v3219
  %v3402 = vsel %vm3038, %v2856, %v3220
  %v3403 = vsel %vm3039, %v2857, %v3221
  %v3404 = vsel %vm3040, %v2858, %v3222
  %v3405 = vsel %vm3041, %v2859, %v3223
  %v3406 = vsel %vm3042, %v2860, %v3224
  %v3407 = vsel %vm3043, %v2861, %v3225
  %v3408 = vsel %vm3044, %v2862, %v3226
  %v3409 = vsel %vm3045, %v2863, %v3227
  %v3410 = vsel %vm3046, %v2864, %v3228
  %v3411 = vsel %vm3047, %v2865, %v3229
  %v3412 = vsel %vm3048, %v2866, %v3230
  %v3413 = vsel %vm3049, %v2867, %v3231
  %v3414 = vsel %vm3050, %v2868, %v3232
  %v3415 = vsel %vm3051, %v2869, %v3233
  %v3416 = vsel %vm3052, %v2870, %v3234
  %v3417 = vsel %vm3053, %v2871, %v3235
  %v3418 = vsel %vm3054, %v2872, %v3236
  %v3419 = vsel %vm3055, %v2873, %v3237
  %v3420 = vsel %vm3056, %v2874, %v3238
  %v3421 = vsel %vm3057, %v2875, %v3239
  %v3422 = vsel %vm3058, %v2876, %v3240
  %v3423 = vsel %vm3059, %v2877, %v3241
  %v3424 = vsel %vm3060, %v2878, %v3242
  %v3425 = vsel %vm3061, %v2879, %v3243
  %v3426 = vsel %vm3062, %v2880, %v3244
  %v3427 = vsel %vm3063, %v2881, %v3245
  %v3428 = vsel %vm3064, %v2882, %v3246
  %v3429 = vsel %vm3065, %v2883, %v3247
  %v3430 = vsel %vm3066, %v2884, %v3248
  %v3431 = vsel %vm3067, %v2885, %v3249
  %v3432 = vsel %vm3068, %v2886, %v3250
  %v3433 = vsel %vm3069, %v2887, %v3251
  %v3434 = vsel %vm3070, %v2888, %v3252
  %v3435 = vsel %vm3071, %v2889, %v3253
  %v3436 = vsel %vm3072, %v2890, %v3254
  %v3437 = vsel %vm3073, %v2891, %v3255
  %v3438 = vsel %vm3074, %v2892, %v3256
  %v3439 = vsel %vm3075, %v2893, %v3257
  %v3440 = vsel %vm3076, %v2894, %v3258
  %v3441 = vsel %vm3077, %v2895, %v3259
  %v3442 = vsel %vm3078, %v2896, %v3260
  %v3443 = vsel %vm3079, %v2897, %v3261
  %v3444 = vsel %vm3080, %v2898, %v3262
  %v3445 = vsel %vm3081, %v2899, %v3263
  %v3446 = vsel %vm3082, %v2900, %v3264
  %v3447 = vsel %vm3083, %v2901, %v3265
  %v3448 = vsel %vm3084, %v2902, %v3266
  %v3449 = vsel %vm3085, %v2903, %v3267
  %v3450 = vsel %vm3086, %v2904, %v3268
  %v3451 = vsel %vm3087, %v2905, %v3269
  %v3452 = vsel %vm3088, %v2906, %v3270
  %v3453 = vsel %vm3089, %v2907, %v3271
  %v3454 = vsel %vm3090, %v2908, %v3272
  %v3455 = vsel %vm3091, %v2909, %v3273
  %v3456 = vsel %vm3092, %v2910, %v3274
  %v3457 = vsel %vm3093, %v2911, %v3275
  %v3458 = vsel %vm3094, %v2912, %v3276
  %v3459 = vsel %vm3095, %v2913, %v3277
  %v3460 = vsel %vm3096, %v2914, %v3278
  %v3461 = vsel %vm3097, %v2915, %v3279
  %v3462 = vsel %vm3098, %v2916, %v3280
  %v3463 = vsel %vm3099, %v2917, %v3281
  %v3464 = vsel %vm3100, %v2918, %v3282
  %v3465 = vsel %vm3101, %v2919, %v3283
  %v3466 = vsel %vm3102, %v2920, %v3284
  %v3467 = vsel %vm3103, %v2921, %v3285
  %v3468 = vsel %vm3104, %v2922, %v3286
  %v3469 = vsel %vm3105, %v2923, %v3287
  %v3470 = vsel %vm3106, %v2924, %v3288
  %v3471 = vsel %vm3107, %v2925, %v3289
  %v3472 = vsel %vm3108, %v2926, %v3290
  %v3473 = vsel %vm3109, %v2927, %v3291
  %v3474 = vsel %vm3110, %v2928, %v3292
  %v3475 = vsel %vm3111, %v2929, %v3293
  %v3476 = vsel %vm3112, %v2930, %v3294
  %v3477 = vsel %vm3113, %v2931, %v3295
  %v3478 = vsel %vm3114, %v2932, %v3296
  %v3479 = vsel %vm3115, %v2933, %v3297
  %v3480 = vsel %vm3116, %v2934, %v3298
  %v3481 = vsel %vm3117, %v2935, %v3299
  %v3482 = vsel %vm3118, %v2936, %v3300
  %v3483 = vsel %vm3119, %v2937, %v3301
  %v3484 = vsel %vm3120, %v2938, %v3302
  %v3485 = vsel %vm3121, %v2939, %v3303
  %v3486 = vsel %vm3122, %v2940, %v3304
  %v3487 = vsel %vm3123, %v2941, %v3305
  %v3488 = vsel %vm3124, %v2942, %v3306
  %v3489 = vsel %vm3125, %v2943, %v3307
  %v3490 = vsel %vm3126, %v2944, %v3308
  %v3491 = vsel %vm3127, %v2945, %v3309
  %v3492 = vsel %vm3128, %v2946, %v3310
  %v3493 = vsel %vm3129, %v2947, %v3311
  %v3494 = vsel %vm3130, %v2948, %v3312
  %v3495 = vsel %vm3131, %v2949, %v3313
  %v3496 = vsel %vm3132, %v2950, %v3314
  %v3497 = vsel %vm3133, %v2951, %v3315
  %v3498 = vsel %vm3134, %v2952, %v3316
  %v3499 = vsel %vm3135, %v2953, %v3317
  %v3500 = vsel %vm3136, %v2954, %v3318
  %v3501 = vsel %vm3137, %v2955, %v3319
  %v3502 = vsel %vm3138, %v2956, %v3320
  %v3503 = vsel %vm3139, %v2957, %v3321
  %v3504 = vsel %vm3140, %v2958, %v3322
  %v3505 = vsel %vm3141, %v2959, %v3323
  %v3506 = vsel %vm3142, %v2960, %v3324
  %v3507 = vsel %vm3143, %v2961, %v3325
  %v3508 = vsel %vm3144, %v2962, %v3326
  %v3509 = vsel %vm3145, %v2963, %v3327
  %v3510 = vsel %vm3146, %v2964, %v3328
  %v3511 = vsel %vm3147, %v2965, %v3329
  %v3512 = vsel %vm3148, %v2966, %v3330
  %v3513 = vsel %vm3149, %v2967, %v3331
  %v3514 = vsel %vm3150, %v2968, %v3332
  %v3515 = vsel %vm3151, %v2969, %v3333
  %v3516 = vsel %vm3152, %v2970, %v3334
  %v3517 = vsel %vm3153, %v2971, %v3335
  %v3518 = vsel %vm3154, %v2972, %v3336
  %v3519 = vsel %vm3155, %v2973, %v3337
  %v3520 = vsel %vm3156, %v2974, %v3338
  %v3521 = vsel %vm3157, %v2975, %v3339
  %v3522 = vsel %vm3158, %v2976, %v3340
  %v3523 = vsel %vm3159, %v2977, %v3341
  %v3524 = vsel %vm3160, %v2978, %v3342
  %v3525 = vsel %vm3161, %v2979, %v3343
  %v3526 = vsel %vm3162, %v2980, %v3344
  %v3527 = vsel %vm3163, %v2981, %v3345
  %v3528 = vsel %vm3164, %v2982, %v3346
  %v3529 = vsel %vm3165, %v2983, %v3347
  %v3530 = vsel %vm3166, %v2984, %v3348
  %v3531 = vsel %vm3167, %v2985, %v3349
  %v3532 = vsel %vm3168, %v2986, %v3350
  %v3533 = vsel %vm3169, %v2987, %v3351
  %v3534 = vsel %vm3170, %v2988, %v3352
  %v3535 = vsel %vm3171, %v2989, %v3353
  %v3536 = vsel %vm3172, %v2990, %v3354
  %v3537 = vsel %vm3173, %v2991, %v3355
  %v3538 = vsel %vm3174, %v2992, %v3356
  %v3539 = vsel %vm3175, %v2993, %v3357
  %v3540 = vsel %vm3176, %v2994, %v3358
  %v3541 = vsel %vm3177, %v2995, %v3359
  %v3542 = vsel %vm3178, %v2996, %v3360
  %v3543 = vsel %vm3179, %v2997, %v3361
  %v3544 = vsel %vm3180, %v2998, %v3362
  %v3545 = vsel %vm3181, %v2999, %v3363
  %v3546 = vsel %vm3182, %v3000, %v3364
  %v3547 = vsel %vm3183, %v3001, %v3365
  %v3548 = vsel %vm3184, %v3002, %v3366
  %v3549 = vsel %vm3185, %v3003, %v3367
  %v3550 = vsel %vm3186, %v3004, %v3368
  %v3551 = vsel %vm3187, %v3005, %v3369
  %v3552 = vsel %vm3188, %v3006, %v3370
  %v3553 = vsel %vm3189, %v3007, %v3371
  %v3554 = vsel %vm3190, %v3008, %v3372
  %v3555 = vsel %vm3191, %v3009, %v3373
  %v3556 = vsel %vm3192, %v3010, %v3374
  %v3557 = vsel %vm3193, %v3011, %v3375
  %v3558 = vsel %vm3194, %v3012, %v3376
  %v3559 = vsel %vm3195, %v3013, %v3377
  %v3560 = vsel %vm3196, %v3014, %v3378
  %v3561 = vsel %vm3197, %v3015, %v3379
  %v3562 = vsel %vm3198, %v3016, %v3380
  %v3563 = vsel %vm3199, %v3017, %v3381
  %v3564 = vsel %vm3200, %v3018, %v3382
  %v3565 = vsel %vm3201, %v3019, %v3383
  %v3566 = vsel %vm3202, %v3020, %v3384
  %v3567 = vsel %vm3203, %v3021, %v3385
  %v3568 = vsel %vm3204, %v3022, %v3386
  %v3569 = vsel %vm3205, %v3023, %v3387
  %v3570 = vsel %vm3206, %v3024, %v3388
  %v3571 = vsel %vm3207, %v3025, %v3389
  %v3572 = vlaneseq
  %v3573 = vshrl.u32 %v3572, 7
  %v3574 = vadd.s32 %v3573, 8
  %v3575 = vadd.s32 %v3573, 16
  %v3576 = vadd.s32 %v3573, 24
  %v3577 = vadd.s32 %v3573, 32
  %v3578 = vadd.s32 %v3573, 40
  %v3579 = vadd.s32 %v3573, 48
  %v3580 = vadd.s32 %v3573, 56
  %v3581 = vadd.s32 %v3573, 64
  %v3582 = vadd.s32 %v3573, 72
  %v3583 = vadd.s32 %v3573, 80
  %v3584 = vadd.s32 %v3573, 88
  %v3585 = vadd.s32 %v3573, 96
  %v3586 = vadd.s32 %v3573, 104
  %v3587 = vadd.s32 %v3573, 112
  %v3588 = vadd.s32 %v3573, 120
  %v3589 = vadd.s32 %v3573, 128
  %v3590 = vadd.s32 %v3573, 136
  %v3591 = vadd.s32 %v3573, 144
  %v3592 = vadd.s32 %v3573, 152
  %v3593 = vadd.s32 %v3573, 160
  %v3594 = vadd.s32 %v3573, 168
  %v3595 = vadd.s32 %v3573, 176
  %v3596 = vadd.s32 %v3573, 184
  %v3597 = vadd.s32 %v3573, 192
  %v3598 = vadd.s32 %v3573, 200
  %vm3599 = vcmp.lt.s32.totalorder %v3573, 0
  %v3600 = vsub.s32 0, %v3573
  %v3601 = vsel %vm3599, %v3600, %v3573
  %v3602 = vshrl.u32 %v3601, 4
  %v3603 = vand.u32 %v3601, 15
  %v3604 = vsub.s32 0, %v3603
  %v3605 = vsel %vm3599, %v3604, %v3603
  %vm3606 = vcmp.lt.s32.totalorder %v3574, 0
  %v3607 = vsub.s32 0, %v3574
  %v3608 = vsel %vm3606, %v3607, %v3574
  %v3609 = vshrl.u32 %v3608, 4
  %v3610 = vand.u32 %v3608, 15
  %v3611 = vsub.s32 0, %v3610
  %v3612 = vsel %vm3606, %v3611, %v3610
  %vm3613 = vcmp.lt.s32.totalorder %v3575, 0
  %v3614 = vsub.s32 0, %v3575
  %v3615 = vsel %vm3613, %v3614, %v3575
  %v3616 = vshrl.u32 %v3615, 4
  %v3617 = vand.u32 %v3615, 15
  %v3618 = vsub.s32 0, %v3617
  %v3619 = vsel %vm3613, %v3618, %v3617
  %vm3620 = vcmp.lt.s32.totalorder %v3576, 0
  %v3621 = vsub.s32 0, %v3576
  %v3622 = vsel %vm3620, %v3621, %v3576
  %v3623 = vshrl.u32 %v3622, 4
  %v3624 = vand.u32 %v3622, 15
  %v3625 = vsub.s32 0, %v3624
  %v3626 = vsel %vm3620, %v3625, %v3624
  %vm3627 = vcmp.lt.s32.totalorder %v3577, 0
  %v3628 = vsub.s32 0, %v3577
  %v3629 = vsel %vm3627, %v3628, %v3577
  %v3630 = vshrl.u32 %v3629, 4
  %v3631 = vand.u32 %v3629, 15
  %v3632 = vsub.s32 0, %v3631
  %v3633 = vsel %vm3627, %v3632, %v3631
  %vm3634 = vcmp.lt.s32.totalorder %v3578, 0
  %v3635 = vsub.s32 0, %v3578
  %v3636 = vsel %vm3634, %v3635, %v3578
  %v3637 = vshrl.u32 %v3636, 4
  %v3638 = vand.u32 %v3636, 15
  %v3639 = vsub.s32 0, %v3638
  %v3640 = vsel %vm3634, %v3639, %v3638
  %vm3641 = vcmp.lt.s32.totalorder %v3579, 0
  %v3642 = vsub.s32 0, %v3579
  %v3643 = vsel %vm3641, %v3642, %v3579
  %v3644 = vshrl.u32 %v3643, 4
  %v3645 = vand.u32 %v3643, 15
  %v3646 = vsub.s32 0, %v3645
  %v3647 = vsel %vm3641, %v3646, %v3645
  %vm3648 = vcmp.lt.s32.totalorder %v3580, 0
  %v3649 = vsub.s32 0, %v3580
  %v3650 = vsel %vm3648, %v3649, %v3580
  %v3651 = vshrl.u32 %v3650, 4
  %v3652 = vand.u32 %v3650, 15
  %v3653 = vsub.s32 0, %v3652
  %v3654 = vsel %vm3648, %v3653, %v3652
  %vm3655 = vcmp.lt.s32.totalorder %v3581, 0
  %v3656 = vsub.s32 0, %v3581
  %v3657 = vsel %vm3655, %v3656, %v3581
  %v3658 = vshrl.u32 %v3657, 4
  %v3659 = vand.u32 %v3657, 15
  %v3660 = vsub.s32 0, %v3659
  %v3661 = vsel %vm3655, %v3660, %v3659
  %vm3662 = vcmp.lt.s32.totalorder %v3582, 0
  %v3663 = vsub.s32 0, %v3582
  %v3664 = vsel %vm3662, %v3663, %v3582
  %v3665 = vshrl.u32 %v3664, 4
  %v3666 = vand.u32 %v3664, 15
  %v3667 = vsub.s32 0, %v3666
  %v3668 = vsel %vm3662, %v3667, %v3666
  %vm3669 = vcmp.lt.s32.totalorder %v3583, 0
  %v3670 = vsub.s32 0, %v3583
  %v3671 = vsel %vm3669, %v3670, %v3583
  %v3672 = vshrl.u32 %v3671, 4
  %v3673 = vand.u32 %v3671, 15
  %v3674 = vsub.s32 0, %v3673
  %v3675 = vsel %vm3669, %v3674, %v3673
  %vm3676 = vcmp.lt.s32.totalorder %v3584, 0
  %v3677 = vsub.s32 0, %v3584
  %v3678 = vsel %vm3676, %v3677, %v3584
  %v3679 = vshrl.u32 %v3678, 4
  %v3680 = vand.u32 %v3678, 15
  %v3681 = vsub.s32 0, %v3680
  %v3682 = vsel %vm3676, %v3681, %v3680
  %vm3683 = vcmp.lt.s32.totalorder %v3585, 0
  %v3684 = vsub.s32 0, %v3585
  %v3685 = vsel %vm3683, %v3684, %v3585
  %v3686 = vshrl.u32 %v3685, 4
  %v3687 = vand.u32 %v3685, 15
  %v3688 = vsub.s32 0, %v3687
  %v3689 = vsel %vm3683, %v3688, %v3687
  %vm3690 = vcmp.lt.s32.totalorder %v3586, 0
  %v3691 = vsub.s32 0, %v3586
  %v3692 = vsel %vm3690, %v3691, %v3586
  %v3693 = vshrl.u32 %v3692, 4
  %v3694 = vand.u32 %v3692, 15
  %v3695 = vsub.s32 0, %v3694
  %v3696 = vsel %vm3690, %v3695, %v3694
  %vm3697 = vcmp.lt.s32.totalorder %v3587, 0
  %v3698 = vsub.s32 0, %v3587
  %v3699 = vsel %vm3697, %v3698, %v3587
  %v3700 = vshrl.u32 %v3699, 4
  %v3701 = vand.u32 %v3699, 15
  %v3702 = vsub.s32 0, %v3701
  %v3703 = vsel %vm3697, %v3702, %v3701
  %vm3704 = vcmp.lt.s32.totalorder %v3588, 0
  %v3705 = vsub.s32 0, %v3588
  %v3706 = vsel %vm3704, %v3705, %v3588
  %v3707 = vshrl.u32 %v3706, 4
  %v3708 = vand.u32 %v3706, 15
  %v3709 = vsub.s32 0, %v3708
  %v3710 = vsel %vm3704, %v3709, %v3708
  %vm3711 = vcmp.lt.s32.totalorder %v3589, 0
  %v3712 = vsub.s32 0, %v3589
  %v3713 = vsel %vm3711, %v3712, %v3589
  %v3714 = vshrl.u32 %v3713, 4
  %v3715 = vand.u32 %v3713, 15
  %v3716 = vsub.s32 0, %v3715
  %v3717 = vsel %vm3711, %v3716, %v3715
  %vm3718 = vcmp.lt.s32.totalorder %v3590, 0
  %v3719 = vsub.s32 0, %v3590
  %v3720 = vsel %vm3718, %v3719, %v3590
  %v3721 = vshrl.u32 %v3720, 4
  %v3722 = vand.u32 %v3720, 15
  %v3723 = vsub.s32 0, %v3722
  %v3724 = vsel %vm3718, %v3723, %v3722
  %vm3725 = vcmp.lt.s32.totalorder %v3591, 0
  %v3726 = vsub.s32 0, %v3591
  %v3727 = vsel %vm3725, %v3726, %v3591
  %v3728 = vshrl.u32 %v3727, 4
  %v3729 = vand.u32 %v3727, 15
  %v3730 = vsub.s32 0, %v3729
  %v3731 = vsel %vm3725, %v3730, %v3729
  %vm3732 = vcmp.lt.s32.totalorder %v3592, 0
  %v3733 = vsub.s32 0, %v3592
  %v3734 = vsel %vm3732, %v3733, %v3592
  %v3735 = vshrl.u32 %v3734, 4
  %v3736 = vand.u32 %v3734, 15
  %v3737 = vsub.s32 0, %v3736
  %v3738 = vsel %vm3732, %v3737, %v3736
  %vm3739 = vcmp.lt.s32.totalorder %v3593, 0
  %v3740 = vsub.s32 0, %v3593
  %v3741 = vsel %vm3739, %v3740, %v3593
  %v3742 = vshrl.u32 %v3741, 4
  %v3743 = vand.u32 %v3741, 15
  %v3744 = vsub.s32 0, %v3743
  %v3745 = vsel %vm3739, %v3744, %v3743
  %vm3746 = vcmp.lt.s32.totalorder %v3594, 0
  %v3747 = vsub.s32 0, %v3594
  %v3748 = vsel %vm3746, %v3747, %v3594
  %v3749 = vshrl.u32 %v3748, 4
  %v3750 = vand.u32 %v3748, 15
  %v3751 = vsub.s32 0, %v3750
  %v3752 = vsel %vm3746, %v3751, %v3750
  %vm3753 = vcmp.lt.s32.totalorder %v3595, 0
  %v3754 = vsub.s32 0, %v3595
  %v3755 = vsel %vm3753, %v3754, %v3595
  %v3756 = vshrl.u32 %v3755, 4
  %v3757 = vand.u32 %v3755, 15
  %v3758 = vsub.s32 0, %v3757
  %v3759 = vsel %vm3753, %v3758, %v3757
  %vm3760 = vcmp.lt.s32.totalorder %v3596, 0
  %v3761 = vsub.s32 0, %v3596
  %v3762 = vsel %vm3760, %v3761, %v3596
  %v3763 = vshrl.u32 %v3762, 4
  %v3764 = vand.u32 %v3762, 15
  %v3765 = vsub.s32 0, %v3764
  %v3766 = vsel %vm3760, %v3765, %v3764
  %vm3767 = vcmp.lt.s32.totalorder %v3597, 0
  %v3768 = vsub.s32 0, %v3597
  %v3769 = vsel %vm3767, %v3768, %v3597
  %v3770 = vshrl.u32 %v3769, 4
  %v3771 = vand.u32 %v3769, 15
  %v3772 = vsub.s32 0, %v3771
  %v3773 = vsel %vm3767, %v3772, %v3771
  %vm3774 = vcmp.lt.s32.totalorder %v3598, 0
  %v3775 = vsub.s32 0, %v3598
  %v3776 = vsel %vm3774, %v3775, %v3598
  %v3777 = vshrl.u32 %v3776, 4
  %v3778 = vand.u32 %v3776, 15
  %v3779 = vsub.s32 0, %v3778
  %v3780 = vsel %vm3774, %v3779, %v3778
  %vm3781 = vcmp.ne.s32.totalorder %v3605, 0
  %vm3782 = vcmp.ne.s32.totalorder %v3612, 0
  %vm3783 = vcmp.ne.s32.totalorder %v3619, 0
  %vm3784 = vcmp.ne.s32.totalorder %v3626, 0
  %vm3785 = vcmp.ne.s32.totalorder %v3633, 0
  %vm3786 = vcmp.ne.s32.totalorder %v3640, 0
  %vm3787 = vcmp.ne.s32.totalorder %v3647, 0
  %vm3788 = vcmp.ne.s32.totalorder %v3654, 0
  %vm3789 = vcmp.ne.s32.totalorder %v3661, 0
  %vm3790 = vcmp.ne.s32.totalorder %v3668, 0
  %vm3791 = vcmp.ne.s32.totalorder %v3675, 0
  %vm3792 = vcmp.ne.s32.totalorder %v3682, 0
  %vm3793 = vcmp.ne.s32.totalorder %v3689, 0
  %vm3794 = vcmp.ne.s32.totalorder %v3696, 0
  %vm3795 = vcmp.ne.s32.totalorder %v3703, 0
  %vm3796 = vcmp.ne.s32.totalorder %v3710, 0
  %vm3797 = vcmp.ne.s32.totalorder %v3717, 0
  %vm3798 = vcmp.ne.s32.totalorder %v3724, 0
  %vm3799 = vcmp.ne.s32.totalorder %v3731, 0
  %vm3800 = vcmp.ne.s32.totalorder %v3738, 0
  %vm3801 = vcmp.ne.s32.totalorder %v3745, 0
  %vm3802 = vcmp.ne.s32.totalorder %v3752, 0
  %vm3803 = vcmp.ne.s32.totalorder %v3759, 0
  %vm3804 = vcmp.ne.s32.totalorder %v3766, 0
  %vm3805 = vcmp.ne.s32.totalorder %v3773, 0
  %vm3806 = vcmp.ne.s32.totalorder %v3780, 0
  %vm3807 = vcmp.lt.s32.totalorder %v3605, 0
  %vm3808 = vcmp.lt.s32.totalorder %v3612, 0
  %vm3809 = vcmp.lt.s32.totalorder %v3619, 0
  %vm3810 = vcmp.lt.s32.totalorder %v3626, 0
  %vm3811 = vcmp.lt.s32.totalorder %v3633, 0
  %vm3812 = vcmp.lt.s32.totalorder %v3640, 0
  %vm3813 = vcmp.lt.s32.totalorder %v3647, 0
  %vm3814 = vcmp.lt.s32.totalorder %v3654, 0
  %vm3815 = vcmp.lt.s32.totalorder %v3661, 0
  %vm3816 = vcmp.lt.s32.totalorder %v3668, 0
  %vm3817 = vcmp.lt.s32.totalorder %v3675, 0
  %vm3818 = vcmp.lt.s32.totalorder %v3682, 0
  %vm3819 = vcmp.lt.s32.totalorder %v3689, 0
  %vm3820 = vcmp.lt.s32.totalorder %v3696, 0
  %vm3821 = vcmp.lt.s32.totalorder %v3703, 0
  %vm3822 = vcmp.lt.s32.totalorder %v3710, 0
  %vm3823 = vcmp.lt.s32.totalorder %v3717, 0
  %vm3824 = vcmp.lt.s32.totalorder %v3724, 0
  %vm3825 = vcmp.lt.s32.totalorder %v3731, 0
  %vm3826 = vcmp.lt.s32.totalorder %v3738, 0
  %vm3827 = vcmp.lt.s32.totalorder %v3745, 0
  %vm3828 = vcmp.lt.s32.totalorder %v3752, 0
  %vm3829 = vcmp.lt.s32.totalorder %v3759, 0
  %vm3830 = vcmp.lt.s32.totalorder %v3766, 0
  %vm3831 = vcmp.lt.s32.totalorder %v3773, 0
  %vm3832 = vcmp.lt.s32.totalorder %v3780, 0
  %vm3833 = vmand %vm3807, %vm3781
  %vm3834 = vmand %vm3808, %vm3782
  %vm3835 = vmand %vm3809, %vm3783
  %vm3836 = vmand %vm3810, %vm3784
  %vm3837 = vmand %vm3811, %vm3785
  %vm3838 = vmand %vm3812, %vm3786
  %vm3839 = vmand %vm3813, %vm3787
  %vm3840 = vmand %vm3814, %vm3788
  %vm3841 = vmand %vm3815, %vm3789
  %vm3842 = vmand %vm3816, %vm3790
  %vm3843 = vmand %vm3817, %vm3791
  %vm3844 = vmand %vm3818, %vm3792
  %vm3845 = vmand %vm3819, %vm3793
  %vm3846 = vmand %vm3820, %vm3794
  %vm3847 = vmand %vm3821, %vm3795
  %vm3848 = vmand %vm3822, %vm3796
  %vm3849 = vmand %vm3823, %vm3797
  %vm3850 = vmand %vm3824, %vm3798
  %vm3851 = vmand %vm3825, %vm3799
  %vm3852 = vmand %vm3826, %vm3800
  %vm3853 = vmand %vm3827, %vm3801
  %vm3854 = vmand %vm3828, %vm3802
  %vm3855 = vmand %vm3829, %vm3803
  %vm3856 = vmand %vm3830, %vm3804
  %vm3857 = vmand %vm3831, %vm3805
  %vm3858 = vmand %vm3832, %vm3806
  %v3859 = vadd.s32 %v3605, 16
  %v3860 = vadd.s32 %v3612, 16
  %v3861 = vadd.s32 %v3619, 16
  %v3862 = vadd.s32 %v3626, 16
  %v3863 = vadd.s32 %v3633, 16
  %v3864 = vadd.s32 %v3640, 16
  %v3865 = vadd.s32 %v3647, 16
  %v3866 = vadd.s32 %v3654, 16
  %v3867 = vadd.s32 %v3661, 16
  %v3868 = vadd.s32 %v3668, 16
  %v3869 = vadd.s32 %v3675, 16
  %v3870 = vadd.s32 %v3682, 16
  %v3871 = vadd.s32 %v3689, 16
  %v3872 = vadd.s32 %v3696, 16
  %v3873 = vadd.s32 %v3703, 16
  %v3874 = vadd.s32 %v3710, 16
  %v3875 = vadd.s32 %v3717, 16
  %v3876 = vadd.s32 %v3724, 16
  %v3877 = vadd.s32 %v3731, 16
  %v3878 = vadd.s32 %v3738, 16
  %v3879 = vadd.s32 %v3745, 16
  %v3880 = vadd.s32 %v3752, 16
  %v3881 = vadd.s32 %v3759, 16
  %v3882 = vadd.s32 %v3766, 16
  %v3883 = vadd.s32 %v3773, 16
  %v3884 = vadd.s32 %v3780, 16
  %v3885 = vsel %vm3833, %v3859, %v3605
  %v3886 = vsel %vm3834, %v3860, %v3612
  %v3887 = vsel %vm3835, %v3861, %v3619
  %v3888 = vsel %vm3836, %v3862, %v3626
  %v3889 = vsel %vm3837, %v3863, %v3633
  %v3890 = vsel %vm3838, %v3864, %v3640
  %v3891 = vsel %vm3839, %v3865, %v3647
  %v3892 = vsel %vm3840, %v3866, %v3654
  %v3893 = vsel %vm3841, %v3867, %v3661
  %v3894 = vsel %vm3842, %v3868, %v3668
  %v3895 = vsel %vm3843, %v3869, %v3675
  %v3896 = vsel %vm3844, %v3870, %v3682
  %v3897 = vsel %vm3845, %v3871, %v3689
  %v3898 = vsel %vm3846, %v3872, %v3696
  %v3899 = vsel %vm3847, %v3873, %v3703
  %v3900 = vsel %vm3848, %v3874, %v3710
  %v3901 = vsel %vm3849, %v3875, %v3717
  %v3902 = vsel %vm3850, %v3876, %v3724
  %v3903 = vsel %vm3851, %v3877, %v3731
  %v3904 = vsel %vm3852, %v3878, %v3738
  %v3905 = vsel %vm3853, %v3879, %v3745
  %v3906 = vsel %vm3854, %v3880, %v3752
  %v3907 = vsel %vm3855, %v3881, %v3759
  %v3908 = vsel %vm3856, %v3882, %v3766
  %v3909 = vsel %vm3857, %v3883, %v3773
  %v3910 = vsel %vm3858, %v3884, %v3780
  %vm3911 = vcmp.lt.s32.totalorder %v3885, 2
  %vm3912 = vcmp.lt.s32.totalorder %v3886, 2
  %vm3913 = vcmp.lt.s32.totalorder %v3887, 2
  %vm3914 = vcmp.lt.s32.totalorder %v3888, 2
  %vm3915 = vcmp.lt.s32.totalorder %v3889, 2
  %vm3916 = vcmp.lt.s32.totalorder %v3890, 2
  %vm3917 = vcmp.lt.s32.totalorder %v3891, 2
  %vm3918 = vcmp.lt.s32.totalorder %v3892, 2
  %vm3919 = vcmp.lt.s32.totalorder %v3893, 2
  %vm3920 = vcmp.lt.s32.totalorder %v3894, 2
  %vm3921 = vcmp.lt.s32.totalorder %v3895, 2
  %vm3922 = vcmp.lt.s32.totalorder %v3896, 2
  %vm3923 = vcmp.lt.s32.totalorder %v3897, 2
  %vm3924 = vcmp.lt.s32.totalorder %v3898, 2
  %vm3925 = vcmp.lt.s32.totalorder %v3899, 2
  %vm3926 = vcmp.lt.s32.totalorder %v3900, 2
  %vm3927 = vcmp.lt.s32.totalorder %v3901, 2
  %vm3928 = vcmp.lt.s32.totalorder %v3902, 2
  %vm3929 = vcmp.lt.s32.totalorder %v3903, 2
  %vm3930 = vcmp.lt.s32.totalorder %v3904, 2
  %vm3931 = vcmp.lt.s32.totalorder %v3905, 2
  %vm3932 = vcmp.lt.s32.totalorder %v3906, 2
  %vm3933 = vcmp.lt.s32.totalorder %v3907, 2
  %vm3934 = vcmp.lt.s32.totalorder %v3908, 2
  %vm3935 = vcmp.lt.s32.totalorder %v3909, 2
  %vm3936 = vcmp.lt.s32.totalorder %v3910, 2
  %v3937 = vsel %vm3911, 1, 0
  %v3938 = vsel %vm3912, 1, 0
  %v3939 = vsel %vm3913, 1, 0
  %v3940 = vsel %vm3914, 1, 0
  %v3941 = vsel %vm3915, 1, 0
  %v3942 = vsel %vm3916, 1, 0
  %v3943 = vsel %vm3917, 1, 0
  %v3944 = vsel %vm3918, 1, 0
  %v3945 = vsel %vm3919, 1, 0
  %v3946 = vsel %vm3920, 1, 0
  %v3947 = vsel %vm3921, 1, 0
  %v3948 = vsel %vm3922, 1, 0
  %v3949 = vsel %vm3923, 1, 0
  %v3950 = vsel %vm3924, 1, 0
  %v3951 = vsel %vm3925, 1, 0
  %v3952 = vsel %vm3926, 1, 0
  %v3953 = vsel %vm3927, 1, 0
  %v3954 = vsel %vm3928, 1, 0
  %v3955 = vsel %vm3929, 1, 0
  %v3956 = vsel %vm3930, 1, 0
  %v3957 = vsel %vm3931, 1, 0
  %v3958 = vsel %vm3932, 1, 0
  %v3959 = vsel %vm3933, 1, 0
  %v3960 = vsel %vm3934, 1, 0
  %v3961 = vsel %vm3935, 1, 0
  %v3962 = vsel %vm3936, 1, 0
  %vm3963 = vcmp.eq.s32.totalorder %v3937, 1
  %vm3964 = vcmp.eq.s32.totalorder %v3938, 1
  %vm3965 = vcmp.eq.s32.totalorder %v3939, 1
  %vm3966 = vcmp.eq.s32.totalorder %v3940, 1
  %vm3967 = vcmp.eq.s32.totalorder %v3941, 1
  %vm3968 = vcmp.eq.s32.totalorder %v3942, 1
  %vm3969 = vcmp.eq.s32.totalorder %v3943, 1
  %vm3970 = vcmp.eq.s32.totalorder %v3944, 1
  %vm3971 = vcmp.eq.s32.totalorder %v3945, 1
  %vm3972 = vcmp.eq.s32.totalorder %v3946, 1
  %vm3973 = vcmp.eq.s32.totalorder %v3947, 1
  %vm3974 = vcmp.eq.s32.totalorder %v3948, 1
  %vm3975 = vcmp.eq.s32.totalorder %v3949, 1
  %vm3976 = vcmp.eq.s32.totalorder %v3950, 1
  %vm3977 = vcmp.eq.s32.totalorder %v3951, 1
  %vm3978 = vcmp.eq.s32.totalorder %v3952, 1
  %vm3979 = vcmp.eq.s32.totalorder %v3953, 1
  %vm3980 = vcmp.eq.s32.totalorder %v3954, 1
  %vm3981 = vcmp.eq.s32.totalorder %v3955, 1
  %vm3982 = vcmp.eq.s32.totalorder %v3956, 1
  %vm3983 = vcmp.eq.s32.totalorder %v3957, 1
  %vm3984 = vcmp.eq.s32.totalorder %v3958, 1
  %vm3985 = vcmp.eq.s32.totalorder %v3959, 1
  %vm3986 = vcmp.eq.s32.totalorder %v3960, 1
  %vm3987 = vcmp.eq.s32.totalorder %v3961, 1
  %vm3988 = vcmp.eq.s32.totalorder %v3962, 1
  %v3989 = vsel %vm3963, %v3390, 0.0
  %v3990 = vsel %vm3963, %v3391, 0.0
  %v3991 = vsel %vm3963, %v3392, 0.0
  %v3992 = vsel %vm3963, %v3393, 0.0
  %v3993 = vsel %vm3963, %v3394, 0.0
  %v3994 = vsel %vm3963, %v3395, 0.0
  %v3995 = vsel %vm3963, %v3396, 0.0
  %v3996 = vsel %vm3964, %v3397, 0.0
  %v3997 = vsel %vm3964, %v3398, 0.0
  %v3998 = vsel %vm3964, %v3399, 0.0
  %v3999 = vsel %vm3964, %v3400, 0.0
  %v4000 = vsel %vm3964, %v3401, 0.0
  %v4001 = vsel %vm3964, %v3402, 0.0
  %v4002 = vsel %vm3964, %v3403, 0.0
  %v4003 = vsel %vm3965, %v3404, 0.0
  %v4004 = vsel %vm3965, %v3405, 0.0
  %v4005 = vsel %vm3965, %v3406, 0.0
  %v4006 = vsel %vm3965, %v3407, 0.0
  %v4007 = vsel %vm3965, %v3408, 0.0
  %v4008 = vsel %vm3965, %v3409, 0.0
  %v4009 = vsel %vm3965, %v3410, 0.0
  %v4010 = vsel %vm3966, %v3411, 0.0
  %v4011 = vsel %vm3966, %v3412, 0.0
  %v4012 = vsel %vm3966, %v3413, 0.0
  %v4013 = vsel %vm3966, %v3414, 0.0
  %v4014 = vsel %vm3966, %v3415, 0.0
  %v4015 = vsel %vm3966, %v3416, 0.0
  %v4016 = vsel %vm3966, %v3417, 0.0
  %v4017 = vsel %vm3967, %v3418, 0.0
  %v4018 = vsel %vm3967, %v3419, 0.0
  %v4019 = vsel %vm3967, %v3420, 0.0
  %v4020 = vsel %vm3967, %v3421, 0.0
  %v4021 = vsel %vm3967, %v3422, 0.0
  %v4022 = vsel %vm3967, %v3423, 0.0
  %v4023 = vsel %vm3967, %v3424, 0.0
  %v4024 = vsel %vm3968, %v3425, 0.0
  %v4025 = vsel %vm3968, %v3426, 0.0
  %v4026 = vsel %vm3968, %v3427, 0.0
  %v4027 = vsel %vm3968, %v3428, 0.0
  %v4028 = vsel %vm3968, %v3429, 0.0
  %v4029 = vsel %vm3968, %v3430, 0.0
  %v4030 = vsel %vm3968, %v3431, 0.0
  %v4031 = vsel %vm3969, %v3432, 0.0
  %v4032 = vsel %vm3969, %v3433, 0.0
  %v4033 = vsel %vm3969, %v3434, 0.0
  %v4034 = vsel %vm3969, %v3435, 0.0
  %v4035 = vsel %vm3969, %v3436, 0.0
  %v4036 = vsel %vm3969, %v3437, 0.0
  %v4037 = vsel %vm3969, %v3438, 0.0
  %v4038 = vsel %vm3970, %v3439, 0.0
  %v4039 = vsel %vm3970, %v3440, 0.0
  %v4040 = vsel %vm3970, %v3441, 0.0
  %v4041 = vsel %vm3970, %v3442, 0.0
  %v4042 = vsel %vm3970, %v3443, 0.0
  %v4043 = vsel %vm3970, %v3444, 0.0
  %v4044 = vsel %vm3970, %v3445, 0.0
  %v4045 = vsel %vm3971, %v3446, 0.0
  %v4046 = vsel %vm3971, %v3447, 0.0
  %v4047 = vsel %vm3971, %v3448, 0.0
  %v4048 = vsel %vm3971, %v3449, 0.0
  %v4049 = vsel %vm3971, %v3450, 0.0
  %v4050 = vsel %vm3971, %v3451, 0.0
  %v4051 = vsel %vm3971, %v3452, 0.0
  %v4052 = vsel %vm3972, %v3453, 0.0
  %v4053 = vsel %vm3972, %v3454, 0.0
  %v4054 = vsel %vm3972, %v3455, 0.0
  %v4055 = vsel %vm3972, %v3456, 0.0
  %v4056 = vsel %vm3972, %v3457, 0.0
  %v4057 = vsel %vm3972, %v3458, 0.0
  %v4058 = vsel %vm3972, %v3459, 0.0
  %v4059 = vsel %vm3973, %v3460, 0.0
  %v4060 = vsel %vm3973, %v3461, 0.0
  %v4061 = vsel %vm3973, %v3462, 0.0
  %v4062 = vsel %vm3973, %v3463, 0.0
  %v4063 = vsel %vm3973, %v3464, 0.0
  %v4064 = vsel %vm3973, %v3465, 0.0
  %v4065 = vsel %vm3973, %v3466, 0.0
  %v4066 = vsel %vm3974, %v3467, 0.0
  %v4067 = vsel %vm3974, %v3468, 0.0
  %v4068 = vsel %vm3974, %v3469, 0.0
  %v4069 = vsel %vm3974, %v3470, 0.0
  %v4070 = vsel %vm3974, %v3471, 0.0
  %v4071 = vsel %vm3974, %v3472, 0.0
  %v4072 = vsel %vm3974, %v3473, 0.0
  %v4073 = vsel %vm3975, %v3474, 0.0
  %v4074 = vsel %vm3975, %v3475, 0.0
  %v4075 = vsel %vm3975, %v3476, 0.0
  %v4076 = vsel %vm3975, %v3477, 0.0
  %v4077 = vsel %vm3975, %v3478, 0.0
  %v4078 = vsel %vm3975, %v3479, 0.0
  %v4079 = vsel %vm3975, %v3480, 0.0
  %v4080 = vsel %vm3976, %v3481, 0.0
  %v4081 = vsel %vm3976, %v3482, 0.0
  %v4082 = vsel %vm3976, %v3483, 0.0
  %v4083 = vsel %vm3976, %v3484, 0.0
  %v4084 = vsel %vm3976, %v3485, 0.0
  %v4085 = vsel %vm3976, %v3486, 0.0
  %v4086 = vsel %vm3976, %v3487, 0.0
  %v4087 = vsel %vm3977, %v3488, 0.0
  %v4088 = vsel %vm3977, %v3489, 0.0
  %v4089 = vsel %vm3977, %v3490, 0.0
  %v4090 = vsel %vm3977, %v3491, 0.0
  %v4091 = vsel %vm3977, %v3492, 0.0
  %v4092 = vsel %vm3977, %v3493, 0.0
  %v4093 = vsel %vm3977, %v3494, 0.0
  %v4094 = vsel %vm3978, %v3495, 0.0
  %v4095 = vsel %vm3978, %v3496, 0.0
  %v4096 = vsel %vm3978, %v3497, 0.0
  %v4097 = vsel %vm3978, %v3498, 0.0
  %v4098 = vsel %vm3978, %v3499, 0.0
  %v4099 = vsel %vm3978, %v3500, 0.0
  %v4100 = vsel %vm3978, %v3501, 0.0
  %v4101 = vsel %vm3979, %v3502, 0.0
  %v4102 = vsel %vm3979, %v3503, 0.0
  %v4103 = vsel %vm3979, %v3504, 0.0
  %v4104 = vsel %vm3979, %v3505, 0.0
  %v4105 = vsel %vm3979, %v3506, 0.0
  %v4106 = vsel %vm3979, %v3507, 0.0
  %v4107 = vsel %vm3979, %v3508, 0.0
  %v4108 = vsel %vm3980, %v3509, 0.0
  %v4109 = vsel %vm3980, %v3510, 0.0
  %v4110 = vsel %vm3980, %v3511, 0.0
  %v4111 = vsel %vm3980, %v3512, 0.0
  %v4112 = vsel %vm3980, %v3513, 0.0
  %v4113 = vsel %vm3980, %v3514, 0.0
  %v4114 = vsel %vm3980, %v3515, 0.0
  %v4115 = vsel %vm3981, %v3516, 0.0
  %v4116 = vsel %vm3981, %v3517, 0.0
  %v4117 = vsel %vm3981, %v3518, 0.0
  %v4118 = vsel %vm3981, %v3519, 0.0
  %v4119 = vsel %vm3981, %v3520, 0.0
  %v4120 = vsel %vm3981, %v3521, 0.0
  %v4121 = vsel %vm3981, %v3522, 0.0
  %v4122 = vsel %vm3982, %v3523, 0.0
  %v4123 = vsel %vm3982, %v3524, 0.0
  %v4124 = vsel %vm3982, %v3525, 0.0
  %v4125 = vsel %vm3982, %v3526, 0.0
  %v4126 = vsel %vm3982, %v3527, 0.0
  %v4127 = vsel %vm3982, %v3528, 0.0
  %v4128 = vsel %vm3982, %v3529, 0.0
  %v4129 = vsel %vm3983, %v3530, 0.0
  %v4130 = vsel %vm3983, %v3531, 0.0
  %v4131 = vsel %vm3983, %v3532, 0.0
  %v4132 = vsel %vm3983, %v3533, 0.0
  %v4133 = vsel %vm3983, %v3534, 0.0
  %v4134 = vsel %vm3983, %v3535, 0.0
  %v4135 = vsel %vm3983, %v3536, 0.0
  %v4136 = vsel %vm3984, %v3537, 0.0
  %v4137 = vsel %vm3984, %v3538, 0.0
  %v4138 = vsel %vm3984, %v3539, 0.0
  %v4139 = vsel %vm3984, %v3540, 0.0
  %v4140 = vsel %vm3984, %v3541, 0.0
  %v4141 = vsel %vm3984, %v3542, 0.0
  %v4142 = vsel %vm3984, %v3543, 0.0
  %v4143 = vsel %vm3985, %v3544, 0.0
  %v4144 = vsel %vm3985, %v3545, 0.0
  %v4145 = vsel %vm3985, %v3546, 0.0
  %v4146 = vsel %vm3985, %v3547, 0.0
  %v4147 = vsel %vm3985, %v3548, 0.0
  %v4148 = vsel %vm3985, %v3549, 0.0
  %v4149 = vsel %vm3985, %v3550, 0.0
  %v4150 = vsel %vm3986, %v3551, 0.0
  %v4151 = vsel %vm3986, %v3552, 0.0
  %v4152 = vsel %vm3986, %v3553, 0.0
  %v4153 = vsel %vm3986, %v3554, 0.0
  %v4154 = vsel %vm3986, %v3555, 0.0
  %v4155 = vsel %vm3986, %v3556, 0.0
  %v4156 = vsel %vm3986, %v3557, 0.0
  %v4157 = vsel %vm3987, %v3558, 0.0
  %v4158 = vsel %vm3987, %v3559, 0.0
  %v4159 = vsel %vm3987, %v3560, 0.0
  %v4160 = vsel %vm3987, %v3561, 0.0
  %v4161 = vsel %vm3987, %v3562, 0.0
  %v4162 = vsel %vm3987, %v3563, 0.0
  %v4163 = vsel %vm3987, %v3564, 0.0
  %v4164 = vsel %vm3988, %v3565, 0.0
  %v4165 = vsel %vm3988, %v3566, 0.0
  %v4166 = vsel %vm3988, %v3567, 0.0
  %v4167 = vsel %vm3988, %v3568, 0.0
  %v4168 = vsel %vm3988, %v3569, 0.0
  %v4169 = vsel %vm3988, %v3570, 0.0
  %v4170 = vsel %vm3988, %v3571, 0.0
  %v4171 = vpack.c.bf16 %v3990, %v3989
  %v4172 = vpack.c.bf16 %v3992, %v3991
  %v4173 = vpack.c.bf16 %v3994, %v3993
  %v4174 = vpack.c.bf16 %v3995, %v3995
  %v4175 = vpack.c.bf16 %v3997, %v3996
  %v4176 = vpack.c.bf16 %v3999, %v3998
  %v4177 = vpack.c.bf16 %v4001, %v4000
  %v4178 = vpack.c.bf16 %v4002, %v4002
  %v4179 = vpack.c.bf16 %v4004, %v4003
  %v4180 = vpack.c.bf16 %v4006, %v4005
  %v4181 = vpack.c.bf16 %v4008, %v4007
  %v4182 = vpack.c.bf16 %v4009, %v4009
  %v4183 = vpack.c.bf16 %v4011, %v4010
  %v4184 = vpack.c.bf16 %v4013, %v4012
  %v4185 = vpack.c.bf16 %v4015, %v4014
  %v4186 = vpack.c.bf16 %v4016, %v4016
  %v4187 = vpack.c.bf16 %v4018, %v4017
  %v4188 = vpack.c.bf16 %v4020, %v4019
  %v4189 = vpack.c.bf16 %v4022, %v4021
  %v4190 = vpack.c.bf16 %v4023, %v4023
  %v4191 = vpack.c.bf16 %v4025, %v4024
  %v4192 = vpack.c.bf16 %v4027, %v4026
  %v4193 = vpack.c.bf16 %v4029, %v4028
  %v4194 = vpack.c.bf16 %v4030, %v4030
  %v4195 = vpack.c.bf16 %v4032, %v4031
  %v4196 = vpack.c.bf16 %v4034, %v4033
  %v4197 = vpack.c.bf16 %v4036, %v4035
  %v4198 = vpack.c.bf16 %v4037, %v4037
  %v4199 = vpack.c.bf16 %v4039, %v4038
  %v4200 = vpack.c.bf16 %v4041, %v4040
  %v4201 = vpack.c.bf16 %v4043, %v4042
  %v4202 = vpack.c.bf16 %v4044, %v4044
  %v4203 = vpack.c.bf16 %v4046, %v4045
  %v4204 = vpack.c.bf16 %v4048, %v4047
  %v4205 = vpack.c.bf16 %v4050, %v4049
  %v4206 = vpack.c.bf16 %v4051, %v4051
  %v4207 = vpack.c.bf16 %v4053, %v4052
  %v4208 = vpack.c.bf16 %v4055, %v4054
  %v4209 = vpack.c.bf16 %v4057, %v4056
  %v4210 = vpack.c.bf16 %v4058, %v4058
  %v4211 = vpack.c.bf16 %v4060, %v4059
  %v4212 = vpack.c.bf16 %v4062, %v4061
  %v4213 = vpack.c.bf16 %v4064, %v4063
  %v4214 = vpack.c.bf16 %v4065, %v4065
  %v4215 = vpack.c.bf16 %v4067, %v4066
  %v4216 = vpack.c.bf16 %v4069, %v4068
  %v4217 = vpack.c.bf16 %v4071, %v4070
  %v4218 = vpack.c.bf16 %v4072, %v4072
  %v4219 = vpack.c.bf16 %v4074, %v4073
  %v4220 = vpack.c.bf16 %v4076, %v4075
  %v4221 = vpack.c.bf16 %v4078, %v4077
  %v4222 = vpack.c.bf16 %v4079, %v4079
  %v4223 = vpack.c.bf16 %v4081, %v4080
  %v4224 = vpack.c.bf16 %v4083, %v4082
  %v4225 = vpack.c.bf16 %v4085, %v4084
  %v4226 = vpack.c.bf16 %v4086, %v4086
  %v4227 = vpack.c.bf16 %v4088, %v4087
  %v4228 = vpack.c.bf16 %v4090, %v4089
  %v4229 = vpack.c.bf16 %v4092, %v4091
  %v4230 = vpack.c.bf16 %v4093, %v4093
  %v4231 = vpack.c.bf16 %v4095, %v4094
  %v4232 = vpack.c.bf16 %v4097, %v4096
  %v4233 = vpack.c.bf16 %v4099, %v4098
  %v4234 = vpack.c.bf16 %v4100, %v4100
  %v4235 = vpack.c.bf16 %v4102, %v4101
  %v4236 = vpack.c.bf16 %v4104, %v4103
  %v4237 = vpack.c.bf16 %v4106, %v4105
  %v4238 = vpack.c.bf16 %v4107, %v4107
  %v4239 = vpack.c.bf16 %v4109, %v4108
  %v4240 = vpack.c.bf16 %v4111, %v4110
  %v4241 = vpack.c.bf16 %v4113, %v4112
  %v4242 = vpack.c.bf16 %v4114, %v4114
  %v4243 = vpack.c.bf16 %v4116, %v4115
  %v4244 = vpack.c.bf16 %v4118, %v4117
  %v4245 = vpack.c.bf16 %v4120, %v4119
  %v4246 = vpack.c.bf16 %v4121, %v4121
  %v4247 = vpack.c.bf16 %v4123, %v4122
  %v4248 = vpack.c.bf16 %v4125, %v4124
  %v4249 = vpack.c.bf16 %v4127, %v4126
  %v4250 = vpack.c.bf16 %v4128, %v4128
  %v4251 = vpack.c.bf16 %v4130, %v4129
  %v4252 = vpack.c.bf16 %v4132, %v4131
  %v4253 = vpack.c.bf16 %v4134, %v4133
  %v4254 = vpack.c.bf16 %v4135, %v4135
  %v4255 = vpack.c.bf16 %v4137, %v4136
  %v4256 = vpack.c.bf16 %v4139, %v4138
  %v4257 = vpack.c.bf16 %v4141, %v4140
  %v4258 = vpack.c.bf16 %v4142, %v4142
  %v4259 = vpack.c.bf16 %v4144, %v4143
  %v4260 = vpack.c.bf16 %v4146, %v4145
  %v4261 = vpack.c.bf16 %v4148, %v4147
  %v4262 = vpack.c.bf16 %v4149, %v4149
  %v4263 = vpack.c.bf16 %v4151, %v4150
  %v4264 = vpack.c.bf16 %v4153, %v4152
  %v4265 = vpack.c.bf16 %v4155, %v4154
  %v4266 = vpack.c.bf16 %v4156, %v4156
  %v4267 = vpack.c.bf16 %v4158, %v4157
  %v4268 = vpack.c.bf16 %v4160, %v4159
  %v4269 = vpack.c.bf16 %v4162, %v4161
  %v4270 = vpack.c.bf16 %v4163, %v4163
  %v4271 = vpack.c.bf16 %v4165, %v4164
  %v4272 = vpack.c.bf16 %v4167, %v4166
  %v4273 = vpack.c.bf16 %v4169, %v4168
  %v4274 = vpack.c.bf16 %v4170, %v4170
  %4275 = vst [vmem:[#allocation2] sm:$0xff] %v4171
  %4276 = vst [vmem:[#allocation2 + $0x8] sm:$0xff] %v4172
  %4277 = vst [vmem:[#allocation2 + $0x10] sm:$0xff] %v4173
  %4278 = vst [vmem:[#allocation2 + $0x18] sm:$0xf] %v4174
  %4279 = vst [vmem:[#allocation2 + $0x1c] sm:$0xff] %v4175
  %4280 = vst [vmem:[#allocation2 + $0x24] sm:$0xff] %v4176
  %4281 = vst [vmem:[#allocation2 + $0x2c] sm:$0xff] %v4177
  %4282 = vst [vmem:[#allocation2 + $0x34] sm:$0xf] %v4178
  %4283 = vst [vmem:[#allocation2 + $0x38] sm:$0xff] %v4179
  %4284 = vst [vmem:[#allocation2 + $0x40] sm:$0xff] %v4180
  %4285 = vst [vmem:[#allocation2 + $0x48] sm:$0xff] %v4181
  %4286 = vst [vmem:[#allocation2 + $0x50] sm:$0xf] %v4182
  %4287 = vst [vmem:[#allocation2 + $0x54] sm:$0xff] %v4183
  %4288 = vst [vmem:[#allocation2 + $0x5c] sm:$0xff] %v4184
  %4289 = vst [vmem:[#allocation2 + $0x64] sm:$0xff] %v4185
  %4290 = vst [vmem:[#allocation2 + $0x6c] sm:$0xf] %v4186
  %4291 = vst [vmem:[#allocation2 + $0x70] sm:$0xff] %v4187
  %4292 = vst [vmem:[#allocation2 + $0x78] sm:$0xff] %v4188
  %4293 = vst [vmem:[#allocation2 + $0x80] sm:$0xff] %v4189
  %4294 = vst [vmem:[#allocation2 + $0x88] sm:$0xf] %v4190
  %4295 = vst [vmem:[#allocation2 + $0x8c] sm:$0xff] %v4191
  %4296 = vst [vmem:[#allocation2 + $0x94] sm:$0xff] %v4192
  %4297 = vst [vmem:[#allocation2 + $0x9c] sm:$0xff] %v4193
  %4298 = vst [vmem:[#allocation2 + $0xa4] sm:$0xf] %v4194
  %4299 = vst [vmem:[#allocation2 + $0xa8] sm:$0xff] %v4195
  %4300 = vst [vmem:[#allocation2 + $0xb0] sm:$0xff] %v4196
  %4301 = vst [vmem:[#allocation2 + $0xb8] sm:$0xff] %v4197
  %4302 = vst [vmem:[#allocation2 + $0xc0] sm:$0xf] %v4198
  %4303 = vst [vmem:[#allocation2 + $0xc4] sm:$0xff] %v4199
  %4304 = vst [vmem:[#allocation2 + $0xcc] sm:$0xff] %v4200
  %4305 = vst [vmem:[#allocation2 + $0xd4] sm:$0xff] %v4201
  %4306 = vst [vmem:[#allocation2 + $0xdc] sm:$0xf] %v4202
  %4307 = vst [vmem:[#allocation2 + $0xe0] sm:$0xff] %v4203
  %4308 = vst [vmem:[#allocation2 + $0xe8] sm:$0xff] %v4204
  %4309 = vst [vmem:[#allocation2 + $0xf0] sm:$0xff] %v4205
  %4310 = vst [vmem:[#allocation2 + $0xf8] sm:$0xf] %v4206
  %4311 = vst [vmem:[#allocation2 + $0xfc] sm:$0xff] %v4207
  %4312 = vst [vmem:[#allocation2 + $0x104] sm:$0xff] %v4208
  %4313 = vst [vmem:[#allocation2 + $0x10c] sm:$0xff] %v4209
  %4314 = vst [vmem:[#allocation2 + $0x114] sm:$0xf] %v4210
  %4315 = vst [vmem:[#allocation2 + $0x118] sm:$0xff] %v4211
  %4316 = vst [vmem:[#allocation2 + $0x120] sm:$0xff] %v4212
  %4317 = vst [vmem:[#allocation2 + $0x128] sm:$0xff] %v4213
  %4318 = vst [vmem:[#allocation2 + $0x130] sm:$0xf] %v4214
  %4319 = vst [vmem:[#allocation2 + $0x134] sm:$0xff] %v4215
  %4320 = vst [vmem:[#allocation2 + $0x13c] sm:$0xff] %v4216
  %4321 = vst [vmem:[#allocation2 + $0x144] sm:$0xff] %v4217
  %4322 = vst [vmem:[#allocation2 + $0x14c] sm:$0xf] %v4218
  %4323 = vst [vmem:[#allocation2 + $0x150] sm:$0xff] %v4219
  %4324 = vst [vmem:[#allocation2 + $0x158] sm:$0xff] %v4220
  %4325 = vst [vmem:[#allocation2 + $0x160] sm:$0xff] %v4221
  %4326 = vst [vmem:[#allocation2 + $0x168] sm:$0xf] %v4222
  %4327 = vst [vmem:[#allocation2 + $0x16c] sm:$0xff] %v4223
  %4328 = vst [vmem:[#allocation2 + $0x174] sm:$0xff] %v4224
  %4329 = vst [vmem:[#allocation2 + $0x17c] sm:$0xff] %v4225
  %4330 = vst [vmem:[#allocation2 + $0x184] sm:$0xf] %v4226
  %4331 = vst [vmem:[#allocation2 + $0x188] sm:$0xff] %v4227
  %4332 = vst [vmem:[#allocation2 + $0x190] sm:$0xff] %v4228
  %4333 = vst [vmem:[#allocation2 + $0x198] sm:$0xff] %v4229
  %4334 = vst [vmem:[#allocation2 + $0x1a0] sm:$0xf] %v4230
  %4335 = vst [vmem:[#allocation2 + $0x1a4] sm:$0xff] %v4231
  %4336 = vst [vmem:[#allocation2 + $0x1ac] sm:$0xff] %v4232
  %4337 = vst [vmem:[#allocation2 + $0x1b4] sm:$0xff] %v4233
  %4338 = vst [vmem:[#allocation2 + $0x1bc] sm:$0xf] %v4234
  %4339 = vst [vmem:[#allocation2 + $0x1c0] sm:$0xff] %v4235
  %4340 = vst [vmem:[#allocation2 + $0x1c8] sm:$0xff] %v4236
  %4341 = vst [vmem:[#allocation2 + $0x1d0] sm:$0xff] %v4237
  %4342 = vst [vmem:[#allocation2 + $0x1d8] sm:$0xf] %v4238
  %4343 = vst [vmem:[#allocation2 + $0x1dc] sm:$0xff] %v4239
  %4344 = vst [vmem:[#allocation2 + $0x1e4] sm:$0xff] %v4240
  %4345 = vst [vmem:[#allocation2 + $0x1ec] sm:$0xff] %v4241
  %4346 = vst [vmem:[#allocation2 + $0x1f4] sm:$0xf] %v4242
  %4347 = vst [vmem:[#allocation2 + $0x1f8] sm:$0xff] %v4243
  %4348 = vst [vmem:[#allocation2 + $0x200] sm:$0xff] %v4244
  %4349 = vst [vmem:[#allocation2 + $0x208] sm:$0xff] %v4245
  %4350 = vst [vmem:[#allocation2 + $0x210] sm:$0xf] %v4246
  %4351 = vst [vmem:[#allocation2 + $0x214] sm:$0xff] %v4247
  %4352 = vst [vmem:[#allocation2 + $0x21c] sm:$0xff] %v4248
  %4353 = vst [vmem:[#allocation2 + $0x224] sm:$0xff] %v4249
  %4354 = vst [vmem:[#allocation2 + $0x22c] sm:$0xf] %v4250
  %4355 = vst [vmem:[#allocation2 + $0x230] sm:$0xff] %v4251
  %4356 = vst [vmem:[#allocation2 + $0x238] sm:$0xff] %v4252
  %4357 = vst [vmem:[#allocation2 + $0x240] sm:$0xff] %v4253
  %4358 = vst [vmem:[#allocation2 + $0x248] sm:$0xf] %v4254
  %4359 = vst [vmem:[#allocation2 + $0x24c] sm:$0xff] %v4255
  %4360 = vst [vmem:[#allocation2 + $0x254] sm:$0xff] %v4256
  %4361 = vst [vmem:[#allocation2 + $0x25c] sm:$0xff] %v4257
  %4362 = vst [vmem:[#allocation2 + $0x264] sm:$0xf] %v4258
  %4363 = vst [vmem:[#allocation2 + $0x268] sm:$0xff] %v4259
  %4364 = vst [vmem:[#allocation2 + $0x270] sm:$0xff] %v4260
  %4365 = vst [vmem:[#allocation2 + $0x278] sm:$0xff] %v4261
  %4366 = vst [vmem:[#allocation2 + $0x280] sm:$0xf] %v4262
  %4367 = vst [vmem:[#allocation2 + $0x284] sm:$0xff] %v4263
  %4368 = vst [vmem:[#allocation2 + $0x28c] sm:$0xff] %v4264
  %4369 = vst [vmem:[#allocation2 + $0x294] sm:$0xff] %v4265
  %4370 = vst [vmem:[#allocation2 + $0x29c] sm:$0xf] %v4266
  %4371 = vst [vmem:[#allocation2 + $0x2a0] sm:$0xff] %v4267
  %4372 = vst [vmem:[#allocation2 + $0x2a8] sm:$0xff] %v4268
  %4373 = vst [vmem:[#allocation2 + $0x2b0] sm:$0xff] %v4269
  %4374 = vst [vmem:[#allocation2 + $0x2b8] sm:$0xf] %v4270
  %4375 = vst [vmem:[#allocation2 + $0x2bc] sm:$0xff] %v4271
  %4376 = vst [vmem:[#allocation2 + $0x2c4] sm:$0xff] %v4272
  %4377 = vst [vmem:[#allocation2 + $0x2cc] sm:$0xff] %v4273
  %4378 = vst [vmem:[#allocation2 + $0x2d4] sm:$0xf] %v4274
  %v4379 = vld [vmem:[#allocation2] sm:$0xf]
  %v4380 = vld [vmem:[#allocation2 + $0x1c] sm:$0xf]
  %v4381 = vld [vmem:[#allocation2 + $0x38] sm:$0xf]
  %v4382 = vld [vmem:[#allocation2 + $0x54] sm:$0xf]
  %v4383 = vld [vmem:[#allocation2 + $0x70] sm:$0xf]
  %v4384 = vld [vmem:[#allocation2 + $0x8c] sm:$0xf]
  %v4385 = vld [vmem:[#allocation2 + $0xa8] sm:$0xf]
  %v4386 = vld [vmem:[#allocation2 + $0xc4] sm:$0xf]
  %v4387 = vld [vmem:[#allocation2 + $0xe0] sm:$0xf]
  %v4388 = vld [vmem:[#allocation2 + $0xfc] sm:$0xf]
  %4389 = vst [vmem:[#allocation3] sm:$0xf] %v4379
  %4390 = vst [vmem:[#allocation3 + $0x20] sm:$0xf] %v4380
  %4391 = vst [vmem:[#allocation3 + $0x40] sm:$0xf] %v4381
  %4392 = vst [vmem:[#allocation3 + $0x60] sm:$0xf] %v4382
  %4393 = vst [vmem:[#allocation3 + $0x80] sm:$0xf] %v4383
  %4394 = vst [vmem:[#allocation3 + $0xa0] sm:$0xf] %v4384
  %4395 = vst [vmem:[#allocation3 + $0xc0] sm:$0xf] %v4385
  %4396 = vst [vmem:[#allocation3 + $0xe0] sm:$0xf] %v4386
  %4397 = vst [vmem:[#allocation3 + $0x100] sm:$0xf] %v4387
  %4398 = vst [vmem:[#allocation3 + $0x120] sm:$0xf] %v4388
  %v4399 = vld [vmem:[#allocation2 + $0xc] sm:$0xff]
  %v4400 = vld [vmem:[#allocation2 + $0x28] sm:$0xff]
  %v4401 = vld [vmem:[#allocation2 + $0x44] sm:$0xff]
  %v4402 = vld [vmem:[#allocation2 + $0x60] sm:$0xff]
  %v4403 = vld [vmem:[#allocation2 + $0x7c] sm:$0xff]
  %v4404 = vld [vmem:[#allocation2 + $0x98] sm:$0xff]
  %v4405 = vld [vmem:[#allocation2 + $0xb4] sm:$0xff]
  %v4406 = vld [vmem:[#allocation2 + $0xd0] sm:$0xff]
  %v4407 = vld [vmem:[#allocation2 + $0xec] sm:$0xff]
  %v4408 = vld [vmem:[#allocation2 + $0x108] sm:$0xff]
  %4419 = vrot.lane.b32.xlu0 %v4399, 64
  %v4420 = vpop.permute.xlu0 %4419
  %4421 = vrot.lane.b32.xlu0 %v4400, 64
  %v4422 = vpop.permute.xlu0 %4421
  %4423 = vrot.lane.b32.xlu0 %v4401, 64
  %v4424 = vpop.permute.xlu0 %4423
  %4425 = vrot.lane.b32.xlu0 %v4402, 64
  %v4426 = vpop.permute.xlu0 %4425
  %4427 = vrot.lane.b32.xlu0 %v4403, 64
  %v4428 = vpop.permute.xlu0 %4427
  %4429 = vrot.lane.b32.xlu0 %v4404, 64
  %v4430 = vpop.permute.xlu0 %4429
  %4431 = vrot.lane.b32.xlu0 %v4405, 64
  %v4432 = vpop.permute.xlu0 %4431
  %4433 = vrot.lane.b32.xlu0 %v4406, 64
  %v4434 = vpop.permute.xlu0 %4433
  %4435 = vrot.lane.b32.xlu0 %v4407, 64
  %v4436 = vpop.permute.xlu0 %4435
  %4437 = vrot.lane.b32.xlu0 %v4408, 64
  %v4438 = vpop.permute.xlu0 %4437
  %v4439 = vrot.slane %v4420, 4
  %v4440 = vrot.slane %v4422, 4
  %v4441 = vrot.slane %v4424, 4
  %v4442 = vrot.slane %v4426, 4
  %v4443 = vrot.slane %v4428, 4
  %v4444 = vrot.slane %v4430, 4
  %v4445 = vrot.slane %v4432, 4
  %v4446 = vrot.slane %v4434, 4
  %v4447 = vrot.slane %v4436, 4
  %v4448 = vrot.slane %v4438, 4
  %vm4449 = vcmask 523264
  %v4450 = vsel %vm4449, %v4420, %v4439
  %v4451 = vsel %vm4449, %v4422, %v4440
  %v4452 = vsel %vm4449, %v4424, %v4441
  %v4453 = vsel %vm4449, %v4426, %v4442
  %v4454 = vsel %vm4449, %v4428, %v4443
  %v4455 = vsel %vm4449, %v4430, %v4444
  %v4456 = vsel %vm4449, %v4432, %v4445
  %v4457 = vsel %vm4449, %v4434, %v4446
  %v4458 = vsel %vm4449, %v4436, %v4447
  %v4459 = vsel %vm4449, %v4438, %v4448
  %4470 = vst [vmem:[#allocation3 + $0x4] sm:$0xf] %v4450
  %4471 = vst [vmem:[#allocation3 + $0x24] sm:$0xf] %v4451
  %4472 = vst [vmem:[#allocation3 + $0x44] sm:$0xf] %v4452
  %4473 = vst [vmem:[#allocation3 + $0x64] sm:$0xf] %v4453
  %4474 = vst [vmem:[#allocation3 + $0x84] sm:$0xf] %v4454
  %4475 = vst [vmem:[#allocation3 + $0xa4] sm:$0xf] %v4455
  %4476 = vst [vmem:[#allocation3 + $0xc4] sm:$0xf] %v4456
  %4477 = vst [vmem:[#allocation3 + $0xe4] sm:$0xf] %v4457
  %4478 = vst [vmem:[#allocation3 + $0x104] sm:$0xf] %v4458
  %4479 = vst [vmem:[#allocation3 + $0x124] sm:$0xf] %v4459
  %v4480 = vld [vmem:[#allocation2 + $0x188] sm:$0xf]
  %v4481 = vld [vmem:[#allocation2 + $0x1a4] sm:$0xf]
  %v4482 = vld [vmem:[#allocation2 + $0x1c0] sm:$0xf]
  %v4483 = vld [vmem:[#allocation2 + $0x1dc] sm:$0xf]
  %v4484 = vld [vmem:[#allocation2 + $0x1f8] sm:$0xf]
  %v4485 = vld [vmem:[#allocation2 + $0x214] sm:$0xf]
  %v4486 = vld [vmem:[#allocation2 + $0x230] sm:$0xf]
  %v4487 = vld [vmem:[#allocation2 + $0x24c] sm:$0xf]
  %v4488 = vld [vmem:[#allocation2 + $0x268] sm:$0xf]
  %v4489 = vld [vmem:[#allocation2 + $0x284] sm:$0xf]
  %4490 = vst [vmem:[#allocation3 + $0x8] sm:$0xf] %v4480
  %4491 = vst [vmem:[#allocation3 + $0x28] sm:$0xf] %v4481
  %4492 = vst [vmem:[#allocation3 + $0x48] sm:$0xf] %v4482
  %4493 = vst [vmem:[#allocation3 + $0x68] sm:$0xf] %v4483
  %4494 = vst [vmem:[#allocation3 + $0x88] sm:$0xf] %v4484
  %4495 = vst [vmem:[#allocation3 + $0xa8] sm:$0xf] %v4485
  %4496 = vst [vmem:[#allocation3 + $0xc8] sm:$0xf] %v4486
  %4497 = vst [vmem:[#allocation3 + $0xe8] sm:$0xf] %v4487
  %4498 = vst [vmem:[#allocation3 + $0x108] sm:$0xf] %v4488
  %4499 = vst [vmem:[#allocation3 + $0x128] sm:$0xf] %v4489
  %v4500 = vld [vmem:[#allocation2 + $0x194] sm:$0xff]
  %v4501 = vld [vmem:[#allocation2 + $0x1b0] sm:$0xff]
  %v4502 = vld [vmem:[#allocation2 + $0x1cc] sm:$0xff]
  %v4503 = vld [vmem:[#allocation2 + $0x1e8] sm:$0xff]
  %v4504 = vld [vmem:[#allocation2 + $0x204] sm:$0xff]
  %v4505 = vld [vmem:[#allocation2 + $0x220] sm:$0xff]
  %v4506 = vld [vmem:[#allocation2 + $0x23c] sm:$0xff]
  %v4507 = vld [vmem:[#allocation2 + $0x258] sm:$0xff]
  %v4508 = vld [vmem:[#allocation2 + $0x274] sm:$0xff]
  %v4509 = vld [vmem:[#allocation2 + $0x290] sm:$0xff]
  %4520 = vrot.lane.b32.xlu0 %v4500, 64
  %v4521 = vpop.permute.xlu0 %4520
  %4522 = vrot.lane.b32.xlu0 %v4501, 64
  %v4523 = vpop.permute.xlu0 %4522
  %4524 = vrot.lane.b32.xlu0 %v4502, 64
  %v4525 = vpop.permute.xlu0 %4524
  %4526 = vrot.lane.b32.xlu0 %v4503, 64
  %v4527 = vpop.permute.xlu0 %4526
  %4528 = vrot.lane.b32.xlu0 %v4504, 64
  %v4529 = vpop.permute.xlu0 %4528
  %4530 = vrot.lane.b32.xlu0 %v4505, 64
  %v4531 = vpop.permute.xlu0 %4530
  %4532 = vrot.lane.b32.xlu0 %v4506, 64
  %v4533 = vpop.permute.xlu0 %4532
  %4534 = vrot.lane.b32.xlu0 %v4507, 64
  %v4535 = vpop.permute.xlu0 %4534
  %4536 = vrot.lane.b32.xlu0 %v4508, 64
  %v4537 = vpop.permute.xlu0 %4536
  %4538 = vrot.lane.b32.xlu0 %v4509, 64
  %v4539 = vpop.permute.xlu0 %4538
  %v4540 = vrot.slane %v4521, 4
  %v4541 = vrot.slane %v4523, 4
  %v4542 = vrot.slane %v4525, 4
  %v4543 = vrot.slane %v4527, 4
  %v4544 = vrot.slane %v4529, 4
  %v4545 = vrot.slane %v4531, 4
  %v4546 = vrot.slane %v4533, 4
  %v4547 = vrot.slane %v4535, 4
  %v4548 = vrot.slane %v4537, 4
  %v4549 = vrot.slane %v4539, 4
  %v4550 = vsel %vm4449, %v4521, %v4540
  %v4551 = vsel %vm4449, %v4523, %v4541
  %v4552 = vsel %vm4449, %v4525, %v4542
  %v4553 = vsel %vm4449, %v4527, %v4543
  %v4554 = vsel %vm4449, %v4529, %v4544
  %v4555 = vsel %vm4449, %v4531, %v4545
  %v4556 = vsel %vm4449, %v4533, %v4546
  %v4557 = vsel %vm4449, %v4535, %v4547
  %v4558 = vsel %vm4449, %v4537, %v4548
  %v4559 = vsel %vm4449, %v4539, %v4549
  %4570 = vst [vmem:[#allocation3 + $0xc] sm:$0xf] %v4550
  %4571 = vst [vmem:[#allocation3 + $0x2c] sm:$0xf] %v4551
  %4572 = vst [vmem:[#allocation3 + $0x4c] sm:$0xf] %v4552
  %4573 = vst [vmem:[#allocation3 + $0x6c] sm:$0xf] %v4553
  %4574 = vst [vmem:[#allocation3 + $0x8c] sm:$0xf] %v4554
  %4575 = vst [vmem:[#allocation3 + $0xac] sm:$0xf] %v4555
  %4576 = vst [vmem:[#allocation3 + $0xcc] sm:$0xf] %v4556
  %4577 = vst [vmem:[#allocation3 + $0xec] sm:$0xf] %v4557
  %4578 = vst [vmem:[#allocation3 + $0x10c] sm:$0xf] %v4558
  %4579 = vst [vmem:[#allocation3 + $0x12c] sm:$0xf] %v4559
  %v4580 = vld [vmem:[#allocation2 + $0x38] sm:$0xf]
  %v4581 = vld [vmem:[#allocation2 + $0x54] sm:$0xf]
  %v4582 = vld [vmem:[#allocation2 + $0x70] sm:$0xf]
  %v4583 = vld [vmem:[#allocation2 + $0x8c] sm:$0xf]
  %v4584 = vld [vmem:[#allocation2 + $0xa8] sm:$0xf]
  %v4585 = vld [vmem:[#allocation2 + $0xc4] sm:$0xf]
  %v4586 = vld [vmem:[#allocation2 + $0xe0] sm:$0xf]
  %v4587 = vld [vmem:[#allocation2 + $0xfc] sm:$0xf]
  %v4588 = vld [vmem:[#allocation2 + $0x118] sm:$0xf]
  %v4589 = vld [vmem:[#allocation2 + $0x134] sm:$0xf]
  %4590 = vst [vmem:[#allocation3 + $0x10] sm:$0xf] %v4580
  %4591 = vst [vmem:[#allocation3 + $0x30] sm:$0xf] %v4581
  %4592 = vst [vmem:[#allocation3 + $0x50] sm:$0xf] %v4582
  %4593 = vst [vmem:[#allocation3 + $0x70] sm:$0xf] %v4583
  %4594 = vst [vmem:[#allocation3 + $0x90] sm:$0xf] %v4584
  %4595 = vst [vmem:[#allocation3 + $0xb0] sm:$0xf] %v4585
  %4596 = vst [vmem:[#allocation3 + $0xd0] sm:$0xf] %v4586
  %4597 = vst [vmem:[#allocation3 + $0xf0] sm:$0xf] %v4587
  %4598 = vst [vmem:[#allocation3 + $0x110] sm:$0xf] %v4588
  %4599 = vst [vmem:[#allocation3 + $0x130] sm:$0xf] %v4589
  %v4600 = vld [vmem:[#allocation2 + $0x44] sm:$0xff]
  %v4601 = vld [vmem:[#allocation2 + $0x60] sm:$0xff]
  %v4602 = vld [vmem:[#allocation2 + $0x7c] sm:$0xff]
  %v4603 = vld [vmem:[#allocation2 + $0x98] sm:$0xff]
  %v4604 = vld [vmem:[#allocation2 + $0xb4] sm:$0xff]
  %v4605 = vld [vmem:[#allocation2 + $0xd0] sm:$0xff]
  %v4606 = vld [vmem:[#allocation2 + $0xec] sm:$0xff]
  %v4607 = vld [vmem:[#allocation2 + $0x108] sm:$0xff]
  %v4608 = vld [vmem:[#allocation2 + $0x124] sm:$0xff]
  %v4609 = vld [vmem:[#allocation2 + $0x140] sm:$0xff]
  %4620 = vrot.lane.b32.xlu0 %v4600, 64
  %v4621 = vpop.permute.xlu0 %4620
  %4622 = vrot.lane.b32.xlu0 %v4601, 64
  %v4623 = vpop.permute.xlu0 %4622
  %4624 = vrot.lane.b32.xlu0 %v4602, 64
  %v4625 = vpop.permute.xlu0 %4624
  %4626 = vrot.lane.b32.xlu0 %v4603, 64
  %v4627 = vpop.permute.xlu0 %4626
  %4628 = vrot.lane.b32.xlu0 %v4604, 64
  %v4629 = vpop.permute.xlu0 %4628
  %4630 = vrot.lane.b32.xlu0 %v4605, 64
  %v4631 = vpop.permute.xlu0 %4630
  %4632 = vrot.lane.b32.xlu0 %v4606, 64
  %v4633 = vpop.permute.xlu0 %4632
  %4634 = vrot.lane.b32.xlu0 %v4607, 64
  %v4635 = vpop.permute.xlu0 %4634
  %4636 = vrot.lane.b32.xlu0 %v4608, 64
  %v4637 = vpop.permute.xlu0 %4636
  %4638 = vrot.lane.b32.xlu0 %v4609, 64
  %v4639 = vpop.permute.xlu0 %4638
  %v4640 = vrot.slane %v4621, 4
  %v4641 = vrot.slane %v4623, 4
  %v4642 = vrot.slane %v4625, 4
  %v4643 = vrot.slane %v4627, 4
  %v4644 = vrot.slane %v4629, 4
  %v4645 = vrot.slane %v4631, 4
  %v4646 = vrot.slane %v4633, 4
  %v4647 = vrot.slane %v4635, 4
  %v4648 = vrot.slane %v4637, 4
  %v4649 = vrot.slane %v4639, 4
  %v4650 = vsel %vm4449, %v4621, %v4640
  %v4651 = vsel %vm4449, %v4623, %v4641
  %v4652 = vsel %vm4449, %v4625, %v4642
  %v4653 = vsel %vm4449, %v4627, %v4643
  %v4654 = vsel %vm4449, %v4629, %v4644
  %v4655 = vsel %vm4449, %v4631, %v4645
  %v4656 = vsel %vm4449, %v4633, %v4646
  %v4657 = vsel %vm4449, %v4635, %v4647
  %v4658 = vsel %vm4449, %v4637, %v4648
  %v4659 = vsel %vm4449, %v4639, %v4649
  %4670 = vst [vmem:[#allocation3 + $0x14] sm:$0xf] %v4650
  %4671 = vst [vmem:[#allocation3 + $0x34] sm:$0xf] %v4651
  %4672 = vst [vmem:[#allocation3 + $0x54] sm:$0xf] %v4652
  %4673 = vst [vmem:[#allocation3 + $0x74] sm:$0xf] %v4653
  %4674 = vst [vmem:[#allocation3 + $0x94] sm:$0xf] %v4654
  %4675 = vst [vmem:[#allocation3 + $0xb4] sm:$0xf] %v4655
  %4676 = vst [vmem:[#allocation3 + $0xd4] sm:$0xf] %v4656
  %4677 = vst [vmem:[#allocation3 + $0xf4] sm:$0xf] %v4657
  %4678 = vst [vmem:[#allocation3 + $0x114] sm:$0xf] %v4658
  %4679 = vst [vmem:[#allocation3 + $0x134] sm:$0xf] %v4659
  %v4680 = vld [vmem:[#allocation2 + $0x1c0] sm:$0xf]
  %v4681 = vld [vmem:[#allocation2 + $0x1dc] sm:$0xf]
  %v4682 = vld [vmem:[#allocation2 + $0x1f8] sm:$0xf]
  %v4683 = vld [vmem:[#allocation2 + $0x214] sm:$0xf]
  %v4684 = vld [vmem:[#allocation2 + $0x230] sm:$0xf]
  %v4685 = vld [vmem:[#allocation2 + $0x24c] sm:$0xf]
  %v4686 = vld [vmem:[#allocation2 + $0x268] sm:$0xf]
  %v4687 = vld [vmem:[#allocation2 + $0x284] sm:$0xf]
  %v4688 = vld [vmem:[#allocation2 + $0x2a0] sm:$0xf]
  %v4689 = vld [vmem:[#allocation2 + $0x2bc] sm:$0xf]
  %4690 = vst [vmem:[#allocation3 + $0x18] sm:$0xf] %v4680
  %4691 = vst [vmem:[#allocation3 + $0x38] sm:$0xf] %v4681
  %4692 = vst [vmem:[#allocation3 + $0x58] sm:$0xf] %v4682
  %4693 = vst [vmem:[#allocation3 + $0x78] sm:$0xf] %v4683
  %4694 = vst [vmem:[#allocation3 + $0x98] sm:$0xf] %v4684
  %4695 = vst [vmem:[#allocation3 + $0xb8] sm:$0xf] %v4685
  %4696 = vst [vmem:[#allocation3 + $0xd8] sm:$0xf] %v4686
  %4697 = vst [vmem:[#allocation3 + $0xf8] sm:$0xf] %v4687
  %4698 = vst [vmem:[#allocation3 + $0x118] sm:$0xf] %v4688
  %4699 = vst [vmem:[#allocation3 + $0x138] sm:$0xf] %v4689
  %v4700 = vld [vmem:[#allocation2 + $0x1cc] sm:$0xff]
  %v4701 = vld [vmem:[#allocation2 + $0x1e8] sm:$0xff]
  %v4702 = vld [vmem:[#allocation2 + $0x204] sm:$0xff]
  %v4703 = vld [vmem:[#allocation2 + $0x220] sm:$0xff]
  %v4704 = vld [vmem:[#allocation2 + $0x23c] sm:$0xff]
  %v4705 = vld [vmem:[#allocation2 + $0x258] sm:$0xff]
  %v4706 = vld [vmem:[#allocation2 + $0x274] sm:$0xff]
  %v4707 = vld [vmem:[#allocation2 + $0x290] sm:$0xff]
  %v4708 = vld [vmem:[#allocation2 + $0x2ac] sm:$0xff]
  %v4709 = vld [vmem:[#allocation2 + $0x2c8] sm:$0xff]
  %4720 = vrot.lane.b32.xlu0 %v4700, 64
  %v4721 = vpop.permute.xlu0 %4720
  %4722 = vrot.lane.b32.xlu0 %v4701, 64
  %v4723 = vpop.permute.xlu0 %4722
  %4724 = vrot.lane.b32.xlu0 %v4702, 64
  %v4725 = vpop.permute.xlu0 %4724
  %4726 = vrot.lane.b32.xlu0 %v4703, 64
  %v4727 = vpop.permute.xlu0 %4726
  %4728 = vrot.lane.b32.xlu0 %v4704, 64
  %v4729 = vpop.permute.xlu0 %4728
  %4730 = vrot.lane.b32.xlu0 %v4705, 64
  %v4731 = vpop.permute.xlu0 %4730
  %4732 = vrot.lane.b32.xlu0 %v4706, 64
  %v4733 = vpop.permute.xlu0 %4732
  %4734 = vrot.lane.b32.xlu0 %v4707, 64
  %v4735 = vpop.permute.xlu0 %4734
  %4736 = vrot.lane.b32.xlu0 %v4708, 64
  %v4737 = vpop.permute.xlu0 %4736
  %4738 = vrot.lane.b32.xlu0 %v4709, 64
  %v4739 = vpop.permute.xlu0 %4738
  %v4740 = vrot.slane %v4721, 4
  %v4741 = vrot.slane %v4723, 4
  %v4742 = vrot.slane %v4725, 4
  %v4743 = vrot.slane %v4727, 4
  %v4744 = vrot.slane %v4729, 4
  %v4745 = vrot.slane %v4731, 4
  %v4746 = vrot.slane %v4733, 4
  %v4747 = vrot.slane %v4735, 4
  %v4748 = vrot.slane %v4737, 4
  %v4749 = vrot.slane %v4739, 4
  %v4750 = vsel %vm4449, %v4721, %v4740
  %v4751 = vsel %vm4449, %v4723, %v4741
  %v4752 = vsel %vm4449, %v4725, %v4742
  %v4753 = vsel %vm4449, %v4727, %v4743
  %v4754 = vsel %vm4449, %v4729, %v4744
  %v4755 = vsel %vm4449, %v4731, %v4745
  %v4756 = vsel %vm4449, %v4733, %v4746
  %v4757 = vsel %vm4449, %v4735, %v4747
  %v4758 = vsel %vm4449, %v4737, %v4748
  %v4759 = vsel %vm4449, %v4739, %v4749
  %4770 = vst [vmem:[#allocation3 + $0x1c] sm:$0xf] %v4750
  %4771 = vst [vmem:[#allocation3 + $0x3c] sm:$0xf] %v4751
  %4772 = vst [vmem:[#allocation3 + $0x5c] sm:$0xf] %v4752
  %4773 = vst [vmem:[#allocation3 + $0x7c] sm:$0xf] %v4753
  %4774 = vst [vmem:[#allocation3 + $0x9c] sm:$0xf] %v4754
  %4775 = vst [vmem:[#allocation3 + $0xbc] sm:$0xf] %v4755
  %4776 = vst [vmem:[#allocation3 + $0xdc] sm:$0xf] %v4756
  %4777 = vst [vmem:[#allocation3 + $0xfc] sm:$0xf] %v4757
  %4778 = vst [vmem:[#allocation3 + $0x11c] sm:$0xf] %v4758
  %4779 = vst [vmem:[#allocation3 + $0x13c] sm:$0xf] %v4759
  %v4780 = vld [vmem:[#allocation2] sm:$0xff]
  %v4781 = vld [vmem:[#allocation2 + $0x1c] sm:$0xff]
  %v4782 = vld [vmem:[#allocation2 + $0x38] sm:$0xff]
  %v4783 = vld [vmem:[#allocation2 + $0x54] sm:$0xff]
  %v4784 = vld [vmem:[#allocation2 + $0x70] sm:$0xff]
  %v4785 = vld [vmem:[#allocation2 + $0x8c] sm:$0xff]
  %v4786 = vld [vmem:[#allocation2 + $0xa8] sm:$0xff]
  %v4787 = vld [vmem:[#allocation2 + $0xc4] sm:$0xff]
  %v4788 = vld [vmem:[#allocation2 + $0xe0] sm:$0xff]
  %v4789 = vld [vmem:[#allocation2 + $0xfc] sm:$0xff]
  %4800 = vrot.lane.b32.xlu0 %v4780, 64
  %v4801 = vpop.permute.xlu0 %4800
  %4802 = vrot.lane.b32.xlu0 %v4781, 64
  %v4803 = vpop.permute.xlu0 %4802
  %4804 = vrot.lane.b32.xlu0 %v4782, 64
  %v4805 = vpop.permute.xlu0 %4804
  %4806 = vrot.lane.b32.xlu0 %v4783, 64
  %v4807 = vpop.permute.xlu0 %4806
  %4808 = vrot.lane.b32.xlu0 %v4784, 64
  %v4809 = vpop.permute.xlu0 %4808
  %4810 = vrot.lane.b32.xlu0 %v4785, 64
  %v4811 = vpop.permute.xlu0 %4810
  %4812 = vrot.lane.b32.xlu0 %v4786, 64
  %v4813 = vpop.permute.xlu0 %4812
  %4814 = vrot.lane.b32.xlu0 %v4787, 64
  %v4815 = vpop.permute.xlu0 %4814
  %4816 = vrot.lane.b32.xlu0 %v4788, 64
  %v4817 = vpop.permute.xlu0 %4816
  %4818 = vrot.lane.b32.xlu0 %v4789, 64
  %v4819 = vpop.permute.xlu0 %4818
  %v4820 = vrot.slane %v4801, 4
  %v4821 = vrot.slane %v4803, 4
  %v4822 = vrot.slane %v4805, 4
  %v4823 = vrot.slane %v4807, 4
  %v4824 = vrot.slane %v4809, 4
  %v4825 = vrot.slane %v4811, 4
  %v4826 = vrot.slane %v4813, 4
  %v4827 = vrot.slane %v4815, 4
  %v4828 = vrot.slane %v4817, 4
  %v4829 = vrot.slane %v4819, 4
  %v4830 = vsel %vm4449, %v4801, %v4820
  %v4831 = vsel %vm4449, %v4803, %v4821
  %v4832 = vsel %vm4449, %v4805, %v4822
  %v4833 = vsel %vm4449, %v4807, %v4823
  %v4834 = vsel %vm4449, %v4809, %v4824
  %v4835 = vsel %vm4449, %v4811, %v4825
  %v4836 = vsel %vm4449, %v4813, %v4826
  %v4837 = vsel %vm4449, %v4815, %v4827
  %v4838 = vsel %vm4449, %v4817, %v4828
  %v4839 = vsel %vm4449, %v4819, %v4829
  %4850 = vst [vmem:[#allocation3 + $0x140] sm:$0xf] %v4830
  %4851 = vst [vmem:[#allocation3 + $0x160] sm:$0xf] %v4831
  %4852 = vst [vmem:[#allocation3 + $0x180] sm:$0xf] %v4832
  %4853 = vst [vmem:[#allocation3 + $0x1a0] sm:$0xf] %v4833
  %4854 = vst [vmem:[#allocation3 + $0x1c0] sm:$0xf] %v4834
  %4855 = vst [vmem:[#allocation3 + $0x1e0] sm:$0xf] %v4835
  %4856 = vst [vmem:[#allocation3 + $0x200] sm:$0xf] %v4836
  %4857 = vst [vmem:[#allocation3 + $0x220] sm:$0xf] %v4837
  %4858 = vst [vmem:[#allocation3 + $0x240] sm:$0xf] %v4838
  %4859 = vst [vmem:[#allocation3 + $0x260] sm:$0xf] %v4839
  %v4860 = vld [vmem:[#allocation2 + $0x10] sm:$0xf]
  %v4861 = vld [vmem:[#allocation2 + $0x2c] sm:$0xf]
  %v4862 = vld [vmem:[#allocation2 + $0x48] sm:$0xf]
  %v4863 = vld [vmem:[#allocation2 + $0x64] sm:$0xf]
  %v4864 = vld [vmem:[#allocation2 + $0x80] sm:$0xf]
  %v4865 = vld [vmem:[#allocation2 + $0x9c] sm:$0xf]
  %v4866 = vld [vmem:[#allocation2 + $0xb8] sm:$0xf]
  %v4867 = vld [vmem:[#allocation2 + $0xd4] sm:$0xf]
  %v4868 = vld [vmem:[#allocation2 + $0xf0] sm:$0xf]
  %v4869 = vld [vmem:[#allocation2 + $0x10c] sm:$0xf]
  %4870 = vst [vmem:[#allocation3 + $0x144] sm:$0xf] %v4860
  %4871 = vst [vmem:[#allocation3 + $0x164] sm:$0xf] %v4861
  %4872 = vst [vmem:[#allocation3 + $0x184] sm:$0xf] %v4862
  %4873 = vst [vmem:[#allocation3 + $0x1a4] sm:$0xf] %v4863
  %4874 = vst [vmem:[#allocation3 + $0x1c4] sm:$0xf] %v4864
  %4875 = vst [vmem:[#allocation3 + $0x1e4] sm:$0xf] %v4865
  %4876 = vst [vmem:[#allocation3 + $0x204] sm:$0xf] %v4866
  %4877 = vst [vmem:[#allocation3 + $0x224] sm:$0xf] %v4867
  %4878 = vst [vmem:[#allocation3 + $0x244] sm:$0xf] %v4868
  %4879 = vst [vmem:[#allocation3 + $0x264] sm:$0xf] %v4869
  %v4880 = vld [vmem:[#allocation2 + $0x188] sm:$0xff]
  %v4881 = vld [vmem:[#allocation2 + $0x1a4] sm:$0xff]
  %v4882 = vld [vmem:[#allocation2 + $0x1c0] sm:$0xff]
  %v4883 = vld [vmem:[#allocation2 + $0x1dc] sm:$0xff]
  %v4884 = vld [vmem:[#allocation2 + $0x1f8] sm:$0xff]
  %v4885 = vld [vmem:[#allocation2 + $0x214] sm:$0xff]
  %v4886 = vld [vmem:[#allocation2 + $0x230] sm:$0xff]
  %v4887 = vld [vmem:[#allocation2 + $0x24c] sm:$0xff]
  %v4888 = vld [vmem:[#allocation2 + $0x268] sm:$0xff]
  %v4889 = vld [vmem:[#allocation2 + $0x284] sm:$0xff]
  %4900 = vrot.lane.b32.xlu0 %v4880, 64
  %v4901 = vpop.permute.xlu0 %4900
  %4902 = vrot.lane.b32.xlu0 %v4881, 64
  %v4903 = vpop.permute.xlu0 %4902
  %4904 = vrot.lane.b32.xlu0 %v4882, 64
  %v4905 = vpop.permute.xlu0 %4904
  %4906 = vrot.lane.b32.xlu0 %v4883, 64
  %v4907 = vpop.permute.xlu0 %4906
  %4908 = vrot.lane.b32.xlu0 %v4884, 64
  %v4909 = vpop.permute.xlu0 %4908
  %4910 = vrot.lane.b32.xlu0 %v4885, 64
  %v4911 = vpop.permute.xlu0 %4910
  %4912 = vrot.lane.b32.xlu0 %v4886, 64
  %v4913 = vpop.permute.xlu0 %4912
  %4914 = vrot.lane.b32.xlu0 %v4887, 64
  %v4915 = vpop.permute.xlu0 %4914
  %4916 = vrot.lane.b32.xlu0 %v4888, 64
  %v4917 = vpop.permute.xlu0 %4916
  %4918 = vrot.lane.b32.xlu0 %v4889, 64
  %v4919 = vpop.permute.xlu0 %4918
  %v4920 = vrot.slane %v4901, 4
  %v4921 = vrot.slane %v4903, 4
  %v4922 = vrot.slane %v4905, 4
  %v4923 = vrot.slane %v4907, 4
  %v4924 = vrot.slane %v4909, 4
  %v4925 = vrot.slane %v4911, 4
  %v4926 = vrot.slane %v4913, 4
  %v4927 = vrot.slane %v4915, 4
  %v4928 = vrot.slane %v4917, 4
  %v4929 = vrot.slane %v4919, 4
  %v4930 = vsel %vm4449, %v4901, %v4920
  %v4931 = vsel %vm4449, %v4903, %v4921
  %v4932 = vsel %vm4449, %v4905, %v4922
  %v4933 = vsel %vm4449, %v4907, %v4923
  %v4934 = vsel %vm4449, %v4909, %v4924
  %v4935 = vsel %vm4449, %v4911, %v4925
  %v4936 = vsel %vm4449, %v4913, %v4926
  %v4937 = vsel %vm4449, %v4915, %v4927
  %v4938 = vsel %vm4449, %v4917, %v4928
  %v4939 = vsel %vm4449, %v4919, %v4929
  %4950 = vst [vmem:[#allocation3 + $0x148] sm:$0xf] %v4930
  %4951 = vst [vmem:[#allocation3 + $0x168] sm:$0xf] %v4931
  %4952 = vst [vmem:[#allocation3 + $0x188] sm:$0xf] %v4932
  %4953 = vst [vmem:[#allocation3 + $0x1a8] sm:$0xf] %v4933
  %4954 = vst [vmem:[#allocation3 + $0x1c8] sm:$0xf] %v4934
  %4955 = vst [vmem:[#allocation3 + $0x1e8] sm:$0xf] %v4935
  %4956 = vst [vmem:[#allocation3 + $0x208] sm:$0xf] %v4936
  %4957 = vst [vmem:[#allocation3 + $0x228] sm:$0xf] %v4937
  %4958 = vst [vmem:[#allocation3 + $0x248] sm:$0xf] %v4938
  %4959 = vst [vmem:[#allocation3 + $0x268] sm:$0xf] %v4939
  %v4960 = vld [vmem:[#allocation2 + $0x198] sm:$0xf]
  %v4961 = vld [vmem:[#allocation2 + $0x1b4] sm:$0xf]
  %v4962 = vld [vmem:[#allocation2 + $0x1d0] sm:$0xf]
  %v4963 = vld [vmem:[#allocation2 + $0x1ec] sm:$0xf]
  %v4964 = vld [vmem:[#allocation2 + $0x208] sm:$0xf]
  %v4965 = vld [vmem:[#allocation2 + $0x224] sm:$0xf]
  %v4966 = vld [vmem:[#allocation2 + $0x240] sm:$0xf]
  %v4967 = vld [vmem:[#allocation2 + $0x25c] sm:$0xf]
  %v4968 = vld [vmem:[#allocation2 + $0x278] sm:$0xf]
  %v4969 = vld [vmem:[#allocation2 + $0x294] sm:$0xf]
  %4970 = vst [vmem:[#allocation3 + $0x14c] sm:$0xf] %v4960
  %4971 = vst [vmem:[#allocation3 + $0x16c] sm:$0xf] %v4961
  %4972 = vst [vmem:[#allocation3 + $0x18c] sm:$0xf] %v4962
  %4973 = vst [vmem:[#allocation3 + $0x1ac] sm:$0xf] %v4963
  %4974 = vst [vmem:[#allocation3 + $0x1cc] sm:$0xf] %v4964
  %4975 = vst [vmem:[#allocation3 + $0x1ec] sm:$0xf] %v4965
  %4976 = vst [vmem:[#allocation3 + $0x20c] sm:$0xf] %v4966
  %4977 = vst [vmem:[#allocation3 + $0x22c] sm:$0xf] %v4967
  %4978 = vst [vmem:[#allocation3 + $0x24c] sm:$0xf] %v4968
  %4979 = vst [vmem:[#allocation3 + $0x26c] sm:$0xf] %v4969
  %v4980 = vld [vmem:[#allocation2 + $0x38] sm:$0xff]
  %v4981 = vld [vmem:[#allocation2 + $0x54] sm:$0xff]
  %v4982 = vld [vmem:[#allocation2 + $0x70] sm:$0xff]
  %v4983 = vld [vmem:[#allocation2 + $0x8c] sm:$0xff]
  %v4984 = vld [vmem:[#allocation2 + $0xa8] sm:$0xff]
  %v4985 = vld [vmem:[#allocation2 + $0xc4] sm:$0xff]
  %v4986 = vld [vmem:[#allocation2 + $0xe0] sm:$0xff]
  %v4987 = vld [vmem:[#allocation2 + $0xfc] sm:$0xff]
  %v4988 = vld [vmem:[#allocation2 + $0x118] sm:$0xff]
  %v4989 = vld [vmem:[#allocation2 + $0x134] sm:$0xff]
  %5000 = vrot.lane.b32.xlu0 %v4980, 64
  %v5001 = vpop.permute.xlu0 %5000
  %5002 = vrot.lane.b32.xlu0 %v4981, 64
  %v5003 = vpop.permute.xlu0 %5002
  %5004 = vrot.lane.b32.xlu0 %v4982, 64
  %v5005 = vpop.permute.xlu0 %5004
  %5006 = vrot.lane.b32.xlu0 %v4983, 64
  %v5007 = vpop.permute.xlu0 %5006
  %5008 = vrot.lane.b32.xlu0 %v4984, 64
  %v5009 = vpop.permute.xlu0 %5008
  %5010 = vrot.lane.b32.xlu0 %v4985, 64
  %v5011 = vpop.permute.xlu0 %5010
  %5012 = vrot.lane.b32.xlu0 %v4986, 64
  %v5013 = vpop.permute.xlu0 %5012
  %5014 = vrot.lane.b32.xlu0 %v4987, 64
  %v5015 = vpop.permute.xlu0 %5014
  %5016 = vrot.lane.b32.xlu0 %v4988, 64
  %v5017 = vpop.permute.xlu0 %5016
  %5018 = vrot.lane.b32.xlu0 %v4989, 64
  %v5019 = vpop.permute.xlu0 %5018
  %v5020 = vrot.slane %v5001, 4
  %v5021 = vrot.slane %v5003, 4
  %v5022 = vrot.slane %v5005, 4
  %v5023 = vrot.slane %v5007, 4
  %v5024 = vrot.slane %v5009, 4
  %v5025 = vrot.slane %v5011, 4
  %v5026 = vrot.slane %v5013, 4
  %v5027 = vrot.slane %v5015, 4
  %v5028 = vrot.slane %v5017, 4
  %v5029 = vrot.slane %v5019, 4
  %v5030 = vsel %vm4449, %v5001, %v5020
  %v5031 = vsel %vm4449, %v5003, %v5021
  %v5032 = vsel %vm4449, %v5005, %v5022
  %v5033 = vsel %vm4449, %v5007, %v5023
  %v5034 = vsel %vm4449, %v5009, %v5024
  %v5035 = vsel %vm4449, %v5011, %v5025
  %v5036 = vsel %vm4449, %v5013, %v5026
  %v5037 = vsel %vm4449, %v5015, %v5027
  %v5038 = vsel %vm4449, %v5017, %v5028
  %v5039 = vsel %vm4449, %v5019, %v5029
  %5050 = vst [vmem:[#allocation3 + $0x150] sm:$0xf] %v5030
  %5051 = vst [vmem:[#allocation3 + $0x170] sm:$0xf] %v5031
  %5052 = vst [vmem:[#allocation3 + $0x190] sm:$0xf] %v5032
  %5053 = vst [vmem:[#allocation3 + $0x1b0] sm:$0xf] %v5033
  %5054 = vst [vmem:[#allocation3 + $0x1d0] sm:$0xf] %v5034
  %5055 = vst [vmem:[#allocation3 + $0x1f0] sm:$0xf] %v5035
  %5056 = vst [vmem:[#allocation3 + $0x210] sm:$0xf] %v5036
  %5057 = vst [vmem:[#allocation3 + $0x230] sm:$0xf] %v5037
  %5058 = vst [vmem:[#allocation3 + $0x250] sm:$0xf] %v5038
  %5059 = vst [vmem:[#allocation3 + $0x270] sm:$0xf] %v5039
  %v5060 = vld [vmem:[#allocation2 + $0x48] sm:$0xf]
  %v5061 = vld [vmem:[#allocation2 + $0x64] sm:$0xf]
  %v5062 = vld [vmem:[#allocation2 + $0x80] sm:$0xf]
  %v5063 = vld [vmem:[#allocation2 + $0x9c] sm:$0xf]
  %v5064 = vld [vmem:[#allocation2 + $0xb8] sm:$0xf]
  %v5065 = vld [vmem:[#allocation2 + $0xd4] sm:$0xf]
  %v5066 = vld [vmem:[#allocation2 + $0xf0] sm:$0xf]
  %v5067 = vld [vmem:[#allocation2 + $0x10c] sm:$0xf]
  %v5068 = vld [vmem:[#allocation2 + $0x128] sm:$0xf]
  %v5069 = vld [vmem:[#allocation2 + $0x144] sm:$0xf]
  %5070 = vst [vmem:[#allocation3 + $0x154] sm:$0xf] %v5060
  %5071 = vst [vmem:[#allocation3 + $0x174] sm:$0xf] %v5061
  %5072 = vst [vmem:[#allocation3 + $0x194] sm:$0xf] %v5062
  %5073 = vst [vmem:[#allocation3 + $0x1b4] sm:$0xf] %v5063
  %5074 = vst [vmem:[#allocation3 + $0x1d4] sm:$0xf] %v5064
  %5075 = vst [vmem:[#allocation3 + $0x1f4] sm:$0xf] %v5065
  %5076 = vst [vmem:[#allocation3 + $0x214] sm:$0xf] %v5066
  %5077 = vst [vmem:[#allocation3 + $0x234] sm:$0xf] %v5067
  %5078 = vst [vmem:[#allocation3 + $0x254] sm:$0xf] %v5068
  %5079 = vst [vmem:[#allocation3 + $0x274] sm:$0xf] %v5069
  %v5080 = vld [vmem:[#allocation2 + $0x1c0] sm:$0xff]
  %v5081 = vld [vmem:[#allocation2 + $0x1dc] sm:$0xff]
  %v5082 = vld [vmem:[#allocation2 + $0x1f8] sm:$0xff]
  %v5083 = vld [vmem:[#allocation2 + $0x214] sm:$0xff]
  %v5084 = vld [vmem:[#allocation2 + $0x230] sm:$0xff]
  %v5085 = vld [vmem:[#allocation2 + $0x24c] sm:$0xff]
  %v5086 = vld [vmem:[#allocation2 + $0x268] sm:$0xff]
  %v5087 = vld [vmem:[#allocation2 + $0x284] sm:$0xff]
  %v5088 = vld [vmem:[#allocation2 + $0x2a0] sm:$0xff]
  %v5089 = vld [vmem:[#allocation2 + $0x2bc] sm:$0xff]
  %5100 = vrot.lane.b32.xlu0 %v5080, 64
  %v5101 = vpop.permute.xlu0 %5100
  %5102 = vrot.lane.b32.xlu0 %v5081, 64
  %v5103 = vpop.permute.xlu0 %5102
  %5104 = vrot.lane.b32.xlu0 %v5082, 64
  %v5105 = vpop.permute.xlu0 %5104
  %5106 = vrot.lane.b32.xlu0 %v5083, 64
  %v5107 = vpop.permute.xlu0 %5106
  %5108 = vrot.lane.b32.xlu0 %v5084, 64
  %v5109 = vpop.permute.xlu0 %5108
  %5110 = vrot.lane.b32.xlu0 %v5085, 64
  %v5111 = vpop.permute.xlu0 %5110
  %5112 = vrot.lane.b32.xlu0 %v5086, 64
  %v5113 = vpop.permute.xlu0 %5112
  %5114 = vrot.lane.b32.xlu0 %v5087, 64
  %v5115 = vpop.permute.xlu0 %5114
  %5116 = vrot.lane.b32.xlu0 %v5088, 64
  %v5117 = vpop.permute.xlu0 %5116
  %5118 = vrot.lane.b32.xlu0 %v5089, 64
  %v5119 = vpop.permute.xlu0 %5118
  %v5120 = vrot.slane %v5101, 4
  %v5121 = vrot.slane %v5103, 4
  %v5122 = vrot.slane %v5105, 4
  %v5123 = vrot.slane %v5107, 4
  %v5124 = vrot.slane %v5109, 4
  %v5125 = vrot.slane %v5111, 4
  %v5126 = vrot.slane %v5113, 4
  %v5127 = vrot.slane %v5115, 4
  %v5128 = vrot.slane %v5117, 4
  %v5129 = vrot.slane %v5119, 4
  %v5130 = vsel %vm4449, %v5101, %v5120
  %v5131 = vsel %vm4449, %v5103, %v5121
  %v5132 = vsel %vm4449, %v5105, %v5122
  %v5133 = vsel %vm4449, %v5107, %v5123
  %v5134 = vsel %vm4449, %v5109, %v5124
  %v5135 = vsel %vm4449, %v5111, %v5125
  %v5136 = vsel %vm4449, %v5113, %v5126
  %v5137 = vsel %vm4449, %v5115, %v5127
  %v5138 = vsel %vm4449, %v5117, %v5128
  %v5139 = vsel %vm4449, %v5119, %v5129
  %5150 = vst [vmem:[#allocation3 + $0x158] sm:$0xf] %v5130
  %5151 = vst [vmem:[#allocation3 + $0x178] sm:$0xf] %v5131
  %5152 = vst [vmem:[#allocation3 + $0x198] sm:$0xf] %v5132
  %5153 = vst [vmem:[#allocation3 + $0x1b8] sm:$0xf] %v5133
  %5154 = vst [vmem:[#allocation3 + $0x1d8] sm:$0xf] %v5134
  %5155 = vst [vmem:[#allocation3 + $0x1f8] sm:$0xf] %v5135
  %5156 = vst [vmem:[#allocation3 + $0x218] sm:$0xf] %v5136
  %5157 = vst [vmem:[#allocation3 + $0x238] sm:$0xf] %v5137
  %5158 = vst [vmem:[#allocation3 + $0x258] sm:$0xf] %v5138
  %5159 = vst [vmem:[#allocation3 + $0x278] sm:$0xf] %v5139
  %v5160 = vld [vmem:[#allocation2 + $0x1d0] sm:$0xf]
  %v5161 = vld [vmem:[#allocation2 + $0x1ec] sm:$0xf]
  %v5162 = vld [vmem:[#allocation2 + $0x208] sm:$0xf]
  %v5163 = vld [vmem:[#allocation2 + $0x224] sm:$0xf]
  %v5164 = vld [vmem:[#allocation2 + $0x240] sm:$0xf]
  %v5165 = vld [vmem:[#allocation2 + $0x25c] sm:$0xf]
  %v5166 = vld [vmem:[#allocation2 + $0x278] sm:$0xf]
  %v5167 = vld [vmem:[#allocation2 + $0x294] sm:$0xf]
  %v5168 = vld [vmem:[#allocation2 + $0x2b0] sm:$0xf]
  %v5169 = vld [vmem:[#allocation2 + $0x2cc] sm:$0xf]
  %5170 = vst [vmem:[#allocation3 + $0x15c] sm:$0xf] %v5160
  %5171 = vst [vmem:[#allocation3 + $0x17c] sm:$0xf] %v5161
  %5172 = vst [vmem:[#allocation3 + $0x19c] sm:$0xf] %v5162
  %5173 = vst [vmem:[#allocation3 + $0x1bc] sm:$0xf] %v5163
  %5174 = vst [vmem:[#allocation3 + $0x1dc] sm:$0xf] %v5164
  %5175 = vst [vmem:[#allocation3 + $0x1fc] sm:$0xf] %v5165
  %5176 = vst [vmem:[#allocation3 + $0x21c] sm:$0xf] %v5166
  %5177 = vst [vmem:[#allocation3 + $0x23c] sm:$0xf] %v5167
  %5178 = vst [vmem:[#allocation3 + $0x25c] sm:$0xf] %v5168
  %5179 = vst [vmem:[#allocation3 + $0x27c] sm:$0xf] %v5169
  %v5180 = vld [vmem:[#allocation2 + $0x4] sm:$0xf]
  %v5181 = vld [vmem:[#allocation2 + $0x20] sm:$0xf]
  %v5182 = vld [vmem:[#allocation2 + $0x3c] sm:$0xf]
  %v5183 = vld [vmem:[#allocation2 + $0x58] sm:$0xf]
  %v5184 = vld [vmem:[#allocation2 + $0x74] sm:$0xf]
  %v5185 = vld [vmem:[#allocation2 + $0x90] sm:$0xf]
  %v5186 = vld [vmem:[#allocation2 + $0xac] sm:$0xf]
  %v5187 = vld [vmem:[#allocation2 + $0xc8] sm:$0xf]
  %v5188 = vld [vmem:[#allocation2 + $0xe4] sm:$0xf]
  %v5189 = vld [vmem:[#allocation2 + $0x100] sm:$0xf]
  %5190 = vst [vmem:[#allocation3 + $0x280] sm:$0xf] %v5180
  %5191 = vst [vmem:[#allocation3 + $0x2a0] sm:$0xf] %v5181
  %5192 = vst [vmem:[#allocation3 + $0x2c0] sm:$0xf] %v5182
  %5193 = vst [vmem:[#allocation3 + $0x2e0] sm:$0xf] %v5183
  %5194 = vst [vmem:[#allocation3 + $0x300] sm:$0xf] %v5184
  %5195 = vst [vmem:[#allocation3 + $0x320] sm:$0xf] %v5185
  %5196 = vst [vmem:[#allocation3 + $0x340] sm:$0xf] %v5186
  %5197 = vst [vmem:[#allocation3 + $0x360] sm:$0xf] %v5187
  %5198 = vst [vmem:[#allocation3 + $0x380] sm:$0xf] %v5188
  %5199 = vst [vmem:[#allocation3 + $0x3a0] sm:$0xf] %v5189
  %v5200 = vld [vmem:[#allocation2 + $0x10] sm:$0xff]
  %v5201 = vld [vmem:[#allocation2 + $0x2c] sm:$0xff]
  %v5202 = vld [vmem:[#allocation2 + $0x48] sm:$0xff]
  %v5203 = vld [vmem:[#allocation2 + $0x64] sm:$0xff]
  %v5204 = vld [vmem:[#allocation2 + $0x80] sm:$0xff]
  %v5205 = vld [vmem:[#allocation2 + $0x9c] sm:$0xff]
  %v5206 = vld [vmem:[#allocation2 + $0xb8] sm:$0xff]
  %v5207 = vld [vmem:[#allocation2 + $0xd4] sm:$0xff]
  %v5208 = vld [vmem:[#allocation2 + $0xf0] sm:$0xff]
  %v5209 = vld [vmem:[#allocation2 + $0x10c] sm:$0xff]
  %5220 = vrot.lane.b32.xlu0 %v5200, 64
  %v5221 = vpop.permute.xlu0 %5220
  %5222 = vrot.lane.b32.xlu0 %v5201, 64
  %v5223 = vpop.permute.xlu0 %5222
  %5224 = vrot.lane.b32.xlu0 %v5202, 64
  %v5225 = vpop.permute.xlu0 %5224
  %5226 = vrot.lane.b32.xlu0 %v5203, 64
  %v5227 = vpop.permute.xlu0 %5226
  %5228 = vrot.lane.b32.xlu0 %v5204, 64
  %v5229 = vpop.permute.xlu0 %5228
  %5230 = vrot.lane.b32.xlu0 %v5205, 64
  %v5231 = vpop.permute.xlu0 %5230
  %5232 = vrot.lane.b32.xlu0 %v5206, 64
  %v5233 = vpop.permute.xlu0 %5232
  %5234 = vrot.lane.b32.xlu0 %v5207, 64
  %v5235 = vpop.permute.xlu0 %5234
  %5236 = vrot.lane.b32.xlu0 %v5208, 64
  %v5237 = vpop.permute.xlu0 %5236
  %5238 = vrot.lane.b32.xlu0 %v5209, 64
  %v5239 = vpop.permute.xlu0 %5238
  %v5240 = vrot.slane %v5221, 4
  %v5241 = vrot.slane %v5223, 4
  %v5242 = vrot.slane %v5225, 4
  %v5243 = vrot.slane %v5227, 4
  %v5244 = vrot.slane %v5229, 4
  %v5245 = vrot.slane %v5231, 4
  %v5246 = vrot.slane %v5233, 4
  %v5247 = vrot.slane %v5235, 4
  %v5248 = vrot.slane %v5237, 4
  %v5249 = vrot.slane %v5239, 4
  %v5250 = vsel %vm4449, %v5221, %v5240
  %v5251 = vsel %vm4449, %v5223, %v5241
  %v5252 = vsel %vm4449, %v5225, %v5242
  %v5253 = vsel %vm4449, %v5227, %v5243
  %v5254 = vsel %vm4449, %v5229, %v5244
  %v5255 = vsel %vm4449, %v5231, %v5245
  %v5256 = vsel %vm4449, %v5233, %v5246
  %v5257 = vsel %vm4449, %v5235, %v5247
  %v5258 = vsel %vm4449, %v5237, %v5248
  %v5259 = vsel %vm4449, %v5239, %v5249
  %5270 = vst [vmem:[#allocation3 + $0x284] sm:$0xf] %v5250
  %5271 = vst [vmem:[#allocation3 + $0x2a4] sm:$0xf] %v5251
  %5272 = vst [vmem:[#allocation3 + $0x2c4] sm:$0xf] %v5252
  %5273 = vst [vmem:[#allocation3 + $0x2e4] sm:$0xf] %v5253
  %5274 = vst [vmem:[#allocation3 + $0x304] sm:$0xf] %v5254
  %5275 = vst [vmem:[#allocation3 + $0x324] sm:$0xf] %v5255
  %5276 = vst [vmem:[#allocation3 + $0x344] sm:$0xf] %v5256
  %5277 = vst [vmem:[#allocation3 + $0x364] sm:$0xf] %v5257
  %5278 = vst [vmem:[#allocation3 + $0x384] sm:$0xf] %v5258
  %5279 = vst [vmem:[#allocation3 + $0x3a4] sm:$0xf] %v5259
  %v5280 = vld [vmem:[#allocation2 + $0x18c] sm:$0xf]
  %v5281 = vld [vmem:[#allocation2 + $0x1a8] sm:$0xf]
  %v5282 = vld [vmem:[#allocation2 + $0x1c4] sm:$0xf]
  %v5283 = vld [vmem:[#allocation2 + $0x1e0] sm:$0xf]
  %v5284 = vld [vmem:[#allocation2 + $0x1fc] sm:$0xf]
  %v5285 = vld [vmem:[#allocation2 + $0x218] sm:$0xf]
  %v5286 = vld [vmem:[#allocation2 + $0x234] sm:$0xf]
  %v5287 = vld [vmem:[#allocation2 + $0x250] sm:$0xf]
  %v5288 = vld [vmem:[#allocation2 + $0x26c] sm:$0xf]
  %v5289 = vld [vmem:[#allocation2 + $0x288] sm:$0xf]
  %5290 = vst [vmem:[#allocation3 + $0x288] sm:$0xf] %v5280
  %5291 = vst [vmem:[#allocation3 + $0x2a8] sm:$0xf] %v5281
  %5292 = vst [vmem:[#allocation3 + $0x2c8] sm:$0xf] %v5282
  %5293 = vst [vmem:[#allocation3 + $0x2e8] sm:$0xf] %v5283
  %5294 = vst [vmem:[#allocation3 + $0x308] sm:$0xf] %v5284
  %5295 = vst [vmem:[#allocation3 + $0x328] sm:$0xf] %v5285
  %5296 = vst [vmem:[#allocation3 + $0x348] sm:$0xf] %v5286
  %5297 = vst [vmem:[#allocation3 + $0x368] sm:$0xf] %v5287
  %5298 = vst [vmem:[#allocation3 + $0x388] sm:$0xf] %v5288
  %5299 = vst [vmem:[#allocation3 + $0x3a8] sm:$0xf] %v5289
  %v5300 = vld [vmem:[#allocation2 + $0x198] sm:$0xff]
  %v5301 = vld [vmem:[#allocation2 + $0x1b4] sm:$0xff]
  %v5302 = vld [vmem:[#allocation2 + $0x1d0] sm:$0xff]
  %v5303 = vld [vmem:[#allocation2 + $0x1ec] sm:$0xff]
  %v5304 = vld [vmem:[#allocation2 + $0x208] sm:$0xff]
  %v5305 = vld [vmem:[#allocation2 + $0x224] sm:$0xff]
  %v5306 = vld [vmem:[#allocation2 + $0x240] sm:$0xff]
  %v5307 = vld [vmem:[#allocation2 + $0x25c] sm:$0xff]
  %v5308 = vld [vmem:[#allocation2 + $0x278] sm:$0xff]
  %v5309 = vld [vmem:[#allocation2 + $0x294] sm:$0xff]
  %5320 = vrot.lane.b32.xlu0 %v5300, 64
  %v5321 = vpop.permute.xlu0 %5320
  %5322 = vrot.lane.b32.xlu0 %v5301, 64
  %v5323 = vpop.permute.xlu0 %5322
  %5324 = vrot.lane.b32.xlu0 %v5302, 64
  %v5325 = vpop.permute.xlu0 %5324
  %5326 = vrot.lane.b32.xlu0 %v5303, 64
  %v5327 = vpop.permute.xlu0 %5326
  %5328 = vrot.lane.b32.xlu0 %v5304, 64
  %v5329 = vpop.permute.xlu0 %5328
  %5330 = vrot.lane.b32.xlu0 %v5305, 64
  %v5331 = vpop.permute.xlu0 %5330
  %5332 = vrot.lane.b32.xlu0 %v5306, 64
  %v5333 = vpop.permute.xlu0 %5332
  %5334 = vrot.lane.b32.xlu0 %v5307, 64
  %v5335 = vpop.permute.xlu0 %5334
  %5336 = vrot.lane.b32.xlu0 %v5308, 64
  %v5337 = vpop.permute.xlu0 %5336
  %5338 = vrot.lane.b32.xlu0 %v5309, 64
  %v5339 = vpop.permute.xlu0 %5338
  %v5340 = vrot.slane %v5321, 4
  %v5341 = vrot.slane %v5323, 4
  %v5342 = vrot.slane %v5325, 4
  %v5343 = vrot.slane %v5327, 4
  %v5344 = vrot.slane %v5329, 4
  %v5345 = vrot.slane %v5331, 4
  %v5346 = vrot.slane %v5333, 4
  %v5347 = vrot.slane %v5335, 4
  %v5348 = vrot.slane %v5337, 4
  %v5349 = vrot.slane %v5339, 4
  %v5350 = vsel %vm4449, %v5321, %v5340
  %v5351 = vsel %vm4449, %v5323, %v5341
  %v5352 = vsel %vm4449, %v5325, %v5342
  %v5353 = vsel %vm4449, %v5327, %v5343
  %v5354 = vsel %vm4449, %v5329, %v5344
  %v5355 = vsel %vm4449, %v5331, %v5345
  %v5356 = vsel %vm4449, %v5333, %v5346
  %v5357 = vsel %vm4449, %v5335, %v5347
  %v5358 = vsel %vm4449, %v5337, %v5348
  %v5359 = vsel %vm4449, %v5339, %v5349
  %5370 = vst [vmem:[#allocation3 + $0x28c] sm:$0xf] %v5350
  %5371 = vst [vmem:[#allocation3 + $0x2ac] sm:$0xf] %v5351
  %5372 = vst [vmem:[#allocation3 + $0x2cc] sm:$0xf] %v5352
  %5373 = vst [vmem:[#allocation3 + $0x2ec] sm:$0xf] %v5353
  %5374 = vst [vmem:[#allocation3 + $0x30c] sm:$0xf] %v5354
  %5375 = vst [vmem:[#allocation3 + $0x32c] sm:$0xf] %v5355
  %5376 = vst [vmem:[#allocation3 + $0x34c] sm:$0xf] %v5356
  %5377 = vst [vmem:[#allocation3 + $0x36c] sm:$0xf] %v5357
  %5378 = vst [vmem:[#allocation3 + $0x38c] sm:$0xf] %v5358
  %5379 = vst [vmem:[#allocation3 + $0x3ac] sm:$0xf] %v5359
  %v5380 = vld [vmem:[#allocation2 + $0x3c] sm:$0xf]
  %v5381 = vld [vmem:[#allocation2 + $0x58] sm:$0xf]
  %v5382 = vld [vmem:[#allocation2 + $0x74] sm:$0xf]
  %v5383 = vld [vmem:[#allocation2 + $0x90] sm:$0xf]
  %v5384 = vld [vmem:[#allocation2 + $0xac] sm:$0xf]
  %v5385 = vld [vmem:[#allocation2 + $0xc8] sm:$0xf]
  %v5386 = vld [vmem:[#allocation2 + $0xe4] sm:$0xf]
  %v5387 = vld [vmem:[#allocation2 + $0x100] sm:$0xf]
  %v5388 = vld [vmem:[#allocation2 + $0x11c] sm:$0xf]
  %v5389 = vld [vmem:[#allocation2 + $0x138] sm:$0xf]
  %5390 = vst [vmem:[#allocation3 + $0x290] sm:$0xf] %v5380
  %5391 = vst [vmem:[#allocation3 + $0x2b0] sm:$0xf] %v5381
  %5392 = vst [vmem:[#allocation3 + $0x2d0] sm:$0xf] %v5382
  %5393 = vst [vmem:[#allocation3 + $0x2f0] sm:$0xf] %v5383
  %5394 = vst [vmem:[#allocation3 + $0x310] sm:$0xf] %v5384
  %5395 = vst [vmem:[#allocation3 + $0x330] sm:$0xf] %v5385
  %5396 = vst [vmem:[#allocation3 + $0x350] sm:$0xf] %v5386
  %5397 = vst [vmem:[#allocation3 + $0x370] sm:$0xf] %v5387
  %5398 = vst [vmem:[#allocation3 + $0x390] sm:$0xf] %v5388
  %5399 = vst [vmem:[#allocation3 + $0x3b0] sm:$0xf] %v5389
  %v5400 = vld [vmem:[#allocation2 + $0x48] sm:$0xff]
  %v5401 = vld [vmem:[#allocation2 + $0x64] sm:$0xff]
  %v5402 = vld [vmem:[#allocation2 + $0x80] sm:$0xff]
  %v5403 = vld [vmem:[#allocation2 + $0x9c] sm:$0xff]
  %v5404 = vld [vmem:[#allocation2 + $0xb8] sm:$0xff]
  %v5405 = vld [vmem:[#allocation2 + $0xd4] sm:$0xff]
  %v5406 = vld [vmem:[#allocation2 + $0xf0] sm:$0xff]
  %v5407 = vld [vmem:[#allocation2 + $0x10c] sm:$0xff]
  %v5408 = vld [vmem:[#allocation2 + $0x128] sm:$0xff]
  %v5409 = vld [vmem:[#allocation2 + $0x144] sm:$0xff]
  %5420 = vrot.lane.b32.xlu0 %v5400, 64
  %v5421 = vpop.permute.xlu0 %5420
  %5422 = vrot.lane.b32.xlu0 %v5401, 64
  %v5423 = vpop.permute.xlu0 %5422
  %5424 = vrot.lane.b32.xlu0 %v5402, 64
  %v5425 = vpop.permute.xlu0 %5424
  %5426 = vrot.lane.b32.xlu0 %v5403, 64
  %v5427 = vpop.permute.xlu0 %5426
  %5428 = vrot.lane.b32.xlu0 %v5404, 64
  %v5429 = vpop.permute.xlu0 %5428
  %5430 = vrot.lane.b32.xlu0 %v5405, 64
  %v5431 = vpop.permute.xlu0 %5430
  %5432 = vrot.lane.b32.xlu0 %v5406, 64
  %v5433 = vpop.permute.xlu0 %5432
  %5434 = vrot.lane.b32.xlu0 %v5407, 64
  %v5435 = vpop.permute.xlu0 %5434
  %5436 = vrot.lane.b32.xlu0 %v5408, 64
  %v5437 = vpop.permute.xlu0 %5436
  %5438 = vrot.lane.b32.xlu0 %v5409, 64
  %v5439 = vpop.permute.xlu0 %5438
  %v5440 = vrot.slane %v5421, 4
  %v5441 = vrot.slane %v5423, 4
  %v5442 = vrot.slane %v5425, 4
  %v5443 = vrot.slane %v5427, 4
  %v5444 = vrot.slane %v5429, 4
  %v5445 = vrot.slane %v5431, 4
  %v5446 = vrot.slane %v5433, 4
  %v5447 = vrot.slane %v5435, 4
  %v5448 = vrot.slane %v5437, 4
  %v5449 = vrot.slane %v5439, 4
  %v5450 = vsel %vm4449, %v5421, %v5440
  %v5451 = vsel %vm4449, %v5423, %v5441
  %v5452 = vsel %vm4449, %v5425, %v5442
  %v5453 = vsel %vm4449, %v5427, %v5443
  %v5454 = vsel %vm4449, %v5429, %v5444
  %v5455 = vsel %vm4449, %v5431, %v5445
  %v5456 = vsel %vm4449, %v5433, %v5446
  %v5457 = vsel %vm4449, %v5435, %v5447
  %v5458 = vsel %vm4449, %v5437, %v5448
  %v5459 = vsel %vm4449, %v5439, %v5449
  %5470 = vst [vmem:[#allocation3 + $0x294] sm:$0xf] %v5450
  %5471 = vst [vmem:[#allocation3 + $0x2b4] sm:$0xf] %v5451
  %5472 = vst [vmem:[#allocation3 + $0x2d4] sm:$0xf] %v5452
  %5473 = vst [vmem:[#allocation3 + $0x2f4] sm:$0xf] %v5453
  %5474 = vst [vmem:[#allocation3 + $0x314] sm:$0xf] %v5454
  %5475 = vst [vmem:[#allocation3 + $0x334] sm:$0xf] %v5455
  %5476 = vst [vmem:[#allocation3 + $0x354] sm:$0xf] %v5456
  %5477 = vst [vmem:[#allocation3 + $0x374] sm:$0xf] %v5457
  %5478 = vst [vmem:[#allocation3 + $0x394] sm:$0xf] %v5458
  %5479 = vst [vmem:[#allocation3 + $0x3b4] sm:$0xf] %v5459
  %v5480 = vld [vmem:[#allocation2 + $0x1c4] sm:$0xf]
  %v5481 = vld [vmem:[#allocation2 + $0x1e0] sm:$0xf]
  %v5482 = vld [vmem:[#allocation2 + $0x1fc] sm:$0xf]
  %v5483 = vld [vmem:[#allocation2 + $0x218] sm:$0xf]
  %v5484 = vld [vmem:[#allocation2 + $0x234] sm:$0xf]
  %v5485 = vld [vmem:[#allocation2 + $0x250] sm:$0xf]
  %v5486 = vld [vmem:[#allocation2 + $0x26c] sm:$0xf]
  %v5487 = vld [vmem:[#allocation2 + $0x288] sm:$0xf]
  %v5488 = vld [vmem:[#allocation2 + $0x2a4] sm:$0xf]
  %v5489 = vld [vmem:[#allocation2 + $0x2c0] sm:$0xf]
  %5490 = vst [vmem:[#allocation3 + $0x298] sm:$0xf] %v5480
  %5491 = vst [vmem:[#allocation3 + $0x2b8] sm:$0xf] %v5481
  %5492 = vst [vmem:[#allocation3 + $0x2d8] sm:$0xf] %v5482
  %5493 = vst [vmem:[#allocation3 + $0x2f8] sm:$0xf] %v5483
  %5494 = vst [vmem:[#allocation3 + $0x318] sm:$0xf] %v5484
  %5495 = vst [vmem:[#allocation3 + $0x338] sm:$0xf] %v5485
  %5496 = vst [vmem:[#allocation3 + $0x358] sm:$0xf] %v5486
  %5497 = vst [vmem:[#allocation3 + $0x378] sm:$0xf] %v5487
  %5498 = vst [vmem:[#allocation3 + $0x398] sm:$0xf] %v5488
  %5499 = vst [vmem:[#allocation3 + $0x3b8] sm:$0xf] %v5489
  %v5500 = vld [vmem:[#allocation2 + $0x1d0] sm:$0xff]
  %v5501 = vld [vmem:[#allocation2 + $0x1ec] sm:$0xff]
  %v5502 = vld [vmem:[#allocation2 + $0x208] sm:$0xff]
  %v5503 = vld [vmem:[#allocation2 + $0x224] sm:$0xff]
  %v5504 = vld [vmem:[#allocation2 + $0x240] sm:$0xff]
  %v5505 = vld [vmem:[#allocation2 + $0x25c] sm:$0xff]
  %v5506 = vld [vmem:[#allocation2 + $0x278] sm:$0xff]
  %v5507 = vld [vmem:[#allocation2 + $0x294] sm:$0xff]
  %v5508 = vld [vmem:[#allocation2 + $0x2b0] sm:$0xff]
  %v5509 = vld [vmem:[#allocation2 + $0x2cc] sm:$0xff]
  %5520 = vrot.lane.b32.xlu0 %v5500, 64
  %v5521 = vpop.permute.xlu0 %5520
  %5522 = vrot.lane.b32.xlu0 %v5501, 64
  %v5523 = vpop.permute.xlu0 %5522
  %5524 = vrot.lane.b32.xlu0 %v5502, 64
  %v5525 = vpop.permute.xlu0 %5524
  %5526 = vrot.lane.b32.xlu0 %v5503, 64
  %v5527 = vpop.permute.xlu0 %5526
  %5528 = vrot.lane.b32.xlu0 %v5504, 64
  %v5529 = vpop.permute.xlu0 %5528
  %5530 = vrot.lane.b32.xlu0 %v5505, 64
  %v5531 = vpop.permute.xlu0 %5530
  %5532 = vrot.lane.b32.xlu0 %v5506, 64
  %v5533 = vpop.permute.xlu0 %5532
  %5534 = vrot.lane.b32.xlu0 %v5507, 64
  %v5535 = vpop.permute.xlu0 %5534
  %5536 = vrot.lane.b32.xlu0 %v5508, 64
  %v5537 = vpop.permute.xlu0 %5536
  %5538 = vrot.lane.b32.xlu0 %v5509, 64
  %v5539 = vpop.permute.xlu0 %5538
  %v5540 = vrot.slane %v5521, 4
  %v5541 = vrot.slane %v5523, 4
  %v5542 = vrot.slane %v5525, 4
  %v5543 = vrot.slane %v5527, 4
  %v5544 = vrot.slane %v5529, 4
  %v5545 = vrot.slane %v5531, 4
  %v5546 = vrot.slane %v5533, 4
  %v5547 = vrot.slane %v5535, 4
  %v5548 = vrot.slane %v5537, 4
  %v5549 = vrot.slane %v5539, 4
  %v5550 = vsel %vm4449, %v5521, %v5540
  %v5551 = vsel %vm4449, %v5523, %v5541
  %v5552 = vsel %vm4449, %v5525, %v5542
  %v5553 = vsel %vm4449, %v5527, %v5543
  %v5554 = vsel %vm4449, %v5529, %v5544
  %v5555 = vsel %vm4449, %v5531, %v5545
  %v5556 = vsel %vm4449, %v5533, %v5546
  %v5557 = vsel %vm4449, %v5535, %v5547
  %v5558 = vsel %vm4449, %v5537, %v5548
  %v5559 = vsel %vm4449, %v5539, %v5549
  %5570 = vst [vmem:[#allocation3 + $0x29c] sm:$0xf] %v5550
  %5571 = vst [vmem:[#allocation3 + $0x2bc] sm:$0xf] %v5551
  %5572 = vst [vmem:[#allocation3 + $0x2dc] sm:$0xf] %v5552
  %5573 = vst [vmem:[#allocation3 + $0x2fc] sm:$0xf] %v5553
  %5574 = vst [vmem:[#allocation3 + $0x31c] sm:$0xf] %v5554
  %5575 = vst [vmem:[#allocation3 + $0x33c] sm:$0xf] %v5555
  %5576 = vst [vmem:[#allocation3 + $0x35c] sm:$0xf] %v5556
  %5577 = vst [vmem:[#allocation3 + $0x37c] sm:$0xf] %v5557
  %5578 = vst [vmem:[#allocation3 + $0x39c] sm:$0xf] %v5558
  %5579 = vst [vmem:[#allocation3 + $0x3bc] sm:$0xf] %v5559
  %v5580 = vld [vmem:[#allocation2 + $0x4] sm:$0xff]
  %v5581 = vld [vmem:[#allocation2 + $0x20] sm:$0xff]
  %v5582 = vld [vmem:[#allocation2 + $0x3c] sm:$0xff]
  %v5583 = vld [vmem:[#allocation2 + $0x58] sm:$0xff]
  %v5584 = vld [vmem:[#allocation2 + $0x74] sm:$0xff]
  %v5585 = vld [vmem:[#allocation2 + $0x90] sm:$0xff]
  %v5586 = vld [vmem:[#allocation2 + $0xac] sm:$0xff]
  %v5587 = vld [vmem:[#allocation2 + $0xc8] sm:$0xff]
  %v5588 = vld [vmem:[#allocation2 + $0xe4] sm:$0xff]
  %v5589 = vld [vmem:[#allocation2 + $0x100] sm:$0xff]
  %5600 = vrot.lane.b32.xlu0 %v5580, 64
  %v5601 = vpop.permute.xlu0 %5600
  %5602 = vrot.lane.b32.xlu0 %v5581, 64
  %v5603 = vpop.permute.xlu0 %5602
  %5604 = vrot.lane.b32.xlu0 %v5582, 64
  %v5605 = vpop.permute.xlu0 %5604
  %5606 = vrot.lane.b32.xlu0 %v5583, 64
  %v5607 = vpop.permute.xlu0 %5606
  %5608 = vrot.lane.b32.xlu0 %v5584, 64
  %v5609 = vpop.permute.xlu0 %5608
  %5610 = vrot.lane.b32.xlu0 %v5585, 64
  %v5611 = vpop.permute.xlu0 %5610
  %5612 = vrot.lane.b32.xlu0 %v5586, 64
  %v5613 = vpop.permute.xlu0 %5612
  %5614 = vrot.lane.b32.xlu0 %v5587, 64
  %v5615 = vpop.permute.xlu0 %5614
  %5616 = vrot.lane.b32.xlu0 %v5588, 64
  %v5617 = vpop.permute.xlu0 %5616
  %5618 = vrot.lane.b32.xlu0 %v5589, 64
  %v5619 = vpop.permute.xlu0 %5618
  %v5620 = vrot.slane %v5601, 4
  %v5621 = vrot.slane %v5603, 4
  %v5622 = vrot.slane %v5605, 4
  %v5623 = vrot.slane %v5607, 4
  %v5624 = vrot.slane %v5609, 4
  %v5625 = vrot.slane %v5611, 4
  %v5626 = vrot.slane %v5613, 4
  %v5627 = vrot.slane %v5615, 4
  %v5628 = vrot.slane %v5617, 4
  %v5629 = vrot.slane %v5619, 4
  %v5630 = vsel %vm4449, %v5601, %v5620
  %v5631 = vsel %vm4449, %v5603, %v5621
  %v5632 = vsel %vm4449, %v5605, %v5622
  %v5633 = vsel %vm4449, %v5607, %v5623
  %v5634 = vsel %vm4449, %v5609, %v5624
  %v5635 = vsel %vm4449, %v5611, %v5625
  %v5636 = vsel %vm4449, %v5613, %v5626
  %v5637 = vsel %vm4449, %v5615, %v5627
  %v5638 = vsel %vm4449, %v5617, %v5628
  %v5639 = vsel %vm4449, %v5619, %v5629
  %5650 = vst [vmem:[#allocation3 + $0x3c0] sm:$0xf] %v5630
  %5651 = vst [vmem:[#allocation3 + $0x3e0] sm:$0xf] %v5631
  %5652 = vst [vmem:[#allocation3 + $0x400] sm:$0xf] %v5632
  %5653 = vst [vmem:[#allocation3 + $0x420] sm:$0xf] %v5633
  %5654 = vst [vmem:[#allocation3 + $0x440] sm:$0xf] %v5634
  %5655 = vst [vmem:[#allocation3 + $0x460] sm:$0xf] %v5635
  %5656 = vst [vmem:[#allocation3 + $0x480] sm:$0xf] %v5636
  %5657 = vst [vmem:[#allocation3 + $0x4a0] sm:$0xf] %v5637
  %5658 = vst [vmem:[#allocation3 + $0x4c0] sm:$0xf] %v5638
  %5659 = vst [vmem:[#allocation3 + $0x4e0] sm:$0xf] %v5639
  %v5660 = vld [vmem:[#allocation2 + $0x14] sm:$0xf]
  %v5661 = vld [vmem:[#allocation2 + $0x30] sm:$0xf]
  %v5662 = vld [vmem:[#allocation2 + $0x4c] sm:$0xf]
  %v5663 = vld [vmem:[#allocation2 + $0x68] sm:$0xf]
  %v5664 = vld [vmem:[#allocation2 + $0x84] sm:$0xf]
  %v5665 = vld [vmem:[#allocation2 + $0xa0] sm:$0xf]
  %v5666 = vld [vmem:[#allocation2 + $0xbc] sm:$0xf]
  %v5667 = vld [vmem:[#allocation2 + $0xd8] sm:$0xf]
  %v5668 = vld [vmem:[#allocation2 + $0xf4] sm:$0xf]
  %v5669 = vld [vmem:[#allocation2 + $0x110] sm:$0xf]
  %5670 = vst [vmem:[#allocation3 + $0x3c4] sm:$0xf] %v5660
  %5671 = vst [vmem:[#allocation3 + $0x3e4] sm:$0xf] %v5661
  %5672 = vst [vmem:[#allocation3 + $0x404] sm:$0xf] %v5662
  %5673 = vst [vmem:[#allocation3 + $0x424] sm:$0xf] %v5663
  %5674 = vst [vmem:[#allocation3 + $0x444] sm:$0xf] %v5664
  %5675 = vst [vmem:[#allocation3 + $0x464] sm:$0xf] %v5665
  %5676 = vst [vmem:[#allocation3 + $0x484] sm:$0xf] %v5666
  %5677 = vst [vmem:[#allocation3 + $0x4a4] sm:$0xf] %v5667
  %5678 = vst [vmem:[#allocation3 + $0x4c4] sm:$0xf] %v5668
  %5679 = vst [vmem:[#allocation3 + $0x4e4] sm:$0xf] %v5669
  %v5680 = vld [vmem:[#allocation2 + $0x18c] sm:$0xff]
  %v5681 = vld [vmem:[#allocation2 + $0x1a8] sm:$0xff]
  %v5682 = vld [vmem:[#allocation2 + $0x1c4] sm:$0xff]
  %v5683 = vld [vmem:[#allocation2 + $0x1e0] sm:$0xff]
  %v5684 = vld [vmem:[#allocation2 + $0x1fc] sm:$0xff]
  %v5685 = vld [vmem:[#allocation2 + $0x218] sm:$0xff]
  %v5686 = vld [vmem:[#allocation2 + $0x234] sm:$0xff]
  %v5687 = vld [vmem:[#allocation2 + $0x250] sm:$0xff]
  %v5688 = vld [vmem:[#allocation2 + $0x26c] sm:$0xff]
  %v5689 = vld [vmem:[#allocation2 + $0x288] sm:$0xff]
  %5700 = vrot.lane.b32.xlu0 %v5680, 64
  %v5701 = vpop.permute.xlu0 %5700
  %5702 = vrot.lane.b32.xlu0 %v5681, 64
  %v5703 = vpop.permute.xlu0 %5702
  %5704 = vrot.lane.b32.xlu0 %v5682, 64
  %v5705 = vpop.permute.xlu0 %5704
  %5706 = vrot.lane.b32.xlu0 %v5683, 64
  %v5707 = vpop.permute.xlu0 %5706
  %5708 = vrot.lane.b32.xlu0 %v5684, 64
  %v5709 = vpop.permute.xlu0 %5708
  %5710 = vrot.lane.b32.xlu0 %v5685, 64
  %v5711 = vpop.permute.xlu0 %5710
  %5712 = vrot.lane.b32.xlu0 %v5686, 64
  %v5713 = vpop.permute.xlu0 %5712
  %5714 = vrot.lane.b32.xlu0 %v5687, 64
  %v5715 = vpop.permute.xlu0 %5714
  %5716 = vrot.lane.b32.xlu0 %v5688, 64
  %v5717 = vpop.permute.xlu0 %5716
  %5718 = vrot.lane.b32.xlu0 %v5689, 64
  %v5719 = vpop.permute.xlu0 %5718
  %v5720 = vrot.slane %v5701, 4
  %v5721 = vrot.slane %v5703, 4
  %v5722 = vrot.slane %v5705, 4
  %v5723 = vrot.slane %v5707, 4
  %v5724 = vrot.slane %v5709, 4
  %v5725 = vrot.slane %v5711, 4
  %v5726 = vrot.slane %v5713, 4
  %v5727 = vrot.slane %v5715, 4
  %v5728 = vrot.slane %v5717, 4
  %v5729 = vrot.slane %v5719, 4
  %v5730 = vsel %vm4449, %v5701, %v5720
  %v5731 = vsel %vm4449, %v5703, %v5721
  %v5732 = vsel %vm4449, %v5705, %v5722
  %v5733 = vsel %vm4449, %v5707, %v5723
  %v5734 = vsel %vm4449, %v5709, %v5724
  %v5735 = vsel %vm4449, %v5711, %v5725
  %v5736 = vsel %vm4449, %v5713, %v5726
  %v5737 = vsel %vm4449, %v5715, %v5727
  %v5738 = vsel %vm4449, %v5717, %v5728
  %v5739 = vsel %vm4449, %v5719, %v5729
  %5750 = vst [vmem:[#allocation3 + $0x3c8] sm:$0xf] %v5730
  %5751 = vst [vmem:[#allocation3 + $0x3e8] sm:$0xf] %v5731
  %5752 = vst [vmem:[#allocation3 + $0x408] sm:$0xf] %v5732
  %5753 = vst [vmem:[#allocation3 + $0x428] sm:$0xf] %v5733
  %5754 = vst [vmem:[#allocation3 + $0x448] sm:$0xf] %v5734
  %5755 = vst [vmem:[#allocation3 + $0x468] sm:$0xf] %v5735
  %5756 = vst [vmem:[#allocation3 + $0x488] sm:$0xf] %v5736
  %5757 = vst [vmem:[#allocation3 + $0x4a8] sm:$0xf] %v5737
  %5758 = vst [vmem:[#allocation3 + $0x4c8] sm:$0xf] %v5738
  %5759 = vst [vmem:[#allocation3 + $0x4e8] sm:$0xf] %v5739
  %v5760 = vld [vmem:[#allocation2 + $0x19c] sm:$0xf]
  %v5761 = vld [vmem:[#allocation2 + $0x1b8] sm:$0xf]
  %v5762 = vld [vmem:[#allocation2 + $0x1d4] sm:$0xf]
  %v5763 = vld [vmem:[#allocation2 + $0x1f0] sm:$0xf]
  %v5764 = vld [vmem:[#allocation2 + $0x20c] sm:$0xf]
  %v5765 = vld [vmem:[#allocation2 + $0x228] sm:$0xf]
  %v5766 = vld [vmem:[#allocation2 + $0x244] sm:$0xf]
  %v5767 = vld [vmem:[#allocation2 + $0x260] sm:$0xf]
  %v5768 = vld [vmem:[#allocation2 + $0x27c] sm:$0xf]
  %v5769 = vld [vmem:[#allocation2 + $0x298] sm:$0xf]
  %5770 = vst [vmem:[#allocation3 + $0x3cc] sm:$0xf] %v5760
  %5771 = vst [vmem:[#allocation3 + $0x3ec] sm:$0xf] %v5761
  %5772 = vst [vmem:[#allocation3 + $0x40c] sm:$0xf] %v5762
  %5773 = vst [vmem:[#allocation3 + $0x42c] sm:$0xf] %v5763
  %5774 = vst [vmem:[#allocation3 + $0x44c] sm:$0xf] %v5764
  %5775 = vst [vmem:[#allocation3 + $0x46c] sm:$0xf] %v5765
  %5776 = vst [vmem:[#allocation3 + $0x48c] sm:$0xf] %v5766
  %5777 = vst [vmem:[#allocation3 + $0x4ac] sm:$0xf] %v5767
  %5778 = vst [vmem:[#allocation3 + $0x4cc] sm:$0xf] %v5768
  %5779 = vst [vmem:[#allocation3 + $0x4ec] sm:$0xf] %v5769
  %v5780 = vld [vmem:[#allocation2 + $0x3c] sm:$0xff]
  %v5781 = vld [vmem:[#allocation2 + $0x58] sm:$0xff]
  %v5782 = vld [vmem:[#allocation2 + $0x74] sm:$0xff]
  %v5783 = vld [vmem:[#allocation2 + $0x90] sm:$0xff]
  %v5784 = vld [vmem:[#allocation2 + $0xac] sm:$0xff]
  %v5785 = vld [vmem:[#allocation2 + $0xc8] sm:$0xff]
  %v5786 = vld [vmem:[#allocation2 + $0xe4] sm:$0xff]
  %v5787 = vld [vmem:[#allocation2 + $0x100] sm:$0xff]
  %v5788 = vld [vmem:[#allocation2 + $0x11c] sm:$0xff]
  %v5789 = vld [vmem:[#allocation2 + $0x138] sm:$0xff]
  %5800 = vrot.lane.b32.xlu0 %v5780, 64
  %v5801 = vpop.permute.xlu0 %5800
  %5802 = vrot.lane.b32.xlu0 %v5781, 64
  %v5803 = vpop.permute.xlu0 %5802
  %5804 = vrot.lane.b32.xlu0 %v5782, 64
  %v5805 = vpop.permute.xlu0 %5804
  %5806 = vrot.lane.b32.xlu0 %v5783, 64
  %v5807 = vpop.permute.xlu0 %5806
  %5808 = vrot.lane.b32.xlu0 %v5784, 64
  %v5809 = vpop.permute.xlu0 %5808
  %5810 = vrot.lane.b32.xlu0 %v5785, 64
  %v5811 = vpop.permute.xlu0 %5810
  %5812 = vrot.lane.b32.xlu0 %v5786, 64
  %v5813 = vpop.permute.xlu0 %5812
  %5814 = vrot.lane.b32.xlu0 %v5787, 64
  %v5815 = vpop.permute.xlu0 %5814
  %5816 = vrot.lane.b32.xlu0 %v5788, 64
  %v5817 = vpop.permute.xlu0 %5816
  %5818 = vrot.lane.b32.xlu0 %v5789, 64
  %v5819 = vpop.permute.xlu0 %5818
  %v5820 = vrot.slane %v5801, 4
  %v5821 = vrot.slane %v5803, 4
  %v5822 = vrot.slane %v5805, 4
  %v5823 = vrot.slane %v5807, 4
  %v5824 = vrot.slane %v5809, 4
  %v5825 = vrot.slane %v5811, 4
  %v5826 = vrot.slane %v5813, 4
  %v5827 = vrot.slane %v5815, 4
  %v5828 = vrot.slane %v5817, 4
  %v5829 = vrot.slane %v5819, 4
  %v5830 = vsel %vm4449, %v5801, %v5820
  %v5831 = vsel %vm4449, %v5803, %v5821
  %v5832 = vsel %vm4449, %v5805, %v5822
  %v5833 = vsel %vm4449, %v5807, %v5823
  %v5834 = vsel %vm4449, %v5809, %v5824
  %v5835 = vsel %vm4449, %v5811, %v5825
  %v5836 = vsel %vm4449, %v5813, %v5826
  %v5837 = vsel %vm4449, %v5815, %v5827
  %v5838 = vsel %vm4449, %v5817, %v5828
  %v5839 = vsel %vm4449, %v5819, %v5829
  %5850 = vst [vmem:[#allocation3 + $0x3d0] sm:$0xf] %v5830
  %5851 = vst [vmem:[#allocation3 + $0x3f0] sm:$0xf] %v5831
  %5852 = vst [vmem:[#allocation3 + $0x410] sm:$0xf] %v5832
  %5853 = vst [vmem:[#allocation3 + $0x430] sm:$0xf] %v5833
  %5854 = vst [vmem:[#allocation3 + $0x450] sm:$0xf] %v5834
  %5855 = vst [vmem:[#allocation3 + $0x470] sm:$0xf] %v5835
  %5856 = vst [vmem:[#allocation3 + $0x490] sm:$0xf] %v5836
  %5857 = vst [vmem:[#allocation3 + $0x4b0] sm:$0xf] %v5837
  %5858 = vst [vmem:[#allocation3 + $0x4d0] sm:$0xf] %v5838
  %5859 = vst [vmem:[#allocation3 + $0x4f0] sm:$0xf] %v5839
  %v5860 = vld [vmem:[#allocation2 + $0x4c] sm:$0xf]
  %v5861 = vld [vmem:[#allocation2 + $0x68] sm:$0xf]
  %v5862 = vld [vmem:[#allocation2 + $0x84] sm:$0xf]
  %v5863 = vld [vmem:[#allocation2 + $0xa0] sm:$0xf]
  %v5864 = vld [vmem:[#allocation2 + $0xbc] sm:$0xf]
  %v5865 = vld [vmem:[#allocation2 + $0xd8] sm:$0xf]
  %v5866 = vld [vmem:[#allocation2 + $0xf4] sm:$0xf]
  %v5867 = vld [vmem:[#allocation2 + $0x110] sm:$0xf]
  %v5868 = vld [vmem:[#allocation2 + $0x12c] sm:$0xf]
  %v5869 = vld [vmem:[#allocation2 + $0x148] sm:$0xf]
  %5870 = vst [vmem:[#allocation3 + $0x3d4] sm:$0xf] %v5860
  %5871 = vst [vmem:[#allocation3 + $0x3f4] sm:$0xf] %v5861
  %5872 = vst [vmem:[#allocation3 + $0x414] sm:$0xf] %v5862
  %5873 = vst [vmem:[#allocation3 + $0x434] sm:$0xf] %v5863
  %5874 = vst [vmem:[#allocation3 + $0x454] sm:$0xf] %v5864
  %5875 = vst [vmem:[#allocation3 + $0x474] sm:$0xf] %v5865
  %5876 = vst [vmem:[#allocation3 + $0x494] sm:$0xf] %v5866
  %5877 = vst [vmem:[#allocation3 + $0x4b4] sm:$0xf] %v5867
  %5878 = vst [vmem:[#allocation3 + $0x4d4] sm:$0xf] %v5868
  %5879 = vst [vmem:[#allocation3 + $0x4f4] sm:$0xf] %v5869
  %v5880 = vld [vmem:[#allocation2 + $0x1c4] sm:$0xff]
  %v5881 = vld [vmem:[#allocation2 + $0x1e0] sm:$0xff]
  %v5882 = vld [vmem:[#allocation2 + $0x1fc] sm:$0xff]
  %v5883 = vld [vmem:[#allocation2 + $0x218] sm:$0xff]
  %v5884 = vld [vmem:[#allocation2 + $0x234] sm:$0xff]
  %v5885 = vld [vmem:[#allocation2 + $0x250] sm:$0xff]
  %v5886 = vld [vmem:[#allocation2 + $0x26c] sm:$0xff]
  %v5887 = vld [vmem:[#allocation2 + $0x288] sm:$0xff]
  %v5888 = vld [vmem:[#allocation2 + $0x2a4] sm:$0xff]
  %v5889 = vld [vmem:[#allocation2 + $0x2c0] sm:$0xff]
  %5900 = vrot.lane.b32.xlu0 %v5880, 64
  %v5901 = vpop.permute.xlu0 %5900
  %5902 = vrot.lane.b32.xlu0 %v5881, 64
  %v5903 = vpop.permute.xlu0 %5902
  %5904 = vrot.lane.b32.xlu0 %v5882, 64
  %v5905 = vpop.permute.xlu0 %5904
  %5906 = vrot.lane.b32.xlu0 %v5883, 64
  %v5907 = vpop.permute.xlu0 %5906
  %5908 = vrot.lane.b32.xlu0 %v5884, 64
  %v5909 = vpop.permute.xlu0 %5908
  %5910 = vrot.lane.b32.xlu0 %v5885, 64
  %v5911 = vpop.permute.xlu0 %5910
  %5912 = vrot.lane.b32.xlu0 %v5886, 64
  %v5913 = vpop.permute.xlu0 %5912
  %5914 = vrot.lane.b32.xlu0 %v5887, 64
  %v5915 = vpop.permute.xlu0 %5914
  %5916 = vrot.lane.b32.xlu0 %v5888, 64
  %v5917 = vpop.permute.xlu0 %5916
  %5918 = vrot.lane.b32.xlu0 %v5889, 64
  %v5919 = vpop.permute.xlu0 %5918
  %v5920 = vrot.slane %v5901, 4
  %v5921 = vrot.slane %v5903, 4
  %v5922 = vrot.slane %v5905, 4
  %v5923 = vrot.slane %v5907, 4
  %v5924 = vrot.slane %v5909, 4
  %v5925 = vrot.slane %v5911, 4
  %v5926 = vrot.slane %v5913, 4
  %v5927 = vrot.slane %v5915, 4
  %v5928 = vrot.slane %v5917, 4
  %v5929 = vrot.slane %v5919, 4
  %v5930 = vsel %vm4449, %v5901, %v5920
  %v5931 = vsel %vm4449, %v5903, %v5921
  %v5932 = vsel %vm4449, %v5905, %v5922
  %v5933 = vsel %vm4449, %v5907, %v5923
  %v5934 = vsel %vm4449, %v5909, %v5924
  %v5935 = vsel %vm4449, %v5911, %v5925
  %v5936 = vsel %vm4449, %v5913, %v5926
  %v5937 = vsel %vm4449, %v5915, %v5927
  %v5938 = vsel %vm4449, %v5917, %v5928
  %v5939 = vsel %vm4449, %v5919, %v5929
  %5950 = vst [vmem:[#allocation3 + $0x3d8] sm:$0xf] %v5930
  %5951 = vst [vmem:[#allocation3 + $0x3f8] sm:$0xf] %v5931
  %5952 = vst [vmem:[#allocation3 + $0x418] sm:$0xf] %v5932
  %5953 = vst [vmem:[#allocation3 + $0x438] sm:$0xf] %v5933
  %5954 = vst [vmem:[#allocation3 + $0x458] sm:$0xf] %v5934
  %5955 = vst [vmem:[#allocation3 + $0x478] sm:$0xf] %v5935
  %5956 = vst [vmem:[#allocation3 + $0x498] sm:$0xf] %v5936
  %5957 = vst [vmem:[#allocation3 + $0x4b8] sm:$0xf] %v5937
  %5958 = vst [vmem:[#allocation3 + $0x4d8] sm:$0xf] %v5938
  %5959 = vst [vmem:[#allocation3 + $0x4f8] sm:$0xf] %v5939
  %v5960 = vld [vmem:[#allocation2 + $0x1d4] sm:$0xf]
  %v5961 = vld [vmem:[#allocation2 + $0x1f0] sm:$0xf]
  %v5962 = vld [vmem:[#allocation2 + $0x20c] sm:$0xf]
  %v5963 = vld [vmem:[#allocation2 + $0x228] sm:$0xf]
  %v5964 = vld [vmem:[#allocation2 + $0x244] sm:$0xf]
  %v5965 = vld [vmem:[#allocation2 + $0x260] sm:$0xf]
  %v5966 = vld [vmem:[#allocation2 + $0x27c] sm:$0xf]
  %v5967 = vld [vmem:[#allocation2 + $0x298] sm:$0xf]
  %v5968 = vld [vmem:[#allocation2 + $0x2b4] sm:$0xf]
  %v5969 = vld [vmem:[#allocation2 + $0x2d0] sm:$0xf]
  %5970 = vst [vmem:[#allocation3 + $0x3dc] sm:$0xf] %v5960
  %5971 = vst [vmem:[#allocation3 + $0x3fc] sm:$0xf] %v5961
  %5972 = vst [vmem:[#allocation3 + $0x41c] sm:$0xf] %v5962
  %5973 = vst [vmem:[#allocation3 + $0x43c] sm:$0xf] %v5963
  %5974 = vst [vmem:[#allocation3 + $0x45c] sm:$0xf] %v5964
  %5975 = vst [vmem:[#allocation3 + $0x47c] sm:$0xf] %v5965
  %5976 = vst [vmem:[#allocation3 + $0x49c] sm:$0xf] %v5966
  %5977 = vst [vmem:[#allocation3 + $0x4bc] sm:$0xf] %v5967
  %5978 = vst [vmem:[#allocation3 + $0x4dc] sm:$0xf] %v5968
  %5979 = vst [vmem:[#allocation3 + $0x4fc] sm:$0xf] %v5969
  %v5980 = vld [vmem:[#allocation2 + $0x8] sm:$0xf]
  %v5981 = vld [vmem:[#allocation2 + $0x24] sm:$0xf]
  %v5982 = vld [vmem:[#allocation2 + $0x40] sm:$0xf]
  %v5983 = vld [vmem:[#allocation2 + $0x5c] sm:$0xf]
  %v5984 = vld [vmem:[#allocation2 + $0x78] sm:$0xf]
  %v5985 = vld [vmem:[#allocation2 + $0x94] sm:$0xf]
  %v5986 = vld [vmem:[#allocation2 + $0xb0] sm:$0xf]
  %v5987 = vld [vmem:[#allocation2 + $0xcc] sm:$0xf]
  %v5988 = vld [vmem:[#allocation2 + $0xe8] sm:$0xf]
  %v5989 = vld [vmem:[#allocation2 + $0x104] sm:$0xf]
  %5990 = vst [vmem:[#allocation3 + $0x500] sm:$0xf] %v5980
  %5991 = vst [vmem:[#allocation3 + $0x520] sm:$0xf] %v5981
  %5992 = vst [vmem:[#allocation3 + $0x540] sm:$0xf] %v5982
  %5993 = vst [vmem:[#allocation3 + $0x560] sm:$0xf] %v5983
  %5994 = vst [vmem:[#allocation3 + $0x580] sm:$0xf] %v5984
  %5995 = vst [vmem:[#allocation3 + $0x5a0] sm:$0xf] %v5985
  %5996 = vst [vmem:[#allocation3 + $0x5c0] sm:$0xf] %v5986
  %5997 = vst [vmem:[#allocation3 + $0x5e0] sm:$0xf] %v5987
  %5998 = vst [vmem:[#allocation3 + $0x600] sm:$0xf] %v5988
  %5999 = vst [vmem:[#allocation3 + $0x620] sm:$0xf] %v5989
  %v6000 = vld [vmem:[#allocation2 + $0x14] sm:$0xff]
  %v6001 = vld [vmem:[#allocation2 + $0x30] sm:$0xff]
  %v6002 = vld [vmem:[#allocation2 + $0x4c] sm:$0xff]
  %v6003 = vld [vmem:[#allocation2 + $0x68] sm:$0xff]
  %v6004 = vld [vmem:[#allocation2 + $0x84] sm:$0xff]
  %v6005 = vld [vmem:[#allocation2 + $0xa0] sm:$0xff]
  %v6006 = vld [vmem:[#allocation2 + $0xbc] sm:$0xff]
  %v6007 = vld [vmem:[#allocation2 + $0xd8] sm:$0xff]
  %v6008 = vld [vmem:[#allocation2 + $0xf4] sm:$0xff]
  %v6009 = vld [vmem:[#allocation2 + $0x110] sm:$0xff]
  %6020 = vrot.lane.b32.xlu0 %v6000, 64
  %v6021 = vpop.permute.xlu0 %6020
  %6022 = vrot.lane.b32.xlu0 %v6001, 64
  %v6023 = vpop.permute.xlu0 %6022
  %6024 = vrot.lane.b32.xlu0 %v6002, 64
  %v6025 = vpop.permute.xlu0 %6024
  %6026 = vrot.lane.b32.xlu0 %v6003, 64
  %v6027 = vpop.permute.xlu0 %6026
  %6028 = vrot.lane.b32.xlu0 %v6004, 64
  %v6029 = vpop.permute.xlu0 %6028
  %6030 = vrot.lane.b32.xlu0 %v6005, 64
  %v6031 = vpop.permute.xlu0 %6030
  %6032 = vrot.lane.b32.xlu0 %v6006, 64
  %v6033 = vpop.permute.xlu0 %6032
  %6034 = vrot.lane.b32.xlu0 %v6007, 64
  %v6035 = vpop.permute.xlu0 %6034
  %6036 = vrot.lane.b32.xlu0 %v6008, 64
  %v6037 = vpop.permute.xlu0 %6036
  %6038 = vrot.lane.b32.xlu0 %v6009, 64
  %v6039 = vpop.permute.xlu0 %6038
  %v6040 = vrot.slane %v6021, 4
  %v6041 = vrot.slane %v6023, 4
  %v6042 = vrot.slane %v6025, 4
  %v6043 = vrot.slane %v6027, 4
  %v6044 = vrot.slane %v6029, 4
  %v6045 = vrot.slane %v6031, 4
  %v6046 = vrot.slane %v6033, 4
  %v6047 = vrot.slane %v6035, 4
  %v6048 = vrot.slane %v6037, 4
  %v6049 = vrot.slane %v6039, 4
  %v6050 = vsel %vm4449, %v6021, %v6040
  %v6051 = vsel %vm4449, %v6023, %v6041
  %v6052 = vsel %vm4449, %v6025, %v6042
  %v6053 = vsel %vm4449, %v6027, %v6043
  %v6054 = vsel %vm4449, %v6029, %v6044
  %v6055 = vsel %vm4449, %v6031, %v6045
  %v6056 = vsel %vm4449, %v6033, %v6046
  %v6057 = vsel %vm4449, %v6035, %v6047
  %v6058 = vsel %vm4449, %v6037, %v6048
  %v6059 = vsel %vm4449, %v6039, %v6049
  %6070 = vst [vmem:[#allocation3 + $0x504] sm:$0xf] %v6050
  %6071 = vst [vmem:[#allocation3 + $0x524] sm:$0xf] %v6051
  %6072 = vst [vmem:[#allocation3 + $0x544] sm:$0xf] %v6052
  %6073 = vst [vmem:[#allocation3 + $0x564] sm:$0xf] %v6053
  %6074 = vst [vmem:[#allocation3 + $0x584] sm:$0xf] %v6054
  %6075 = vst [vmem:[#allocation3 + $0x5a4] sm:$0xf] %v6055
  %6076 = vst [vmem:[#allocation3 + $0x5c4] sm:$0xf] %v6056
  %6077 = vst [vmem:[#allocation3 + $0x5e4] sm:$0xf] %v6057
  %6078 = vst [vmem:[#allocation3 + $0x604] sm:$0xf] %v6058
  %6079 = vst [vmem:[#allocation3 + $0x624] sm:$0xf] %v6059
  %v6080 = vld [vmem:[#allocation2 + $0x190] sm:$0xf]
  %v6081 = vld [vmem:[#allocation2 + $0x1ac] sm:$0xf]
  %v6082 = vld [vmem:[#allocation2 + $0x1c8] sm:$0xf]
  %v6083 = vld [vmem:[#allocation2 + $0x1e4] sm:$0xf]
  %v6084 = vld [vmem:[#allocation2 + $0x200] sm:$0xf]
  %v6085 = vld [vmem:[#allocation2 + $0x21c] sm:$0xf]
  %v6086 = vld [vmem:[#allocation2 + $0x238] sm:$0xf]
  %v6087 = vld [vmem:[#allocation2 + $0x254] sm:$0xf]
  %v6088 = vld [vmem:[#allocation2 + $0x270] sm:$0xf]
  %v6089 = vld [vmem:[#allocation2 + $0x28c] sm:$0xf]
  %6090 = vst [vmem:[#allocation3 + $0x508] sm:$0xf] %v6080
  %6091 = vst [vmem:[#allocation3 + $0x528] sm:$0xf] %v6081
  %6092 = vst [vmem:[#allocation3 + $0x548] sm:$0xf] %v6082
  %6093 = vst [vmem:[#allocation3 + $0x568] sm:$0xf] %v6083
  %6094 = vst [vmem:[#allocation3 + $0x588] sm:$0xf] %v6084
  %6095 = vst [vmem:[#allocation3 + $0x5a8] sm:$0xf] %v6085
  %6096 = vst [vmem:[#allocation3 + $0x5c8] sm:$0xf] %v6086
  %6097 = vst [vmem:[#allocation3 + $0x5e8] sm:$0xf] %v6087
  %6098 = vst [vmem:[#allocation3 + $0x608] sm:$0xf] %v6088
  %6099 = vst [vmem:[#allocation3 + $0x628] sm:$0xf] %v6089
  %v6100 = vld [vmem:[#allocation2 + $0x19c] sm:$0xff]
  %v6101 = vld [vmem:[#allocation2 + $0x1b8] sm:$0xff]
  %v6102 = vld [vmem:[#allocation2 + $0x1d4] sm:$0xff]
  %v6103 = vld [vmem:[#allocation2 + $0x1f0] sm:$0xff]
  %v6104 = vld [vmem:[#allocation2 + $0x20c] sm:$0xff]
  %v6105 = vld [vmem:[#allocation2 + $0x228] sm:$0xff]
  %v6106 = vld [vmem:[#allocation2 + $0x244] sm:$0xff]
  %v6107 = vld [vmem:[#allocation2 + $0x260] sm:$0xff]
  %v6108 = vld [vmem:[#allocation2 + $0x27c] sm:$0xff]
  %v6109 = vld [vmem:[#allocation2 + $0x298] sm:$0xff]
  %6120 = vrot.lane.b32.xlu0 %v6100, 64
  %v6121 = vpop.permute.xlu0 %6120
  %6122 = vrot.lane.b32.xlu0 %v6101, 64
  %v6123 = vpop.permute.xlu0 %6122
  %6124 = vrot.lane.b32.xlu0 %v6102, 64
  %v6125 = vpop.permute.xlu0 %6124
  %6126 = vrot.lane.b32.xlu0 %v6103, 64
  %v6127 = vpop.permute.xlu0 %6126
  %6128 = vrot.lane.b32.xlu0 %v6104, 64
  %v6129 = vpop.permute.xlu0 %6128
  %6130 = vrot.lane.b32.xlu0 %v6105, 64
  %v6131 = vpop.permute.xlu0 %6130
  %6132 = vrot.lane.b32.xlu0 %v6106, 64
  %v6133 = vpop.permute.xlu0 %6132
  %6134 = vrot.lane.b32.xlu0 %v6107, 64
  %v6135 = vpop.permute.xlu0 %6134
  %6136 = vrot.lane.b32.xlu0 %v6108, 64
  %v6137 = vpop.permute.xlu0 %6136
  %6138 = vrot.lane.b32.xlu0 %v6109, 64
  %v6139 = vpop.permute.xlu0 %6138
  %v6140 = vrot.slane %v6121, 4
  %v6141 = vrot.slane %v6123, 4
  %v6142 = vrot.slane %v6125, 4
  %v6143 = vrot.slane %v6127, 4
  %v6144 = vrot.slane %v6129, 4
  %v6145 = vrot.slane %v6131, 4
  %v6146 = vrot.slane %v6133, 4
  %v6147 = vrot.slane %v6135, 4
  %v6148 = vrot.slane %v6137, 4
  %v6149 = vrot.slane %v6139, 4
  %v6150 = vsel %vm4449, %v6121, %v6140
  %v6151 = vsel %vm4449, %v6123, %v6141
  %v6152 = vsel %vm4449, %v6125, %v6142
  %v6153 = vsel %vm4449, %v6127, %v6143
  %v6154 = vsel %vm4449, %v6129, %v6144
  %v6155 = vsel %vm4449, %v6131, %v6145
  %v6156 = vsel %vm4449, %v6133, %v6146
  %v6157 = vsel %vm4449, %v6135, %v6147
  %v6158 = vsel %vm4449, %v6137, %v6148
  %v6159 = vsel %vm4449, %v6139, %v6149
  %6170 = vst [vmem:[#allocation3 + $0x50c] sm:$0xf] %v6150
  %6171 = vst [vmem:[#allocation3 + $0x52c] sm:$0xf] %v6151
  %6172 = vst [vmem:[#allocation3 + $0x54c] sm:$0xf] %v6152
  %6173 = vst [vmem:[#allocation3 + $0x56c] sm:$0xf] %v6153
  %6174 = vst [vmem:[#allocation3 + $0x58c] sm:$0xf] %v6154
  %6175 = vst [vmem:[#allocation3 + $0x5ac] sm:$0xf] %v6155
  %6176 = vst [vmem:[#allocation3 + $0x5cc] sm:$0xf] %v6156
  %6177 = vst [vmem:[#allocation3 + $0x5ec] sm:$0xf] %v6157
  %6178 = vst [vmem:[#allocation3 + $0x60c] sm:$0xf] %v6158
  %6179 = vst [vmem:[#allocation3 + $0x62c] sm:$0xf] %v6159
  %v6180 = vld [vmem:[#allocation2 + $0x40] sm:$0xf]
  %v6181 = vld [vmem:[#allocation2 + $0x5c] sm:$0xf]
  %v6182 = vld [vmem:[#allocation2 + $0x78] sm:$0xf]
  %v6183 = vld [vmem:[#allocation2 + $0x94] sm:$0xf]
  %v6184 = vld [vmem:[#allocation2 + $0xb0] sm:$0xf]
  %v6185 = vld [vmem:[#allocation2 + $0xcc] sm:$0xf]
  %v6186 = vld [vmem:[#allocation2 + $0xe8] sm:$0xf]
  %v6187 = vld [vmem:[#allocation2 + $0x104] sm:$0xf]
  %v6188 = vld [vmem:[#allocation2 + $0x120] sm:$0xf]
  %v6189 = vld [vmem:[#allocation2 + $0x13c] sm:$0xf]
  %6190 = vst [vmem:[#allocation3 + $0x510] sm:$0xf] %v6180
  %6191 = vst [vmem:[#allocation3 + $0x530] sm:$0xf] %v6181
  %6192 = vst [vmem:[#allocation3 + $0x550] sm:$0xf] %v6182
  %6193 = vst [vmem:[#allocation3 + $0x570] sm:$0xf] %v6183
  %6194 = vst [vmem:[#allocation3 + $0x590] sm:$0xf] %v6184
  %6195 = vst [vmem:[#allocation3 + $0x5b0] sm:$0xf] %v6185
  %6196 = vst [vmem:[#allocation3 + $0x5d0] sm:$0xf] %v6186
  %6197 = vst [vmem:[#allocation3 + $0x5f0] sm:$0xf] %v6187
  %6198 = vst [vmem:[#allocation3 + $0x610] sm:$0xf] %v6188
  %6199 = vst [vmem:[#allocation3 + $0x630] sm:$0xf] %v6189
  %v6200 = vld [vmem:[#allocation2 + $0x4c] sm:$0xff]
  %v6201 = vld [vmem:[#allocation2 + $0x68] sm:$0xff]
  %v6202 = vld [vmem:[#allocation2 + $0x84] sm:$0xff]
  %v6203 = vld [vmem:[#allocation2 + $0xa0] sm:$0xff]
  %v6204 = vld [vmem:[#allocation2 + $0xbc] sm:$0xff]
  %v6205 = vld [vmem:[#allocation2 + $0xd8] sm:$0xff]
  %v6206 = vld [vmem:[#allocation2 + $0xf4] sm:$0xff]
  %v6207 = vld [vmem:[#allocation2 + $0x110] sm:$0xff]
  %v6208 = vld [vmem:[#allocation2 + $0x12c] sm:$0xff]
  %v6209 = vld [vmem:[#allocation2 + $0x148] sm:$0xff]
  %6220 = vrot.lane.b32.xlu0 %v6200, 64
  %v6221 = vpop.permute.xlu0 %6220
  %6222 = vrot.lane.b32.xlu0 %v6201, 64
  %v6223 = vpop.permute.xlu0 %6222
  %6224 = vrot.lane.b32.xlu0 %v6202, 64
  %v6225 = vpop.permute.xlu0 %6224
  %6226 = vrot.lane.b32.xlu0 %v6203, 64
  %v6227 = vpop.permute.xlu0 %6226
  %6228 = vrot.lane.b32.xlu0 %v6204, 64
  %v6229 = vpop.permute.xlu0 %6228
  %6230 = vrot.lane.b32.xlu0 %v6205, 64
  %v6231 = vpop.permute.xlu0 %6230
  %6232 = vrot.lane.b32.xlu0 %v6206, 64
  %v6233 = vpop.permute.xlu0 %6232
  %6234 = vrot.lane.b32.xlu0 %v6207, 64
  %v6235 = vpop.permute.xlu0 %6234
  %6236 = vrot.lane.b32.xlu0 %v6208, 64
  %v6237 = vpop.permute.xlu0 %6236
  %6238 = vrot.lane.b32.xlu0 %v6209, 64
  %v6239 = vpop.permute.xlu0 %6238
  %v6240 = vrot.slane %v6221, 4
  %v6241 = vrot.slane %v6223, 4
  %v6242 = vrot.slane %v6225, 4
  %v6243 = vrot.slane %v6227, 4
  %v6244 = vrot.slane %v6229, 4
  %v6245 = vrot.slane %v6231, 4
  %v6246 = vrot.slane %v6233, 4
  %v6247 = vrot.slane %v6235, 4
  %v6248 = vrot.slane %v6237, 4
  %v6249 = vrot.slane %v6239, 4
  %v6250 = vsel %vm4449, %v6221, %v6240
  %v6251 = vsel %vm4449, %v6223, %v6241
  %v6252 = vsel %vm4449, %v6225, %v6242
  %v6253 = vsel %vm4449, %v6227, %v6243
  %v6254 = vsel %vm4449, %v6229, %v6244
  %v6255 = vsel %vm4449, %v6231, %v6245
  %v6256 = vsel %vm4449, %v6233, %v6246
  %v6257 = vsel %vm4449, %v6235, %v6247
  %v6258 = vsel %vm4449, %v6237, %v6248
  %v6259 = vsel %vm4449, %v6239, %v6249
  %6270 = vst [vmem:[#allocation3 + $0x514] sm:$0xf] %v6250
  %6271 = vst [vmem:[#allocation3 + $0x534] sm:$0xf] %v6251
  %6272 = vst [vmem:[#allocation3 + $0x554] sm:$0xf] %v6252
  %6273 = vst [vmem:[#allocation3 + $0x574] sm:$0xf] %v6253
  %6274 = vst [vmem:[#allocation3 + $0x594] sm:$0xf] %v6254
  %6275 = vst [vmem:[#allocation3 + $0x5b4] sm:$0xf] %v6255
  %6276 = vst [vmem:[#allocation3 + $0x5d4] sm:$0xf] %v6256
  %6277 = vst [vmem:[#allocation3 + $0x5f4] sm:$0xf] %v6257
  %6278 = vst [vmem:[#allocation3 + $0x614] sm:$0xf] %v6258
  %6279 = vst [vmem:[#allocation3 + $0x634] sm:$0xf] %v6259
  %v6280 = vld [vmem:[#allocation2 + $0x1c8] sm:$0xf]
  %v6281 = vld [vmem:[#allocation2 + $0x1e4] sm:$0xf]
  %v6282 = vld [vmem:[#allocation2 + $0x200] sm:$0xf]
  %v6283 = vld [vmem:[#allocation2 + $0x21c] sm:$0xf]
  %v6284 = vld [vmem:[#allocation2 + $0x238] sm:$0xf]
  %v6285 = vld [vmem:[#allocation2 + $0x254] sm:$0xf]
  %v6286 = vld [vmem:[#allocation2 + $0x270] sm:$0xf]
  %v6287 = vld [vmem:[#allocation2 + $0x28c] sm:$0xf]
  %v6288 = vld [vmem:[#allocation2 + $0x2a8] sm:$0xf]
  %v6289 = vld [vmem:[#allocation2 + $0x2c4] sm:$0xf]
  %6290 = vst [vmem:[#allocation3 + $0x518] sm:$0xf] %v6280
  %6291 = vst [vmem:[#allocation3 + $0x538] sm:$0xf] %v6281
  %6292 = vst [vmem:[#allocation3 + $0x558] sm:$0xf] %v6282
  %6293 = vst [vmem:[#allocation3 + $0x578] sm:$0xf] %v6283
  %6294 = vst [vmem:[#allocation3 + $0x598] sm:$0xf] %v6284
  %6295 = vst [vmem:[#allocation3 + $0x5b8] sm:$0xf] %v6285
  %6296 = vst [vmem:[#allocation3 + $0x5d8] sm:$0xf] %v6286
  %6297 = vst [vmem:[#allocation3 + $0x5f8] sm:$0xf] %v6287
  %6298 = vst [vmem:[#allocation3 + $0x618] sm:$0xf] %v6288
  %6299 = vst [vmem:[#allocation3 + $0x638] sm:$0xf] %v6289
  %v6300 = vld [vmem:[#allocation2 + $0x1d4] sm:$0xff]
  %v6301 = vld [vmem:[#allocation2 + $0x1f0] sm:$0xff]
  %v6302 = vld [vmem:[#allocation2 + $0x20c] sm:$0xff]
  %v6303 = vld [vmem:[#allocation2 + $0x228] sm:$0xff]
  %v6304 = vld [vmem:[#allocation2 + $0x244] sm:$0xff]
  %v6305 = vld [vmem:[#allocation2 + $0x260] sm:$0xff]
  %v6306 = vld [vmem:[#allocation2 + $0x27c] sm:$0xff]
  %v6307 = vld [vmem:[#allocation2 + $0x298] sm:$0xff]
  %v6308 = vld [vmem:[#allocation2 + $0x2b4] sm:$0xff]
  %v6309 = vld [vmem:[#allocation2 + $0x2d0] sm:$0xff]
  %6320 = vrot.lane.b32.xlu0 %v6300, 64
  %v6321 = vpop.permute.xlu0 %6320
  %6322 = vrot.lane.b32.xlu0 %v6301, 64
  %v6323 = vpop.permute.xlu0 %6322
  %6324 = vrot.lane.b32.xlu0 %v6302, 64
  %v6325 = vpop.permute.xlu0 %6324
  %6326 = vrot.lane.b32.xlu0 %v6303, 64
  %v6327 = vpop.permute.xlu0 %6326
  %6328 = vrot.lane.b32.xlu0 %v6304, 64
  %v6329 = vpop.permute.xlu0 %6328
  %6330 = vrot.lane.b32.xlu0 %v6305, 64
  %v6331 = vpop.permute.xlu0 %6330
  %6332 = vrot.lane.b32.xlu0 %v6306, 64
  %v6333 = vpop.permute.xlu0 %6332
  %6334 = vrot.lane.b32.xlu0 %v6307, 64
  %v6335 = vpop.permute.xlu0 %6334
  %6336 = vrot.lane.b32.xlu0 %v6308, 64
  %v6337 = vpop.permute.xlu0 %6336
  %6338 = vrot.lane.b32.xlu0 %v6309, 64
  %v6339 = vpop.permute.xlu0 %6338
  %v6340 = vrot.slane %v6321, 4
  %v6341 = vrot.slane %v6323, 4
  %v6342 = vrot.slane %v6325, 4
  %v6343 = vrot.slane %v6327, 4
  %v6344 = vrot.slane %v6329, 4
  %v6345 = vrot.slane %v6331, 4
  %v6346 = vrot.slane %v6333, 4
  %v6347 = vrot.slane %v6335, 4
  %v6348 = vrot.slane %v6337, 4
  %v6349 = vrot.slane %v6339, 4
  %v6350 = vsel %vm4449, %v6321, %v6340
  %v6351 = vsel %vm4449, %v6323, %v6341
  %v6352 = vsel %vm4449, %v6325, %v6342
  %v6353 = vsel %vm4449, %v6327, %v6343
  %v6354 = vsel %vm4449, %v6329, %v6344
  %v6355 = vsel %vm4449, %v6331, %v6345
  %v6356 = vsel %vm4449, %v6333, %v6346
  %v6357 = vsel %vm4449, %v6335, %v6347
  %v6358 = vsel %vm4449, %v6337, %v6348
  %v6359 = vsel %vm4449, %v6339, %v6349
  %6370 = vst [vmem:[#allocation3 + $0x51c] sm:$0xf] %v6350
  %6371 = vst [vmem:[#allocation3 + $0x53c] sm:$0xf] %v6351
  %6372 = vst [vmem:[#allocation3 + $0x55c] sm:$0xf] %v6352
  %6373 = vst [vmem:[#allocation3 + $0x57c] sm:$0xf] %v6353
  %6374 = vst [vmem:[#allocation3 + $0x59c] sm:$0xf] %v6354
  %6375 = vst [vmem:[#allocation3 + $0x5bc] sm:$0xf] %v6355
  %6376 = vst [vmem:[#allocation3 + $0x5dc] sm:$0xf] %v6356
  %6377 = vst [vmem:[#allocation3 + $0x5fc] sm:$0xf] %v6357
  %6378 = vst [vmem:[#allocation3 + $0x61c] sm:$0xf] %v6358
  %6379 = vst [vmem:[#allocation3 + $0x63c] sm:$0xf] %v6359
  %v6380 = vld [vmem:[#allocation3] sm:$0xff]
  %v6381 = vld [vmem:[#allocation3 + $0x8] sm:$0xff]
  %v6382 = vld [vmem:[#allocation3 + $0x10] sm:$0xff]
  %v6383 = vld [vmem:[#allocation3 + $0x18] sm:$0xff]
  %v6384 = vld [vmem:[#allocation3 + $0x20] sm:$0xff]
  %v6385 = vld [vmem:[#allocation3 + $0x28] sm:$0xff]
  %v6386 = vld [vmem:[#allocation3 + $0x30] sm:$0xff]
  %v6387 = vld [vmem:[#allocation3 + $0x38] sm:$0xff]
  %v6388 = vld [vmem:[#allocation3 + $0x40] sm:$0xff]
  %v6389 = vld [vmem:[#allocation3 + $0x48] sm:$0xff]
  %v6390 = vld [vmem:[#allocation3 + $0x50] sm:$0xff]
  %v6391 = vld [vmem:[#allocation3 + $0x58] sm:$0xff]
  %v6392 = vld [vmem:[#allocation3 + $0x60] sm:$0xff]
  %v6393 = vld [vmem:[#allocation3 + $0x68] sm:$0xff]
  %v6394 = vld [vmem:[#allocation3 + $0x70] sm:$0xff]
  %v6395 = vld [vmem:[#allocation3 + $0x78] sm:$0xff]
  %v6396 = vld [vmem:[#allocation3 + $0x80] sm:$0xff]
  %v6397 = vld [vmem:[#allocation3 + $0x88] sm:$0xff]
  %v6398 = vld [vmem:[#allocation3 + $0x90] sm:$0xff]
  %v6399 = vld [vmem:[#allocation3 + $0x98] sm:$0xff]
  %v6400 = vld [vmem:[#allocation3 + $0xa0] sm:$0xff]
  %v6401 = vld [vmem:[#allocation3 + $0xa8] sm:$0xff]
  %v6402 = vld [vmem:[#allocation3 + $0xb0] sm:$0xff]
  %v6403 = vld [vmem:[#allocation3 + $0xb8] sm:$0xff]
  %v6404 = vld [vmem:[#allocation3 + $0xc0] sm:$0xff]
  %v6405 = vld [vmem:[#allocation3 + $0xc8] sm:$0xff]
  %v6406 = vld [vmem:[#allocation3 + $0xd0] sm:$0xff]
  %v6407 = vld [vmem:[#allocation3 + $0xd8] sm:$0xff]
  %v6408 = vld [vmem:[#allocation3 + $0xe0] sm:$0xff]
  %v6409 = vld [vmem:[#allocation3 + $0xe8] sm:$0xff]
  %v6410 = vld [vmem:[#allocation3 + $0xf0] sm:$0xff]
  %v6411 = vld [vmem:[#allocation3 + $0xf8] sm:$0xff]
  %v6412 = vld [vmem:[#allocation3 + $0x100] sm:$0xff]
  %v6413 = vld [vmem:[#allocation3 + $0x108] sm:$0xff]
  %v6414 = vld [vmem:[#allocation3 + $0x110] sm:$0xff]
  %v6415 = vld [vmem:[#allocation3 + $0x118] sm:$0xff]
  %v6416 = vld [vmem:[#allocation3 + $0x120] sm:$0xff]
  %v6417 = vld [vmem:[#allocation3 + $0x128] sm:$0xff]
  %v6418 = vld [vmem:[#allocation3 + $0x130] sm:$0xff]
  %v6419 = vld [vmem:[#allocation3 + $0x138] sm:$0xff]
  %v6420 = vld [vmem:[#allocation3 + $0x140] sm:$0xff]
  %v6421 = vld [vmem:[#allocation3 + $0x148] sm:$0xff]
  %v6422 = vld [vmem:[#allocation3 + $0x150] sm:$0xff]
  %v6423 = vld [vmem:[#allocation3 + $0x158] sm:$0xff]
  %v6424 = vld [vmem:[#allocation3 + $0x160] sm:$0xff]
  %v6425 = vld [vmem:[#allocation3 + $0x168] sm:$0xff]
  %v6426 = vld [vmem:[#allocation3 + $0x170] sm:$0xff]
  %v6427 = vld [vmem:[#allocation3 + $0x178] sm:$0xff]
  %v6428 = vld [vmem:[#allocation3 + $0x180] sm:$0xff]
  %v6429 = vld [vmem:[#allocation3 + $0x188] sm:$0xff]
  %v6430 = vld [vmem:[#allocation3 + $0x190] sm:$0xff]
  %v6431 = vld [vmem:[#allocation3 + $0x198] sm:$0xff]
  %v6432 = vld [vmem:[#allocation3 + $0x1a0] sm:$0xff]
  %v6433 = vld [vmem:[#allocation3 + $0x1a8] sm:$0xff]
  %v6434 = vld [vmem:[#allocation3 + $0x1b0] sm:$0xff]
  %v6435 = vld [vmem:[#allocation3 + $0x1b8] sm:$0xff]
  %v6436 = vld [vmem:[#allocation3 + $0x1c0] sm:$0xff]
  %v6437 = vld [vmem:[#allocation3 + $0x1c8] sm:$0xff]
  %v6438 = vld [vmem:[#allocation3 + $0x1d0] sm:$0xff]
  %v6439 = vld [vmem:[#allocation3 + $0x1d8] sm:$0xff]
  %v6440 = vld [vmem:[#allocation3 + $0x1e0] sm:$0xff]
  %v6441 = vld [vmem:[#allocation3 + $0x1e8] sm:$0xff]
  %v6442 = vld [vmem:[#allocation3 + $0x1f0] sm:$0xff]
  %v6443 = vld [vmem:[#allocation3 + $0x1f8] sm:$0xff]
  %v6444 = vld [vmem:[#allocation3 + $0x200] sm:$0xff]
  %v6445 = vld [vmem:[#allocation3 + $0x208] sm:$0xff]
  %v6446 = vld [vmem:[#allocation3 + $0x210] sm:$0xff]
  %v6447 = vld [vmem:[#allocation3 + $0x218] sm:$0xff]
  %v6448 = vld [vmem:[#allocation3 + $0x220] sm:$0xff]
  %v6449 = vld [vmem:[#allocation3 + $0x228] sm:$0xff]
  %v6450 = vld [vmem:[#allocation3 + $0x230] sm:$0xff]
  %v6451 = vld [vmem:[#allocation3 + $0x238] sm:$0xff]
  %v6452 = vld [vmem:[#allocation3 + $0x240] sm:$0xff]
  %v6453 = vld [vmem:[#allocation3 + $0x248] sm:$0xff]
  %v6454 = vld [vmem:[#allocation3 + $0x250] sm:$0xff]
  %v6455 = vld [vmem:[#allocation3 + $0x258] sm:$0xff]
  %v6456 = vld [vmem:[#allocation3 + $0x260] sm:$0xff]
  %v6457 = vld [vmem:[#allocation3 + $0x268] sm:$0xff]
  %v6458 = vld [vmem:[#allocation3 + $0x270] sm:$0xff]
  %v6459 = vld [vmem:[#allocation3 + $0x278] sm:$0xff]
  %v6460 = vld [vmem:[#allocation3 + $0x280] sm:$0xff]
  %v6461 = vld [vmem:[#allocation3 + $0x288] sm:$0xff]
  %v6462 = vld [vmem:[#allocation3 + $0x290] sm:$0xff]
  %v6463 = vld [vmem:[#allocation3 + $0x298] sm:$0xff]
  %v6464 = vld [vmem:[#allocation3 + $0x2a0] sm:$0xff]
  %v6465 = vld [vmem:[#allocation3 + $0x2a8] sm:$0xff]
  %v6466 = vld [vmem:[#allocation3 + $0x2b0] sm:$0xff]
  %v6467 = vld [vmem:[#allocation3 + $0x2b8] sm:$0xff]
  %v6468 = vld [vmem:[#allocation3 + $0x2c0] sm:$0xff]
  %v6469 = vld [vmem:[#allocation3 + $0x2c8] sm:$0xff]
  %v6470 = vld [vmem:[#allocation3 + $0x2d0] sm:$0xff]
  %v6471 = vld [vmem:[#allocation3 + $0x2d8] sm:$0xff]
  %v6472 = vld [vmem:[#allocation3 + $0x2e0] sm:$0xff]
  %v6473 = vld [vmem:[#allocation3 + $0x2e8] sm:$0xff]
  %v6474 = vld [vmem:[#allocation3 + $0x2f0] sm:$0xff]
  %v6475 = vld [vmem:[#allocation3 + $0x2f8] sm:$0xff]
  %v6476 = vld [vmem:[#allocation3 + $0x300] sm:$0xff]
  %v6477 = vld [vmem:[#allocation3 + $0x308] sm:$0xff]
  %v6478 = vld [vmem:[#allocation3 + $0x310] sm:$0xff]
  %v6479 = vld [vmem:[#allocation3 + $0x318] sm:$0xff]
  %v6480 = vld [vmem:[#allocation3 + $0x320] sm:$0xff]
  %v6481 = vld [vmem:[#allocation3 + $0x328] sm:$0xff]
  %v6482 = vld [vmem:[#allocation3 + $0x330] sm:$0xff]
  %v6483 = vld [vmem:[#allocation3 + $0x338] sm:$0xff]
  %v6484 = vld [vmem:[#allocation3 + $0x340] sm:$0xff]
  %v6485 = vld [vmem:[#allocation3 + $0x348] sm:$0xff]
  %v6486 = vld [vmem:[#allocation3 + $0x350] sm:$0xff]
  %v6487 = vld [vmem:[#allocation3 + $0x358] sm:$0xff]
  %v6488 = vld [vmem:[#allocation3 + $0x360] sm:$0xff]
  %v6489 = vld [vmem:[#allocation3 + $0x368] sm:$0xff]
  %v6490 = vld [vmem:[#allocation3 + $0x370] sm:$0xff]
  %v6491 = vld [vmem:[#allocation3 + $0x378] sm:$0xff]
  %v6492 = vld [vmem:[#allocation3 + $0x380] sm:$0xff]
  %v6493 = vld [vmem:[#allocation3 + $0x388] sm:$0xff]
  %v6494 = vld [vmem:[#allocation3 + $0x390] sm:$0xff]
  %v6495 = vld [vmem:[#allocation3 + $0x398] sm:$0xff]
  %v6496 = vld [vmem:[#allocation3 + $0x3a0] sm:$0xff]
  %v6497 = vld [vmem:[#allocation3 + $0x3a8] sm:$0xff]
  %v6498 = vld [vmem:[#allocation3 + $0x3b0] sm:$0xff]
  %v6499 = vld [vmem:[#allocation3 + $0x3b8] sm:$0xff]
  %v6500 = vld [vmem:[#allocation3 + $0x3c0] sm:$0xff]
  %v6501 = vld [vmem:[#allocation3 + $0x3c8] sm:$0xff]
  %v6502 = vld [vmem:[#allocation3 + $0x3d0] sm:$0xff]
  %v6503 = vld [vmem:[#allocation3 + $0x3d8] sm:$0xff]
  %v6504 = vld [vmem:[#allocation3 + $0x3e0] sm:$0xff]
  %v6505 = vld [vmem:[#allocation3 + $0x3e8] sm:$0xff]
  %v6506 = vld [vmem:[#allocation3 + $0x3f0] sm:$0xff]
  %v6507 = vld [vmem:[#allocation3 + $0x3f8] sm:$0xff]
  %v6508 = vld [vmem:[#allocation3 + $0x400] sm:$0xff]
  %v6509 = vld [vmem:[#allocation3 + $0x408] sm:$0xff]
  %v6510 = vld [vmem:[#allocation3 + $0x410] sm:$0xff]
  %v6511 = vld [vmem:[#allocation3 + $0x418] sm:$0xff]
  %v6512 = vld [vmem:[#allocation3 + $0x420] sm:$0xff]
  %v6513 = vld [vmem:[#allocation3 + $0x428] sm:$0xff]
  %v6514 = vld [vmem:[#allocation3 + $0x430] sm:$0xff]
  %v6515 = vld [vmem:[#allocation3 + $0x438] sm:$0xff]
  %v6516 = vld [vmem:[#allocation3 + $0x440] sm:$0xff]
  %v6517 = vld [vmem:[#allocation3 + $0x448] sm:$0xff]
  %v6518 = vld [vmem:[#allocation3 + $0x450] sm:$0xff]
  %v6519 = vld [vmem:[#allocation3 + $0x458] sm:$0xff]
  %v6520 = vld [vmem:[#allocation3 + $0x460] sm:$0xff]
  %v6521 = vld [vmem:[#allocation3 + $0x468] sm:$0xff]
  %v6522 = vld [vmem:[#allocation3 + $0x470] sm:$0xff]
  %v6523 = vld [vmem:[#allocation3 + $0x478] sm:$0xff]
  %v6524 = vld [vmem:[#allocation3 + $0x480] sm:$0xff]
  %v6525 = vld [vmem:[#allocation3 + $0x488] sm:$0xff]
  %v6526 = vld [vmem:[#allocation3 + $0x490] sm:$0xff]
  %v6527 = vld [vmem:[#allocation3 + $0x498] sm:$0xff]
  %v6528 = vld [vmem:[#allocation3 + $0x4a0] sm:$0xff]
  %v6529 = vld [vmem:[#allocation3 + $0x4a8] sm:$0xff]
  %v6530 = vld [vmem:[#allocation3 + $0x4b0] sm:$0xff]
  %v6531 = vld [vmem:[#allocation3 + $0x4b8] sm:$0xff]
  %v6532 = vld [vmem:[#allocation3 + $0x4c0] sm:$0xff]
  %v6533 = vld [vmem:[#allocation3 + $0x4c8] sm:$0xff]
  %v6534 = vld [vmem:[#allocation3 + $0x4d0] sm:$0xff]
  %v6535 = vld [vmem:[#allocation3 + $0x4d8] sm:$0xff]
  %v6536 = vld [vmem:[#allocation3 + $0x4e0] sm:$0xff]
  %v6537 = vld [vmem:[#allocation3 + $0x4e8] sm:$0xff]
  %v6538 = vld [vmem:[#allocation3 + $0x4f0] sm:$0xff]
  %v6539 = vld [vmem:[#allocation3 + $0x4f8] sm:$0xff]
  %v6540 = vld [vmem:[#allocation3 + $0x500] sm:$0xff]
  %v6541 = vld [vmem:[#allocation3 + $0x508] sm:$0xff]
  %v6542 = vld [vmem:[#allocation3 + $0x510] sm:$0xff]
  %v6543 = vld [vmem:[#allocation3 + $0x518] sm:$0xff]
  %v6544 = vld [vmem:[#allocation3 + $0x520] sm:$0xff]
  %v6545 = vld [vmem:[#allocation3 + $0x528] sm:$0xff]
  %v6546 = vld [vmem:[#allocation3 + $0x530] sm:$0xff]
  %v6547 = vld [vmem:[#allocation3 + $0x538] sm:$0xff]
  %v6548 = vld [vmem:[#allocation3 + $0x540] sm:$0xff]
  %v6549 = vld [vmem:[#allocation3 + $0x548] sm:$0xff]
  %v6550 = vld [vmem:[#allocation3 + $0x550] sm:$0xff]
  %v6551 = vld [vmem:[#allocation3 + $0x558] sm:$0xff]
  %v6552 = vld [vmem:[#allocation3 + $0x560] sm:$0xff]
  %v6553 = vld [vmem:[#allocation3 + $0x568] sm:$0xff]
  %v6554 = vld [vmem:[#allocation3 + $0x570] sm:$0xff]
  %v6555 = vld [vmem:[#allocation3 + $0x578] sm:$0xff]
  %v6556 = vld [vmem:[#allocation3 + $0x580] sm:$0xff]
  %v6557 = vld [vmem:[#allocation3 + $0x588] sm:$0xff]
  %v6558 = vld [vmem:[#allocation3 + $0x590] sm:$0xff]
  %v6559 = vld [vmem:[#allocation3 + $0x598] sm:$0xff]
  %v6560 = vld [vmem:[#allocation3 + $0x5a0] sm:$0xff]
  %v6561 = vld [vmem:[#allocation3 + $0x5a8] sm:$0xff]
  %v6562 = vld [vmem:[#allocation3 + $0x5b0] sm:$0xff]
  %v6563 = vld [vmem:[#allocation3 + $0x5b8] sm:$0xff]
  %v6564 = vld [vmem:[#allocation3 + $0x5c0] sm:$0xff]
  %v6565 = vld [vmem:[#allocation3 + $0x5c8] sm:$0xff]
  %v6566 = vld [vmem:[#allocation3 + $0x5d0] sm:$0xff]
  %v6567 = vld [vmem:[#allocation3 + $0x5d8] sm:$0xff]
  %v6568 = vld [vmem:[#allocation3 + $0x5e0] sm:$0xff]
  %v6569 = vld [vmem:[#allocation3 + $0x5e8] sm:$0xff]
  %v6570 = vld [vmem:[#allocation3 + $0x5f0] sm:$0xff]
  %v6571 = vld [vmem:[#allocation3 + $0x5f8] sm:$0xff]
  %v6572 = vld [vmem:[#allocation3 + $0x600] sm:$0xff]
  %v6573 = vld [vmem:[#allocation3 + $0x608] sm:$0xff]
  %v6574 = vld [vmem:[#allocation3 + $0x610] sm:$0xff]
  %v6575 = vld [vmem:[#allocation3 + $0x618] sm:$0xff]
  %v6576 = vld [vmem:[#allocation3 + $0x620] sm:$0xff]
  %v6577 = vld [vmem:[#allocation3 + $0x628] sm:$0xff]
  %v6578 = vld [vmem:[#allocation3 + $0x630] sm:$0xff]
  %v6579 = vld [vmem:[#allocation3 + $0x638] sm:$0xff]
  %v6580 = vld [vmem:[%s4] sm:$0xf]
  %v6581 = vld [vmem:[%s4 + $0x4] sm:$0xf]
  %v6582 = vld [vmem:[%s4 + $0x8] sm:$0xf]
  %v6583 = vld [vmem:[%s4 + $0xc] sm:$0xf]
  %v6584 = vld [vmem:[%s4 + $0x10] sm:$0xf]
  %v6585 = vld [vmem:[%s4 + $0x14] sm:$0xf]
  %v6586 = vld [vmem:[%s4 + $0x18] sm:$0xf]
  %v6587 = vld [vmem:[%s4 + $0x1c] sm:$0xf]
  %v6588 = vld [vmem:[%s4 + $0x20] sm:$0xf]
  %v6589 = vld [vmem:[%s4 + $0x24] sm:$0xf]
  %v6590 = vld [vmem:[%s4 + $0x28] sm:$0xf]
  %v6591 = vld [vmem:[%s4 + $0x2c] sm:$0xf]
  %v6592 = vld [vmem:[%s4 + $0x30] sm:$0xf]
  %v6593 = vld [vmem:[%s4 + $0x34] sm:$0xf]
  %v6594 = vld [vmem:[%s4 + $0x38] sm:$0xf]
  %v6595 = vld [vmem:[%s4 + $0x3c] sm:$0xf]
  %v6596 = vld [vmem:[%s4 + $0x40] sm:$0xf]
  %v6597 = vld [vmem:[%s4 + $0x44] sm:$0xf]
  %v6598 = vld [vmem:[%s4 + $0x48] sm:$0xf]
  %v6599 = vld [vmem:[%s4 + $0x4c] sm:$0xf]
  %v6600 = vld [vmem:[%s4 + $0x50] sm:$0xf]
  %v6601 = vld [vmem:[%s4 + $0x54] sm:$0xf]
  %v6602 = vld [vmem:[%s4 + $0x58] sm:$0xf]
  %v6603 = vld [vmem:[%s4 + $0x5c] sm:$0xf]
  %v6604 = vld [vmem:[%s4 + $0x60] sm:$0xf]
  %v6605 = vld [vmem:[%s4 + $0x64] sm:$0xf]
  %v6606 = vld [vmem:[%s4 + $0x68] sm:$0xf]
  %v6607 = vld [vmem:[%s4 + $0x6c] sm:$0xf]
  %v6608 = vld [vmem:[%s4 + $0x70] sm:$0xf]
  %v6609 = vld [vmem:[%s4 + $0x74] sm:$0xf]
  %v6610 = vld [vmem:[%s4 + $0x78] sm:$0xf]
  %v6611 = vld [vmem:[%s4 + $0x7c] sm:$0xf]
  %v6612 = vld [vmem:[%s4 + $0x80] sm:$0xf]
  %v6613 = vld [vmem:[%s4 + $0x84] sm:$0xf]
  %v6614 = vld [vmem:[%s4 + $0x88] sm:$0xf]
  %v6615 = vld [vmem:[%s4 + $0x8c] sm:$0xf]
  %v6616 = vld [vmem:[%s4 + $0x90] sm:$0xf]
  %v6617 = vld [vmem:[%s4 + $0x94] sm:$0xf]
  %v6618 = vld [vmem:[%s4 + $0x98] sm:$0xf]
  %v6619 = vld [vmem:[%s4 + $0x9c] sm:$0xf]
  %v6620 = vld [vmem:[%s4 + $0xa0] sm:$0xf]
  %v6621 = vld [vmem:[%s4 + $0xa4] sm:$0xf]
  %v6622 = vld [vmem:[%s4 + $0xa8] sm:$0xf]
  %v6623 = vld [vmem:[%s4 + $0xac] sm:$0xf]
  %v6624 = vld [vmem:[%s4 + $0xb0] sm:$0xf]
  %v6625 = vld [vmem:[%s4 + $0xb4] sm:$0xf]
  %v6626 = vld [vmem:[%s4 + $0xb8] sm:$0xf]
  %v6627 = vld [vmem:[%s4 + $0xbc] sm:$0xf]
  %v6628 = vld [vmem:[%s4 + $0xc0] sm:$0xf]
  %v6629 = vld [vmem:[%s4 + $0xc4] sm:$0xf]
  %v6630 = vld [vmem:[%s4 + $0xc8] sm:$0xf]
  %v6631 = vld [vmem:[%s4 + $0xcc] sm:$0xf]
  %v6632 = vld [vmem:[%s4 + $0xd0] sm:$0xf]
  %v6633 = vld [vmem:[%s4 + $0xd4] sm:$0xf]
  %v6634 = vld [vmem:[%s4 + $0xd8] sm:$0xf]
  %v6635 = vld [vmem:[%s4 + $0xdc] sm:$0xf]
  %v6636 = vld [vmem:[%s4 + $0xe0] sm:$0xf]
  %v6637 = vld [vmem:[%s4 + $0xe4] sm:$0xf]
  %v6638 = vld [vmem:[%s4 + $0xe8] sm:$0xf]
  %v6639 = vld [vmem:[%s4 + $0xec] sm:$0xf]
  %v6640 = vld [vmem:[%s4 + $0xf0] sm:$0xf]
  %v6641 = vld [vmem:[%s4 + $0xf4] sm:$0xf]
  %v6642 = vld [vmem:[%s4 + $0xf8] sm:$0xf]
  %v6643 = vld [vmem:[%s4 + $0xfc] sm:$0xf]
  %v6644 = vld [vmem:[%s4 + $0x100] sm:$0xf]
  %v6645 = vld [vmem:[%s4 + $0x104] sm:$0xf]
  %v6646 = vld [vmem:[%s4 + $0x108] sm:$0xf]
  %v6647 = vld [vmem:[%s4 + $0x10c] sm:$0xf]
  %v6648 = vld [vmem:[%s4 + $0x110] sm:$0xf]
  %v6649 = vld [vmem:[%s4 + $0x114] sm:$0xf]
  %v6650 = vld [vmem:[%s4 + $0x118] sm:$0xf]
  %v6651 = vld [vmem:[%s4 + $0x11c] sm:$0xf]
  %v6652 = vld [vmem:[%s4 + $0x120] sm:$0xf]
  %v6653 = vld [vmem:[%s4 + $0x124] sm:$0xf]
  %v6654 = vld [vmem:[%s4 + $0x128] sm:$0xf]
  %v6655 = vld [vmem:[%s4 + $0x12c] sm:$0xf]
  %v6656 = vld [vmem:[%s4 + $0x130] sm:$0xf]
  %v6657 = vld [vmem:[%s4 + $0x134] sm:$0xf]
  %v6658 = vld [vmem:[%s4 + $0x138] sm:$0xf]
  %v6659 = vld [vmem:[%s4 + $0x13c] sm:$0xf]
  %v6660 = vld [vmem:[%s4 + $0x140] sm:$0xf]
  %v6661 = vld [vmem:[%s4 + $0x144] sm:$0xf]
  %v6662 = vld [vmem:[%s4 + $0x148] sm:$0xf]
  %v6663 = vld [vmem:[%s4 + $0x14c] sm:$0xf]
  %v6664 = vld [vmem:[%s4 + $0x150] sm:$0xf]
  %v6665 = vld [vmem:[%s4 + $0x154] sm:$0xf]
  %v6666 = vld [vmem:[%s4 + $0x158] sm:$0xf]
  %v6667 = vld [vmem:[%s4 + $0x15c] sm:$0xf]
  %v6668 = vld [vmem:[%s4 + $0x160] sm:$0xf]
  %v6669 = vld [vmem:[%s4 + $0x164] sm:$0xf]
  %v6670 = vld [vmem:[%s4 + $0x168] sm:$0xf]
  %v6671 = vld [vmem:[%s4 + $0x16c] sm:$0xf]
  %v6672 = vld [vmem:[%s4 + $0x170] sm:$0xf]
  %v6673 = vld [vmem:[%s4 + $0x174] sm:$0xf]
  %v6674 = vld [vmem:[%s4 + $0x178] sm:$0xf]
  %v6675 = vld [vmem:[%s4 + $0x17c] sm:$0xf]
  %v6676 = vld [vmem:[%s4 + $0x180] sm:$0xf]
  %v6677 = vld [vmem:[%s4 + $0x184] sm:$0xf]
  %v6678 = vld [vmem:[%s4 + $0x188] sm:$0xf]
  %v6679 = vld [vmem:[%s4 + $0x18c] sm:$0xf]
  %v6680 = vld [vmem:[%s4 + $0x190] sm:$0xf]
  %v6681 = vld [vmem:[%s4 + $0x194] sm:$0xf]
  %v6682 = vld [vmem:[%s4 + $0x198] sm:$0xf]
  %v6683 = vld [vmem:[%s4 + $0x19c] sm:$0xf]
  %v6684 = vld [vmem:[%s4 + $0x1a0] sm:$0xf]
  %v6685 = vld [vmem:[%s4 + $0x1a4] sm:$0xf]
  %v6686 = vld [vmem:[%s4 + $0x1a8] sm:$0xf]
  %v6687 = vld [vmem:[%s4 + $0x1ac] sm:$0xf]
  %v6688 = vld [vmem:[%s4 + $0x1b0] sm:$0xf]
  %v6689 = vld [vmem:[%s4 + $0x1b4] sm:$0xf]
  %v6690 = vld [vmem:[%s4 + $0x1b8] sm:$0xf]
  %v6691 = vld [vmem:[%s4 + $0x1bc] sm:$0xf]
  %v6692 = vld [vmem:[%s4 + $0x1c0] sm:$0xf]
  %v6693 = vld [vmem:[%s4 + $0x1c4] sm:$0xf]
  %v6694 = vld [vmem:[%s4 + $0x1c8] sm:$0xf]
  %v6695 = vld [vmem:[%s4 + $0x1cc] sm:$0xf]
  %v6696 = vld [vmem:[%s4 + $0x1d0] sm:$0xf]
  %v6697 = vld [vmem:[%s4 + $0x1d4] sm:$0xf]
  %v6698 = vld [vmem:[%s4 + $0x1d8] sm:$0xf]
  %v6699 = vld [vmem:[%s4 + $0x1dc] sm:$0xf]
  %v6700 = vld [vmem:[%s4 + $0x1e0] sm:$0xf]
  %v6701 = vld [vmem:[%s4 + $0x1e4] sm:$0xf]
  %v6702 = vld [vmem:[%s4 + $0x1e8] sm:$0xf]
  %v6703 = vld [vmem:[%s4 + $0x1ec] sm:$0xf]
  %v6704 = vld [vmem:[%s4 + $0x1f0] sm:$0xf]
  %v6705 = vld [vmem:[%s4 + $0x1f4] sm:$0xf]
  %v6706 = vld [vmem:[%s4 + $0x1f8] sm:$0xf]
  %v6707 = vld [vmem:[%s4 + $0x1fc] sm:$0xf]
  %v6908 = vunpack.c.l.b16 %v6380
  %v6909 = vunpack.c.h.b16 %v6380
  %v6910 = vunpack.c.l.b16 %v6381
  %v6911 = vunpack.c.h.b16 %v6381
  %v6912 = vunpack.c.l.b16 %v6382
  %v6913 = vunpack.c.h.b16 %v6382
  %v6914 = vunpack.c.l.b16 %v6383
  %v6915 = vunpack.c.h.b16 %v6383
  %v6916 = vunpack.c.l.b16 %v6384
  %v6917 = vunpack.c.h.b16 %v6384
  %v6918 = vunpack.c.l.b16 %v6385
  %v6919 = vunpack.c.h.b16 %v6385
  %v6920 = vunpack.c.l.b16 %v6386
  %v6921 = vunpack.c.h.b16 %v6386
  %v6922 = vunpack.c.l.b16 %v6387
  %v6923 = vunpack.c.h.b16 %v6387
  %v6924 = vunpack.c.l.b16 %v6388
  %v6925 = vunpack.c.h.b16 %v6388
  %v6926 = vunpack.c.l.b16 %v6389
  %v6927 = vunpack.c.h.b16 %v6389
  %v6928 = vunpack.c.l.b16 %v6390
  %v6929 = vunpack.c.h.b16 %v6390
  %v6930 = vunpack.c.l.b16 %v6391
  %v6931 = vunpack.c.h.b16 %v6391
  %v6932 = vunpack.c.l.b16 %v6392
  %v6933 = vunpack.c.h.b16 %v6392
  %v6934 = vunpack.c.l.b16 %v6393
  %v6935 = vunpack.c.h.b16 %v6393
  %v6936 = vunpack.c.l.b16 %v6394
  %v6937 = vunpack.c.h.b16 %v6394
  %v6938 = vunpack.c.l.b16 %v6395
  %v6939 = vunpack.c.h.b16 %v6395
  %v6940 = vunpack.c.l.b16 %v6396
  %v6941 = vunpack.c.h.b16 %v6396
  %v6942 = vunpack.c.l.b16 %v6397
  %v6943 = vunpack.c.h.b16 %v6397
  %v6944 = vunpack.c.l.b16 %v6398
  %v6945 = vunpack.c.h.b16 %v6398
  %v6946 = vunpack.c.l.b16 %v6399
  %v6947 = vunpack.c.h.b16 %v6399
  %v6948 = vunpack.c.l.b16 %v6400
  %v6949 = vunpack.c.h.b16 %v6400
  %v6950 = vunpack.c.l.b16 %v6401
  %v6951 = vunpack.c.h.b16 %v6401
  %v6952 = vunpack.c.l.b16 %v6402
  %v6953 = vunpack.c.h.b16 %v6402
  %v6954 = vunpack.c.l.b16 %v6403
  %v6955 = vunpack.c.h.b16 %v6403
  %v6956 = vunpack.c.l.b16 %v6404
  %v6957 = vunpack.c.h.b16 %v6404
  %v6958 = vunpack.c.l.b16 %v6405
  %v6959 = vunpack.c.h.b16 %v6405
  %v6960 = vunpack.c.l.b16 %v6406
  %v6961 = vunpack.c.h.b16 %v6406
  %v6962 = vunpack.c.l.b16 %v6407
  %v6963 = vunpack.c.h.b16 %v6407
  %v6964 = vunpack.c.l.b16 %v6408
  %v6965 = vunpack.c.h.b16 %v6408
  %v6966 = vunpack.c.l.b16 %v6409
  %v6967 = vunpack.c.h.b16 %v6409
  %v6968 = vunpack.c.l.b16 %v6410
  %v6969 = vunpack.c.h.b16 %v6410
  %v6970 = vunpack.c.l.b16 %v6411
  %v6971 = vunpack.c.h.b16 %v6411
  %v6972 = vunpack.c.l.b16 %v6412
  %v6973 = vunpack.c.h.b16 %v6412
  %v6974 = vunpack.c.l.b16 %v6413
  %v6975 = vunpack.c.h.b16 %v6413
  %v6976 = vunpack.c.l.b16 %v6414
  %v6977 = vunpack.c.h.b16 %v6414
  %v6978 = vunpack.c.l.b16 %v6415
  %v6979 = vunpack.c.h.b16 %v6415
  %v6980 = vunpack.c.l.b16 %v6416
  %v6981 = vunpack.c.h.b16 %v6416
  %v6982 = vunpack.c.l.b16 %v6417
  %v6983 = vunpack.c.h.b16 %v6417
  %v6984 = vunpack.c.l.b16 %v6418
  %v6985 = vunpack.c.h.b16 %v6418
  %v6986 = vunpack.c.l.b16 %v6419
  %v6987 = vunpack.c.h.b16 %v6419
  %v6988 = vunpack.c.l.b16 %v6420
  %v6989 = vunpack.c.h.b16 %v6420
  %v6990 = vunpack.c.l.b16 %v6421
  %v6991 = vunpack.c.h.b16 %v6421
  %v6992 = vunpack.c.l.b16 %v6422
  %v6993 = vunpack.c.h.b16 %v6422
  %v6994 = vunpack.c.l.b16 %v6423
  %v6995 = vunpack.c.h.b16 %v6423
  %v6996 = vunpack.c.l.b16 %v6424
  %v6997 = vunpack.c.h.b16 %v6424
  %v6998 = vunpack.c.l.b16 %v6425
  %v6999 = vunpack.c.h.b16 %v6425
  %v7000 = vunpack.c.l.b16 %v6426
  %v7001 = vunpack.c.h.b16 %v6426
  %v7002 = vunpack.c.l.b16 %v6427
  %v7003 = vunpack.c.h.b16 %v6427
  %v7004 = vunpack.c.l.b16 %v6428
  %v7005 = vunpack.c.h.b16 %v6428
  %v7006 = vunpack.c.l.b16 %v6429
  %v7007 = vunpack.c.h.b16 %v6429
  %v7008 = vunpack.c.l.b16 %v6430
  %v7009 = vunpack.c.h.b16 %v6430
  %v7010 = vunpack.c.l.b16 %v6431
  %v7011 = vunpack.c.h.b16 %v6431
  %v7012 = vunpack.c.l.b16 %v6432
  %v7013 = vunpack.c.h.b16 %v6432
  %v7014 = vunpack.c.l.b16 %v6433
  %v7015 = vunpack.c.h.b16 %v6433
  %v7016 = vunpack.c.l.b16 %v6434
  %v7017 = vunpack.c.h.b16 %v6434
  %v7018 = vunpack.c.l.b16 %v6435
  %v7019 = vunpack.c.h.b16 %v6435
  %v7020 = vunpack.c.l.b16 %v6436
  %v7021 = vunpack.c.h.b16 %v6436
  %v7022 = vunpack.c.l.b16 %v6437
  %v7023 = vunpack.c.h.b16 %v6437
  %v7024 = vunpack.c.l.b16 %v6438
  %v7025 = vunpack.c.h.b16 %v6438
  %v7026 = vunpack.c.l.b16 %v6439
  %v7027 = vunpack.c.h.b16 %v6439
  %v7028 = vunpack.c.l.b16 %v6440
  %v7029 = vunpack.c.h.b16 %v6440
  %v7030 = vunpack.c.l.b16 %v6441
  %v7031 = vunpack.c.h.b16 %v6441
  %v7032 = vunpack.c.l.b16 %v6442
  %v7033 = vunpack.c.h.b16 %v6442
  %v7034 = vunpack.c.l.b16 %v6443
  %v7035 = vunpack.c.h.b16 %v6443
  %v7036 = vunpack.c.l.b16 %v6444
  %v7037 = vunpack.c.h.b16 %v6444
  %v7038 = vunpack.c.l.b16 %v6445
  %v7039 = vunpack.c.h.b16 %v6445
  %v7040 = vunpack.c.l.b16 %v6446
  %v7041 = vunpack.c.h.b16 %v6446
  %v7042 = vunpack.c.l.b16 %v6447
  %v7043 = vunpack.c.h.b16 %v6447
  %v7044 = vunpack.c.l.b16 %v6448
  %v7045 = vunpack.c.h.b16 %v6448
  %v7046 = vunpack.c.l.b16 %v6449
  %v7047 = vunpack.c.h.b16 %v6449
  %v7048 = vunpack.c.l.b16 %v6450
  %v7049 = vunpack.c.h.b16 %v6450
  %v7050 = vunpack.c.l.b16 %v6451
  %v7051 = vunpack.c.h.b16 %v6451
  %v7052 = vunpack.c.l.b16 %v6452
  %v7053 = vunpack.c.h.b16 %v6452
  %v7054 = vunpack.c.l.b16 %v6453
  %v7055 = vunpack.c.h.b16 %v6453
  %v7056 = vunpack.c.l.b16 %v6454
  %v7057 = vunpack.c.h.b16 %v6454
  %v7058 = vunpack.c.l.b16 %v6455
  %v7059 = vunpack.c.h.b16 %v6455
  %v7060 = vunpack.c.l.b16 %v6456
  %v7061 = vunpack.c.h.b16 %v6456
  %v7062 = vunpack.c.l.b16 %v6457
  %v7063 = vunpack.c.h.b16 %v6457
  %v7064 = vunpack.c.l.b16 %v6458
  %v7065 = vunpack.c.h.b16 %v6458
  %v7066 = vunpack.c.l.b16 %v6459
  %v7067 = vunpack.c.h.b16 %v6459
  %v7068 = vunpack.c.l.b16 %v6460
  %v7069 = vunpack.c.h.b16 %v6460
  %v7070 = vunpack.c.l.b16 %v6461
  %v7071 = vunpack.c.h.b16 %v6461
  %v7072 = vunpack.c.l.b16 %v6462
  %v7073 = vunpack.c.h.b16 %v6462
  %v7074 = vunpack.c.l.b16 %v6463
  %v7075 = vunpack.c.h.b16 %v6463
  %v7076 = vunpack.c.l.b16 %v6464
  %v7077 = vunpack.c.h.b16 %v6464
  %v7078 = vunpack.c.l.b16 %v6465
  %v7079 = vunpack.c.h.b16 %v6465
  %v7080 = vunpack.c.l.b16 %v6466
  %v7081 = vunpack.c.h.b16 %v6466
  %v7082 = vunpack.c.l.b16 %v6467
  %v7083 = vunpack.c.h.b16 %v6467
  %v7084 = vunpack.c.l.b16 %v6468
  %v7085 = vunpack.c.h.b16 %v6468
  %v7086 = vunpack.c.l.b16 %v6469
  %v7087 = vunpack.c.h.b16 %v6469
  %v7088 = vunpack.c.l.b16 %v6470
  %v7089 = vunpack.c.h.b16 %v6470
  %v7090 = vunpack.c.l.b16 %v6471
  %v7091 = vunpack.c.h.b16 %v6471
  %v7092 = vunpack.c.l.b16 %v6472
  %v7093 = vunpack.c.h.b16 %v6472
  %v7094 = vunpack.c.l.b16 %v6473
  %v7095 = vunpack.c.h.b16 %v6473
  %v7096 = vunpack.c.l.b16 %v6474
  %v7097 = vunpack.c.h.b16 %v6474
  %v7098 = vunpack.c.l.b16 %v6475
  %v7099 = vunpack.c.h.b16 %v6475
  %v7100 = vunpack.c.l.b16 %v6476
  %v7101 = vunpack.c.h.b16 %v6476
  %v7102 = vunpack.c.l.b16 %v6477
  %v7103 = vunpack.c.h.b16 %v6477
  %v7104 = vunpack.c.l.b16 %v6478
  %v7105 = vunpack.c.h.b16 %v6478
  %v7106 = vunpack.c.l.b16 %v6479
  %v7107 = vunpack.c.h.b16 %v6479
  %v7108 = vunpack.c.l.b16 %v6480
  %v7109 = vunpack.c.h.b16 %v6480
  %v7110 = vunpack.c.l.b16 %v6481
  %v7111 = vunpack.c.h.b16 %v6481
  %v7112 = vunpack.c.l.b16 %v6482
  %v7113 = vunpack.c.h.b16 %v6482
  %v7114 = vunpack.c.l.b16 %v6483
  %v7115 = vunpack.c.h.b16 %v6483
  %v7116 = vunpack.c.l.b16 %v6484
  %v7117 = vunpack.c.h.b16 %v6484
  %v7118 = vunpack.c.l.b16 %v6485
  %v7119 = vunpack.c.h.b16 %v6485
  %v7120 = vunpack.c.l.b16 %v6486
  %v7121 = vunpack.c.h.b16 %v6486
  %v7122 = vunpack.c.l.b16 %v6487
  %v7123 = vunpack.c.h.b16 %v6487
  %v7124 = vunpack.c.l.b16 %v6488
  %v7125 = vunpack.c.h.b16 %v6488
  %v7126 = vunpack.c.l.b16 %v6489
  %v7127 = vunpack.c.h.b16 %v6489
  %v7128 = vunpack.c.l.b16 %v6490
  %v7129 = vunpack.c.h.b16 %v6490
  %v7130 = vunpack.c.l.b16 %v6491
  %v7131 = vunpack.c.h.b16 %v6491
  %v7132 = vunpack.c.l.b16 %v6492
  %v7133 = vunpack.c.h.b16 %v6492
  %v7134 = vunpack.c.l.b16 %v6493
  %v7135 = vunpack.c.h.b16 %v6493
  %v7136 = vunpack.c.l.b16 %v6494
  %v7137 = vunpack.c.h.b16 %v6494
  %v7138 = vunpack.c.l.b16 %v6495
  %v7139 = vunpack.c.h.b16 %v6495
  %v7140 = vunpack.c.l.b16 %v6496
  %v7141 = vunpack.c.h.b16 %v6496
  %v7142 = vunpack.c.l.b16 %v6497
  %v7143 = vunpack.c.h.b16 %v6497
  %v7144 = vunpack.c.l.b16 %v6498
  %v7145 = vunpack.c.h.b16 %v6498
  %v7146 = vunpack.c.l.b16 %v6499
  %v7147 = vunpack.c.h.b16 %v6499
  %v7148 = vunpack.c.l.b16 %v6500
  %v7149 = vunpack.c.h.b16 %v6500
  %v7150 = vunpack.c.l.b16 %v6501
  %v7151 = vunpack.c.h.b16 %v6501
  %v7152 = vunpack.c.l.b16 %v6502
  %v7153 = vunpack.c.h.b16 %v6502
  %v7154 = vunpack.c.l.b16 %v6503
  %v7155 = vunpack.c.h.b16 %v6503
  %v7156 = vunpack.c.l.b16 %v6504
  %v7157 = vunpack.c.h.b16 %v6504
  %v7158 = vunpack.c.l.b16 %v6505
  %v7159 = vunpack.c.h.b16 %v6505
  %v7160 = vunpack.c.l.b16 %v6506
  %v7161 = vunpack.c.h.b16 %v6506
  %v7162 = vunpack.c.l.b16 %v6507
  %v7163 = vunpack.c.h.b16 %v6507
  %v7164 = vunpack.c.l.b16 %v6508
  %v7165 = vunpack.c.h.b16 %v6508
  %v7166 = vunpack.c.l.b16 %v6509
  %v7167 = vunpack.c.h.b16 %v6509
  %v7168 = vunpack.c.l.b16 %v6510
  %v7169 = vunpack.c.h.b16 %v6510
  %v7170 = vunpack.c.l.b16 %v6511
  %v7171 = vunpack.c.h.b16 %v6511
  %v7172 = vunpack.c.l.b16 %v6512
  %v7173 = vunpack.c.h.b16 %v6512
  %v7174 = vunpack.c.l.b16 %v6513
  %v7175 = vunpack.c.h.b16 %v6513
  %v7176 = vunpack.c.l.b16 %v6514
  %v7177 = vunpack.c.h.b16 %v6514
  %v7178 = vunpack.c.l.b16 %v6515
  %v7179 = vunpack.c.h.b16 %v6515
  %v7180 = vunpack.c.l.b16 %v6516
  %v7181 = vunpack.c.h.b16 %v6516
  %v7182 = vunpack.c.l.b16 %v6517
  %v7183 = vunpack.c.h.b16 %v6517
  %v7184 = vunpack.c.l.b16 %v6518
  %v7185 = vunpack.c.h.b16 %v6518
  %v7186 = vunpack.c.l.b16 %v6519
  %v7187 = vunpack.c.h.b16 %v6519
  %v7188 = vunpack.c.l.b16 %v6520
  %v7189 = vunpack.c.h.b16 %v6520
  %v7190 = vunpack.c.l.b16 %v6521
  %v7191 = vunpack.c.h.b16 %v6521
  %v7192 = vunpack.c.l.b16 %v6522
  %v7193 = vunpack.c.h.b16 %v6522
  %v7194 = vunpack.c.l.b16 %v6523
  %v7195 = vunpack.c.h.b16 %v6523
  %v7196 = vunpack.c.l.b16 %v6524
  %v7197 = vunpack.c.h.b16 %v6524
  %v7198 = vunpack.c.l.b16 %v6525
  %v7199 = vunpack.c.h.b16 %v6525
  %v7200 = vunpack.c.l.b16 %v6526
  %v7201 = vunpack.c.h.b16 %v6526
  %v7202 = vunpack.c.l.b16 %v6527
  %v7203 = vunpack.c.h.b16 %v6527
  %v7204 = vunpack.c.l.b16 %v6528
  %v7205 = vunpack.c.h.b16 %v6528
  %v7206 = vunpack.c.l.b16 %v6529
  %v7207 = vunpack.c.h.b16 %v6529
  %v7208 = vunpack.c.l.b16 %v6530
  %v7209 = vunpack.c.h.b16 %v6530
  %v7210 = vunpack.c.l.b16 %v6531
  %v7211 = vunpack.c.h.b16 %v6531
  %v7212 = vunpack.c.l.b16 %v6532
  %v7213 = vunpack.c.h.b16 %v6532
  %v7214 = vunpack.c.l.b16 %v6533
  %v7215 = vunpack.c.h.b16 %v6533
  %v7216 = vunpack.c.l.b16 %v6534
  %v7217 = vunpack.c.h.b16 %v6534
  %v7218 = vunpack.c.l.b16 %v6535
  %v7219 = vunpack.c.h.b16 %v6535
  %v7220 = vunpack.c.l.b16 %v6536
  %v7221 = vunpack.c.h.b16 %v6536
  %v7222 = vunpack.c.l.b16 %v6537
  %v7223 = vunpack.c.h.b16 %v6537
  %v7224 = vunpack.c.l.b16 %v6538
  %v7225 = vunpack.c.h.b16 %v6538
  %v7226 = vunpack.c.l.b16 %v6539
  %v7227 = vunpack.c.h.b16 %v6539
  %v7228 = vunpack.c.l.b16 %v6540
  %v7229 = vunpack.c.h.b16 %v6540
  %v7230 = vunpack.c.l.b16 %v6541
  %v7231 = vunpack.c.h.b16 %v6541
  %v7232 = vunpack.c.l.b16 %v6542
  %v7233 = vunpack.c.h.b16 %v6542
  %v7234 = vunpack.c.l.b16 %v6543
  %v7235 = vunpack.c.h.b16 %v6543
  %v7236 = vunpack.c.l.b16 %v6544
  %v7237 = vunpack.c.h.b16 %v6544
  %v7238 = vunpack.c.l.b16 %v6545
  %v7239 = vunpack.c.h.b16 %v6545
  %v7240 = vunpack.c.l.b16 %v6546
  %v7241 = vunpack.c.h.b16 %v6546
  %v7242 = vunpack.c.l.b16 %v6547
  %v7243 = vunpack.c.h.b16 %v6547
  %v7244 = vunpack.c.l.b16 %v6548
  %v7245 = vunpack.c.h.b16 %v6548
  %v7246 = vunpack.c.l.b16 %v6549
  %v7247 = vunpack.c.h.b16 %v6549
  %v7248 = vunpack.c.l.b16 %v6550
  %v7249 = vunpack.c.h.b16 %v6550
  %v7250 = vunpack.c.l.b16 %v6551
  %v7251 = vunpack.c.h.b16 %v6551
  %v7252 = vunpack.c.l.b16 %v6552
  %v7253 = vunpack.c.h.b16 %v6552
  %v7254 = vunpack.c.l.b16 %v6553
  %v7255 = vunpack.c.h.b16 %v6553
  %v7256 = vunpack.c.l.b16 %v6554
  %v7257 = vunpack.c.h.b16 %v6554
  %v7258 = vunpack.c.l.b16 %v6555
  %v7259 = vunpack.c.h.b16 %v6555
  %v7260 = vunpack.c.l.b16 %v6556
  %v7261 = vunpack.c.h.b16 %v6556
  %v7262 = vunpack.c.l.b16 %v6557
  %v7263 = vunpack.c.h.b16 %v6557
  %v7264 = vunpack.c.l.b16 %v6558
  %v7265 = vunpack.c.h.b16 %v6558
  %v7266 = vunpack.c.l.b16 %v6559
  %v7267 = vunpack.c.h.b16 %v6559
  %v7268 = vunpack.c.l.b16 %v6560
  %v7269 = vunpack.c.h.b16 %v6560
  %v7270 = vunpack.c.l.b16 %v6561
  %v7271 = vunpack.c.h.b16 %v6561
  %v7272 = vunpack.c.l.b16 %v6562
  %v7273 = vunpack.c.h.b16 %v6562
  %v7274 = vunpack.c.l.b16 %v6563
  %v7275 = vunpack.c.h.b16 %v6563
  %v7276 = vunpack.c.l.b16 %v6564
  %v7277 = vunpack.c.h.b16 %v6564
  %v7278 = vunpack.c.l.b16 %v6565
  %v7279 = vunpack.c.h.b16 %v6565
  %v7280 = vunpack.c.l.b16 %v6566
  %v7281 = vunpack.c.h.b16 %v6566
  %v7282 = vunpack.c.l.b16 %v6567
  %v7283 = vunpack.c.h.b16 %v6567
  %v7284 = vunpack.c.l.b16 %v6568
  %v7285 = vunpack.c.h.b16 %v6568
  %v7286 = vunpack.c.l.b16 %v6569
  %v7287 = vunpack.c.h.b16 %v6569
  %v7288 = vunpack.c.l.b16 %v6570
  %v7289 = vunpack.c.h.b16 %v6570
  %v7290 = vunpack.c.l.b16 %v6571
  %v7291 = vunpack.c.h.b16 %v6571
  %v7292 = vunpack.c.l.b16 %v6572
  %v7293 = vunpack.c.h.b16 %v6572
  %v7294 = vunpack.c.l.b16 %v6573
  %v7295 = vunpack.c.h.b16 %v6573
  %v7296 = vunpack.c.l.b16 %v6574
  %v7297 = vunpack.c.h.b16 %v6574
  %v7298 = vunpack.c.l.b16 %v6575
  %v7299 = vunpack.c.h.b16 %v6575
  %v7300 = vunpack.c.l.b16 %v6576
  %v7301 = vunpack.c.h.b16 %v6576
  %v7302 = vunpack.c.l.b16 %v6577
  %v7303 = vunpack.c.h.b16 %v6577
  %v7304 = vunpack.c.l.b16 %v6578
  %v7305 = vunpack.c.h.b16 %v6578
  %v7306 = vunpack.c.l.b16 %v6579
  %v7307 = vunpack.c.h.b16 %v6579
  %v7308 = vpack.c.b16 %v6916, %v6908
  %v7309 = vpack.c.b16 %v6917, %v6909
  %v7310 = vpack.c.b16 %v6918, %v6910
  %v7311 = vpack.c.b16 %v6919, %v6911
  %v7312 = vpack.c.b16 %v6920, %v6912
  %v7313 = vpack.c.b16 %v6921, %v6913
  %v7314 = vpack.c.b16 %v6922, %v6914
  %v7315 = vpack.c.b16 %v6923, %v6915
  %v7316 = vpack.c.b16 %v6932, %v6924
  %v7317 = vpack.c.b16 %v6933, %v6925
  %v7318 = vpack.c.b16 %v6934, %v6926
  %v7319 = vpack.c.b16 %v6935, %v6927
  %v7320 = vpack.c.b16 %v6936, %v6928
  %v7321 = vpack.c.b16 %v6937, %v6929
  %v7322 = vpack.c.b16 %v6938, %v6930
  %v7323 = vpack.c.b16 %v6939, %v6931
  %v7324 = vpack.c.b16 %v6948, %v6940
  %v7325 = vpack.c.b16 %v6949, %v6941
  %v7326 = vpack.c.b16 %v6950, %v6942
  %v7327 = vpack.c.b16 %v6951, %v6943
  %v7328 = vpack.c.b16 %v6952, %v6944
  %v7329 = vpack.c.b16 %v6953, %v6945
  %v7330 = vpack.c.b16 %v6954, %v6946
  %v7331 = vpack.c.b16 %v6955, %v6947
  %v7332 = vpack.c.b16 %v6964, %v6956
  %v7333 = vpack.c.b16 %v6965, %v6957
  %v7334 = vpack.c.b16 %v6966, %v6958
  %v7335 = vpack.c.b16 %v6967, %v6959
  %v7336 = vpack.c.b16 %v6968, %v6960
  %v7337 = vpack.c.b16 %v6969, %v6961
  %v7338 = vpack.c.b16 %v6970, %v6962
  %v7339 = vpack.c.b16 %v6971, %v6963
  %v7340 = vpack.c.b16 %v6980, %v6972
  %v7341 = vpack.c.b16 %v6981, %v6973
  %v7342 = vpack.c.b16 %v6982, %v6974
  %v7343 = vpack.c.b16 %v6983, %v6975
  %v7344 = vpack.c.b16 %v6984, %v6976
  %v7345 = vpack.c.b16 %v6985, %v6977
  %v7346 = vpack.c.b16 %v6986, %v6978
  %v7347 = vpack.c.b16 %v6987, %v6979
  %v7348 = vpack.c.b16 %v6996, %v6988
  %v7349 = vpack.c.b16 %v6997, %v6989
  %v7350 = vpack.c.b16 %v6998, %v6990
  %v7351 = vpack.c.b16 %v6999, %v6991
  %v7352 = vpack.c.b16 %v7000, %v6992
  %v7353 = vpack.c.b16 %v7001, %v6993
  %v7354 = vpack.c.b16 %v7002, %v6994
  %v7355 = vpack.c.b16 %v7003, %v6995
  %v7356 = vpack.c.b16 %v7012, %v7004
  %v7357 = vpack.c.b16 %v7013, %v7005
  %v7358 = vpack.c.b16 %v7014, %v7006
  %v7359 = vpack.c.b16 %v7015, %v7007
  %v7360 = vpack.c.b16 %v7016, %v7008
  %v7361 = vpack.c.b16 %v7017, %v7009
  %v7362 = vpack.c.b16 %v7018, %v7010
  %v7363 = vpack.c.b16 %v7019, %v7011
  %v7364 = vpack.c.b16 %v7028, %v7020
  %v7365 = vpack.c.b16 %v7029, %v7021
  %v7366 = vpack.c.b16 %v7030, %v7022
  %v7367 = vpack.c.b16 %v7031, %v7023
  %v7368 = vpack.c.b16 %v7032, %v7024
  %v7369 = vpack.c.b16 %v7033, %v7025
  %v7370 = vpack.c.b16 %v7034, %v7026
  %v7371 = vpack.c.b16 %v7035, %v7027
  %v7372 = vpack.c.b16 %v7044, %v7036
  %v7373 = vpack.c.b16 %v7045, %v7037
  %v7374 = vpack.c.b16 %v7046, %v7038
  %v7375 = vpack.c.b16 %v7047, %v7039
  %v7376 = vpack.c.b16 %v7048, %v7040
  %v7377 = vpack.c.b16 %v7049, %v7041
  %v7378 = vpack.c.b16 %v7050, %v7042
  %v7379 = vpack.c.b16 %v7051, %v7043
  %v7380 = vpack.c.b16 %v7060, %v7052
  %v7381 = vpack.c.b16 %v7061, %v7053
  %v7382 = vpack.c.b16 %v7062, %v7054
  %v7383 = vpack.c.b16 %v7063, %v7055
  %v7384 = vpack.c.b16 %v7064, %v7056
  %v7385 = vpack.c.b16 %v7065, %v7057
  %v7386 = vpack.c.b16 %v7066, %v7058
  %v7387 = vpack.c.b16 %v7067, %v7059
  %v7388 = vpack.c.b16 %v7076, %v7068
  %v7389 = vpack.c.b16 %v7077, %v7069
  %v7390 = vpack.c.b16 %v7078, %v7070
  %v7391 = vpack.c.b16 %v7079, %v7071
  %v7392 = vpack.c.b16 %v7080, %v7072
  %v7393 = vpack.c.b16 %v7081, %v7073
  %v7394 = vpack.c.b16 %v7082, %v7074
  %v7395 = vpack.c.b16 %v7083, %v7075
  %v7396 = vpack.c.b16 %v7092, %v7084
  %v7397 = vpack.c.b16 %v7093, %v7085
  %v7398 = vpack.c.b16 %v7094, %v7086
  %v7399 = vpack.c.b16 %v7095, %v7087
  %v7400 = vpack.c.b16 %v7096, %v7088
  %v7401 = vpack.c.b16 %v7097, %v7089
  %v7402 = vpack.c.b16 %v7098, %v7090
  %v7403 = vpack.c.b16 %v7099, %v7091
  %v7404 = vpack.c.b16 %v7108, %v7100
  %v7405 = vpack.c.b16 %v7109, %v7101
  %v7406 = vpack.c.b16 %v7110, %v7102
  %v7407 = vpack.c.b16 %v7111, %v7103
  %v7408 = vpack.c.b16 %v7112, %v7104
  %v7409 = vpack.c.b16 %v7113, %v7105
  %v7410 = vpack.c.b16 %v7114, %v7106
  %v7411 = vpack.c.b16 %v7115, %v7107
  %v7412 = vpack.c.b16 %v7124, %v7116
  %v7413 = vpack.c.b16 %v7125, %v7117
  %v7414 = vpack.c.b16 %v7126, %v7118
  %v7415 = vpack.c.b16 %v7127, %v7119
  %v7416 = vpack.c.b16 %v7128, %v7120
  %v7417 = vpack.c.b16 %v7129, %v7121
  %v7418 = vpack.c.b16 %v7130, %v7122
  %v7419 = vpack.c.b16 %v7131, %v7123
  %v7420 = vpack.c.b16 %v7140, %v7132
  %v7421 = vpack.c.b16 %v7141, %v7133
  %v7422 = vpack.c.b16 %v7142, %v7134
  %v7423 = vpack.c.b16 %v7143, %v7135
  %v7424 = vpack.c.b16 %v7144, %v7136
  %v7425 = vpack.c.b16 %v7145, %v7137
  %v7426 = vpack.c.b16 %v7146, %v7138
  %v7427 = vpack.c.b16 %v7147, %v7139
  %v7428 = vpack.c.b16 %v7156, %v7148
  %v7429 = vpack.c.b16 %v7157, %v7149
  %v7430 = vpack.c.b16 %v7158, %v7150
  %v7431 = vpack.c.b16 %v7159, %v7151
  %v7432 = vpack.c.b16 %v7160, %v7152
  %v7433 = vpack.c.b16 %v7161, %v7153
  %v7434 = vpack.c.b16 %v7162, %v7154
  %v7435 = vpack.c.b16 %v7163, %v7155
  %v7436 = vpack.c.b16 %v7172, %v7164
  %v7437 = vpack.c.b16 %v7173, %v7165
  %v7438 = vpack.c.b16 %v7174, %v7166
  %v7439 = vpack.c.b16 %v7175, %v7167
  %v7440 = vpack.c.b16 %v7176, %v7168
  %v7441 = vpack.c.b16 %v7177, %v7169
  %v7442 = vpack.c.b16 %v7178, %v7170
  %v7443 = vpack.c.b16 %v7179, %v7171
  %v7444 = vpack.c.b16 %v7188, %v7180
  %v7445 = vpack.c.b16 %v7189, %v7181
  %v7446 = vpack.c.b16 %v7190, %v7182
  %v7447 = vpack.c.b16 %v7191, %v7183
  %v7448 = vpack.c.b16 %v7192, %v7184
  %v7449 = vpack.c.b16 %v7193, %v7185
  %v7450 = vpack.c.b16 %v7194, %v7186
  %v7451 = vpack.c.b16 %v7195, %v7187
  %v7452 = vpack.c.b16 %v7204, %v7196
  %v7453 = vpack.c.b16 %v7205, %v7197
  %v7454 = vpack.c.b16 %v7206, %v7198
  %v7455 = vpack.c.b16 %v7207, %v7199
  %v7456 = vpack.c.b16 %v7208, %v7200
  %v7457 = vpack.c.b16 %v7209, %v7201
  %v7458 = vpack.c.b16 %v7210, %v7202
  %v7459 = vpack.c.b16 %v7211, %v7203
  %v7460 = vpack.c.b16 %v7220, %v7212
  %v7461 = vpack.c.b16 %v7221, %v7213
  %v7462 = vpack.c.b16 %v7222, %v7214
  %v7463 = vpack.c.b16 %v7223, %v7215
  %v7464 = vpack.c.b16 %v7224, %v7216
  %v7465 = vpack.c.b16 %v7225, %v7217
  %v7466 = vpack.c.b16 %v7226, %v7218
  %v7467 = vpack.c.b16 %v7227, %v7219
  %v7468 = vpack.c.b16 %v7236, %v7228
  %v7469 = vpack.c.b16 %v7237, %v7229
  %v7470 = vpack.c.b16 %v7238, %v7230
  %v7471 = vpack.c.b16 %v7239, %v7231
  %v7472 = vpack.c.b16 %v7240, %v7232
  %v7473 = vpack.c.b16 %v7241, %v7233
  %v7474 = vpack.c.b16 %v7242, %v7234
  %v7475 = vpack.c.b16 %v7243, %v7235
  %v7476 = vpack.c.b16 %v7252, %v7244
  %v7477 = vpack.c.b16 %v7253, %v7245
  %v7478 = vpack.c.b16 %v7254, %v7246
  %v7479 = vpack.c.b16 %v7255, %v7247
  %v7480 = vpack.c.b16 %v7256, %v7248
  %v7481 = vpack.c.b16 %v7257, %v7249
  %v7482 = vpack.c.b16 %v7258, %v7250
  %v7483 = vpack.c.b16 %v7259, %v7251
  %v7484 = vpack.c.b16 %v7268, %v7260
  %v7485 = vpack.c.b16 %v7269, %v7261
  %v7486 = vpack.c.b16 %v7270, %v7262
  %v7487 = vpack.c.b16 %v7271, %v7263
  %v7488 = vpack.c.b16 %v7272, %v7264
  %v7489 = vpack.c.b16 %v7273, %v7265
  %v7490 = vpack.c.b16 %v7274, %v7266
  %v7491 = vpack.c.b16 %v7275, %v7267
  %v7492 = vpack.c.b16 %v7284, %v7276
  %v7493 = vpack.c.b16 %v7285, %v7277
  %v7494 = vpack.c.b16 %v7286, %v7278
  %v7495 = vpack.c.b16 %v7287, %v7279
  %v7496 = vpack.c.b16 %v7288, %v7280
  %v7497 = vpack.c.b16 %v7289, %v7281
  %v7498 = vpack.c.b16 %v7290, %v7282
  %v7499 = vpack.c.b16 %v7291, %v7283
  %v7500 = vpack.c.b16 %v7300, %v7292
  %v7501 = vpack.c.b16 %v7301, %v7293
  %v7502 = vpack.c.b16 %v7302, %v7294
  %v7503 = vpack.c.b16 %v7303, %v7295
  %v7504 = vpack.c.b16 %v7304, %v7296
  %v7505 = vpack.c.b16 %v7305, %v7297
  %v7506 = vpack.c.b16 %v7306, %v7298
  %v7507 = vpack.c.b16 %v7307, %v7299
  %v7836 = vunpack.c.l.b16 %v6580
  %v7837 = vunpack.c.l.b16 %v6581
  %v7838 = vunpack.c.l.b16 %v6582
  %v7839 = vunpack.c.l.b16 %v6583
  %v7840 = vunpack.c.l.b16 %v6584
  %v7841 = vunpack.c.l.b16 %v6585
  %v7842 = vunpack.c.l.b16 %v6586
  %v7843 = vunpack.c.l.b16 %v6587
  %v7844 = vunpack.c.l.b16 %v6588
  %v7845 = vunpack.c.l.b16 %v6589
  %v7846 = vunpack.c.l.b16 %v6590
  %v7847 = vunpack.c.l.b16 %v6591
  %v7848 = vunpack.c.l.b16 %v6592
  %v7849 = vunpack.c.l.b16 %v6593
  %v7850 = vunpack.c.l.b16 %v6594
  %v7851 = vunpack.c.l.b16 %v6595
  %v7852 = vunpack.c.l.b16 %v6596
  %v7853 = vunpack.c.l.b16 %v6597
  %v7854 = vunpack.c.l.b16 %v6598
  %v7855 = vunpack.c.l.b16 %v6599
  %v7856 = vunpack.c.l.b16 %v6600
  %v7857 = vunpack.c.l.b16 %v6601
  %v7858 = vunpack.c.l.b16 %v6602
  %v7859 = vunpack.c.l.b16 %v6603
  %v7860 = vunpack.c.l.b16 %v6604
  %v7861 = vunpack.c.l.b16 %v6605
  %v7862 = vunpack.c.l.b16 %v6606
  %v7863 = vunpack.c.l.b16 %v6607
  %v7864 = vunpack.c.l.b16 %v6608
  %v7865 = vunpack.c.l.b16 %v6609
  %v7866 = vunpack.c.l.b16 %v6610
  %v7867 = vunpack.c.l.b16 %v6611
  %v7868 = vunpack.c.l.b16 %v6612
  %v7869 = vunpack.c.l.b16 %v6613
  %v7870 = vunpack.c.l.b16 %v6614
  %v7871 = vunpack.c.l.b16 %v6615
  %v7872 = vunpack.c.l.b16 %v6616
  %v7873 = vunpack.c.l.b16 %v6617
  %v7874 = vunpack.c.l.b16 %v6618
  %v7875 = vunpack.c.l.b16 %v6619
  %v7876 = vunpack.c.l.b16 %v6620
  %v7877 = vunpack.c.l.b16 %v6621
  %v7878 = vunpack.c.l.b16 %v6622
  %v7879 = vunpack.c.l.b16 %v6623
  %v7880 = vunpack.c.l.b16 %v6624
  %v7881 = vunpack.c.l.b16 %v6625
  %v7882 = vunpack.c.l.b16 %v6626
  %v7883 = vunpack.c.l.b16 %v6627
  %v7884 = vunpack.c.l.b16 %v6628
  %v7885 = vunpack.c.l.b16 %v6629
  %v7886 = vunpack.c.l.b16 %v6630
  %v7887 = vunpack.c.l.b16 %v6631
  %v7888 = vunpack.c.l.b16 %v6632
  %v7889 = vunpack.c.l.b16 %v6633
  %v7890 = vunpack.c.l.b16 %v6634
  %v7891 = vunpack.c.l.b16 %v6635
  %v7892 = vunpack.c.l.b16 %v6636
  %v7893 = vunpack.c.l.b16 %v6637
  %v7894 = vunpack.c.l.b16 %v6638
  %v7895 = vunpack.c.l.b16 %v6639
  %v7896 = vunpack.c.l.b16 %v6640
  %v7897 = vunpack.c.l.b16 %v6641
  %v7898 = vunpack.c.l.b16 %v6642
  %v7899 = vunpack.c.l.b16 %v6643
  %v7900 = vunpack.c.l.b16 %v6644
  %v7901 = vunpack.c.l.b16 %v6645
  %v7902 = vunpack.c.l.b16 %v6646
  %v7903 = vunpack.c.l.b16 %v6647
  %v7904 = vunpack.c.l.b16 %v6648
  %v7905 = vunpack.c.l.b16 %v6649
  %v7906 = vunpack.c.l.b16 %v6650
  %v7907 = vunpack.c.l.b16 %v6651
  %v7908 = vunpack.c.l.b16 %v6652
  %v7909 = vunpack.c.l.b16 %v6653
  %v7910 = vunpack.c.l.b16 %v6654
  %v7911 = vunpack.c.l.b16 %v6655
  %v7912 = vunpack.c.l.b16 %v6656
  %v7913 = vunpack.c.l.b16 %v6657
  %v7914 = vunpack.c.l.b16 %v6658
  %v7915 = vunpack.c.l.b16 %v6659
  %v7916 = vunpack.c.l.b16 %v6660
  %v7917 = vunpack.c.l.b16 %v6661
  %v7918 = vunpack.c.l.b16 %v6662
  %v7919 = vunpack.c.l.b16 %v6663
  %v7920 = vunpack.c.l.b16 %v6664
  %v7921 = vunpack.c.l.b16 %v6665
  %v7922 = vunpack.c.l.b16 %v6666
  %v7923 = vunpack.c.l.b16 %v6667
  %v7924 = vunpack.c.l.b16 %v6668
  %v7925 = vunpack.c.l.b16 %v6669
  %v7926 = vunpack.c.l.b16 %v6670
  %v7927 = vunpack.c.l.b16 %v6671
  %v7928 = vunpack.c.l.b16 %v6672
  %v7929 = vunpack.c.l.b16 %v6673
  %v7930 = vunpack.c.l.b16 %v6674
  %v7931 = vunpack.c.l.b16 %v6675
  %v7932 = vunpack.c.l.b16 %v6676
  %v7933 = vunpack.c.l.b16 %v6677
  %v7934 = vunpack.c.l.b16 %v6678
  %v7935 = vunpack.c.l.b16 %v6679
  %v7936 = vunpack.c.l.b16 %v6680
  %v7937 = vunpack.c.l.b16 %v6681
  %v7938 = vunpack.c.l.b16 %v6682
  %v7939 = vunpack.c.l.b16 %v6683
  %v7940 = vunpack.c.l.b16 %v6684
  %v7941 = vunpack.c.l.b16 %v6685
  %v7942 = vunpack.c.l.b16 %v6686
  %v7943 = vunpack.c.l.b16 %v6687
  %v7944 = vunpack.c.l.b16 %v6688
  %v7945 = vunpack.c.l.b16 %v6689
  %v7946 = vunpack.c.l.b16 %v6690
  %v7947 = vunpack.c.l.b16 %v6691
  %v7948 = vunpack.c.l.b16 %v6692
  %v7949 = vunpack.c.l.b16 %v6693
  %v7950 = vunpack.c.l.b16 %v6694
  %v7951 = vunpack.c.l.b16 %v6695
  %v7952 = vunpack.c.l.b16 %v6696
  %v7953 = vunpack.c.l.b16 %v6697
  %v7954 = vunpack.c.l.b16 %v6698
  %v7955 = vunpack.c.l.b16 %v6699
  %v7956 = vunpack.c.l.b16 %v6700
  %v7957 = vunpack.c.l.b16 %v6701
  %v7958 = vunpack.c.l.b16 %v6702
  %v7959 = vunpack.c.l.b16 %v6703
  %v7960 = vunpack.c.l.b16 %v6704
  %v7961 = vunpack.c.l.b16 %v6705
  %v7962 = vunpack.c.l.b16 %v6706
  %v7963 = vunpack.c.l.b16 %v6707
  %v7964 = vpack.c.b16 %v7837, %v7836
  %v7965 = vpack.c.b16 %v7839, %v7838
  %v7966 = vpack.c.b16 %v7841, %v7840
  %v7967 = vpack.c.b16 %v7843, %v7842
  %v7968 = vpack.c.b16 %v7845, %v7844
  %v7969 = vpack.c.b16 %v7847, %v7846
  %v7970 = vpack.c.b16 %v7849, %v7848
  %v7971 = vpack.c.b16 %v7851, %v7850
  %v7972 = vpack.c.b16 %v7853, %v7852
  %v7973 = vpack.c.b16 %v7855, %v7854
  %v7974 = vpack.c.b16 %v7857, %v7856
  %v7975 = vpack.c.b16 %v7859, %v7858
  %v7976 = vpack.c.b16 %v7861, %v7860
  %v7977 = vpack.c.b16 %v7863, %v7862
  %v7978 = vpack.c.b16 %v7865, %v7864
  %v7979 = vpack.c.b16 %v7867, %v7866
  %v7980 = vpack.c.b16 %v7869, %v7868
  %v7981 = vpack.c.b16 %v7871, %v7870
  %v7982 = vpack.c.b16 %v7873, %v7872
  %v7983 = vpack.c.b16 %v7875, %v7874
  %v7984 = vpack.c.b16 %v7877, %v7876
  %v7985 = vpack.c.b16 %v7879, %v7878
  %v7986 = vpack.c.b16 %v7881, %v7880
  %v7987 = vpack.c.b16 %v7883, %v7882
  %v7988 = vpack.c.b16 %v7885, %v7884
  %v7989 = vpack.c.b16 %v7887, %v7886
  %v7990 = vpack.c.b16 %v7889, %v7888
  %v7991 = vpack.c.b16 %v7891, %v7890
  %v7992 = vpack.c.b16 %v7893, %v7892
  %v7993 = vpack.c.b16 %v7895, %v7894
  %v7994 = vpack.c.b16 %v7897, %v7896
  %v7995 = vpack.c.b16 %v7899, %v7898
  %v7996 = vpack.c.b16 %v7901, %v7900
  %v7997 = vpack.c.b16 %v7903, %v7902
  %v7998 = vpack.c.b16 %v7905, %v7904
  %v7999 = vpack.c.b16 %v7907, %v7906
  %v8000 = vpack.c.b16 %v7909, %v7908
  %v8001 = vpack.c.b16 %v7911, %v7910
  %v8002 = vpack.c.b16 %v7913, %v7912
  %v8003 = vpack.c.b16 %v7915, %v7914
  %v8004 = vpack.c.b16 %v7917, %v7916
  %v8005 = vpack.c.b16 %v7919, %v7918
  %v8006 = vpack.c.b16 %v7921, %v7920
  %v8007 = vpack.c.b16 %v7923, %v7922
  %v8008 = vpack.c.b16 %v7925, %v7924
  %v8009 = vpack.c.b16 %v7927, %v7926
  %v8010 = vpack.c.b16 %v7929, %v7928
  %v8011 = vpack.c.b16 %v7931, %v7930
  %v8012 = vpack.c.b16 %v7933, %v7932
  %v8013 = vpack.c.b16 %v7935, %v7934
  %v8014 = vpack.c.b16 %v7937, %v7936
  %v8015 = vpack.c.b16 %v7939, %v7938
  %v8016 = vpack.c.b16 %v7941, %v7940
  %v8017 = vpack.c.b16 %v7943, %v7942
  %v8018 = vpack.c.b16 %v7945, %v7944
  %v8019 = vpack.c.b16 %v7947, %v7946
  %v8020 = vpack.c.b16 %v7949, %v7948
  %v8021 = vpack.c.b16 %v7951, %v7950
  %v8022 = vpack.c.b16 %v7953, %v7952
  %v8023 = vpack.c.b16 %v7955, %v7954
  %v8024 = vpack.c.b16 %v7957, %v7956
  %v8025 = vpack.c.b16 %v7959, %v7958
  %v8026 = vpack.c.b16 %v7961, %v7960
  %v8027 = vpack.c.b16 %v7963, %v7962
  %8092 = vmatpush.bf16.msra.mxu0 %v7971
  %8093 = vmatpush.bf16.msra.mxu0 %v7970
  %8094 = vmatpush.bf16.msra.mxu0 %v7969
  %8095 = vmatpush.bf16.msra.mxu0 %v7968
  %8096 = vmatpush.bf16.msra.mxu0 %v7967
  %8097 = vmatpush.bf16.msra.mxu0 %v7966
  %8098 = vmatpush.bf16.msra.mxu0 %v7965
  %8099 = vmatpush.bf16.msra.mxu0 %v7964
  %8100 = vmatmul.bf16.gmra.mxu0 %v7308
  %v8101 = vpop.f32.mrf.mxu0
  %v8102 = vadd.f32 0.0, %v8101
  %v8103 = vpop.f32.mrf.mxu0
  %v8104 = vadd.f32 0.0, %v8103
  %8105 = vmatmul.bf16.gmra.mxu0 %v7316
  %v8106 = vpop.f32.mrf.mxu0
  %v8107 = vadd.f32 0.0, %v8106
  %v8108 = vpop.f32.mrf.mxu0
  %v8109 = vadd.f32 0.0, %v8108
  %8110 = vmatmul.bf16.gmra.mxu0 %v7324
  %v8111 = vpop.f32.mrf.mxu0
  %v8112 = vadd.f32 0.0, %v8111
  %v8113 = vpop.f32.mrf.mxu0
  %v8114 = vadd.f32 0.0, %v8113
  %8115 = vmatmul.bf16.gmra.mxu0 %v7332
  %v8116 = vpop.f32.mrf.mxu0
  %v8117 = vadd.f32 0.0, %v8116
  %v8118 = vpop.f32.mrf.mxu0
  %v8119 = vadd.f32 0.0, %v8118
  %8120 = vmatmul.bf16.gmra.mxu0 %v7340
  %v8121 = vpop.f32.mrf.mxu0
  %v8122 = vadd.f32 0.0, %v8121
  %v8123 = vpop.f32.mrf.mxu0
  %v8124 = vadd.f32 0.0, %v8123
  %8125 = vmatmul.bf16.gmra.mxu0 %v7348
  %v8126 = vpop.f32.mrf.mxu0
  %v8127 = vadd.f32 0.0, %v8126
  %v8128 = vpop.f32.mrf.mxu0
  %v8129 = vadd.f32 0.0, %v8128
  %8130 = vmatmul.bf16.gmra.mxu0 %v7356
  %v8131 = vpop.f32.mrf.mxu0
  %v8132 = vadd.f32 0.0, %v8131
  %v8133 = vpop.f32.mrf.mxu0
  %v8134 = vadd.f32 0.0, %v8133
  %8135 = vmatmul.bf16.gmra.mxu0 %v7364
  %v8136 = vpop.f32.mrf.mxu0
  %v8137 = vadd.f32 0.0, %v8136
  %v8138 = vpop.f32.mrf.mxu0
  %v8139 = vadd.f32 0.0, %v8138
  %8140 = vmatmul.bf16.gmra.mxu0 %v7372
  %v8141 = vpop.f32.mrf.mxu0
  %v8142 = vadd.f32 0.0, %v8141
  %v8143 = vpop.f32.mrf.mxu0
  %v8144 = vadd.f32 0.0, %v8143
  %8145 = vmatmul.bf16.gmra.mxu0 %v7380
  %v8146 = vpop.f32.mrf.mxu0
  %v8147 = vadd.f32 0.0, %v8146
  %v8148 = vpop.f32.mrf.mxu0
  %v8149 = vadd.f32 0.0, %v8148
  %8150 = vmatmul.bf16.gmra.mxu0 %v7388
  %v8151 = vpop.f32.mrf.mxu0
  %v8152 = vadd.f32 0.0, %v8151
  %v8153 = vpop.f32.mrf.mxu0
  %v8154 = vadd.f32 0.0, %v8153
  %8155 = vmatmul.bf16.gmra.mxu0 %v7396
  %v8156 = vpop.f32.mrf.mxu0
  %v8157 = vadd.f32 0.0, %v8156
  %v8158 = vpop.f32.mrf.mxu0
  %v8159 = vadd.f32 0.0, %v8158
  %8160 = vmatmul.bf16.gmra.mxu0 %v7404
  %v8161 = vpop.f32.mrf.mxu0
  %v8162 = vadd.f32 0.0, %v8161
  %v8163 = vpop.f32.mrf.mxu0
  %v8164 = vadd.f32 0.0, %v8163
  %8165 = vmatmul.bf16.gmra.mxu0 %v7412
  %v8166 = vpop.f32.mrf.mxu0
  %v8167 = vadd.f32 0.0, %v8166
  %v8168 = vpop.f32.mrf.mxu0
  %v8169 = vadd.f32 0.0, %v8168
  %8170 = vmatmul.bf16.gmra.mxu0 %v7420
  %v8171 = vpop.f32.mrf.mxu0
  %v8172 = vadd.f32 0.0, %v8171
  %v8173 = vpop.f32.mrf.mxu0
  %v8174 = vadd.f32 0.0, %v8173
  %8175 = vmatmul.bf16.gmra.mxu0 %v7428
  %v8176 = vpop.f32.mrf.mxu0
  %v8177 = vadd.f32 0.0, %v8176
  %v8178 = vpop.f32.mrf.mxu0
  %v8179 = vadd.f32 0.0, %v8178
  %8180 = vmatmul.bf16.gmra.mxu0 %v7436
  %v8181 = vpop.f32.mrf.mxu0
  %v8182 = vadd.f32 0.0, %v8181
  %v8183 = vpop.f32.mrf.mxu0
  %v8184 = vadd.f32 0.0, %v8183
  %8185 = vmatmul.bf16.gmra.mxu0 %v7444
  %v8186 = vpop.f32.mrf.mxu0
  %v8187 = vadd.f32 0.0, %v8186
  %v8188 = vpop.f32.mrf.mxu0
  %v8189 = vadd.f32 0.0, %v8188
  %8190 = vmatmul.bf16.gmra.mxu0 %v7452
  %v8191 = vpop.f32.mrf.mxu0
  %v8192 = vadd.f32 0.0, %v8191
  %v8193 = vpop.f32.mrf.mxu0
  %v8194 = vadd.f32 0.0, %v8193
  %8195 = vmatmul.bf16.gmra.mxu0 %v7460
  %v8196 = vpop.f32.mrf.mxu0
  %v8197 = vadd.f32 0.0, %v8196
  %v8198 = vpop.f32.mrf.mxu0
  %v8199 = vadd.f32 0.0, %v8198
  %8200 = vmatmul.bf16.gmra.mxu0 %v7468
  %v8201 = vpop.f32.mrf.mxu0
  %v8202 = vadd.f32 0.0, %v8201
  %v8203 = vpop.f32.mrf.mxu0
  %v8204 = vadd.f32 0.0, %v8203
  %8205 = vmatmul.bf16.gmra.mxu0 %v7476
  %v8206 = vpop.f32.mrf.mxu0
  %v8207 = vadd.f32 0.0, %v8206
  %v8208 = vpop.f32.mrf.mxu0
  %v8209 = vadd.f32 0.0, %v8208
  %8210 = vmatmul.bf16.gmra.mxu0 %v7484
  %v8211 = vpop.f32.mrf.mxu0
  %v8212 = vadd.f32 0.0, %v8211
  %v8213 = vpop.f32.mrf.mxu0
  %v8214 = vadd.f32 0.0, %v8213
  %8215 = vmatmul.bf16.gmra.mxu0 %v7492
  %v8216 = vpop.f32.mrf.mxu0
  %v8217 = vadd.f32 0.0, %v8216
  %v8218 = vpop.f32.mrf.mxu0
  %v8219 = vadd.f32 0.0, %v8218
  %8220 = vmatmul.bf16.gmra.mxu0 %v7500
  %v8221 = vpop.f32.mrf.mxu0
  %v8222 = vadd.f32 0.0, %v8221
  %v8223 = vpop.f32.mrf.mxu0
  %v8224 = vadd.f32 0.0, %v8223
  %8225 = vdwg.mxu0
  %8226 = vmatpush.bf16.msra.mxu0 %v7979
  %8227 = vmatpush.bf16.msra.mxu0 %v7978
  %8228 = vmatpush.bf16.msra.mxu0 %v7977
  %8229 = vmatpush.bf16.msra.mxu0 %v7976
  %8230 = vmatpush.bf16.msra.mxu0 %v7975
  %8231 = vmatpush.bf16.msra.mxu0 %v7974
  %8232 = vmatpush.bf16.msra.mxu0 %v7973
  %8233 = vmatpush.bf16.msra.mxu0 %v7972
  %8234 = vmatmul.bf16.gmra.mxu0 %v7309
  %v8235 = vpop.f32.mrf.mxu0
  %v8236 = vadd.f32 %v8102, %v8235
  %v8237 = vpop.f32.mrf.mxu0
  %v8238 = vadd.f32 %v8104, %v8237
  %8239 = vmatmul.bf16.gmra.mxu0 %v7317
  %v8240 = vpop.f32.mrf.mxu0
  %v8241 = vadd.f32 %v8107, %v8240
  %v8242 = vpop.f32.mrf.mxu0
  %v8243 = vadd.f32 %v8109, %v8242
  %8244 = vmatmul.bf16.gmra.mxu0 %v7325
  %v8245 = vpop.f32.mrf.mxu0
  %v8246 = vadd.f32 %v8112, %v8245
  %v8247 = vpop.f32.mrf.mxu0
  %v8248 = vadd.f32 %v8114, %v8247
  %8249 = vmatmul.bf16.gmra.mxu0 %v7333
  %v8250 = vpop.f32.mrf.mxu0
  %v8251 = vadd.f32 %v8117, %v8250
  %v8252 = vpop.f32.mrf.mxu0
  %v8253 = vadd.f32 %v8119, %v8252
  %8254 = vmatmul.bf16.gmra.mxu0 %v7341
  %v8255 = vpop.f32.mrf.mxu0
  %v8256 = vadd.f32 %v8122, %v8255
  %v8257 = vpop.f32.mrf.mxu0
  %v8258 = vadd.f32 %v8124, %v8257
  %8259 = vmatmul.bf16.gmra.mxu0 %v7349
  %v8260 = vpop.f32.mrf.mxu0
  %v8261 = vadd.f32 %v8127, %v8260
  %v8262 = vpop.f32.mrf.mxu0
  %v8263 = vadd.f32 %v8129, %v8262
  %8264 = vmatmul.bf16.gmra.mxu0 %v7357
  %v8265 = vpop.f32.mrf.mxu0
  %v8266 = vadd.f32 %v8132, %v8265
  %v8267 = vpop.f32.mrf.mxu0
  %v8268 = vadd.f32 %v8134, %v8267
  %8269 = vmatmul.bf16.gmra.mxu0 %v7365
  %v8270 = vpop.f32.mrf.mxu0
  %v8271 = vadd.f32 %v8137, %v8270
  %v8272 = vpop.f32.mrf.mxu0
  %v8273 = vadd.f32 %v8139, %v8272
  %8274 = vmatmul.bf16.gmra.mxu0 %v7373
  %v8275 = vpop.f32.mrf.mxu0
  %v8276 = vadd.f32 %v8142, %v8275
  %v8277 = vpop.f32.mrf.mxu0
  %v8278 = vadd.f32 %v8144, %v8277
  %8279 = vmatmul.bf16.gmra.mxu0 %v7381
  %v8280 = vpop.f32.mrf.mxu0
  %v8281 = vadd.f32 %v8147, %v8280
  %v8282 = vpop.f32.mrf.mxu0
  %v8283 = vadd.f32 %v8149, %v8282
  %8284 = vmatmul.bf16.gmra.mxu0 %v7389
  %v8285 = vpop.f32.mrf.mxu0
  %v8286 = vadd.f32 %v8152, %v8285
  %v8287 = vpop.f32.mrf.mxu0
  %v8288 = vadd.f32 %v8154, %v8287
  %8289 = vmatmul.bf16.gmra.mxu0 %v7397
  %v8290 = vpop.f32.mrf.mxu0
  %v8291 = vadd.f32 %v8157, %v8290
  %v8292 = vpop.f32.mrf.mxu0
  %v8293 = vadd.f32 %v8159, %v8292
  %8294 = vmatmul.bf16.gmra.mxu0 %v7405
  %v8295 = vpop.f32.mrf.mxu0
  %v8296 = vadd.f32 %v8162, %v8295
  %v8297 = vpop.f32.mrf.mxu0
  %v8298 = vadd.f32 %v8164, %v8297
  %8299 = vmatmul.bf16.gmra.mxu0 %v7413
  %v8300 = vpop.f32.mrf.mxu0
  %v8301 = vadd.f32 %v8167, %v8300
  %v8302 = vpop.f32.mrf.mxu0
  %v8303 = vadd.f32 %v8169, %v8302
  %8304 = vmatmul.bf16.gmra.mxu0 %v7421
  %v8305 = vpop.f32.mrf.mxu0
  %v8306 = vadd.f32 %v8172, %v8305
  %v8307 = vpop.f32.mrf.mxu0
  %v8308 = vadd.f32 %v8174, %v8307
  %8309 = vmatmul.bf16.gmra.mxu0 %v7429
  %v8310 = vpop.f32.mrf.mxu0
  %v8311 = vadd.f32 %v8177, %v8310
  %v8312 = vpop.f32.mrf.mxu0
  %v8313 = vadd.f32 %v8179, %v8312
  %8314 = vmatmul.bf16.gmra.mxu0 %v7437
  %v8315 = vpop.f32.mrf.mxu0
  %v8316 = vadd.f32 %v8182, %v8315
  %v8317 = vpop.f32.mrf.mxu0
  %v8318 = vadd.f32 %v8184, %v8317
  %8319 = vmatmul.bf16.gmra.mxu0 %v7445
  %v8320 = vpop.f32.mrf.mxu0
  %v8321 = vadd.f32 %v8187, %v8320
  %v8322 = vpop.f32.mrf.mxu0
  %v8323 = vadd.f32 %v8189, %v8322
  %8324 = vmatmul.bf16.gmra.mxu0 %v7453
  %v8325 = vpop.f32.mrf.mxu0
  %v8326 = vadd.f32 %v8192, %v8325
  %v8327 = vpop.f32.mrf.mxu0
  %v8328 = vadd.f32 %v8194, %v8327
  %8329 = vmatmul.bf16.gmra.mxu0 %v7461
  %v8330 = vpop.f32.mrf.mxu0
  %v8331 = vadd.f32 %v8197, %v8330
  %v8332 = vpop.f32.mrf.mxu0
  %v8333 = vadd.f32 %v8199, %v8332
  %8334 = vmatmul.bf16.gmra.mxu0 %v7469
  %v8335 = vpop.f32.mrf.mxu0
  %v8336 = vadd.f32 %v8202, %v8335
  %v8337 = vpop.f32.mrf.mxu0
  %v8338 = vadd.f32 %v8204, %v8337
  %8339 = vmatmul.bf16.gmra.mxu0 %v7477
  %v8340 = vpop.f32.mrf.mxu0
  %v8341 = vadd.f32 %v8207, %v8340
  %v8342 = vpop.f32.mrf.mxu0
  %v8343 = vadd.f32 %v8209, %v8342
  %8344 = vmatmul.bf16.gmra.mxu0 %v7485
  %v8345 = vpop.f32.mrf.mxu0
  %v8346 = vadd.f32 %v8212, %v8345
  %v8347 = vpop.f32.mrf.mxu0
  %v8348 = vadd.f32 %v8214, %v8347
  %8349 = vmatmul.bf16.gmra.mxu0 %v7493
  %v8350 = vpop.f32.mrf.mxu0
  %v8351 = vadd.f32 %v8217, %v8350
  %v8352 = vpop.f32.mrf.mxu0
  %v8353 = vadd.f32 %v8219, %v8352
  %8354 = vmatmul.bf16.gmra.mxu0 %v7501
  %v8355 = vpop.f32.mrf.mxu0
  %v8356 = vadd.f32 %v8222, %v8355
  %v8357 = vpop.f32.mrf.mxu0
  %v8358 = vadd.f32 %v8224, %v8357
  %8359 = vdwg.mxu0
  %8360 = vmatpush.bf16.msra.mxu0 %v7987
  %8361 = vmatpush.bf16.msra.mxu0 %v7986
  %8362 = vmatpush.bf16.msra.mxu0 %v7985
  %8363 = vmatpush.bf16.msra.mxu0 %v7984
  %8364 = vmatpush.bf16.msra.mxu0 %v7983
  %8365 = vmatpush.bf16.msra.mxu0 %v7982
  %8366 = vmatpush.bf16.msra.mxu0 %v7981
  %8367 = vmatpush.bf16.msra.mxu0 %v7980
  %8368 = vmatmul.bf16.gmra.mxu0 %v7310
  %v8369 = vpop.f32.mrf.mxu0
  %v8370 = vadd.f32 %v8236, %v8369
  %v8371 = vpop.f32.mrf.mxu0
  %v8372 = vadd.f32 %v8238, %v8371
  %8373 = vmatmul.bf16.gmra.mxu0 %v7318
  %v8374 = vpop.f32.mrf.mxu0
  %v8375 = vadd.f32 %v8241, %v8374
  %v8376 = vpop.f32.mrf.mxu0
  %v8377 = vadd.f32 %v8243, %v8376
  %8378 = vmatmul.bf16.gmra.mxu0 %v7326
  %v8379 = vpop.f32.mrf.mxu0
  %v8380 = vadd.f32 %v8246, %v8379
  %v8381 = vpop.f32.mrf.mxu0
  %v8382 = vadd.f32 %v8248, %v8381
  %8383 = vmatmul.bf16.gmra.mxu0 %v7334
  %v8384 = vpop.f32.mrf.mxu0
  %v8385 = vadd.f32 %v8251, %v8384
  %v8386 = vpop.f32.mrf.mxu0
  %v8387 = vadd.f32 %v8253, %v8386
  %8388 = vmatmul.bf16.gmra.mxu0 %v7342
  %v8389 = vpop.f32.mrf.mxu0
  %v8390 = vadd.f32 %v8256, %v8389
  %v8391 = vpop.f32.mrf.mxu0
  %v8392 = vadd.f32 %v8258, %v8391
  %8393 = vmatmul.bf16.gmra.mxu0 %v7350
  %v8394 = vpop.f32.mrf.mxu0
  %v8395 = vadd.f32 %v8261, %v8394
  %v8396 = vpop.f32.mrf.mxu0
  %v8397 = vadd.f32 %v8263, %v8396
  %8398 = vmatmul.bf16.gmra.mxu0 %v7358
  %v8399 = vpop.f32.mrf.mxu0
  %v8400 = vadd.f32 %v8266, %v8399
  %v8401 = vpop.f32.mrf.mxu0
  %v8402 = vadd.f32 %v8268, %v8401
  %8403 = vmatmul.bf16.gmra.mxu0 %v7366
  %v8404 = vpop.f32.mrf.mxu0
  %v8405 = vadd.f32 %v8271, %v8404
  %v8406 = vpop.f32.mrf.mxu0
  %v8407 = vadd.f32 %v8273, %v8406
  %8408 = vmatmul.bf16.gmra.mxu0 %v7374
  %v8409 = vpop.f32.mrf.mxu0
  %v8410 = vadd.f32 %v8276, %v8409
  %v8411 = vpop.f32.mrf.mxu0
  %v8412 = vadd.f32 %v8278, %v8411
  %8413 = vmatmul.bf16.gmra.mxu0 %v7382
  %v8414 = vpop.f32.mrf.mxu0
  %v8415 = vadd.f32 %v8281, %v8414
  %v8416 = vpop.f32.mrf.mxu0
  %v8417 = vadd.f32 %v8283, %v8416
  %8418 = vmatmul.bf16.gmra.mxu0 %v7390
  %v8419 = vpop.f32.mrf.mxu0
  %v8420 = vadd.f32 %v8286, %v8419
  %v8421 = vpop.f32.mrf.mxu0
  %v8422 = vadd.f32 %v8288, %v8421
  %8423 = vmatmul.bf16.gmra.mxu0 %v7398
  %v8424 = vpop.f32.mrf.mxu0
  %v8425 = vadd.f32 %v8291, %v8424
  %v8426 = vpop.f32.mrf.mxu0
  %v8427 = vadd.f32 %v8293, %v8426
  %8428 = vmatmul.bf16.gmra.mxu0 %v7406
  %v8429 = vpop.f32.mrf.mxu0
  %v8430 = vadd.f32 %v8296, %v8429
  %v8431 = vpop.f32.mrf.mxu0
  %v8432 = vadd.f32 %v8298, %v8431
  %8433 = vmatmul.bf16.gmra.mxu0 %v7414
  %v8434 = vpop.f32.mrf.mxu0
  %v8435 = vadd.f32 %v8301, %v8434
  %v8436 = vpop.f32.mrf.mxu0
  %v8437 = vadd.f32 %v8303, %v8436
  %8438 = vmatmul.bf16.gmra.mxu0 %v7422
  %v8439 = vpop.f32.mrf.mxu0
  %v8440 = vadd.f32 %v8306, %v8439
  %v8441 = vpop.f32.mrf.mxu0
  %v8442 = vadd.f32 %v8308, %v8441
  %8443 = vmatmul.bf16.gmra.mxu0 %v7430
  %v8444 = vpop.f32.mrf.mxu0
  %v8445 = vadd.f32 %v8311, %v8444
  %v8446 = vpop.f32.mrf.mxu0
  %v8447 = vadd.f32 %v8313, %v8446
  %8448 = vmatmul.bf16.gmra.mxu0 %v7438
  %v8449 = vpop.f32.mrf.mxu0
  %v8450 = vadd.f32 %v8316, %v8449
  %v8451 = vpop.f32.mrf.mxu0
  %v8452 = vadd.f32 %v8318, %v8451
  %8453 = vmatmul.bf16.gmra.mxu0 %v7446
  %v8454 = vpop.f32.mrf.mxu0
  %v8455 = vadd.f32 %v8321, %v8454
  %v8456 = vpop.f32.mrf.mxu0
  %v8457 = vadd.f32 %v8323, %v8456
  %8458 = vmatmul.bf16.gmra.mxu0 %v7454
  %v8459 = vpop.f32.mrf.mxu0
  %v8460 = vadd.f32 %v8326, %v8459
  %v8461 = vpop.f32.mrf.mxu0
  %v8462 = vadd.f32 %v8328, %v8461
  %8463 = vmatmul.bf16.gmra.mxu0 %v7462
  %v8464 = vpop.f32.mrf.mxu0
  %v8465 = vadd.f32 %v8331, %v8464
  %v8466 = vpop.f32.mrf.mxu0
  %v8467 = vadd.f32 %v8333, %v8466
  %8468 = vmatmul.bf16.gmra.mxu0 %v7470
  %v8469 = vpop.f32.mrf.mxu0
  %v8470 = vadd.f32 %v8336, %v8469
  %v8471 = vpop.f32.mrf.mxu0
  %v8472 = vadd.f32 %v8338, %v8471
  %8473 = vmatmul.bf16.gmra.mxu0 %v7478
  %v8474 = vpop.f32.mrf.mxu0
  %v8475 = vadd.f32 %v8341, %v8474
  %v8476 = vpop.f32.mrf.mxu0
  %v8477 = vadd.f32 %v8343, %v8476
  %8478 = vmatmul.bf16.gmra.mxu0 %v7486
  %v8479 = vpop.f32.mrf.mxu0
  %v8480 = vadd.f32 %v8346, %v8479
  %v8481 = vpop.f32.mrf.mxu0
  %v8482 = vadd.f32 %v8348, %v8481
  %8483 = vmatmul.bf16.gmra.mxu0 %v7494
  %v8484 = vpop.f32.mrf.mxu0
  %v8485 = vadd.f32 %v8351, %v8484
  %v8486 = vpop.f32.mrf.mxu0
  %v8487 = vadd.f32 %v8353, %v8486
  %8488 = vmatmul.bf16.gmra.mxu0 %v7502
  %v8489 = vpop.f32.mrf.mxu0
  %v8490 = vadd.f32 %v8356, %v8489
  %v8491 = vpop.f32.mrf.mxu0
  %v8492 = vadd.f32 %v8358, %v8491
  %8493 = vdwg.mxu0
  %8494 = vmatpush.bf16.msra.mxu0 %v7995
  %8495 = vmatpush.bf16.msra.mxu0 %v7994
  %8496 = vmatpush.bf16.msra.mxu0 %v7993
  %8497 = vmatpush.bf16.msra.mxu0 %v7992
  %8498 = vmatpush.bf16.msra.mxu0 %v7991
  %8499 = vmatpush.bf16.msra.mxu0 %v7990
  %8500 = vmatpush.bf16.msra.mxu0 %v7989
  %8501 = vmatpush.bf16.msra.mxu0 %v7988
  %8502 = vmatmul.bf16.gmra.mxu0 %v7311
  %v8503 = vpop.f32.mrf.mxu0
  %v8504 = vadd.f32 %v8370, %v8503
  %v8505 = vpop.f32.mrf.mxu0
  %v8506 = vadd.f32 %v8372, %v8505
  %8507 = vmatmul.bf16.gmra.mxu0 %v7319
  %v8508 = vpop.f32.mrf.mxu0
  %v8509 = vadd.f32 %v8375, %v8508
  %v8510 = vpop.f32.mrf.mxu0
  %v8511 = vadd.f32 %v8377, %v8510
  %8512 = vmatmul.bf16.gmra.mxu0 %v7327
  %v8513 = vpop.f32.mrf.mxu0
  %v8514 = vadd.f32 %v8380, %v8513
  %v8515 = vpop.f32.mrf.mxu0
  %v8516 = vadd.f32 %v8382, %v8515
  %8517 = vmatmul.bf16.gmra.mxu0 %v7335
  %v8518 = vpop.f32.mrf.mxu0
  %v8519 = vadd.f32 %v8385, %v8518
  %v8520 = vpop.f32.mrf.mxu0
  %v8521 = vadd.f32 %v8387, %v8520
  %8522 = vmatmul.bf16.gmra.mxu0 %v7343
  %v8523 = vpop.f32.mrf.mxu0
  %v8524 = vadd.f32 %v8390, %v8523
  %v8525 = vpop.f32.mrf.mxu0
  %v8526 = vadd.f32 %v8392, %v8525
  %8527 = vmatmul.bf16.gmra.mxu0 %v7351
  %v8528 = vpop.f32.mrf.mxu0
  %v8529 = vadd.f32 %v8395, %v8528
  %v8530 = vpop.f32.mrf.mxu0
  %v8531 = vadd.f32 %v8397, %v8530
  %8532 = vmatmul.bf16.gmra.mxu0 %v7359
  %v8533 = vpop.f32.mrf.mxu0
  %v8534 = vadd.f32 %v8400, %v8533
  %v8535 = vpop.f32.mrf.mxu0
  %v8536 = vadd.f32 %v8402, %v8535
  %8537 = vmatmul.bf16.gmra.mxu0 %v7367
  %v8538 = vpop.f32.mrf.mxu0
  %v8539 = vadd.f32 %v8405, %v8538
  %v8540 = vpop.f32.mrf.mxu0
  %v8541 = vadd.f32 %v8407, %v8540
  %8542 = vmatmul.bf16.gmra.mxu0 %v7375
  %v8543 = vpop.f32.mrf.mxu0
  %v8544 = vadd.f32 %v8410, %v8543
  %v8545 = vpop.f32.mrf.mxu0
  %v8546 = vadd.f32 %v8412, %v8545
  %8547 = vmatmul.bf16.gmra.mxu0 %v7383
  %v8548 = vpop.f32.mrf.mxu0
  %v8549 = vadd.f32 %v8415, %v8548
  %v8550 = vpop.f32.mrf.mxu0
  %v8551 = vadd.f32 %v8417, %v8550
  %8552 = vmatmul.bf16.gmra.mxu0 %v7391
  %v8553 = vpop.f32.mrf.mxu0
  %v8554 = vadd.f32 %v8420, %v8553
  %v8555 = vpop.f32.mrf.mxu0
  %v8556 = vadd.f32 %v8422, %v8555
  %8557 = vmatmul.bf16.gmra.mxu0 %v7399
  %v8558 = vpop.f32.mrf.mxu0
  %v8559 = vadd.f32 %v8425, %v8558
  %v8560 = vpop.f32.mrf.mxu0
  %v8561 = vadd.f32 %v8427, %v8560
  %8562 = vmatmul.bf16.gmra.mxu0 %v7407
  %v8563 = vpop.f32.mrf.mxu0
  %v8564 = vadd.f32 %v8430, %v8563
  %v8565 = vpop.f32.mrf.mxu0
  %v8566 = vadd.f32 %v8432, %v8565
  %8567 = vmatmul.bf16.gmra.mxu0 %v7415
  %v8568 = vpop.f32.mrf.mxu0
  %v8569 = vadd.f32 %v8435, %v8568
  %v8570 = vpop.f32.mrf.mxu0
  %v8571 = vadd.f32 %v8437, %v8570
  %8572 = vmatmul.bf16.gmra.mxu0 %v7423
  %v8573 = vpop.f32.mrf.mxu0
  %v8574 = vadd.f32 %v8440, %v8573
  %v8575 = vpop.f32.mrf.mxu0
  %v8576 = vadd.f32 %v8442, %v8575
  %8577 = vmatmul.bf16.gmra.mxu0 %v7431
  %v8578 = vpop.f32.mrf.mxu0
  %v8579 = vadd.f32 %v8445, %v8578
  %v8580 = vpop.f32.mrf.mxu0
  %v8581 = vadd.f32 %v8447, %v8580
  %8582 = vmatmul.bf16.gmra.mxu0 %v7439
  %v8583 = vpop.f32.mrf.mxu0
  %v8584 = vadd.f32 %v8450, %v8583
  %v8585 = vpop.f32.mrf.mxu0
  %v8586 = vadd.f32 %v8452, %v8585
  %8587 = vmatmul.bf16.gmra.mxu0 %v7447
  %v8588 = vpop.f32.mrf.mxu0
  %v8589 = vadd.f32 %v8455, %v8588
  %v8590 = vpop.f32.mrf.mxu0
  %v8591 = vadd.f32 %v8457, %v8590
  %8592 = vmatmul.bf16.gmra.mxu0 %v7455
  %v8593 = vpop.f32.mrf.mxu0
  %v8594 = vadd.f32 %v8460, %v8593
  %v8595 = vpop.f32.mrf.mxu0
  %v8596 = vadd.f32 %v8462, %v8595
  %8597 = vmatmul.bf16.gmra.mxu0 %v7463
  %v8598 = vpop.f32.mrf.mxu0
  %v8599 = vadd.f32 %v8465, %v8598
  %v8600 = vpop.f32.mrf.mxu0
  %v8601 = vadd.f32 %v8467, %v8600
  %8602 = vmatmul.bf16.gmra.mxu0 %v7471
  %v8603 = vpop.f32.mrf.mxu0
  %v8604 = vadd.f32 %v8470, %v8603
  %v8605 = vpop.f32.mrf.mxu0
  %v8606 = vadd.f32 %v8472, %v8605
  %8607 = vmatmul.bf16.gmra.mxu0 %v7479
  %v8608 = vpop.f32.mrf.mxu0
  %v8609 = vadd.f32 %v8475, %v8608
  %v8610 = vpop.f32.mrf.mxu0
  %v8611 = vadd.f32 %v8477, %v8610
  %8612 = vmatmul.bf16.gmra.mxu0 %v7487
  %v8613 = vpop.f32.mrf.mxu0
  %v8614 = vadd.f32 %v8480, %v8613
  %v8615 = vpop.f32.mrf.mxu0
  %v8616 = vadd.f32 %v8482, %v8615
  %8617 = vmatmul.bf16.gmra.mxu0 %v7495
  %v8618 = vpop.f32.mrf.mxu0
  %v8619 = vadd.f32 %v8485, %v8618
  %v8620 = vpop.f32.mrf.mxu0
  %v8621 = vadd.f32 %v8487, %v8620
  %8622 = vmatmul.bf16.gmra.mxu0 %v7503
  %v8623 = vpop.f32.mrf.mxu0
  %v8624 = vadd.f32 %v8490, %v8623
  %v8625 = vpop.f32.mrf.mxu0
  %v8626 = vadd.f32 %v8492, %v8625
  %8627 = vdwg.mxu0
  %8628 = vmatpush.bf16.msra.mxu0 %v8003
  %8629 = vmatpush.bf16.msra.mxu0 %v8002
  %8630 = vmatpush.bf16.msra.mxu0 %v8001
  %8631 = vmatpush.bf16.msra.mxu0 %v8000
  %8632 = vmatpush.bf16.msra.mxu0 %v7999
  %8633 = vmatpush.bf16.msra.mxu0 %v7998
  %8634 = vmatpush.bf16.msra.mxu0 %v7997
  %8635 = vmatpush.bf16.msra.mxu0 %v7996
  %8636 = vmatmul.bf16.gmra.mxu0 %v7312
  %v8637 = vpop.f32.mrf.mxu0
  %v8638 = vadd.f32 %v8504, %v8637
  %v8639 = vpop.f32.mrf.mxu0
  %v8640 = vadd.f32 %v8506, %v8639
  %8641 = vmatmul.bf16.gmra.mxu0 %v7320
  %v8642 = vpop.f32.mrf.mxu0
  %v8643 = vadd.f32 %v8509, %v8642
  %v8644 = vpop.f32.mrf.mxu0
  %v8645 = vadd.f32 %v8511, %v8644
  %8646 = vmatmul.bf16.gmra.mxu0 %v7328
  %v8647 = vpop.f32.mrf.mxu0
  %v8648 = vadd.f32 %v8514, %v8647
  %v8649 = vpop.f32.mrf.mxu0
  %v8650 = vadd.f32 %v8516, %v8649
  %8651 = vmatmul.bf16.gmra.mxu0 %v7336
  %v8652 = vpop.f32.mrf.mxu0
  %v8653 = vadd.f32 %v8519, %v8652
  %v8654 = vpop.f32.mrf.mxu0
  %v8655 = vadd.f32 %v8521, %v8654
  %8656 = vmatmul.bf16.gmra.mxu0 %v7344
  %v8657 = vpop.f32.mrf.mxu0
  %v8658 = vadd.f32 %v8524, %v8657
  %v8659 = vpop.f32.mrf.mxu0
  %v8660 = vadd.f32 %v8526, %v8659
  %8661 = vmatmul.bf16.gmra.mxu0 %v7352
  %v8662 = vpop.f32.mrf.mxu0
  %v8663 = vadd.f32 %v8529, %v8662
  %v8664 = vpop.f32.mrf.mxu0
  %v8665 = vadd.f32 %v8531, %v8664
  %8666 = vmatmul.bf16.gmra.mxu0 %v7360
  %v8667 = vpop.f32.mrf.mxu0
  %v8668 = vadd.f32 %v8534, %v8667
  %v8669 = vpop.f32.mrf.mxu0
  %v8670 = vadd.f32 %v8536, %v8669
  %8671 = vmatmul.bf16.gmra.mxu0 %v7368
  %v8672 = vpop.f32.mrf.mxu0
  %v8673 = vadd.f32 %v8539, %v8672
  %v8674 = vpop.f32.mrf.mxu0
  %v8675 = vadd.f32 %v8541, %v8674
  %8676 = vmatmul.bf16.gmra.mxu0 %v7376
  %v8677 = vpop.f32.mrf.mxu0
  %v8678 = vadd.f32 %v8544, %v8677
  %v8679 = vpop.f32.mrf.mxu0
  %v8680 = vadd.f32 %v8546, %v8679
  %8681 = vmatmul.bf16.gmra.mxu0 %v7384
  %v8682 = vpop.f32.mrf.mxu0
  %v8683 = vadd.f32 %v8549, %v8682
  %v8684 = vpop.f32.mrf.mxu0
  %v8685 = vadd.f32 %v8551, %v8684
  %8686 = vmatmul.bf16.gmra.mxu0 %v7392
  %v8687 = vpop.f32.mrf.mxu0
  %v8688 = vadd.f32 %v8554, %v8687
  %v8689 = vpop.f32.mrf.mxu0
  %v8690 = vadd.f32 %v8556, %v8689
  %8691 = vmatmul.bf16.gmra.mxu0 %v7400
  %v8692 = vpop.f32.mrf.mxu0
  %v8693 = vadd.f32 %v8559, %v8692
  %v8694 = vpop.f32.mrf.mxu0
  %v8695 = vadd.f32 %v8561, %v8694
  %8696 = vmatmul.bf16.gmra.mxu0 %v7408
  %v8697 = vpop.f32.mrf.mxu0
  %v8698 = vadd.f32 %v8564, %v8697
  %v8699 = vpop.f32.mrf.mxu0
  %v8700 = vadd.f32 %v8566, %v8699
  %8701 = vmatmul.bf16.gmra.mxu0 %v7416
  %v8702 = vpop.f32.mrf.mxu0
  %v8703 = vadd.f32 %v8569, %v8702
  %v8704 = vpop.f32.mrf.mxu0
  %v8705 = vadd.f32 %v8571, %v8704
  %8706 = vmatmul.bf16.gmra.mxu0 %v7424
  %v8707 = vpop.f32.mrf.mxu0
  %v8708 = vadd.f32 %v8574, %v8707
  %v8709 = vpop.f32.mrf.mxu0
  %v8710 = vadd.f32 %v8576, %v8709
  %8711 = vmatmul.bf16.gmra.mxu0 %v7432
  %v8712 = vpop.f32.mrf.mxu0
  %v8713 = vadd.f32 %v8579, %v8712
  %v8714 = vpop.f32.mrf.mxu0
  %v8715 = vadd.f32 %v8581, %v8714
  %8716 = vmatmul.bf16.gmra.mxu0 %v7440
  %v8717 = vpop.f32.mrf.mxu0
  %v8718 = vadd.f32 %v8584, %v8717
  %v8719 = vpop.f32.mrf.mxu0
  %v8720 = vadd.f32 %v8586, %v8719
  %8721 = vmatmul.bf16.gmra.mxu0 %v7448
  %v8722 = vpop.f32.mrf.mxu0
  %v8723 = vadd.f32 %v8589, %v8722
  %v8724 = vpop.f32.mrf.mxu0
  %v8725 = vadd.f32 %v8591, %v8724
  %8726 = vmatmul.bf16.gmra.mxu0 %v7456
  %v8727 = vpop.f32.mrf.mxu0
  %v8728 = vadd.f32 %v8594, %v8727
  %v8729 = vpop.f32.mrf.mxu0
  %v8730 = vadd.f32 %v8596, %v8729
  %8731 = vmatmul.bf16.gmra.mxu0 %v7464
  %v8732 = vpop.f32.mrf.mxu0
  %v8733 = vadd.f32 %v8599, %v8732
  %v8734 = vpop.f32.mrf.mxu0
  %v8735 = vadd.f32 %v8601, %v8734
  %8736 = vmatmul.bf16.gmra.mxu0 %v7472
  %v8737 = vpop.f32.mrf.mxu0
  %v8738 = vadd.f32 %v8604, %v8737
  %v8739 = vpop.f32.mrf.mxu0
  %v8740 = vadd.f32 %v8606, %v8739
  %8741 = vmatmul.bf16.gmra.mxu0 %v7480
  %v8742 = vpop.f32.mrf.mxu0
  %v8743 = vadd.f32 %v8609, %v8742
  %v8744 = vpop.f32.mrf.mxu0
  %v8745 = vadd.f32 %v8611, %v8744
  %8746 = vmatmul.bf16.gmra.mxu0 %v7488
  %v8747 = vpop.f32.mrf.mxu0
  %v8748 = vadd.f32 %v8614, %v8747
  %v8749 = vpop.f32.mrf.mxu0
  %v8750 = vadd.f32 %v8616, %v8749
  %8751 = vmatmul.bf16.gmra.mxu0 %v7496
  %v8752 = vpop.f32.mrf.mxu0
  %v8753 = vadd.f32 %v8619, %v8752
  %v8754 = vpop.f32.mrf.mxu0
  %v8755 = vadd.f32 %v8621, %v8754
  %8756 = vmatmul.bf16.gmra.mxu0 %v7504
  %v8757 = vpop.f32.mrf.mxu0
  %v8758 = vadd.f32 %v8624, %v8757
  %v8759 = vpop.f32.mrf.mxu0
  %v8760 = vadd.f32 %v8626, %v8759
  %8761 = vdwg.mxu0
  %8762 = vmatpush.bf16.msra.mxu0 %v8011
  %8763 = vmatpush.bf16.msra.mxu0 %v8010
  %8764 = vmatpush.bf16.msra.mxu0 %v8009
  %8765 = vmatpush.bf16.msra.mxu0 %v8008
  %8766 = vmatpush.bf16.msra.mxu0 %v8007
  %8767 = vmatpush.bf16.msra.mxu0 %v8006
  %8768 = vmatpush.bf16.msra.mxu0 %v8005
  %8769 = vmatpush.bf16.msra.mxu0 %v8004
  %8770 = vmatmul.bf16.gmra.mxu0 %v7313
  %v8771 = vpop.f32.mrf.mxu0
  %v8772 = vadd.f32 %v8638, %v8771
  %v8773 = vpop.f32.mrf.mxu0
  %v8774 = vadd.f32 %v8640, %v8773
  %8775 = vmatmul.bf16.gmra.mxu0 %v7321
  %v8776 = vpop.f32.mrf.mxu0
  %v8777 = vadd.f32 %v8643, %v8776
  %v8778 = vpop.f32.mrf.mxu0
  %v8779 = vadd.f32 %v8645, %v8778
  %8780 = vmatmul.bf16.gmra.mxu0 %v7329
  %v8781 = vpop.f32.mrf.mxu0
  %v8782 = vadd.f32 %v8648, %v8781
  %v8783 = vpop.f32.mrf.mxu0
  %v8784 = vadd.f32 %v8650, %v8783
  %8785 = vmatmul.bf16.gmra.mxu0 %v7337
  %v8786 = vpop.f32.mrf.mxu0
  %v8787 = vadd.f32 %v8653, %v8786
  %v8788 = vpop.f32.mrf.mxu0
  %v8789 = vadd.f32 %v8655, %v8788
  %8790 = vmatmul.bf16.gmra.mxu0 %v7345
  %v8791 = vpop.f32.mrf.mxu0
  %v8792 = vadd.f32 %v8658, %v8791
  %v8793 = vpop.f32.mrf.mxu0
  %v8794 = vadd.f32 %v8660, %v8793
  %8795 = vmatmul.bf16.gmra.mxu0 %v7353
  %v8796 = vpop.f32.mrf.mxu0
  %v8797 = vadd.f32 %v8663, %v8796
  %v8798 = vpop.f32.mrf.mxu0
  %v8799 = vadd.f32 %v8665, %v8798
  %8800 = vmatmul.bf16.gmra.mxu0 %v7361
  %v8801 = vpop.f32.mrf.mxu0
  %v8802 = vadd.f32 %v8668, %v8801
  %v8803 = vpop.f32.mrf.mxu0
  %v8804 = vadd.f32 %v8670, %v8803
  %8805 = vmatmul.bf16.gmra.mxu0 %v7369
  %v8806 = vpop.f32.mrf.mxu0
  %v8807 = vadd.f32 %v8673, %v8806
  %v8808 = vpop.f32.mrf.mxu0
  %v8809 = vadd.f32 %v8675, %v8808
  %8810 = vmatmul.bf16.gmra.mxu0 %v7377
  %v8811 = vpop.f32.mrf.mxu0
  %v8812 = vadd.f32 %v8678, %v8811
  %v8813 = vpop.f32.mrf.mxu0
  %v8814 = vadd.f32 %v8680, %v8813
  %8815 = vmatmul.bf16.gmra.mxu0 %v7385
  %v8816 = vpop.f32.mrf.mxu0
  %v8817 = vadd.f32 %v8683, %v8816
  %v8818 = vpop.f32.mrf.mxu0
  %v8819 = vadd.f32 %v8685, %v8818
  %8820 = vmatmul.bf16.gmra.mxu0 %v7393
  %v8821 = vpop.f32.mrf.mxu0
  %v8822 = vadd.f32 %v8688, %v8821
  %v8823 = vpop.f32.mrf.mxu0
  %v8824 = vadd.f32 %v8690, %v8823
  %8825 = vmatmul.bf16.gmra.mxu0 %v7401
  %v8826 = vpop.f32.mrf.mxu0
  %v8827 = vadd.f32 %v8693, %v8826
  %v8828 = vpop.f32.mrf.mxu0
  %v8829 = vadd.f32 %v8695, %v8828
  %8830 = vmatmul.bf16.gmra.mxu0 %v7409
  %v8831 = vpop.f32.mrf.mxu0
  %v8832 = vadd.f32 %v8698, %v8831
  %v8833 = vpop.f32.mrf.mxu0
  %v8834 = vadd.f32 %v8700, %v8833
  %8835 = vmatmul.bf16.gmra.mxu0 %v7417
  %v8836 = vpop.f32.mrf.mxu0
  %v8837 = vadd.f32 %v8703, %v8836
  %v8838 = vpop.f32.mrf.mxu0
  %v8839 = vadd.f32 %v8705, %v8838
  %8840 = vmatmul.bf16.gmra.mxu0 %v7425
  %v8841 = vpop.f32.mrf.mxu0
  %v8842 = vadd.f32 %v8708, %v8841
  %v8843 = vpop.f32.mrf.mxu0
  %v8844 = vadd.f32 %v8710, %v8843
  %8845 = vmatmul.bf16.gmra.mxu0 %v7433
  %v8846 = vpop.f32.mrf.mxu0
  %v8847 = vadd.f32 %v8713, %v8846
  %v8848 = vpop.f32.mrf.mxu0
  %v8849 = vadd.f32 %v8715, %v8848
  %8850 = vmatmul.bf16.gmra.mxu0 %v7441
  %v8851 = vpop.f32.mrf.mxu0
  %v8852 = vadd.f32 %v8718, %v8851
  %v8853 = vpop.f32.mrf.mxu0
  %v8854 = vadd.f32 %v8720, %v8853
  %8855 = vmatmul.bf16.gmra.mxu0 %v7449
  %v8856 = vpop.f32.mrf.mxu0
  %v8857 = vadd.f32 %v8723, %v8856
  %v8858 = vpop.f32.mrf.mxu0
  %v8859 = vadd.f32 %v8725, %v8858
  %8860 = vmatmul.bf16.gmra.mxu0 %v7457
  %v8861 = vpop.f32.mrf.mxu0
  %v8862 = vadd.f32 %v8728, %v8861
  %v8863 = vpop.f32.mrf.mxu0
  %v8864 = vadd.f32 %v8730, %v8863
  %8865 = vmatmul.bf16.gmra.mxu0 %v7465
  %v8866 = vpop.f32.mrf.mxu0
  %v8867 = vadd.f32 %v8733, %v8866
  %v8868 = vpop.f32.mrf.mxu0
  %v8869 = vadd.f32 %v8735, %v8868
  %8870 = vmatmul.bf16.gmra.mxu0 %v7473
  %v8871 = vpop.f32.mrf.mxu0
  %v8872 = vadd.f32 %v8738, %v8871
  %v8873 = vpop.f32.mrf.mxu0
  %v8874 = vadd.f32 %v8740, %v8873
  %8875 = vmatmul.bf16.gmra.mxu0 %v7481
  %v8876 = vpop.f32.mrf.mxu0
  %v8877 = vadd.f32 %v8743, %v8876
  %v8878 = vpop.f32.mrf.mxu0
  %v8879 = vadd.f32 %v8745, %v8878
  %8880 = vmatmul.bf16.gmra.mxu0 %v7489
  %v8881 = vpop.f32.mrf.mxu0
  %v8882 = vadd.f32 %v8748, %v8881
  %v8883 = vpop.f32.mrf.mxu0
  %v8884 = vadd.f32 %v8750, %v8883
  %8885 = vmatmul.bf16.gmra.mxu0 %v7497
  %v8886 = vpop.f32.mrf.mxu0
  %v8887 = vadd.f32 %v8753, %v8886
  %v8888 = vpop.f32.mrf.mxu0
  %v8889 = vadd.f32 %v8755, %v8888
  %8890 = vmatmul.bf16.gmra.mxu0 %v7505
  %v8891 = vpop.f32.mrf.mxu0
  %v8892 = vadd.f32 %v8758, %v8891
  %v8893 = vpop.f32.mrf.mxu0
  %v8894 = vadd.f32 %v8760, %v8893
  %8895 = vdwg.mxu0
  %8896 = vmatpush.bf16.msra.mxu0 %v8019
  %8897 = vmatpush.bf16.msra.mxu0 %v8018
  %8898 = vmatpush.bf16.msra.mxu0 %v8017
  %8899 = vmatpush.bf16.msra.mxu0 %v8016
  %8900 = vmatpush.bf16.msra.mxu0 %v8015
  %8901 = vmatpush.bf16.msra.mxu0 %v8014
  %8902 = vmatpush.bf16.msra.mxu0 %v8013
  %8903 = vmatpush.bf16.msra.mxu0 %v8012
  %8904 = vmatmul.bf16.gmra.mxu0 %v7314
  %v8905 = vpop.f32.mrf.mxu0
  %v8906 = vadd.f32 %v8772, %v8905
  %v8907 = vpop.f32.mrf.mxu0
  %v8908 = vadd.f32 %v8774, %v8907
  %8909 = vmatmul.bf16.gmra.mxu0 %v7322
  %v8910 = vpop.f32.mrf.mxu0
  %v8911 = vadd.f32 %v8777, %v8910
  %v8912 = vpop.f32.mrf.mxu0
  %v8913 = vadd.f32 %v8779, %v8912
  %8914 = vmatmul.bf16.gmra.mxu0 %v7330
  %v8915 = vpop.f32.mrf.mxu0
  %v8916 = vadd.f32 %v8782, %v8915
  %v8917 = vpop.f32.mrf.mxu0
  %v8918 = vadd.f32 %v8784, %v8917
  %8919 = vmatmul.bf16.gmra.mxu0 %v7338
  %v8920 = vpop.f32.mrf.mxu0
  %v8921 = vadd.f32 %v8787, %v8920
  %v8922 = vpop.f32.mrf.mxu0
  %v8923 = vadd.f32 %v8789, %v8922
  %8924 = vmatmul.bf16.gmra.mxu0 %v7346
  %v8925 = vpop.f32.mrf.mxu0
  %v8926 = vadd.f32 %v8792, %v8925
  %v8927 = vpop.f32.mrf.mxu0
  %v8928 = vadd.f32 %v8794, %v8927
  %8929 = vmatmul.bf16.gmra.mxu0 %v7354
  %v8930 = vpop.f32.mrf.mxu0
  %v8931 = vadd.f32 %v8797, %v8930
  %v8932 = vpop.f32.mrf.mxu0
  %v8933 = vadd.f32 %v8799, %v8932
  %8934 = vmatmul.bf16.gmra.mxu0 %v7362
  %v8935 = vpop.f32.mrf.mxu0
  %v8936 = vadd.f32 %v8802, %v8935
  %v8937 = vpop.f32.mrf.mxu0
  %v8938 = vadd.f32 %v8804, %v8937
  %8939 = vmatmul.bf16.gmra.mxu0 %v7370
  %v8940 = vpop.f32.mrf.mxu0
  %v8941 = vadd.f32 %v8807, %v8940
  %v8942 = vpop.f32.mrf.mxu0
  %v8943 = vadd.f32 %v8809, %v8942
  %8944 = vmatmul.bf16.gmra.mxu0 %v7378
  %v8945 = vpop.f32.mrf.mxu0
  %v8946 = vadd.f32 %v8812, %v8945
  %v8947 = vpop.f32.mrf.mxu0
  %v8948 = vadd.f32 %v8814, %v8947
  %8949 = vmatmul.bf16.gmra.mxu0 %v7386
  %v8950 = vpop.f32.mrf.mxu0
  %v8951 = vadd.f32 %v8817, %v8950
  %v8952 = vpop.f32.mrf.mxu0
  %v8953 = vadd.f32 %v8819, %v8952
  %8954 = vmatmul.bf16.gmra.mxu0 %v7394
  %v8955 = vpop.f32.mrf.mxu0
  %v8956 = vadd.f32 %v8822, %v8955
  %v8957 = vpop.f32.mrf.mxu0
  %v8958 = vadd.f32 %v8824, %v8957
  %8959 = vmatmul.bf16.gmra.mxu0 %v7402
  %v8960 = vpop.f32.mrf.mxu0
  %v8961 = vadd.f32 %v8827, %v8960
  %v8962 = vpop.f32.mrf.mxu0
  %v8963 = vadd.f32 %v8829, %v8962
  %8964 = vmatmul.bf16.gmra.mxu0 %v7410
  %v8965 = vpop.f32.mrf.mxu0
  %v8966 = vadd.f32 %v8832, %v8965
  %v8967 = vpop.f32.mrf.mxu0
  %v8968 = vadd.f32 %v8834, %v8967
  %8969 = vmatmul.bf16.gmra.mxu0 %v7418
  %v8970 = vpop.f32.mrf.mxu0
  %v8971 = vadd.f32 %v8837, %v8970
  %v8972 = vpop.f32.mrf.mxu0
  %v8973 = vadd.f32 %v8839, %v8972
  %8974 = vmatmul.bf16.gmra.mxu0 %v7426
  %v8975 = vpop.f32.mrf.mxu0
  %v8976 = vadd.f32 %v8842, %v8975
  %v8977 = vpop.f32.mrf.mxu0
  %v8978 = vadd.f32 %v8844, %v8977
  %8979 = vmatmul.bf16.gmra.mxu0 %v7434
  %v8980 = vpop.f32.mrf.mxu0
  %v8981 = vadd.f32 %v8847, %v8980
  %v8982 = vpop.f32.mrf.mxu0
  %v8983 = vadd.f32 %v8849, %v8982
  %8984 = vmatmul.bf16.gmra.mxu0 %v7442
  %v8985 = vpop.f32.mrf.mxu0
  %v8986 = vadd.f32 %v8852, %v8985
  %v8987 = vpop.f32.mrf.mxu0
  %v8988 = vadd.f32 %v8854, %v8987
  %8989 = vmatmul.bf16.gmra.mxu0 %v7450
  %v8990 = vpop.f32.mrf.mxu0
  %v8991 = vadd.f32 %v8857, %v8990
  %v8992 = vpop.f32.mrf.mxu0
  %v8993 = vadd.f32 %v8859, %v8992
  %8994 = vmatmul.bf16.gmra.mxu0 %v7458
  %v8995 = vpop.f32.mrf.mxu0
  %v8996 = vadd.f32 %v8862, %v8995
  %v8997 = vpop.f32.mrf.mxu0
  %v8998 = vadd.f32 %v8864, %v8997
  %8999 = vmatmul.bf16.gmra.mxu0 %v7466
  %v9000 = vpop.f32.mrf.mxu0
  %v9001 = vadd.f32 %v8867, %v9000
  %v9002 = vpop.f32.mrf.mxu0
  %v9003 = vadd.f32 %v8869, %v9002
  %9004 = vmatmul.bf16.gmra.mxu0 %v7474
  %v9005 = vpop.f32.mrf.mxu0
  %v9006 = vadd.f32 %v8872, %v9005
  %v9007 = vpop.f32.mrf.mxu0
  %v9008 = vadd.f32 %v8874, %v9007
  %9009 = vmatmul.bf16.gmra.mxu0 %v7482
  %v9010 = vpop.f32.mrf.mxu0
  %v9011 = vadd.f32 %v8877, %v9010
  %v9012 = vpop.f32.mrf.mxu0
  %v9013 = vadd.f32 %v8879, %v9012
  %9014 = vmatmul.bf16.gmra.mxu0 %v7490
  %v9015 = vpop.f32.mrf.mxu0
  %v9016 = vadd.f32 %v8882, %v9015
  %v9017 = vpop.f32.mrf.mxu0
  %v9018 = vadd.f32 %v8884, %v9017
  %9019 = vmatmul.bf16.gmra.mxu0 %v7498
  %v9020 = vpop.f32.mrf.mxu0
  %v9021 = vadd.f32 %v8887, %v9020
  %v9022 = vpop.f32.mrf.mxu0
  %v9023 = vadd.f32 %v8889, %v9022
  %9024 = vmatmul.bf16.gmra.mxu0 %v7506
  %v9025 = vpop.f32.mrf.mxu0
  %v9026 = vadd.f32 %v8892, %v9025
  %v9027 = vpop.f32.mrf.mxu0
  %v9028 = vadd.f32 %v8894, %v9027
  %9029 = vdwg.mxu0
  %9030 = vmatpush.bf16.msra.mxu0 %v8027
  %9031 = vmatpush.bf16.msra.mxu0 %v8026
  %9032 = vmatpush.bf16.msra.mxu0 %v8025
  %9033 = vmatpush.bf16.msra.mxu0 %v8024
  %9034 = vmatpush.bf16.msra.mxu0 %v8023
  %9035 = vmatpush.bf16.msra.mxu0 %v8022
  %9036 = vmatpush.bf16.msra.mxu0 %v8021
  %9037 = vmatpush.bf16.msra.mxu0 %v8020
  %9038 = vmatmul.bf16.gmra.mxu0 %v7315
  %v9039 = vpop.f32.mrf.mxu0
  %v9040 = vadd.f32 %v8906, %v9039
  %v9041 = vpop.f32.mrf.mxu0
  %v9042 = vadd.f32 %v8908, %v9041
  %9043 = vmatmul.bf16.gmra.mxu0 %v7323
  %v9044 = vpop.f32.mrf.mxu0
  %v9045 = vadd.f32 %v8911, %v9044
  %v9046 = vpop.f32.mrf.mxu0
  %v9047 = vadd.f32 %v8913, %v9046
  %9048 = vmatmul.bf16.gmra.mxu0 %v7331
  %v9049 = vpop.f32.mrf.mxu0
  %v9050 = vadd.f32 %v8916, %v9049
  %v9051 = vpop.f32.mrf.mxu0
  %v9052 = vadd.f32 %v8918, %v9051
  %9053 = vmatmul.bf16.gmra.mxu0 %v7339
  %v9054 = vpop.f32.mrf.mxu0
  %v9055 = vadd.f32 %v8921, %v9054
  %v9056 = vpop.f32.mrf.mxu0
  %v9057 = vadd.f32 %v8923, %v9056
  %9058 = vmatmul.bf16.gmra.mxu0 %v7347
  %v9059 = vpop.f32.mrf.mxu0
  %v9060 = vadd.f32 %v8926, %v9059
  %v9061 = vpop.f32.mrf.mxu0
  %v9062 = vadd.f32 %v8928, %v9061
  %9063 = vmatmul.bf16.gmra.mxu0 %v7355
  %v9064 = vpop.f32.mrf.mxu0
  %v9065 = vadd.f32 %v8931, %v9064
  %v9066 = vpop.f32.mrf.mxu0
  %v9067 = vadd.f32 %v8933, %v9066
  %9068 = vmatmul.bf16.gmra.mxu0 %v7363
  %v9069 = vpop.f32.mrf.mxu0
  %v9070 = vadd.f32 %v8936, %v9069
  %v9071 = vpop.f32.mrf.mxu0
  %v9072 = vadd.f32 %v8938, %v9071
  %9073 = vmatmul.bf16.gmra.mxu0 %v7371
  %v9074 = vpop.f32.mrf.mxu0
  %v9075 = vadd.f32 %v8941, %v9074
  %v9076 = vpop.f32.mrf.mxu0
  %v9077 = vadd.f32 %v8943, %v9076
  %9078 = vmatmul.bf16.gmra.mxu0 %v7379
  %v9079 = vpop.f32.mrf.mxu0
  %v9080 = vadd.f32 %v8946, %v9079
  %v9081 = vpop.f32.mrf.mxu0
  %v9082 = vadd.f32 %v8948, %v9081
  %9083 = vmatmul.bf16.gmra.mxu0 %v7387
  %v9084 = vpop.f32.mrf.mxu0
  %v9085 = vadd.f32 %v8951, %v9084
  %v9086 = vpop.f32.mrf.mxu0
  %v9087 = vadd.f32 %v8953, %v9086
  %9088 = vmatmul.bf16.gmra.mxu0 %v7395
  %v9089 = vpop.f32.mrf.mxu0
  %v9090 = vadd.f32 %v8956, %v9089
  %v9091 = vpop.f32.mrf.mxu0
  %v9092 = vadd.f32 %v8958, %v9091
  %9093 = vmatmul.bf16.gmra.mxu0 %v7403
  %v9094 = vpop.f32.mrf.mxu0
  %v9095 = vadd.f32 %v8961, %v9094
  %v9096 = vpop.f32.mrf.mxu0
  %v9097 = vadd.f32 %v8963, %v9096
  %9098 = vmatmul.bf16.gmra.mxu0 %v7411
  %v9099 = vpop.f32.mrf.mxu0
  %v9100 = vadd.f32 %v8966, %v9099
  %v9101 = vpop.f32.mrf.mxu0
  %v9102 = vadd.f32 %v8968, %v9101
  %9103 = vmatmul.bf16.gmra.mxu0 %v7419
  %v9104 = vpop.f32.mrf.mxu0
  %v9105 = vadd.f32 %v8971, %v9104
  %v9106 = vpop.f32.mrf.mxu0
  %v9107 = vadd.f32 %v8973, %v9106
  %9108 = vmatmul.bf16.gmra.mxu0 %v7427
  %v9109 = vpop.f32.mrf.mxu0
  %v9110 = vadd.f32 %v8976, %v9109
  %v9111 = vpop.f32.mrf.mxu0
  %v9112 = vadd.f32 %v8978, %v9111
  %9113 = vmatmul.bf16.gmra.mxu0 %v7435
  %v9114 = vpop.f32.mrf.mxu0
  %v9115 = vadd.f32 %v8981, %v9114
  %v9116 = vpop.f32.mrf.mxu0
  %v9117 = vadd.f32 %v8983, %v9116
  %9118 = vmatmul.bf16.gmra.mxu0 %v7443
  %v9119 = vpop.f32.mrf.mxu0
  %v9120 = vadd.f32 %v8986, %v9119
  %v9121 = vpop.f32.mrf.mxu0
  %v9122 = vadd.f32 %v8988, %v9121
  %9123 = vmatmul.bf16.gmra.mxu0 %v7451
  %v9124 = vpop.f32.mrf.mxu0
  %v9125 = vadd.f32 %v8991, %v9124
  %v9126 = vpop.f32.mrf.mxu0
  %v9127 = vadd.f32 %v8993, %v9126
  %9128 = vmatmul.bf16.gmra.mxu0 %v7459
  %v9129 = vpop.f32.mrf.mxu0
  %v9130 = vadd.f32 %v8996, %v9129
  %v9131 = vpop.f32.mrf.mxu0
  %v9132 = vadd.f32 %v8998, %v9131
  %9133 = vmatmul.bf16.gmra.mxu0 %v7467
  %v9134 = vpop.f32.mrf.mxu0
  %v9135 = vadd.f32 %v9001, %v9134
  %v9136 = vpop.f32.mrf.mxu0
  %v9137 = vadd.f32 %v9003, %v9136
  %9138 = vmatmul.bf16.gmra.mxu0 %v7475
  %v9139 = vpop.f32.mrf.mxu0
  %v9140 = vadd.f32 %v9006, %v9139
  %v9141 = vpop.f32.mrf.mxu0
  %v9142 = vadd.f32 %v9008, %v9141
  %9143 = vmatmul.bf16.gmra.mxu0 %v7483
  %v9144 = vpop.f32.mrf.mxu0
  %v9145 = vadd.f32 %v9011, %v9144
  %v9146 = vpop.f32.mrf.mxu0
  %v9147 = vadd.f32 %v9013, %v9146
  %9148 = vmatmul.bf16.gmra.mxu0 %v7491
  %v9149 = vpop.f32.mrf.mxu0
  %v9150 = vadd.f32 %v9016, %v9149
  %v9151 = vpop.f32.mrf.mxu0
  %v9152 = vadd.f32 %v9018, %v9151
  %9153 = vmatmul.bf16.gmra.mxu0 %v7499
  %v9154 = vpop.f32.mrf.mxu0
  %v9155 = vadd.f32 %v9021, %v9154
  %v9156 = vpop.f32.mrf.mxu0
  %v9157 = vadd.f32 %v9023, %v9156
  %9158 = vmatmul.bf16.gmra.mxu0 %v7507
  %v9159 = vpop.f32.mrf.mxu0
  %v9160 = vadd.f32 %v9026, %v9159
  %v9161 = vpop.f32.mrf.mxu0
  %v9162 = vadd.f32 %v9028, %v9161
  %9163 = vdwg.mxu0
  %v9164 = vadd.f32 %v9040, %v9042
  %v9165 = vadd.f32 %v9164, %v9045
  %v9166 = vadd.f32 %v9165, %v9047
  %v9167 = vadd.f32 %v9166, %v9050
  %v9168 = vadd.f32 %v9167, %v9052
  %v9169 = vadd.f32 %v9168, %v9055
  %v9170 = vadd.f32 %v9169, %v9057
  %v9171 = vadd.f32 %v9170, %v9060
  %v9172 = vadd.f32 %v9171, %v9062
  %v9173 = vadd.f32 %v9172, %v9065
  %v9174 = vadd.f32 %v9173, %v9067
  %v9175 = vadd.f32 %v9174, %v9070
  %v9176 = vadd.f32 %v9175, %v9072
  %v9177 = vadd.f32 %v9176, %v9075
  %v9178 = vadd.f32 %v9177, %v9077
  %v9179 = vadd.f32 %v9178, %v9080
  %v9180 = vadd.f32 %v9179, %v9082
  %v9181 = vadd.f32 %v9180, %v9085
  %v9182 = vadd.f32 %v9181, %v9087
  %v9183 = vadd.f32 %v9182, %v9090
  %v9184 = vadd.f32 %v9183, %v9092
  %v9185 = vadd.f32 %v9184, %v9095
  %v9186 = vadd.f32 %v9185, %v9097
  %v9187 = vadd.f32 %v9186, %v9100
  %v9188 = vadd.f32 %v9187, %v9102
  %v9189 = vadd.f32 %v9188, %v9105
  %v9190 = vadd.f32 %v9189, %v9107
  %v9191 = vadd.f32 %v9190, %v9110
  %v9192 = vadd.f32 %v9191, %v9112
  %v9193 = vadd.f32 %v9192, %v9115
  %v9194 = vadd.f32 %v9193, %v9117
  %v9195 = vadd.f32 %v9194, %v9120
  %v9196 = vadd.f32 %v9195, %v9122
  %v9197 = vadd.f32 %v9196, %v9125
  %v9198 = vadd.f32 %v9197, %v9127
  %v9199 = vadd.f32 %v9198, %v9130
  %v9200 = vadd.f32 %v9199, %v9132
  %v9201 = vadd.f32 %v9200, %v9135
  %v9202 = vadd.f32 %v9201, %v9137
  %v9203 = vadd.f32 %v9202, %v9140
  %v9204 = vadd.f32 %v9203, %v9142
  %v9205 = vadd.f32 %v9204, %v9145
  %v9206 = vadd.f32 %v9205, %v9147
  %v9207 = vadd.f32 %v9206, %v9150
  %v9208 = vadd.f32 %v9207, %v9152
  %v9209 = vadd.f32 %v9208, %v9155
  %v9210 = vadd.f32 %v9209, %v9157
  %v9211 = vadd.f32 %v9210, %v9160
  %v9212 = vadd.f32 %v9211, %v9162
  %v9213 = vrot.slane %v9212, 4
  %v9214 = vadd.f32 %v9212, %v9213
  %v9215 = vrot.slane %v9214, 2
  %v9216 = vadd.f32 %v9214, %v9215
  %v9217 = vrot.slane %v9216, 1
  %v9218 = vadd.f32 %v9216, %v9217
  %v9219 = vmul.f32 %v9040, %v9040
  %v9220 = vmul.f32 %v9042, %v9042
  %v9221 = vmul.f32 %v9045, %v9045
  %v9222 = vmul.f32 %v9047, %v9047
  %v9223 = vmul.f32 %v9050, %v9050
  %v9224 = vmul.f32 %v9052, %v9052
  %v9225 = vmul.f32 %v9055, %v9055
  %v9226 = vmul.f32 %v9057, %v9057
  %v9227 = vmul.f32 %v9060, %v9060
  %v9228 = vmul.f32 %v9062, %v9062
  %v9229 = vmul.f32 %v9065, %v9065
  %v9230 = vmul.f32 %v9067, %v9067
  %v9231 = vmul.f32 %v9070, %v9070
  %v9232 = vmul.f32 %v9072, %v9072
  %v9233 = vmul.f32 %v9075, %v9075
  %v9234 = vmul.f32 %v9077, %v9077
  %v9235 = vmul.f32 %v9080, %v9080
  %v9236 = vmul.f32 %v9082, %v9082
  %v9237 = vmul.f32 %v9085, %v9085
  %v9238 = vmul.f32 %v9087, %v9087
  %v9239 = vmul.f32 %v9090, %v9090
  %v9240 = vmul.f32 %v9092, %v9092
  %v9241 = vmul.f32 %v9095, %v9095
  %v9242 = vmul.f32 %v9097, %v9097
  %v9243 = vmul.f32 %v9100, %v9100
  %v9244 = vmul.f32 %v9102, %v9102
  %v9245 = vmul.f32 %v9105, %v9105
  %v9246 = vmul.f32 %v9107, %v9107
  %v9247 = vmul.f32 %v9110, %v9110
  %v9248 = vmul.f32 %v9112, %v9112
  %v9249 = vmul.f32 %v9115, %v9115
  %v9250 = vmul.f32 %v9117, %v9117
  %v9251 = vmul.f32 %v9120, %v9120
  %v9252 = vmul.f32 %v9122, %v9122
  %v9253 = vmul.f32 %v9125, %v9125
  %v9254 = vmul.f32 %v9127, %v9127
  %v9255 = vmul.f32 %v9130, %v9130
  %v9256 = vmul.f32 %v9132, %v9132
  %v9257 = vmul.f32 %v9135, %v9135
  %v9258 = vmul.f32 %v9137, %v9137
  %v9259 = vmul.f32 %v9140, %v9140
  %v9260 = vmul.f32 %v9142, %v9142
  %v9261 = vmul.f32 %v9145, %v9145
  %v9262 = vmul.f32 %v9147, %v9147
  %v9263 = vmul.f32 %v9150, %v9150
  %v9264 = vmul.f32 %v9152, %v9152
  %v9265 = vmul.f32 %v9155, %v9155
  %v9266 = vmul.f32 %v9157, %v9157
  %v9267 = vmul.f32 %v9160, %v9160
  %v9268 = vmul.f32 %v9162, %v9162
  %v9269 = vadd.f32 %v9219, %v9220
  %v9270 = vadd.f32 %v9269, %v9221
  %v9271 = vadd.f32 %v9270, %v9222
  %v9272 = vadd.f32 %v9271, %v9223
  %v9273 = vadd.f32 %v9272, %v9224
  %v9274 = vadd.f32 %v9273, %v9225
  %v9275 = vadd.f32 %v9274, %v9226
  %v9276 = vadd.f32 %v9275, %v9227
  %v9277 = vadd.f32 %v9276, %v9228
  %v9278 = vadd.f32 %v9277, %v9229
  %v9279 = vadd.f32 %v9278, %v9230
  %v9280 = vadd.f32 %v9279, %v9231
  %v9281 = vadd.f32 %v9280, %v9232
  %v9282 = vadd.f32 %v9281, %v9233
  %v9283 = vadd.f32 %v9282, %v9234
  %v9284 = vadd.f32 %v9283, %v9235
  %v9285 = vadd.f32 %v9284, %v9236
  %v9286 = vadd.f32 %v9285, %v9237
  %v9287 = vadd.f32 %v9286, %v9238
  %v9288 = vadd.f32 %v9287, %v9239
  %v9289 = vadd.f32 %v9288, %v9240
  %v9290 = vadd.f32 %v9289, %v9241
  %v9291 = vadd.f32 %v9290, %v9242
  %v9292 = vadd.f32 %v9291, %v9243
  %v9293 = vadd.f32 %v9292, %v9244
  %v9294 = vadd.f32 %v9293, %v9245
  %v9295 = vadd.f32 %v9294, %v9246
  %v9296 = vadd.f32 %v9295, %v9247
  %v9297 = vadd.f32 %v9296, %v9248
  %v9298 = vadd.f32 %v9297, %v9249
  %v9299 = vadd.f32 %v9298, %v9250
  %v9300 = vadd.f32 %v9299, %v9251
  %v9301 = vadd.f32 %v9300, %v9252
  %v9302 = vadd.f32 %v9301, %v9253
  %v9303 = vadd.f32 %v9302, %v9254
  %v9304 = vadd.f32 %v9303, %v9255
  %v9305 = vadd.f32 %v9304, %v9256
  %v9306 = vadd.f32 %v9305, %v9257
  %v9307 = vadd.f32 %v9306, %v9258
  %v9308 = vadd.f32 %v9307, %v9259
  %v9309 = vadd.f32 %v9308, %v9260
  %v9310 = vadd.f32 %v9309, %v9261
  %v9311 = vadd.f32 %v9310, %v9262
  %v9312 = vadd.f32 %v9311, %v9263
  %v9313 = vadd.f32 %v9312, %v9264
  %v9314 = vadd.f32 %v9313, %v9265
  %v9315 = vadd.f32 %v9314, %v9266
  %v9316 = vadd.f32 %v9315, %v9267
  %v9317 = vadd.f32 %v9316, %v9268
  %v9318 = vrot.slane %v9317, 4
  %v9319 = vadd.f32 %v9317, %v9318
  %v9320 = vrot.slane %v9319, 2
  %v9321 = vadd.f32 %v9319, %v9320
  %v9322 = vrot.slane %v9321, 1
  %v9323 = vadd.f32 %v9321, %v9322
  %v9324 = vmul.f32 %v9218, 0.02
  %v9325 = vmul.f32 %v9323, 0.02
  %v9326 = vmul.f32 %v9324, %v9324
  %v9327 = vsub.f32 %v9325, %v9326
  %v9328 = vmax.f32 %v9327, 0.0
  %v9329 = vld [vmem:[%s5] sm:$0x1]
  %v9330 = vadd.f32 %v9328, 1e-05
  %v9331 = vrsqrt.pop %v9330
  %v9332 = vmul.f32 %v9331, %v9330
  %v9333 = vmul.f32 %v9332, %v9331
  %v9334 = vmul.f32 0.5, %v9333
  %v9335 = vsub.f32 1.5, %v9334
  %v9336 = vmul.f32 %v9331, %v9335
  %vm9337 = vweird.f32 %v9330
  %vm9338 = vweird.f32 %v9331
  %vm9339 = vmor %vm9337, %vm9338
  %v9340 = vsel %vm9339, %v9331, %v9336
  %v9341 = vmul.f32 %v9329, %v9340
  %v9342 = vld [vmem:[%s6] sm:$0x1]
  %v9343 = vmul.f32 %v9324, %v9341
  %v9344 = vsub.f32 %v9342, %v9343
  %v9346 = vperm.slane %v9341, 0
  %v9348 = vmul.f32 %v9040, %v9346
  %v9349 = vmul.f32 %v9042, %v9346
  %v9350 = vmul.f32 %v9045, %v9346
  %v9351 = vmul.f32 %v9047, %v9346
  %v9352 = vmul.f32 %v9050, %v9346
  %v9353 = vmul.f32 %v9052, %v9346
  %v9354 = vmul.f32 %v9055, %v9346
  %v9355 = vmul.f32 %v9057, %v9346
  %v9356 = vmul.f32 %v9060, %v9346
  %v9357 = vmul.f32 %v9062, %v9346
  %v9358 = vmul.f32 %v9065, %v9346
  %v9359 = vmul.f32 %v9067, %v9346
  %v9360 = vmul.f32 %v9070, %v9346
  %v9361 = vmul.f32 %v9072, %v9346
  %v9362 = vmul.f32 %v9075, %v9346
  %v9363 = vmul.f32 %v9077, %v9346
  %v9364 = vmul.f32 %v9080, %v9346
  %v9365 = vmul.f32 %v9082, %v9346
  %v9366 = vmul.f32 %v9085, %v9346
  %v9367 = vmul.f32 %v9087, %v9346
  %v9368 = vmul.f32 %v9090, %v9346
  %v9369 = vmul.f32 %v9092, %v9346
  %v9370 = vmul.f32 %v9095, %v9346
  %v9371 = vmul.f32 %v9097, %v9346
  %v9372 = vmul.f32 %v9100, %v9346
  %v9373 = vmul.f32 %v9102, %v9346
  %v9374 = vmul.f32 %v9105, %v9346
  %v9375 = vmul.f32 %v9107, %v9346
  %v9376 = vmul.f32 %v9110, %v9346
  %v9377 = vmul.f32 %v9112, %v9346
  %v9378 = vmul.f32 %v9115, %v9346
  %v9379 = vmul.f32 %v9117, %v9346
  %v9380 = vmul.f32 %v9120, %v9346
  %v9381 = vmul.f32 %v9122, %v9346
  %v9382 = vmul.f32 %v9125, %v9346
  %v9383 = vmul.f32 %v9127, %v9346
  %v9384 = vmul.f32 %v9130, %v9346
  %v9385 = vmul.f32 %v9132, %v9346
  %v9386 = vmul.f32 %v9135, %v9346
  %v9387 = vmul.f32 %v9137, %v9346
  %v9388 = vmul.f32 %v9140, %v9346
  %v9389 = vmul.f32 %v9142, %v9346
  %v9390 = vmul.f32 %v9145, %v9346
  %v9391 = vmul.f32 %v9147, %v9346
  %v9392 = vmul.f32 %v9150, %v9346
  %v9393 = vmul.f32 %v9152, %v9346
  %v9394 = vmul.f32 %v9155, %v9346
  %v9395 = vmul.f32 %v9157, %v9346
  %v9396 = vmul.f32 %v9160, %v9346
  %v9397 = vmul.f32 %v9162, %v9346
  %v9399 = vperm.slane %v9344, 0
  %v9401 = vadd.f32 %v9348, %v9399
  %v9402 = vadd.f32 %v9349, %v9399
  %v9403 = vadd.f32 %v9350, %v9399
  %v9404 = vadd.f32 %v9351, %v9399
  %v9405 = vadd.f32 %v9352, %v9399
  %v9406 = vadd.f32 %v9353, %v9399
  %v9407 = vadd.f32 %v9354, %v9399
  %v9408 = vadd.f32 %v9355, %v9399
  %v9409 = vadd.f32 %v9356, %v9399
  %v9410 = vadd.f32 %v9357, %v9399
  %v9411 = vadd.f32 %v9358, %v9399
  %v9412 = vadd.f32 %v9359, %v9399
  %v9413 = vadd.f32 %v9360, %v9399
  %v9414 = vadd.f32 %v9361, %v9399
  %v9415 = vadd.f32 %v9362, %v9399
  %v9416 = vadd.f32 %v9363, %v9399
  %v9417 = vadd.f32 %v9364, %v9399
  %v9418 = vadd.f32 %v9365, %v9399
  %v9419 = vadd.f32 %v9366, %v9399
  %v9420 = vadd.f32 %v9367, %v9399
  %v9421 = vadd.f32 %v9368, %v9399
  %v9422 = vadd.f32 %v9369, %v9399
  %v9423 = vadd.f32 %v9370, %v9399
  %v9424 = vadd.f32 %v9371, %v9399
  %v9425 = vadd.f32 %v9372, %v9399
  %v9426 = vadd.f32 %v9373, %v9399
  %v9427 = vadd.f32 %v9374, %v9399
  %v9428 = vadd.f32 %v9375, %v9399
  %v9429 = vadd.f32 %v9376, %v9399
  %v9430 = vadd.f32 %v9377, %v9399
  %v9431 = vadd.f32 %v9378, %v9399
  %v9432 = vadd.f32 %v9379, %v9399
  %v9433 = vadd.f32 %v9380, %v9399
  %v9434 = vadd.f32 %v9381, %v9399
  %v9435 = vadd.f32 %v9382, %v9399
  %v9436 = vadd.f32 %v9383, %v9399
  %v9437 = vadd.f32 %v9384, %v9399
  %v9438 = vadd.f32 %v9385, %v9399
  %v9439 = vadd.f32 %v9386, %v9399
  %v9440 = vadd.f32 %v9387, %v9399
  %v9441 = vadd.f32 %v9388, %v9399
  %v9442 = vadd.f32 %v9389, %v9399
  %v9443 = vadd.f32 %v9390, %v9399
  %v9444 = vadd.f32 %v9391, %v9399
  %v9445 = vadd.f32 %v9392, %v9399
  %v9446 = vadd.f32 %v9393, %v9399
  %v9447 = vadd.f32 %v9394, %v9399
  %v9448 = vadd.f32 %v9395, %v9399
  %v9449 = vadd.f32 %v9396, %v9399
  %v9450 = vadd.f32 %v9397, %v9399
  %vm9451 = vcmp.gt.f32.partialorder %v9401, 0.0
  %vm9452 = vcmp.gt.f32.partialorder %v9402, 0.0
  %vm9453 = vcmp.gt.f32.partialorder %v9403, 0.0
  %vm9454 = vcmp.gt.f32.partialorder %v9404, 0.0
  %vm9455 = vcmp.gt.f32.partialorder %v9405, 0.0
  %vm9456 = vcmp.gt.f32.partialorder %v9406, 0.0
  %vm9457 = vcmp.gt.f32.partialorder %v9407, 0.0
  %vm9458 = vcmp.gt.f32.partialorder %v9408, 0.0
  %vm9459 = vcmp.gt.f32.partialorder %v9409, 0.0
  %vm9460 = vcmp.gt.f32.partialorder %v9410, 0.0
  %vm9461 = vcmp.gt.f32.partialorder %v9411, 0.0
  %vm9462 = vcmp.gt.f32.partialorder %v9412, 0.0
  %vm9463 = vcmp.gt.f32.partialorder %v9413, 0.0
  %vm9464 = vcmp.gt.f32.partialorder %v9414, 0.0
  %vm9465 = vcmp.gt.f32.partialorder %v9415, 0.0
  %vm9466 = vcmp.gt.f32.partialorder %v9416, 0.0
  %vm9467 = vcmp.gt.f32.partialorder %v9417, 0.0
  %vm9468 = vcmp.gt.f32.partialorder %v9418, 0.0
  %vm9469 = vcmp.gt.f32.partialorder %v9419, 0.0
  %vm9470 = vcmp.gt.f32.partialorder %v9420, 0.0
  %vm9471 = vcmp.gt.f32.partialorder %v9421, 0.0
  %vm9472 = vcmp.gt.f32.partialorder %v9422, 0.0
  %vm9473 = vcmp.gt.f32.partialorder %v9423, 0.0
  %vm9474 = vcmp.gt.f32.partialorder %v9424, 0.0
  %vm9475 = vcmp.gt.f32.partialorder %v9425, 0.0
  %vm9476 = vcmp.gt.f32.partialorder %v9426, 0.0
  %vm9477 = vcmp.gt.f32.partialorder %v9427, 0.0
  %vm9478 = vcmp.gt.f32.partialorder %v9428, 0.0
  %vm9479 = vcmp.gt.f32.partialorder %v9429, 0.0
  %vm9480 = vcmp.gt.f32.partialorder %v9430, 0.0
  %vm9481 = vcmp.gt.f32.partialorder %v9431, 0.0
  %vm9482 = vcmp.gt.f32.partialorder %v9432, 0.0
  %vm9483 = vcmp.gt.f32.partialorder %v9433, 0.0
  %vm9484 = vcmp.gt.f32.partialorder %v9434, 0.0
  %vm9485 = vcmp.gt.f32.partialorder %v9435, 0.0
  %vm9486 = vcmp.gt.f32.partialorder %v9436, 0.0
  %vm9487 = vcmp.gt.f32.partialorder %v9437, 0.0
  %vm9488 = vcmp.gt.f32.partialorder %v9438, 0.0
  %vm9489 = vcmp.gt.f32.partialorder %v9439, 0.0
  %vm9490 = vcmp.gt.f32.partialorder %v9440, 0.0
  %vm9491 = vcmp.gt.f32.partialorder %v9441, 0.0
  %vm9492 = vcmp.gt.f32.partialorder %v9442, 0.0
  %vm9493 = vcmp.gt.f32.partialorder %v9443, 0.0
  %vm9494 = vcmp.gt.f32.partialorder %v9444, 0.0
  %vm9495 = vcmp.gt.f32.partialorder %v9445, 0.0
  %vm9496 = vcmp.gt.f32.partialorder %v9446, 0.0
  %vm9497 = vcmp.gt.f32.partialorder %v9447, 0.0
  %vm9498 = vcmp.gt.f32.partialorder %v9448, 0.0
  %vm9499 = vcmp.gt.f32.partialorder %v9449, 0.0
  %vm9500 = vcmp.gt.f32.partialorder %v9450, 0.0
  %v9501 = vmul.f32 %v9401, 0.2
  %v9502 = vmul.f32 %v9402, 0.2
  %v9503 = vmul.f32 %v9403, 0.2
  %v9504 = vmul.f32 %v9404, 0.2
  %v9505 = vmul.f32 %v9405, 0.2
  %v9506 = vmul.f32 %v9406, 0.2
  %v9507 = vmul.f32 %v9407, 0.2
  %v9508 = vmul.f32 %v9408, 0.2
  %v9509 = vmul.f32 %v9409, 0.2
  %v9510 = vmul.f32 %v9410, 0.2
  %v9511 = vmul.f32 %v9411, 0.2
  %v9512 = vmul.f32 %v9412, 0.2
  %v9513 = vmul.f32 %v9413, 0.2
  %v9514 = vmul.f32 %v9414, 0.2
  %v9515 = vmul.f32 %v9415, 0.2
  %v9516 = vmul.f32 %v9416, 0.2
  %v9517 = vmul.f32 %v9417, 0.2
  %v9518 = vmul.f32 %v9418, 0.2
  %v9519 = vmul.f32 %v9419, 0.2
  %v9520 = vmul.f32 %v9420, 0.2
  %v9521 = vmul.f32 %v9421, 0.2
  %v9522 = vmul.f32 %v9422, 0.2
  %v9523 = vmul.f32 %v9423, 0.2
  %v9524 = vmul.f32 %v9424, 0.2
  %v9525 = vmul.f32 %v9425, 0.2
  %v9526 = vmul.f32 %v9426, 0.2
  %v9527 = vmul.f32 %v9427, 0.2
  %v9528 = vmul.f32 %v9428, 0.2
  %v9529 = vmul.f32 %v9429, 0.2
  %v9530 = vmul.f32 %v9430, 0.2
  %v9531 = vmul.f32 %v9431, 0.2
  %v9532 = vmul.f32 %v9432, 0.2
  %v9533 = vmul.f32 %v9433, 0.2
  %v9534 = vmul.f32 %v9434, 0.2
  %v9535 = vmul.f32 %v9435, 0.2
  %v9536 = vmul.f32 %v9436, 0.2
  %v9537 = vmul.f32 %v9437, 0.2
  %v9538 = vmul.f32 %v9438, 0.2
  %v9539 = vmul.f32 %v9439, 0.2
  %v9540 = vmul.f32 %v9440, 0.2
  %v9541 = vmul.f32 %v9441, 0.2
  %v9542 = vmul.f32 %v9442, 0.2
  %v9543 = vmul.f32 %v9443, 0.2
  %v9544 = vmul.f32 %v9444, 0.2
  %v9545 = vmul.f32 %v9445, 0.2
  %v9546 = vmul.f32 %v9446, 0.2
  %v9547 = vmul.f32 %v9447, 0.2
  %v9548 = vmul.f32 %v9448, 0.2
  %v9549 = vmul.f32 %v9449, 0.2
  %v9550 = vmul.f32 %v9450, 0.2
  %v9551 = vsel %vm9451, %v9401, %v9501
  %v9552 = vsel %vm9452, %v9402, %v9502
  %v9553 = vsel %vm9453, %v9403, %v9503
  %v9554 = vsel %vm9454, %v9404, %v9504
  %v9555 = vsel %vm9455, %v9405, %v9505
  %v9556 = vsel %vm9456, %v9406, %v9506
  %v9557 = vsel %vm9457, %v9407, %v9507
  %v9558 = vsel %vm9458, %v9408, %v9508
  %v9559 = vsel %vm9459, %v9409, %v9509
  %v9560 = vsel %vm9460, %v9410, %v9510
  %v9561 = vsel %vm9461, %v9411, %v9511
  %v9562 = vsel %vm9462, %v9412, %v9512
  %v9563 = vsel %vm9463, %v9413, %v9513
  %v9564 = vsel %vm9464, %v9414, %v9514
  %v9565 = vsel %vm9465, %v9415, %v9515
  %v9566 = vsel %vm9466, %v9416, %v9516
  %v9567 = vsel %vm9467, %v9417, %v9517
  %v9568 = vsel %vm9468, %v9418, %v9518
  %v9569 = vsel %vm9469, %v9419, %v9519
  %v9570 = vsel %vm9470, %v9420, %v9520
  %v9571 = vsel %vm9471, %v9421, %v9521
  %v9572 = vsel %vm9472, %v9422, %v9522
  %v9573 = vsel %vm9473, %v9423, %v9523
  %v9574 = vsel %vm9474, %v9424, %v9524
  %v9575 = vsel %vm9475, %v9425, %v9525
  %v9576 = vsel %vm9476, %v9426, %v9526
  %v9577 = vsel %vm9477, %v9427, %v9527
  %v9578 = vsel %vm9478, %v9428, %v9528
  %v9579 = vsel %vm9479, %v9429, %v9529
  %v9580 = vsel %vm9480, %v9430, %v9530
  %v9581 = vsel %vm9481, %v9431, %v9531
  %v9582 = vsel %vm9482, %v9432, %v9532
  %v9583 = vsel %vm9483, %v9433, %v9533
  %v9584 = vsel %vm9484, %v9434, %v9534
  %v9585 = vsel %vm9485, %v9435, %v9535
  %v9586 = vsel %vm9486, %v9436, %v9536
  %v9587 = vsel %vm9487, %v9437, %v9537
  %v9588 = vsel %vm9488, %v9438, %v9538
  %v9589 = vsel %vm9489, %v9439, %v9539
  %v9590 = vsel %vm9490, %v9440, %v9540
  %v9591 = vsel %vm9491, %v9441, %v9541
  %v9592 = vsel %vm9492, %v9442, %v9542
  %v9593 = vsel %vm9493, %v9443, %v9543
  %v9594 = vsel %vm9494, %v9444, %v9544
  %v9595 = vsel %vm9495, %v9445, %v9545
  %v9596 = vsel %vm9496, %v9446, %v9546
  %v9597 = vsel %vm9497, %v9447, %v9547
  %v9598 = vsel %vm9498, %v9448, %v9548
  %v9599 = vsel %vm9499, %v9449, %v9549
  %v9600 = vsel %vm9500, %v9450, %v9550
  %v9601 = vpack.c.bf16 %v9551, %v9551
  %v9602 = vpack.c.bf16 %v9552, %v9552
  %9603 = vst [vmem:[#allocation4] sm:$0xf] %v9601
  %9604 = vst [vmem:[#allocation4 + $0x68] sm:$0xf] %v9602
  %v9605 = vpack.c.bf16 %v9553, %v9553
  %v9606 = vpack.c.bf16 %v9554, %v9554
  %9607 = vst [vmem:[#allocation4 + $0x4] sm:$0xf] %v9605
  %9608 = vst [vmem:[#allocation4 + $0x6c] sm:$0xf] %v9606
  %v9609 = vpack.c.bf16 %v9555, %v9555
  %v9610 = vpack.c.bf16 %v9556, %v9556
  %9611 = vst [vmem:[#allocation4 + $0x8] sm:$0xf] %v9609
  %9612 = vst [vmem:[#allocation4 + $0x70] sm:$0xf] %v9610
  %v9613 = vpack.c.bf16 %v9557, %v9557
  %v9614 = vpack.c.bf16 %v9558, %v9558
  %9615 = vst [vmem:[#allocation4 + $0xc] sm:$0xf] %v9613
  %9616 = vst [vmem:[#allocation4 + $0x74] sm:$0xf] %v9614
  %v9617 = vpack.c.bf16 %v9559, %v9559
  %v9618 = vpack.c.bf16 %v9560, %v9560
  %9619 = vst [vmem:[#allocation4 + $0x10] sm:$0xf] %v9617
  %9620 = vst [vmem:[#allocation4 + $0x78] sm:$0xf] %v9618
  %v9621 = vpack.c.bf16 %v9561, %v9561
  %v9622 = vpack.c.bf16 %v9562, %v9562
  %9623 = vst [vmem:[#allocation4 + $0x14] sm:$0xf] %v9621
  %9624 = vst [vmem:[#allocation4 + $0x7c] sm:$0xf] %v9622
  %v9625 = vpack.c.bf16 %v9563, %v9563
  %v9626 = vpack.c.bf16 %v9564, %v9564
  %9627 = vst [vmem:[#allocation4 + $0x18] sm:$0xf] %v9625
  %9628 = vst [vmem:[#allocation4 + $0x80] sm:$0xf] %v9626
  %v9629 = vpack.c.bf16 %v9565, %v9565
  %v9630 = vpack.c.bf16 %v9566, %v9566
  %9631 = vst [vmem:[#allocation4 + $0x1c] sm:$0xf] %v9629
  %9632 = vst [vmem:[#allocation4 + $0x84] sm:$0xf] %v9630
  %v9633 = vpack.c.bf16 %v9567, %v9567
  %v9634 = vpack.c.bf16 %v9568, %v9568
  %9635 = vst [vmem:[#allocation4 + $0x20] sm:$0xf] %v9633
  %9636 = vst [vmem:[#allocation4 + $0x88] sm:$0xf] %v9634
  %v9637 = vpack.c.bf16 %v9569, %v9569
  %v9638 = vpack.c.bf16 %v9570, %v9570
  %9639 = vst [vmem:[#allocation4 + $0x24] sm:$0xf] %v9637
  %9640 = vst [vmem:[#allocation4 + $0x8c] sm:$0xf] %v9638
  %v9641 = vpack.c.bf16 %v9571, %v9571
  %v9642 = vpack.c.bf16 %v9572, %v9572
  %9643 = vst [vmem:[#allocation4 + $0x28] sm:$0xf] %v9641
  %9644 = vst [vmem:[#allocation4 + $0x90] sm:$0xf] %v9642
  %v9645 = vpack.c.bf16 %v9573, %v9573
  %v9646 = vpack.c.bf16 %v9574, %v9574
  %9647 = vst [vmem:[#allocation4 + $0x2c] sm:$0xf] %v9645
  %9648 = vst [vmem:[#allocation4 + $0x94] sm:$0xf] %v9646
  %v9649 = vpack.c.bf16 %v9575, %v9575
  %v9650 = vpack.c.bf16 %v9576, %v9576
  %9651 = vst [vmem:[#allocation4 + $0x30] sm:$0xf] %v9649
  %9652 = vst [vmem:[#allocation4 + $0x98] sm:$0xf] %v9650
  %v9653 = vpack.c.bf16 %v9577, %v9577
  %v9654 = vpack.c.bf16 %v9578, %v9578
  %9655 = vst [vmem:[#allocation4 + $0x34] sm:$0xf] %v9653
  %9656 = vst [vmem:[#allocation4 + $0x9c] sm:$0xf] %v9654
  %v9657 = vpack.c.bf16 %v9579, %v9579
  %v9658 = vpack.c.bf16 %v9580, %v9580
  %9659 = vst [vmem:[#allocation4 + $0x38] sm:$0xf] %v9657
  %9660 = vst [vmem:[#allocation4 + $0xa0] sm:$0xf] %v9658
  %v9661 = vpack.c.bf16 %v9581, %v9581
  %v9662 = vpack.c.bf16 %v9582, %v9582
  %9663 = vst [vmem:[#allocation4 + $0x3c] sm:$0xf] %v9661
  %9664 = vst [vmem:[#allocation4 + $0xa4] sm:$0xf] %v9662
  %v9665 = vpack.c.bf16 %v9583, %v9583
  %v9666 = vpack.c.bf16 %v9584, %v9584
  %9667 = vst [vmem:[#allocation4 + $0x40] sm:$0xf] %v9665
  %9668 = vst [vmem:[#allocation4 + $0xa8] sm:$0xf] %v9666
  %v9669 = vpack.c.bf16 %v9585, %v9585
  %v9670 = vpack.c.bf16 %v9586, %v9586
  %9671 = vst [vmem:[#allocation4 + $0x44] sm:$0xf] %v9669
  %9672 = vst [vmem:[#allocation4 + $0xac] sm:$0xf] %v9670
  %v9673 = vpack.c.bf16 %v9587, %v9587
  %v9674 = vpack.c.bf16 %v9588, %v9588
  %9675 = vst [vmem:[#allocation4 + $0x48] sm:$0xf] %v9673
  %9676 = vst [vmem:[#allocation4 + $0xb0] sm:$0xf] %v9674
  %v9677 = vpack.c.bf16 %v9589, %v9589
  %v9678 = vpack.c.bf16 %v9590, %v9590
  %9679 = vst [vmem:[#allocation4 + $0x4c] sm:$0xf] %v9677
  %9680 = vst [vmem:[#allocation4 + $0xb4] sm:$0xf] %v9678
  %v9681 = vpack.c.bf16 %v9591, %v9591
  %v9682 = vpack.c.bf16 %v9592, %v9592
  %9683 = vst [vmem:[#allocation4 + $0x50] sm:$0xf] %v9681
  %9684 = vst [vmem:[#allocation4 + $0xb8] sm:$0xf] %v9682
  %v9685 = vpack.c.bf16 %v9593, %v9593
  %v9686 = vpack.c.bf16 %v9594, %v9594
  %9687 = vst [vmem:[#allocation4 + $0x54] sm:$0xf] %v9685
  %9688 = vst [vmem:[#allocation4 + $0xbc] sm:$0xf] %v9686
  %v9689 = vpack.c.bf16 %v9595, %v9595
  %v9690 = vpack.c.bf16 %v9596, %v9596
  %9691 = vst [vmem:[#allocation4 + $0x58] sm:$0xf] %v9689
  %9692 = vst [vmem:[#allocation4 + $0xc0] sm:$0xf] %v9690
  %v9693 = vpack.c.bf16 %v9597, %v9597
  %v9694 = vpack.c.bf16 %v9598, %v9598
  %9695 = vst [vmem:[#allocation4 + $0x5c] sm:$0xf] %v9693
  %9696 = vst [vmem:[#allocation4 + $0xc4] sm:$0xf] %v9694
  %v9697 = vpack.c.bf16 %v9599, %v9599
  %v9698 = vpack.c.bf16 %v9600, %v9600
  %9699 = vst [vmem:[#allocation4 + $0x60] sm:$0xf] %v9697
  %9700 = vst [vmem:[#allocation4 + $0xc8] sm:$0xf] %v9698
  %v9701 = vld [vmem:[%s9] sm:$0xf]
  %v9702 = vld [vmem:[%s9 + $0x4] sm:$0xf]
  %9703 = vst [vmem:[#allocation4 + $0x64] sm:$0xf] %v9701
  %9704 = vst [vmem:[#allocation4 + $0xcc] sm:$0xf] %v9702
  %v9705 = vld [vmem:[#allocation4] sm:$0xff]
  %v9706 = vld [vmem:[#allocation4 + $0x8] sm:$0xff]
  %v9707 = vld [vmem:[#allocation4 + $0x10] sm:$0xff]
  %v9708 = vld [vmem:[#allocation4 + $0x18] sm:$0xff]
  %v9709 = vld [vmem:[#allocation4 + $0x20] sm:$0xff]
  %v9710 = vld [vmem:[#allocation4 + $0x28] sm:$0xff]
  %v9711 = vld [vmem:[#allocation4 + $0x30] sm:$0xff]
  %v9712 = vld [vmem:[#allocation4 + $0x38] sm:$0xff]
  %v9713 = vld [vmem:[#allocation4 + $0x40] sm:$0xff]
  %v9714 = vld [vmem:[#allocation4 + $0x48] sm:$0xff]
  %v9715 = vld [vmem:[#allocation4 + $0x50] sm:$0xff]
  %v9716 = vld [vmem:[#allocation4 + $0x58] sm:$0xff]
  %v9717 = vld [vmem:[#allocation4 + $0x60] sm:$0xff]
  %v9718 = vld [vmem:[#allocation4 + $0x68] sm:$0xff]
  %v9719 = vld [vmem:[#allocation4 + $0x70] sm:$0xff]
  %v9720 = vld [vmem:[#allocation4 + $0x78] sm:$0xff]
  %v9721 = vld [vmem:[#allocation4 + $0x80] sm:$0xff]
  %v9722 = vld [vmem:[#allocation4 + $0x88] sm:$0xff]
  %v9723 = vld [vmem:[#allocation4 + $0x90] sm:$0xff]
  %v9724 = vld [vmem:[#allocation4 + $0x98] sm:$0xff]
  %v9725 = vld [vmem:[#allocation4 + $0xa0] sm:$0xff]
  %v9726 = vld [vmem:[#allocation4 + $0xa8] sm:$0xff]
  %v9727 = vld [vmem:[#allocation4 + $0xb0] sm:$0xff]
  %v9728 = vld [vmem:[#allocation4 + $0xb8] sm:$0xff]
  %v9729 = vld [vmem:[#allocation4 + $0xc0] sm:$0xff]
  %v9730 = vld [vmem:[#allocation4 + $0xc8] sm:$0xff]
  %v9731 = vld [vmem:[%s7] sm:$0xf]
  %v9732 = vld [vmem:[%s7 + $0x4] sm:$0xf]
  %v9733 = vld [vmem:[%s7 + $0x8] sm:$0xf]
  %v9734 = vld [vmem:[%s7 + $0xc] sm:$0xf]
  %v9735 = vld [vmem:[%s7 + $0x10] sm:$0xf]
  %v9736 = vld [vmem:[%s7 + $0x14] sm:$0xf]
  %v9737 = vld [vmem:[%s7 + $0x18] sm:$0xf]
  %v9738 = vld [vmem:[%s7 + $0x1c] sm:$0xf]
  %v9739 = vld [vmem:[%s7 + $0x20] sm:$0xf]
  %v9740 = vld [vmem:[%s7 + $0x24] sm:$0xf]
  %v9741 = vld [vmem:[%s7 + $0x28] sm:$0xf]
  %v9742 = vld [vmem:[%s7 + $0x2c] sm:$0xf]
  %v9743 = vld [vmem:[%s7 + $0x30] sm:$0xf]
  %v9744 = vld [vmem:[%s7 + $0x34] sm:$0xf]
  %v9745 = vld [vmem:[%s7 + $0x38] sm:$0xf]
  %v9746 = vld [vmem:[%s7 + $0x3c] sm:$0xf]
  %v9747 = vld [vmem:[%s7 + $0x40] sm:$0xf]
  %v9748 = vld [vmem:[%s7 + $0x44] sm:$0xf]
  %v9749 = vld [vmem:[%s7 + $0x48] sm:$0xf]
  %v9750 = vld [vmem:[%s7 + $0x4c] sm:$0xf]
  %v9751 = vld [vmem:[%s7 + $0x50] sm:$0xf]
  %v9752 = vld [vmem:[%s7 + $0x54] sm:$0xf]
  %v9753 = vld [vmem:[%s7 + $0x58] sm:$0xf]
  %v9754 = vld [vmem:[%s7 + $0x5c] sm:$0xf]
  %v9755 = vld [vmem:[%s7 + $0x60] sm:$0xf]
  %v9756 = vld [vmem:[%s7 + $0x64] sm:$0xf]
  %v9757 = vld [vmem:[%s7 + $0x68] sm:$0xf]
  %v9758 = vld [vmem:[%s7 + $0x6c] sm:$0xf]
  %v9759 = vld [vmem:[%s7 + $0x70] sm:$0xf]
  %v9760 = vld [vmem:[%s7 + $0x74] sm:$0xf]
  %v9761 = vld [vmem:[%s7 + $0x78] sm:$0xf]
  %v9762 = vld [vmem:[%s7 + $0x7c] sm:$0xf]
  %v9763 = vld [vmem:[%s7 + $0x80] sm:$0xf]
  %v9764 = vld [vmem:[%s7 + $0x84] sm:$0xf]
  %v9765 = vld [vmem:[%s7 + $0x88] sm:$0xf]
  %v9766 = vld [vmem:[%s7 + $0x8c] sm:$0xf]
  %v9767 = vld [vmem:[%s7 + $0x90] sm:$0xf]
  %v9768 = vld [vmem:[%s7 + $0x94] sm:$0xf]
  %v9769 = vld [vmem:[%s7 + $0x98] sm:$0xf]
  %v9770 = vld [vmem:[%s7 + $0x9c] sm:$0xf]
  %v9771 = vld [vmem:[%s7 + $0xa0] sm:$0xf]
  %v9772 = vld [vmem:[%s7 + $0xa4] sm:$0xf]
  %v9773 = vld [vmem:[%s7 + $0xa8] sm:$0xf]
  %v9774 = vld [vmem:[%s7 + $0xac] sm:$0xf]
  %v9775 = vld [vmem:[%s7 + $0xb0] sm:$0xf]
  %v9776 = vld [vmem:[%s7 + $0xb4] sm:$0xf]
  %v9777 = vld [vmem:[%s7 + $0xb8] sm:$0xf]
  %v9778 = vld [vmem:[%s7 + $0xbc] sm:$0xf]
  %v9779 = vld [vmem:[%s7 + $0xc0] sm:$0xf]
  %v9780 = vld [vmem:[%s7 + $0xc4] sm:$0xf]
  %v9781 = vld [vmem:[%s7 + $0xc8] sm:$0xf]
  %v9782 = vld [vmem:[%s7 + $0xcc] sm:$0xf]
  %v9783 = vld [vmem:[%s7 + $0xd0] sm:$0xf]
  %v9784 = vld [vmem:[%s7 + $0xd4] sm:$0xf]
  %v9785 = vld [vmem:[%s7 + $0xd8] sm:$0xf]
  %v9786 = vld [vmem:[%s7 + $0xdc] sm:$0xf]
  %v9787 = vld [vmem:[%s7 + $0xe0] sm:$0xf]
  %v9788 = vld [vmem:[%s7 + $0xe4] sm:$0xf]
  %v9789 = vld [vmem:[%s7 + $0xe8] sm:$0xf]
  %v9790 = vld [vmem:[%s7 + $0xec] sm:$0xf]
  %v9791 = vld [vmem:[%s7 + $0xf0] sm:$0xf]
  %v9792 = vld [vmem:[%s7 + $0xf4] sm:$0xf]
  %v9793 = vld [vmem:[%s7 + $0xf8] sm:$0xf]
  %v9794 = vld [vmem:[%s7 + $0xfc] sm:$0xf]
  %v9795 = vld [vmem:[%s7 + $0x100] sm:$0xf]
  %v9796 = vld [vmem:[%s7 + $0x104] sm:$0xf]
  %v9797 = vld [vmem:[%s7 + $0x108] sm:$0xf]
  %v9798 = vld [vmem:[%s7 + $0x10c] sm:$0xf]
  %v9799 = vld [vmem:[%s7 + $0x110] sm:$0xf]
  %v9800 = vld [vmem:[%s7 + $0x114] sm:$0xf]
  %v9801 = vld [vmem:[%s7 + $0x118] sm:$0xf]
  %v9802 = vld [vmem:[%s7 + $0x11c] sm:$0xf]
  %v9803 = vld [vmem:[%s7 + $0x120] sm:$0xf]
  %v9804 = vld [vmem:[%s7 + $0x124] sm:$0xf]
  %v9805 = vld [vmem:[%s7 + $0x128] sm:$0xf]
  %v9806 = vld [vmem:[%s7 + $0x12c] sm:$0xf]
  %v9807 = vld [vmem:[%s7 + $0x130] sm:$0xf]
  %v9808 = vld [vmem:[%s7 + $0x134] sm:$0xf]
  %v9809 = vld [vmem:[%s7 + $0x138] sm:$0xf]
  %v9810 = vld [vmem:[%s7 + $0x13c] sm:$0xf]
  %v9811 = vld [vmem:[%s7 + $0x140] sm:$0xf]
  %v9812 = vld [vmem:[%s7 + $0x144] sm:$0xf]
  %v9813 = vld [vmem:[%s7 + $0x148] sm:$0xf]
  %v9814 = vld [vmem:[%s7 + $0x14c] sm:$0xf]
  %v9815 = vld [vmem:[%s7 + $0x150] sm:$0xf]
  %v9816 = vld [vmem:[%s7 + $0x154] sm:$0xf]
  %v9817 = vld [vmem:[%s7 + $0x158] sm:$0xf]
  %v9818 = vld [vmem:[%s7 + $0x15c] sm:$0xf]
  %v9819 = vld [vmem:[%s7 + $0x160] sm:$0xf]
  %v9820 = vld [vmem:[%s7 + $0x164] sm:$0xf]
  %v9821 = vld [vmem:[%s7 + $0x168] sm:$0xf]
  %v9822 = vld [vmem:[%s7 + $0x16c] sm:$0xf]
  %v9823 = vld [vmem:[%s7 + $0x170] sm:$0xf]
  %v9824 = vld [vmem:[%s7 + $0x174] sm:$0xf]
  %v9825 = vld [vmem:[%s7 + $0x178] sm:$0xf]
  %v9826 = vld [vmem:[%s7 + $0x17c] sm:$0xf]
  %v9827 = vld [vmem:[%s7 + $0x180] sm:$0xf]
  %v9828 = vld [vmem:[%s7 + $0x184] sm:$0xf]
  %v9829 = vld [vmem:[%s7 + $0x188] sm:$0xf]
  %v9830 = vld [vmem:[%s7 + $0x18c] sm:$0xf]
  %v9831 = vld [vmem:[%s7 + $0x190] sm:$0xf]
  %v9832 = vld [vmem:[%s7 + $0x194] sm:$0xf]
  %v9833 = vld [vmem:[%s7 + $0x198] sm:$0xf]
  %v9834 = vld [vmem:[%s7 + $0x19c] sm:$0xf]
  %v9835 = vld [vmem:[%s7 + $0x1a0] sm:$0xf]
  %v9836 = vld [vmem:[%s7 + $0x1a4] sm:$0xf]
  %v9837 = vld [vmem:[%s7 + $0x1a8] sm:$0xf]
  %v9838 = vld [vmem:[%s7 + $0x1ac] sm:$0xf]
  %v9839 = vld [vmem:[%s7 + $0x1b0] sm:$0xf]
  %v9840 = vld [vmem:[%s7 + $0x1b4] sm:$0xf]
  %v9841 = vld [vmem:[%s7 + $0x1b8] sm:$0xf]
  %v9842 = vld [vmem:[%s7 + $0x1bc] sm:$0xf]
  %v9843 = vld [vmem:[%s7 + $0x1c0] sm:$0xf]
  %v9844 = vld [vmem:[%s7 + $0x1c4] sm:$0xf]
  %v9845 = vld [vmem:[%s7 + $0x1c8] sm:$0xf]
  %v9846 = vld [vmem:[%s7 + $0x1cc] sm:$0xf]
  %v9847 = vld [vmem:[%s7 + $0x1d0] sm:$0xf]
  %v9848 = vld [vmem:[%s7 + $0x1d4] sm:$0xf]
  %v9849 = vld [vmem:[%s7 + $0x1d8] sm:$0xf]
  %v9850 = vld [vmem:[%s7 + $0x1dc] sm:$0xf]
  %v9851 = vld [vmem:[%s7 + $0x1e0] sm:$0xf]
  %v9852 = vld [vmem:[%s7 + $0x1e4] sm:$0xf]
  %v9853 = vld [vmem:[%s7 + $0x1e8] sm:$0xf]
  %v9854 = vld [vmem:[%s7 + $0x1ec] sm:$0xf]
  %v9855 = vld [vmem:[%s7 + $0x1f0] sm:$0xf]
  %v9856 = vld [vmem:[%s7 + $0x1f4] sm:$0xf]
  %v9857 = vld [vmem:[%s7 + $0x1f8] sm:$0xf]
  %v9858 = vld [vmem:[%s7 + $0x1fc] sm:$0xf]
  %v9859 = vld [vmem:[%s7 + $0x200] sm:$0xf]
  %v9860 = vld [vmem:[%s7 + $0x204] sm:$0xf]
  %v9861 = vld [vmem:[%s7 + $0x208] sm:$0xf]
  %v9862 = vld [vmem:[%s7 + $0x20c] sm:$0xf]
  %v9863 = vld [vmem:[%s7 + $0x210] sm:$0xf]
  %v9864 = vld [vmem:[%s7 + $0x214] sm:$0xf]
  %v9865 = vld [vmem:[%s7 + $0x218] sm:$0xf]
  %v9866 = vld [vmem:[%s7 + $0x21c] sm:$0xf]
  %v9867 = vld [vmem:[%s7 + $0x220] sm:$0xf]
  %v9868 = vld [vmem:[%s7 + $0x224] sm:$0xf]
  %v9869 = vld [vmem:[%s7 + $0x228] sm:$0xf]
  %v9870 = vld [vmem:[%s7 + $0x22c] sm:$0xf]
  %v9871 = vld [vmem:[%s7 + $0x230] sm:$0xf]
  %v9872 = vld [vmem:[%s7 + $0x234] sm:$0xf]
  %v9873 = vld [vmem:[%s7 + $0x238] sm:$0xf]
  %v9874 = vld [vmem:[%s7 + $0x23c] sm:$0xf]
  %v9875 = vld [vmem:[%s7 + $0x240] sm:$0xf]
  %v9876 = vld [vmem:[%s7 + $0x244] sm:$0xf]
  %v9877 = vld [vmem:[%s7 + $0x248] sm:$0xf]
  %v9878 = vld [vmem:[%s7 + $0x24c] sm:$0xf]
  %v9879 = vld [vmem:[%s7 + $0x250] sm:$0xf]
  %v9880 = vld [vmem:[%s7 + $0x254] sm:$0xf]
  %v9881 = vld [vmem:[%s7 + $0x258] sm:$0xf]
  %v9882 = vld [vmem:[%s7 + $0x25c] sm:$0xf]
  %v9883 = vld [vmem:[%s7 + $0x260] sm:$0xf]
  %v9884 = vld [vmem:[%s7 + $0x264] sm:$0xf]
  %v9885 = vld [vmem:[%s7 + $0x268] sm:$0xf]
  %v9886 = vld [vmem:[%s7 + $0x26c] sm:$0xf]
  %v9887 = vld [vmem:[%s7 + $0x270] sm:$0xf]
  %v9888 = vld [vmem:[%s7 + $0x274] sm:$0xf]
  %v9889 = vld [vmem:[%s7 + $0x278] sm:$0xf]
  %v9890 = vld [vmem:[%s7 + $0x27c] sm:$0xf]
  %v9891 = vld [vmem:[%s7 + $0x280] sm:$0xf]
  %v9892 = vld [vmem:[%s7 + $0x284] sm:$0xf]
  %v9893 = vld [vmem:[%s7 + $0x288] sm:$0xf]
  %v9894 = vld [vmem:[%s7 + $0x28c] sm:$0xf]
  %v9895 = vld [vmem:[%s7 + $0x290] sm:$0xf]
  %v9896 = vld [vmem:[%s7 + $0x294] sm:$0xf]
  %v9897 = vld [vmem:[%s7 + $0x298] sm:$0xf]
  %v9898 = vld [vmem:[%s7 + $0x29c] sm:$0xf]
  %v9899 = vld [vmem:[%s7 + $0x2a0] sm:$0xf]
  %v9900 = vld [vmem:[%s7 + $0x2a4] sm:$0xf]
  %v9901 = vld [vmem:[%s7 + $0x2a8] sm:$0xf]
  %v9902 = vld [vmem:[%s7 + $0x2ac] sm:$0xf]
  %v9903 = vld [vmem:[%s7 + $0x2b0] sm:$0xf]
  %v9904 = vld [vmem:[%s7 + $0x2b4] sm:$0xf]
  %v9905 = vld [vmem:[%s7 + $0x2b8] sm:$0xf]
  %v9906 = vld [vmem:[%s7 + $0x2bc] sm:$0xf]
  %v9907 = vld [vmem:[%s7 + $0x2c0] sm:$0xf]
  %v9908 = vld [vmem:[%s7 + $0x2c4] sm:$0xf]
  %v9909 = vld [vmem:[%s7 + $0x2c8] sm:$0xf]
  %v9910 = vld [vmem:[%s7 + $0x2cc] sm:$0xf]
  %v9911 = vld [vmem:[%s7 + $0x2d0] sm:$0xf]
  %v9912 = vld [vmem:[%s7 + $0x2d4] sm:$0xf]
  %v9913 = vld [vmem:[%s7 + $0x2d8] sm:$0xf]
  %v9914 = vld [vmem:[%s7 + $0x2dc] sm:$0xf]
  %v9915 = vld [vmem:[%s7 + $0x2e0] sm:$0xf]
  %v9916 = vld [vmem:[%s7 + $0x2e4] sm:$0xf]
  %v9917 = vld [vmem:[%s7 + $0x2e8] sm:$0xf]
  %v9918 = vld [vmem:[%s7 + $0x2ec] sm:$0xf]
  %v9919 = vld [vmem:[%s7 + $0x2f0] sm:$0xf]
  %v9920 = vld [vmem:[%s7 + $0x2f4] sm:$0xf]
  %v9921 = vld [vmem:[%s7 + $0x2f8] sm:$0xf]
  %v9922 = vld [vmem:[%s7 + $0x2fc] sm:$0xf]
  %v9923 = vld [vmem:[%s7 + $0x300] sm:$0xf]
  %v9924 = vld [vmem:[%s7 + $0x304] sm:$0xf]
  %v9925 = vld [vmem:[%s7 + $0x308] sm:$0xf]
  %v9926 = vld [vmem:[%s7 + $0x30c] sm:$0xf]
  %v9927 = vld [vmem:[%s7 + $0x310] sm:$0xf]
  %v9928 = vld [vmem:[%s7 + $0x314] sm:$0xf]
  %v9929 = vld [vmem:[%s7 + $0x318] sm:$0xf]
  %v9930 = vld [vmem:[%s7 + $0x31c] sm:$0xf]
  %v9931 = vld [vmem:[%s7 + $0x320] sm:$0xf]
  %v9932 = vld [vmem:[%s7 + $0x324] sm:$0xf]
  %v9933 = vld [vmem:[%s7 + $0x328] sm:$0xf]
  %v9934 = vld [vmem:[%s7 + $0x32c] sm:$0xf]
  %v9935 = vld [vmem:[%s7 + $0x330] sm:$0xf]
  %v9936 = vld [vmem:[%s7 + $0x334] sm:$0xf]
  %v9937 = vld [vmem:[%s7 + $0x338] sm:$0xf]
  %v9938 = vld [vmem:[%s7 + $0x33c] sm:$0xf]
  %v9939 = vld [vmem:[%s7 + $0x340] sm:$0xf]
  %v9940 = vld [vmem:[%s7 + $0x344] sm:$0xf]
  %v9941 = vld [vmem:[%s7 + $0x348] sm:$0xf]
  %v9942 = vld [vmem:[%s7 + $0x34c] sm:$0xf]
  %v9943 = vld [vmem:[%s7 + $0x350] sm:$0xf]
  %v9944 = vld [vmem:[%s7 + $0x354] sm:$0xf]
  %v9945 = vld [vmem:[%s7 + $0x358] sm:$0xf]
  %v9946 = vld [vmem:[%s7 + $0x35c] sm:$0xf]
  %v9947 = vld [vmem:[%s7 + $0x360] sm:$0xf]
  %v9948 = vld [vmem:[%s7 + $0x364] sm:$0xf]
  %v9949 = vld [vmem:[%s7 + $0x368] sm:$0xf]
  %v9950 = vld [vmem:[%s7 + $0x36c] sm:$0xf]
  %v9951 = vld [vmem:[%s7 + $0x370] sm:$0xf]
  %v9952 = vld [vmem:[%s7 + $0x374] sm:$0xf]
  %v9953 = vld [vmem:[%s7 + $0x378] sm:$0xf]
  %v9954 = vld [vmem:[%s7 + $0x37c] sm:$0xf]
  %v9955 = vld [vmem:[%s7 + $0x380] sm:$0xf]
  %v9956 = vld [vmem:[%s7 + $0x384] sm:$0xf]
  %v9957 = vld [vmem:[%s7 + $0x388] sm:$0xf]
  %v9958 = vld [vmem:[%s7 + $0x38c] sm:$0xf]
  %v9959 = vld [vmem:[%s7 + $0x390] sm:$0xf]
  %v9960 = vld [vmem:[%s7 + $0x394] sm:$0xf]
  %v9961 = vld [vmem:[%s7 + $0x398] sm:$0xf]
  %v9962 = vld [vmem:[%s7 + $0x39c] sm:$0xf]
  %v9963 = vld [vmem:[%s7 + $0x3a0] sm:$0xf]
  %v9964 = vld [vmem:[%s7 + $0x3a4] sm:$0xf]
  %v9965 = vld [vmem:[%s7 + $0x3a8] sm:$0xf]
  %v9966 = vld [vmem:[%s7 + $0x3ac] sm:$0xf]
  %v9967 = vld [vmem:[%s7 + $0x3b0] sm:$0xf]
  %v9968 = vld [vmem:[%s7 + $0x3b4] sm:$0xf]
  %v9969 = vld [vmem:[%s7 + $0x3b8] sm:$0xf]
  %v9970 = vld [vmem:[%s7 + $0x3bc] sm:$0xf]
  %v9971 = vld [vmem:[%s7 + $0x3c0] sm:$0xf]
  %v9972 = vld [vmem:[%s7 + $0x3c4] sm:$0xf]
  %v9973 = vld [vmem:[%s7 + $0x3c8] sm:$0xf]
  %v9974 = vld [vmem:[%s7 + $0x3cc] sm:$0xf]
  %v9975 = vld [vmem:[%s7 + $0x3d0] sm:$0xf]
  %v9976 = vld [vmem:[%s7 + $0x3d4] sm:$0xf]
  %v9977 = vld [vmem:[%s7 + $0x3d8] sm:$0xf]
  %v9978 = vld [vmem:[%s7 + $0x3dc] sm:$0xf]
  %v9979 = vld [vmem:[%s7 + $0x3e0] sm:$0xf]
  %v9980 = vld [vmem:[%s7 + $0x3e4] sm:$0xf]
  %v9981 = vld [vmem:[%s7 + $0x3e8] sm:$0xf]
  %v9982 = vld [vmem:[%s7 + $0x3ec] sm:$0xf]
  %v9983 = vld [vmem:[%s7 + $0x3f0] sm:$0xf]
  %v9984 = vld [vmem:[%s7 + $0x3f4] sm:$0xf]
  %v9985 = vld [vmem:[%s7 + $0x3f8] sm:$0xf]
  %v9986 = vld [vmem:[%s7 + $0x3fc] sm:$0xf]
  %v9987 = vld [vmem:[%s7 + $0x400] sm:$0xf]
  %v9988 = vld [vmem:[%s7 + $0x404] sm:$0xf]
  %v9989 = vld [vmem:[%s7 + $0x408] sm:$0xf]
  %v9990 = vld [vmem:[%s7 + $0x40c] sm:$0xf]
  %v9991 = vld [vmem:[%s7 + $0x410] sm:$0xf]
  %v9992 = vld [vmem:[%s7 + $0x414] sm:$0xf]
  %v9993 = vld [vmem:[%s7 + $0x418] sm:$0xf]
  %v9994 = vld [vmem:[%s7 + $0x41c] sm:$0xf]
  %v9995 = vld [vmem:[%s7 + $0x420] sm:$0xf]
  %v9996 = vld [vmem:[%s7 + $0x424] sm:$0xf]
  %v9997 = vld [vmem:[%s7 + $0x428] sm:$0xf]
  %v9998 = vld [vmem:[%s7 + $0x42c] sm:$0xf]
  %v9999 = vld [vmem:[%s7 + $0x430] sm:$0xf]
  %v10000 = vld [vmem:[%s7 + $0x434] sm:$0xf]
  %v10001 = vld [vmem:[%s7 + $0x438] sm:$0xf]
  %v10002 = vld [vmem:[%s7 + $0x43c] sm:$0xf]
  %v10003 = vld [vmem:[%s7 + $0x440] sm:$0xf]
  %v10004 = vld [vmem:[%s7 + $0x444] sm:$0xf]
  %v10005 = vld [vmem:[%s7 + $0x448] sm:$0xf]
  %v10006 = vld [vmem:[%s7 + $0x44c] sm:$0xf]
  %v10007 = vld [vmem:[%s7 + $0x450] sm:$0xf]
  %v10008 = vld [vmem:[%s7 + $0x454] sm:$0xf]
  %v10009 = vld [vmem:[%s7 + $0x458] sm:$0xf]
  %v10010 = vld [vmem:[%s7 + $0x45c] sm:$0xf]
  %v10011 = vld [vmem:[%s7 + $0x460] sm:$0xf]
  %v10012 = vld [vmem:[%s7 + $0x464] sm:$0xf]
  %v10013 = vld [vmem:[%s7 + $0x468] sm:$0xf]
  %v10014 = vld [vmem:[%s7 + $0x46c] sm:$0xf]
  %v10015 = vld [vmem:[%s7 + $0x470] sm:$0xf]
  %v10016 = vld [vmem:[%s7 + $0x474] sm:$0xf]
  %v10017 = vld [vmem:[%s7 + $0x478] sm:$0xf]
  %v10018 = vld [vmem:[%s7 + $0x47c] sm:$0xf]
  %v10019 = vld [vmem:[%s7 + $0x480] sm:$0xf]
  %v10020 = vld [vmem:[%s7 + $0x484] sm:$0xf]
  %v10021 = vld [vmem:[%s7 + $0x488] sm:$0xf]
  %v10022 = vld [vmem:[%s7 + $0x48c] sm:$0xf]
  %v10023 = vld [vmem:[%s7 + $0x490] sm:$0xf]
  %v10024 = vld [vmem:[%s7 + $0x494] sm:$0xf]
  %v10025 = vld [vmem:[%s7 + $0x498] sm:$0xf]
  %v10026 = vld [vmem:[%s7 + $0x49c] sm:$0xf]
  %v10027 = vld [vmem:[%s7 + $0x4a0] sm:$0xf]
  %v10028 = vld [vmem:[%s7 + $0x4a4] sm:$0xf]
  %v10029 = vld [vmem:[%s7 + $0x4a8] sm:$0xf]
  %v10030 = vld [vmem:[%s7 + $0x4ac] sm:$0xf]
  %v10031 = vld [vmem:[%s7 + $0x4b0] sm:$0xf]
  %v10032 = vld [vmem:[%s7 + $0x4b4] sm:$0xf]
  %v10033 = vld [vmem:[%s7 + $0x4b8] sm:$0xf]
  %v10034 = vld [vmem:[%s7 + $0x4bc] sm:$0xf]
  %v10035 = vld [vmem:[%s7 + $0x4c0] sm:$0xf]
  %v10036 = vld [vmem:[%s7 + $0x4c4] sm:$0xf]
  %v10037 = vld [vmem:[%s7 + $0x4c8] sm:$0xf]
  %v10038 = vld [vmem:[%s7 + $0x4cc] sm:$0xf]
  %v10039 = vld [vmem:[%s7 + $0x4d0] sm:$0xf]
  %v10040 = vld [vmem:[%s7 + $0x4d4] sm:$0xf]
  %v10041 = vld [vmem:[%s7 + $0x4d8] sm:$0xf]
  %v10042 = vld [vmem:[%s7 + $0x4dc] sm:$0xf]
  %v10043 = vld [vmem:[%s7 + $0x4e0] sm:$0xf]
  %v10044 = vld [vmem:[%s7 + $0x4e4] sm:$0xf]
  %v10045 = vld [vmem:[%s7 + $0x4e8] sm:$0xf]
  %v10046 = vld [vmem:[%s7 + $0x4ec] sm:$0xf]
  %v10047 = vld [vmem:[%s7 + $0x4f0] sm:$0xf]
  %v10048 = vld [vmem:[%s7 + $0x4f4] sm:$0xf]
  %v10049 = vld [vmem:[%s7 + $0x4f8] sm:$0xf]
  %v10050 = vld [vmem:[%s7 + $0x4fc] sm:$0xf]
  %v10051 = vld [vmem:[%s7 + $0x500] sm:$0xf]
  %v10052 = vld [vmem:[%s7 + $0x504] sm:$0xf]
  %v10053 = vld [vmem:[%s7 + $0x508] sm:$0xf]
  %v10054 = vld [vmem:[%s7 + $0x50c] sm:$0xf]
  %v10055 = vld [vmem:[%s7 + $0x510] sm:$0xf]
  %v10056 = vld [vmem:[%s7 + $0x514] sm:$0xf]
  %v10057 = vld [vmem:[%s7 + $0x518] sm:$0xf]
  %v10058 = vld [vmem:[%s7 + $0x51c] sm:$0xf]
  %v10059 = vld [vmem:[%s7 + $0x520] sm:$0xf]
  %v10060 = vld [vmem:[%s7 + $0x524] sm:$0xf]
  %v10061 = vld [vmem:[%s7 + $0x528] sm:$0xf]
  %v10062 = vld [vmem:[%s7 + $0x52c] sm:$0xf]
  %v10063 = vld [vmem:[%s7 + $0x530] sm:$0xf]
  %v10064 = vld [vmem:[%s7 + $0x534] sm:$0xf]
  %v10065 = vld [vmem:[%s7 + $0x538] sm:$0xf]
  %v10066 = vld [vmem:[%s7 + $0x53c] sm:$0xf]
  %v10067 = vld [vmem:[%s7 + $0x540] sm:$0xf]
  %v10068 = vld [vmem:[%s7 + $0x544] sm:$0xf]
  %v10069 = vld [vmem:[%s7 + $0x548] sm:$0xf]
  %v10070 = vld [vmem:[%s7 + $0x54c] sm:$0xf]
  %v10071 = vld [vmem:[%s7 + $0x550] sm:$0xf]
  %v10072 = vld [vmem:[%s7 + $0x554] sm:$0xf]
  %v10073 = vld [vmem:[%s7 + $0x558] sm:$0xf]
  %v10074 = vld [vmem:[%s7 + $0x55c] sm:$0xf]
  %v10075 = vld [vmem:[%s7 + $0x560] sm:$0xf]
  %v10076 = vld [vmem:[%s7 + $0x564] sm:$0xf]
  %v10077 = vld [vmem:[%s7 + $0x568] sm:$0xf]
  %v10078 = vld [vmem:[%s7 + $0x56c] sm:$0xf]
  %v10079 = vld [vmem:[%s7 + $0x570] sm:$0xf]
  %v10080 = vld [vmem:[%s7 + $0x574] sm:$0xf]
  %v10081 = vld [vmem:[%s7 + $0x578] sm:$0xf]
  %v10082 = vld [vmem:[%s7 + $0x57c] sm:$0xf]
  %v10083 = vld [vmem:[%s7 + $0x580] sm:$0xf]
  %v10084 = vld [vmem:[%s7 + $0x584] sm:$0xf]
  %v10085 = vld [vmem:[%s7 + $0x588] sm:$0xf]
  %v10086 = vld [vmem:[%s7 + $0x58c] sm:$0xf]
  %v10087 = vld [vmem:[%s7 + $0x590] sm:$0xf]
  %v10088 = vld [vmem:[%s7 + $0x594] sm:$0xf]
  %v10089 = vld [vmem:[%s7 + $0x598] sm:$0xf]
  %v10090 = vld [vmem:[%s7 + $0x59c] sm:$0xf]
  %v10091 = vld [vmem:[%s7 + $0x5a0] sm:$0xf]
  %v10092 = vld [vmem:[%s7 + $0x5a4] sm:$0xf]
  %v10093 = vld [vmem:[%s7 + $0x5a8] sm:$0xf]
  %v10094 = vld [vmem:[%s7 + $0x5ac] sm:$0xf]
  %v10095 = vld [vmem:[%s7 + $0x5b0] sm:$0xf]
  %v10096 = vld [vmem:[%s7 + $0x5b4] sm:$0xf]
  %v10097 = vld [vmem:[%s7 + $0x5b8] sm:$0xf]
  %v10098 = vld [vmem:[%s7 + $0x5bc] sm:$0xf]
  %v10099 = vld [vmem:[%s7 + $0x5c0] sm:$0xf]
  %v10100 = vld [vmem:[%s7 + $0x5c4] sm:$0xf]
  %v10101 = vld [vmem:[%s7 + $0x5c8] sm:$0xf]
  %v10102 = vld [vmem:[%s7 + $0x5cc] sm:$0xf]
  %v10103 = vld [vmem:[%s7 + $0x5d0] sm:$0xf]
  %v10104 = vld [vmem:[%s7 + $0x5d4] sm:$0xf]
  %v10105 = vld [vmem:[%s7 + $0x5d8] sm:$0xf]
  %v10106 = vld [vmem:[%s7 + $0x5dc] sm:$0xf]
  %v10107 = vld [vmem:[%s7 + $0x5e0] sm:$0xf]
  %v10108 = vld [vmem:[%s7 + $0x5e4] sm:$0xf]
  %v10109 = vld [vmem:[%s7 + $0x5e8] sm:$0xf]
  %v10110 = vld [vmem:[%s7 + $0x5ec] sm:$0xf]
  %v10111 = vld [vmem:[%s7 + $0x5f0] sm:$0xf]
  %v10112 = vld [vmem:[%s7 + $0x5f4] sm:$0xf]
  %v10113 = vld [vmem:[%s7 + $0x5f8] sm:$0xf]
  %v10114 = vld [vmem:[%s7 + $0x5fc] sm:$0xf]
  %v10115 = vld [vmem:[%s7 + $0x600] sm:$0xf]
  %v10116 = vld [vmem:[%s7 + $0x604] sm:$0xf]
  %v10117 = vld [vmem:[%s7 + $0x608] sm:$0xf]
  %v10118 = vld [vmem:[%s7 + $0x60c] sm:$0xf]
  %v10119 = vld [vmem:[%s7 + $0x610] sm:$0xf]
  %v10120 = vld [vmem:[%s7 + $0x614] sm:$0xf]
  %v10121 = vld [vmem:[%s7 + $0x618] sm:$0xf]
  %v10122 = vld [vmem:[%s7 + $0x61c] sm:$0xf]
  %v10123 = vld [vmem:[%s7 + $0x620] sm:$0xf]
  %v10124 = vld [vmem:[%s7 + $0x624] sm:$0xf]
  %v10125 = vld [vmem:[%s7 + $0x628] sm:$0xf]
  %v10126 = vld [vmem:[%s7 + $0x62c] sm:$0xf]
  %v10127 = vld [vmem:[%s7 + $0x630] sm:$0xf]
  %v10128 = vld [vmem:[%s7 + $0x634] sm:$0xf]
  %v10129 = vld [vmem:[%s7 + $0x638] sm:$0xf]
  %v10130 = vld [vmem:[%s7 + $0x63c] sm:$0xf]
  %v10131 = vld [vmem:[%s7 + $0x640] sm:$0xf]
  %v10132 = vld [vmem:[%s7 + $0x644] sm:$0xf]
  %v10133 = vld [vmem:[%s7 + $0x648] sm:$0xf]
  %v10134 = vld [vmem:[%s7 + $0x64c] sm:$0xf]
  %v10135 = vld [vmem:[%s7 + $0x650] sm:$0xf]
  %v10136 = vld [vmem:[%s7 + $0x654] sm:$0xf]
  %v10137 = vld [vmem:[%s7 + $0x658] sm:$0xf]
  %v10138 = vld [vmem:[%s7 + $0x65c] sm:$0xf]
  %v10139 = vld [vmem:[%s7 + $0x660] sm:$0xf]
  %v10140 = vld [vmem:[%s7 + $0x664] sm:$0xf]
  %v10141 = vld [vmem:[%s7 + $0x668] sm:$0xf]
  %v10142 = vld [vmem:[%s7 + $0x66c] sm:$0xf]
  %v10143 = vld [vmem:[%s7 + $0x670] sm:$0xf]
  %v10144 = vld [vmem:[%s7 + $0x674] sm:$0xf]
  %v10145 = vld [vmem:[%s7 + $0x678] sm:$0xf]
  %v10146 = vld [vmem:[%s7 + $0x67c] sm:$0xf]
  %v10147 = vld [vmem:[%s8] sm:$0x1]
  %v10149 = vperm.slane %v10147, 0
  %v10177 = vunpack.c.l.b16 %v9705
  %v10178 = vunpack.c.h.b16 %v9705
  %v10179 = vunpack.c.l.b16 %v9706
  %v10180 = vunpack.c.h.b16 %v9706
  %v10181 = vunpack.c.l.b16 %v9707
  %v10182 = vunpack.c.h.b16 %v9707
  %v10183 = vunpack.c.l.b16 %v9708
  %v10184 = vunpack.c.h.b16 %v9708
  %v10185 = vunpack.c.l.b16 %v9709
  %v10186 = vunpack.c.h.b16 %v9709
  %v10187 = vunpack.c.l.b16 %v9710
  %v10188 = vunpack.c.h.b16 %v9710
  %v10189 = vunpack.c.l.b16 %v9711
  %v10190 = vunpack.c.h.b16 %v9711
  %v10191 = vunpack.c.l.b16 %v9712
  %v10192 = vunpack.c.h.b16 %v9712
  %v10193 = vunpack.c.l.b16 %v9713
  %v10194 = vunpack.c.h.b16 %v9713
  %v10195 = vunpack.c.l.b16 %v9714
  %v10196 = vunpack.c.h.b16 %v9714
  %v10197 = vunpack.c.l.b16 %v9715
  %v10198 = vunpack.c.h.b16 %v9715
  %v10199 = vunpack.c.l.b16 %v9716
  %v10200 = vunpack.c.h.b16 %v9716
  %v10201 = vunpack.c.l.b16 %v9717
  %v10202 = vunpack.c.h.b16 %v9717
  %v10203 = vunpack.c.l.b16 %v9718
  %v10204 = vunpack.c.h.b16 %v9718
  %v10205 = vunpack.c.l.b16 %v9719
  %v10206 = vunpack.c.h.b16 %v9719
  %v10207 = vunpack.c.l.b16 %v9720
  %v10208 = vunpack.c.h.b16 %v9720
  %v10209 = vunpack.c.l.b16 %v9721
  %v10210 = vunpack.c.h.b16 %v9721
  %v10211 = vunpack.c.l.b16 %v9722
  %v10212 = vunpack.c.h.b16 %v9722
  %v10213 = vunpack.c.l.b16 %v9723
  %v10214 = vunpack.c.h.b16 %v9723
  %v10215 = vunpack.c.l.b16 %v9724
  %v10216 = vunpack.c.h.b16 %v9724
  %v10217 = vunpack.c.l.b16 %v9725
  %v10218 = vunpack.c.h.b16 %v9725
  %v10219 = vunpack.c.l.b16 %v9726
  %v10220 = vunpack.c.h.b16 %v9726
  %v10221 = vunpack.c.l.b16 %v9727
  %v10222 = vunpack.c.h.b16 %v9727
  %v10223 = vunpack.c.l.b16 %v9728
  %v10224 = vunpack.c.h.b16 %v9728
  %v10225 = vunpack.c.l.b16 %v9729
  %v10226 = vunpack.c.h.b16 %v9729
  %v10227 = vunpack.c.l.b16 %v9730
  %v10228 = vunpack.c.h.b16 %v9730
  %v10229 = vpack.c.b16 %v10203, %v10177
  %v10230 = vpack.c.b16 %v10204, %v10178
  %v10231 = vpack.c.b16 %v10205, %v10179
  %v10232 = vpack.c.b16 %v10206, %v10180
  %v10233 = vpack.c.b16 %v10207, %v10181
  %v10234 = vpack.c.b16 %v10208, %v10182
  %v10235 = vpack.c.b16 %v10209, %v10183
  %v10236 = vpack.c.b16 %v10210, %v10184
  %v10237 = vpack.c.b16 %v10211, %v10185
  %v10238 = vpack.c.b16 %v10212, %v10186
  %v10239 = vpack.c.b16 %v10213, %v10187
  %v10240 = vpack.c.b16 %v10214, %v10188
  %v10241 = vpack.c.b16 %v10215, %v10189
  %v10242 = vpack.c.b16 %v10216, %v10190
  %v10243 = vpack.c.b16 %v10217, %v10191
  %v10244 = vpack.c.b16 %v10218, %v10192
  %v10245 = vpack.c.b16 %v10219, %v10193
  %v10246 = vpack.c.b16 %v10220, %v10194
  %v10247 = vpack.c.b16 %v10221, %v10195
  %v10248 = vpack.c.b16 %v10222, %v10196
  %v10249 = vpack.c.b16 %v10223, %v10197
  %v10250 = vpack.c.b16 %v10224, %v10198
  %v10251 = vpack.c.b16 %v10225, %v10199
  %v10252 = vpack.c.b16 %v10226, %v10200
  %v10253 = vpack.c.b16 %v10227, %v10201
  %v10254 = vpack.c.b16 %v10228, %v10202
  %v10697 = vunpack.c.l.b16 %v9731
  %v10698 = vunpack.c.l.b16 %v9732
  %v10699 = vunpack.c.l.b16 %v9733
  %v10700 = vunpack.c.l.b16 %v9734
  %v10701 = vunpack.c.l.b16 %v9735
  %v10702 = vunpack.c.l.b16 %v9736
  %v10703 = vunpack.c.l.b16 %v9737
  %v10704 = vunpack.c.l.b16 %v9738
  %v10705 = vunpack.c.l.b16 %v9739
  %v10706 = vunpack.c.l.b16 %v9740
  %v10707 = vunpack.c.l.b16 %v9741
  %v10708 = vunpack.c.l.b16 %v9742
  %v10709 = vunpack.c.l.b16 %v9743
  %v10710 = vunpack.c.l.b16 %v9744
  %v10711 = vunpack.c.l.b16 %v9745
  %v10712 = vunpack.c.l.b16 %v9746
  %v10713 = vunpack.c.l.b16 %v9747
  %v10714 = vunpack.c.l.b16 %v9748
  %v10715 = vunpack.c.l.b16 %v9749
  %v10716 = vunpack.c.l.b16 %v9750
  %v10717 = vunpack.c.l.b16 %v9751
  %v10718 = vunpack.c.l.b16 %v9752
  %v10719 = vunpack.c.l.b16 %v9753
  %v10720 = vunpack.c.l.b16 %v9754
  %v10721 = vunpack.c.l.b16 %v9755
  %v10722 = vunpack.c.l.b16 %v9756
  %v10723 = vunpack.c.l.b16 %v9757
  %v10724 = vunpack.c.l.b16 %v9758
  %v10725 = vunpack.c.l.b16 %v9759
  %v10726 = vunpack.c.l.b16 %v9760
  %v10727 = vunpack.c.l.b16 %v9761
  %v10728 = vunpack.c.l.b16 %v9762
  %v10729 = vunpack.c.l.b16 %v9763
  %v10730 = vunpack.c.l.b16 %v9764
  %v10731 = vunpack.c.l.b16 %v9765
  %v10732 = vunpack.c.l.b16 %v9766
  %v10733 = vunpack.c.l.b16 %v9767
  %v10734 = vunpack.c.l.b16 %v9768
  %v10735 = vunpack.c.l.b16 %v9769
  %v10736 = vunpack.c.l.b16 %v9770
  %v10737 = vunpack.c.l.b16 %v9771
  %v10738 = vunpack.c.l.b16 %v9772
  %v10739 = vunpack.c.l.b16 %v9773
  %v10740 = vunpack.c.l.b16 %v9774
  %v10741 = vunpack.c.l.b16 %v9775
  %v10742 = vunpack.c.l.b16 %v9776
  %v10743 = vunpack.c.l.b16 %v9777
  %v10744 = vunpack.c.l.b16 %v9778
  %v10745 = vunpack.c.l.b16 %v9779
  %v10746 = vunpack.c.l.b16 %v9780
  %v10747 = vunpack.c.l.b16 %v9781
  %v10748 = vunpack.c.l.b16 %v9782
  %v10749 = vunpack.c.l.b16 %v9783
  %v10750 = vunpack.c.l.b16 %v9784
  %v10751 = vunpack.c.l.b16 %v9785
  %v10752 = vunpack.c.l.b16 %v9786
  %v10753 = vunpack.c.l.b16 %v9787
  %v10754 = vunpack.c.l.b16 %v9788
  %v10755 = vunpack.c.l.b16 %v9789
  %v10756 = vunpack.c.l.b16 %v9790
  %v10757 = vunpack.c.l.b16 %v9791
  %v10758 = vunpack.c.l.b16 %v9792
  %v10759 = vunpack.c.l.b16 %v9793
  %v10760 = vunpack.c.l.b16 %v9794
  %v10761 = vunpack.c.l.b16 %v9795
  %v10762 = vunpack.c.l.b16 %v9796
  %v10763 = vunpack.c.l.b16 %v9797
  %v10764 = vunpack.c.l.b16 %v9798
  %v10765 = vunpack.c.l.b16 %v9799
  %v10766 = vunpack.c.l.b16 %v9800
  %v10767 = vunpack.c.l.b16 %v9801
  %v10768 = vunpack.c.l.b16 %v9802
  %v10769 = vunpack.c.l.b16 %v9803
  %v10770 = vunpack.c.l.b16 %v9804
  %v10771 = vunpack.c.l.b16 %v9805
  %v10772 = vunpack.c.l.b16 %v9806
  %v10773 = vunpack.c.l.b16 %v9807
  %v10774 = vunpack.c.l.b16 %v9808
  %v10775 = vunpack.c.l.b16 %v9809
  %v10776 = vunpack.c.l.b16 %v9810
  %v10777 = vunpack.c.l.b16 %v9811
  %v10778 = vunpack.c.l.b16 %v9812
  %v10779 = vunpack.c.l.b16 %v9813
  %v10780 = vunpack.c.l.b16 %v9814
  %v10781 = vunpack.c.l.b16 %v9815
  %v10782 = vunpack.c.l.b16 %v9816
  %v10783 = vunpack.c.l.b16 %v9817
  %v10784 = vunpack.c.l.b16 %v9818
  %v10785 = vunpack.c.l.b16 %v9819
  %v10786 = vunpack.c.l.b16 %v9820
  %v10787 = vunpack.c.l.b16 %v9821
  %v10788 = vunpack.c.l.b16 %v9822
  %v10789 = vunpack.c.l.b16 %v9823
  %v10790 = vunpack.c.l.b16 %v9824
  %v10791 = vunpack.c.l.b16 %v9825
  %v10792 = vunpack.c.l.b16 %v9826
  %v10793 = vunpack.c.l.b16 %v9827
  %v10794 = vunpack.c.l.b16 %v9828
  %v10795 = vunpack.c.l.b16 %v9829
  %v10796 = vunpack.c.l.b16 %v9830
  %v10797 = vunpack.c.l.b16 %v9831
  %v10798 = vunpack.c.l.b16 %v9832
  %v10799 = vunpack.c.l.b16 %v9833
  %v10800 = vunpack.c.l.b16 %v9834
  %v10801 = vunpack.c.l.b16 %v9835
  %v10802 = vunpack.c.l.b16 %v9836
  %v10803 = vunpack.c.l.b16 %v9837
  %v10804 = vunpack.c.l.b16 %v9838
  %v10805 = vunpack.c.l.b16 %v9839
  %v10806 = vunpack.c.l.b16 %v9840
  %v10807 = vunpack.c.l.b16 %v9841
  %v10808 = vunpack.c.l.b16 %v9842
  %v10809 = vunpack.c.l.b16 %v9843
  %v10810 = vunpack.c.l.b16 %v9844
  %v10811 = vunpack.c.l.b16 %v9845
  %v10812 = vunpack.c.l.b16 %v9846
  %v10813 = vunpack.c.l.b16 %v9847
  %v10814 = vunpack.c.l.b16 %v9848
  %v10815 = vunpack.c.l.b16 %v9849
  %v10816 = vunpack.c.l.b16 %v9850
  %v10817 = vunpack.c.l.b16 %v9851
  %v10818 = vunpack.c.l.b16 %v9852
  %v10819 = vunpack.c.l.b16 %v9853
  %v10820 = vunpack.c.l.b16 %v9854
  %v10821 = vunpack.c.l.b16 %v9855
  %v10822 = vunpack.c.l.b16 %v9856
  %v10823 = vunpack.c.l.b16 %v9857
  %v10824 = vunpack.c.l.b16 %v9858
  %v10825 = vunpack.c.l.b16 %v9859
  %v10826 = vunpack.c.l.b16 %v9860
  %v10827 = vunpack.c.l.b16 %v9861
  %v10828 = vunpack.c.l.b16 %v9862
  %v10829 = vunpack.c.l.b16 %v9863
  %v10830 = vunpack.c.l.b16 %v9864
  %v10831 = vunpack.c.l.b16 %v9865
  %v10832 = vunpack.c.l.b16 %v9866
  %v10833 = vunpack.c.l.b16 %v9867
  %v10834 = vunpack.c.l.b16 %v9868
  %v10835 = vunpack.c.l.b16 %v9869
  %v10836 = vunpack.c.l.b16 %v9870
  %v10837 = vunpack.c.l.b16 %v9871
  %v10838 = vunpack.c.l.b16 %v9872
  %v10839 = vunpack.c.l.b16 %v9873
  %v10840 = vunpack.c.l.b16 %v9874
  %v10841 = vunpack.c.l.b16 %v9875
  %v10842 = vunpack.c.l.b16 %v9876
  %v10843 = vunpack.c.l.b16 %v9877
  %v10844 = vunpack.c.l.b16 %v9878
  %v10845 = vunpack.c.l.b16 %v9879
  %v10846 = vunpack.c.l.b16 %v9880
  %v10847 = vunpack.c.l.b16 %v9881
  %v10848 = vunpack.c.l.b16 %v9882
  %v10849 = vunpack.c.l.b16 %v9883
  %v10850 = vunpack.c.l.b16 %v9884
  %v10851 = vunpack.c.l.b16 %v9885
  %v10852 = vunpack.c.l.b16 %v9886
  %v10853 = vunpack.c.l.b16 %v9887
  %v10854 = vunpack.c.l.b16 %v9888
  %v10855 = vunpack.c.l.b16 %v9889
  %v10856 = vunpack.c.l.b16 %v9890
  %v10857 = vunpack.c.l.b16 %v9891
  %v10858 = vunpack.c.l.b16 %v9892
  %v10859 = vunpack.c.l.b16 %v9893
  %v10860 = vunpack.c.l.b16 %v9894
  %v10861 = vunpack.c.l.b16 %v9895
  %v10862 = vunpack.c.l.b16 %v9896
  %v10863 = vunpack.c.l.b16 %v9897
  %v10864 = vunpack.c.l.b16 %v9898
  %v10865 = vunpack.c.l.b16 %v9899
  %v10866 = vunpack.c.l.b16 %v9900
  %v10867 = vunpack.c.l.b16 %v9901
  %v10868 = vunpack.c.l.b16 %v9902
  %v10869 = vunpack.c.l.b16 %v9903
  %v10870 = vunpack.c.l.b16 %v9904
  %v10871 = vunpack.c.l.b16 %v9905
  %v10872 = vunpack.c.l.b16 %v9906
  %v10873 = vunpack.c.l.b16 %v9907
  %v10874 = vunpack.c.l.b16 %v9908
  %v10875 = vunpack.c.l.b16 %v9909
  %v10876 = vunpack.c.l.b16 %v9910
  %v10877 = vunpack.c.l.b16 %v9911
  %v10878 = vunpack.c.l.b16 %v9912
  %v10879 = vunpack.c.l.b16 %v9913
  %v10880 = vunpack.c.l.b16 %v9914
  %v10881 = vunpack.c.l.b16 %v9915
  %v10882 = vunpack.c.l.b16 %v9916
  %v10883 = vunpack.c.l.b16 %v9917
  %v10884 = vunpack.c.l.b16 %v9918
  %v10885 = vunpack.c.l.b16 %v9919
  %v10886 = vunpack.c.l.b16 %v9920
  %v10887 = vunpack.c.l.b16 %v9921
  %v10888 = vunpack.c.l.b16 %v9922
  %v10889 = vunpack.c.l.b16 %v9923
  %v10890 = vunpack.c.l.b16 %v9924
  %v10891 = vunpack.c.l.b16 %v9925
  %v10892 = vunpack.c.l.b16 %v9926
  %v10893 = vunpack.c.l.b16 %v9927
  %v10894 = vunpack.c.l.b16 %v9928
  %v10895 = vunpack.c.l.b16 %v9929
  %v10896 = vunpack.c.l.b16 %v9930
  %v10897 = vunpack.c.l.b16 %v9931
  %v10898 = vunpack.c.l.b16 %v9932
  %v10899 = vunpack.c.l.b16 %v9933
  %v10900 = vunpack.c.l.b16 %v9934
  %v10901 = vunpack.c.l.b16 %v9935
  %v10902 = vunpack.c.l.b16 %v9936
  %v10903 = vunpack.c.l.b16 %v9937
  %v10904 = vunpack.c.l.b16 %v9938
  %v10905 = vunpack.c.l.b16 %v9939
  %v10906 = vunpack.c.l.b16 %v9940
  %v10907 = vunpack.c.l.b16 %v9941
  %v10908 = vunpack.c.l.b16 %v9942
  %v10909 = vunpack.c.l.b16 %v9943
  %v10910 = vunpack.c.l.b16 %v9944
  %v10911 = vunpack.c.l.b16 %v9945
  %v10912 = vunpack.c.l.b16 %v9946
  %v10913 = vunpack.c.l.b16 %v9947
  %v10914 = vunpack.c.l.b16 %v9948
  %v10915 = vunpack.c.l.b16 %v9949
  %v10916 = vunpack.c.l.b16 %v9950
  %v10917 = vunpack.c.l.b16 %v9951
  %v10918 = vunpack.c.l.b16 %v9952
  %v10919 = vunpack.c.l.b16 %v9953
  %v10920 = vunpack.c.l.b16 %v9954
  %v10921 = vunpack.c.l.b16 %v9955
  %v10922 = vunpack.c.l.b16 %v9956
  %v10923 = vunpack.c.l.b16 %v9957
  %v10924 = vunpack.c.l.b16 %v9958
  %v10925 = vunpack.c.l.b16 %v9959
  %v10926 = vunpack.c.l.b16 %v9960
  %v10927 = vunpack.c.l.b16 %v9961
  %v10928 = vunpack.c.l.b16 %v9962
  %v10929 = vunpack.c.l.b16 %v9963
  %v10930 = vunpack.c.l.b16 %v9964
  %v10931 = vunpack.c.l.b16 %v9965
  %v10932 = vunpack.c.l.b16 %v9966
  %v10933 = vunpack.c.l.b16 %v9967
  %v10934 = vunpack.c.l.b16 %v9968
  %v10935 = vunpack.c.l.b16 %v9969
  %v10936 = vunpack.c.l.b16 %v9970
  %v10937 = vunpack.c.l.b16 %v9971
  %v10938 = vunpack.c.l.b16 %v9972
  %v10939 = vunpack.c.l.b16 %v9973
  %v10940 = vunpack.c.l.b16 %v9974
  %v10941 = vunpack.c.l.b16 %v9975
  %v10942 = vunpack.c.l.b16 %v9976
  %v10943 = vunpack.c.l.b16 %v9977
  %v10944 = vunpack.c.l.b16 %v9978
  %v10945 = vunpack.c.l.b16 %v9979
  %v10946 = vunpack.c.l.b16 %v9980
  %v10947 = vunpack.c.l.b16 %v9981
  %v10948 = vunpack.c.l.b16 %v9982
  %v10949 = vunpack.c.l.b16 %v9983
  %v10950 = vunpack.c.l.b16 %v9984
  %v10951 = vunpack.c.l.b16 %v9985
  %v10952 = vunpack.c.l.b16 %v9986
  %v10953 = vunpack.c.l.b16 %v9987
  %v10954 = vunpack.c.l.b16 %v9988
  %v10955 = vunpack.c.l.b16 %v9989
  %v10956 = vunpack.c.l.b16 %v9990
  %v10957 = vunpack.c.l.b16 %v9991
  %v10958 = vunpack.c.l.b16 %v9992
  %v10959 = vunpack.c.l.b16 %v9993
  %v10960 = vunpack.c.l.b16 %v9994
  %v10961 = vunpack.c.l.b16 %v9995
  %v10962 = vunpack.c.l.b16 %v9996
  %v10963 = vunpack.c.l.b16 %v9997
  %v10964 = vunpack.c.l.b16 %v9998
  %v10965 = vunpack.c.l.b16 %v9999
  %v10966 = vunpack.c.l.b16 %v10000
  %v10967 = vunpack.c.l.b16 %v10001
  %v10968 = vunpack.c.l.b16 %v10002
  %v10969 = vunpack.c.l.b16 %v10003
  %v10970 = vunpack.c.l.b16 %v10004
  %v10971 = vunpack.c.l.b16 %v10005
  %v10972 = vunpack.c.l.b16 %v10006
  %v10973 = vunpack.c.l.b16 %v10007
  %v10974 = vunpack.c.l.b16 %v10008
  %v10975 = vunpack.c.l.b16 %v10009
  %v10976 = vunpack.c.l.b16 %v10010
  %v10977 = vunpack.c.l.b16 %v10011
  %v10978 = vunpack.c.l.b16 %v10012
  %v10979 = vunpack.c.l.b16 %v10013
  %v10980 = vunpack.c.l.b16 %v10014
  %v10981 = vunpack.c.l.b16 %v10015
  %v10982 = vunpack.c.l.b16 %v10016
  %v10983 = vunpack.c.l.b16 %v10017
  %v10984 = vunpack.c.l.b16 %v10018
  %v10985 = vunpack.c.l.b16 %v10019
  %v10986 = vunpack.c.l.b16 %v10020
  %v10987 = vunpack.c.l.b16 %v10021
  %v10988 = vunpack.c.l.b16 %v10022
  %v10989 = vunpack.c.l.b16 %v10023
  %v10990 = vunpack.c.l.b16 %v10024
  %v10991 = vunpack.c.l.b16 %v10025
  %v10992 = vunpack.c.l.b16 %v10026
  %v10993 = vunpack.c.l.b16 %v10027
  %v10994 = vunpack.c.l.b16 %v10028
  %v10995 = vunpack.c.l.b16 %v10029
  %v10996 = vunpack.c.l.b16 %v10030
  %v10997 = vunpack.c.l.b16 %v10031
  %v10998 = vunpack.c.l.b16 %v10032
  %v10999 = vunpack.c.l.b16 %v10033
  %v11000 = vunpack.c.l.b16 %v10034
  %v11001 = vunpack.c.l.b16 %v10035
  %v11002 = vunpack.c.l.b16 %v10036
  %v11003 = vunpack.c.l.b16 %v10037
  %v11004 = vunpack.c.l.b16 %v10038
  %v11005 = vunpack.c.l.b16 %v10039
  %v11006 = vunpack.c.l.b16 %v10040
  %v11007 = vunpack.c.l.b16 %v10041
  %v11008 = vunpack.c.l.b16 %v10042
  %v11009 = vunpack.c.l.b16 %v10043
  %v11010 = vunpack.c.l.b16 %v10044
  %v11011 = vunpack.c.l.b16 %v10045
  %v11012 = vunpack.c.l.b16 %v10046
  %v11013 = vunpack.c.l.b16 %v10047
  %v11014 = vunpack.c.l.b16 %v10048
  %v11015 = vunpack.c.l.b16 %v10049
  %v11016 = vunpack.c.l.b16 %v10050
  %v11017 = vunpack.c.l.b16 %v10051
  %v11018 = vunpack.c.l.b16 %v10052
  %v11019 = vunpack.c.l.b16 %v10053
  %v11020 = vunpack.c.l.b16 %v10054
  %v11021 = vunpack.c.l.b16 %v10055
  %v11022 = vunpack.c.l.b16 %v10056
  %v11023 = vunpack.c.l.b16 %v10057
  %v11024 = vunpack.c.l.b16 %v10058
  %v11025 = vunpack.c.l.b16 %v10059
  %v11026 = vunpack.c.l.b16 %v10060
  %v11027 = vunpack.c.l.b16 %v10061
  %v11028 = vunpack.c.l.b16 %v10062
  %v11029 = vunpack.c.l.b16 %v10063
  %v11030 = vunpack.c.l.b16 %v10064
  %v11031 = vunpack.c.l.b16 %v10065
  %v11032 = vunpack.c.l.b16 %v10066
  %v11033 = vunpack.c.l.b16 %v10067
  %v11034 = vunpack.c.l.b16 %v10068
  %v11035 = vunpack.c.l.b16 %v10069
  %v11036 = vunpack.c.l.b16 %v10070
  %v11037 = vunpack.c.l.b16 %v10071
  %v11038 = vunpack.c.l.b16 %v10072
  %v11039 = vunpack.c.l.b16 %v10073
  %v11040 = vunpack.c.l.b16 %v10074
  %v11041 = vunpack.c.l.b16 %v10075
  %v11042 = vunpack.c.l.b16 %v10076
  %v11043 = vunpack.c.l.b16 %v10077
  %v11044 = vunpack.c.l.b16 %v10078
  %v11045 = vunpack.c.l.b16 %v10079
  %v11046 = vunpack.c.l.b16 %v10080
  %v11047 = vunpack.c.l.b16 %v10081
  %v11048 = vunpack.c.l.b16 %v10082
  %v11049 = vunpack.c.l.b16 %v10083
  %v11050 = vunpack.c.l.b16 %v10084
  %v11051 = vunpack.c.l.b16 %v10085
  %v11052 = vunpack.c.l.b16 %v10086
  %v11053 = vunpack.c.l.b16 %v10087
  %v11054 = vunpack.c.l.b16 %v10088
  %v11055 = vunpack.c.l.b16 %v10089
  %v11056 = vunpack.c.l.b16 %v10090
  %v11057 = vunpack.c.l.b16 %v10091
  %v11058 = vunpack.c.l.b16 %v10092
  %v11059 = vunpack.c.l.b16 %v10093
  %v11060 = vunpack.c.l.b16 %v10094
  %v11061 = vunpack.c.l.b16 %v10095
  %v11062 = vunpack.c.l.b16 %v10096
  %v11063 = vunpack.c.l.b16 %v10097
  %v11064 = vunpack.c.l.b16 %v10098
  %v11065 = vunpack.c.l.b16 %v10099
  %v11066 = vunpack.c.l.b16 %v10100
  %v11067 = vunpack.c.l.b16 %v10101
  %v11068 = vunpack.c.l.b16 %v10102
  %v11069 = vunpack.c.l.b16 %v10103
  %v11070 = vunpack.c.l.b16 %v10104
  %v11071 = vunpack.c.l.b16 %v10105
  %v11072 = vunpack.c.l.b16 %v10106
  %v11073 = vunpack.c.l.b16 %v10107
  %v11074 = vunpack.c.l.b16 %v10108
  %v11075 = vunpack.c.l.b16 %v10109
  %v11076 = vunpack.c.l.b16 %v10110
  %v11077 = vunpack.c.l.b16 %v10111
  %v11078 = vunpack.c.l.b16 %v10112
  %v11079 = vunpack.c.l.b16 %v10113
  %v11080 = vunpack.c.l.b16 %v10114
  %v11081 = vunpack.c.l.b16 %v10115
  %v11082 = vunpack.c.l.b16 %v10116
  %v11083 = vunpack.c.l.b16 %v10117
  %v11084 = vunpack.c.l.b16 %v10118
  %v11085 = vunpack.c.l.b16 %v10119
  %v11086 = vunpack.c.l.b16 %v10120
  %v11087 = vunpack.c.l.b16 %v10121
  %v11088 = vunpack.c.l.b16 %v10122
  %v11089 = vunpack.c.l.b16 %v10123
  %v11090 = vunpack.c.l.b16 %v10124
  %v11091 = vunpack.c.l.b16 %v10125
  %v11092 = vunpack.c.l.b16 %v10126
  %v11093 = vunpack.c.l.b16 %v10127
  %v11094 = vunpack.c.l.b16 %v10128
  %v11095 = vunpack.c.l.b16 %v10129
  %v11096 = vunpack.c.l.b16 %v10130
  %v11097 = vunpack.c.l.b16 %v10131
  %v11098 = vunpack.c.l.b16 %v10132
  %v11099 = vunpack.c.l.b16 %v10133
  %v11100 = vunpack.c.l.b16 %v10134
  %v11101 = vunpack.c.l.b16 %v10135
  %v11102 = vunpack.c.l.b16 %v10136
  %v11103 = vunpack.c.l.b16 %v10137
  %v11104 = vunpack.c.l.b16 %v10138
  %v11105 = vunpack.c.l.b16 %v10139
  %v11106 = vunpack.c.l.b16 %v10140
  %v11107 = vunpack.c.l.b16 %v10141
  %v11108 = vunpack.c.l.b16 %v10142
  %v11109 = vunpack.c.l.b16 %v10143
  %v11110 = vunpack.c.l.b16 %v10144
  %v11111 = vunpack.c.l.b16 %v10145
  %v11112 = vunpack.c.l.b16 %v10146
  %v11113 = vpack.c.b16 %v10698, %v10697
  %v11114 = vpack.c.b16 %v10700, %v10699
  %v11115 = vpack.c.b16 %v10702, %v10701
  %v11116 = vpack.c.b16 %v10704, %v10703
  %v11117 = vpack.c.b16 %v10706, %v10705
  %v11118 = vpack.c.b16 %v10708, %v10707
  %v11119 = vpack.c.b16 %v10710, %v10709
  %v11120 = vpack.c.b16 %v10712, %v10711
  %v11121 = vpack.c.b16 %v10714, %v10713
  %v11122 = vpack.c.b16 %v10716, %v10715
  %v11123 = vpack.c.b16 %v10718, %v10717
  %v11124 = vpack.c.b16 %v10720, %v10719
  %v11125 = vpack.c.b16 %v10722, %v10721
  %v11126 = vpack.c.b16 %v10724, %v10723
  %v11127 = vpack.c.b16 %v10726, %v10725
  %v11128 = vpack.c.b16 %v10728, %v10727
  %v11129 = vpack.c.b16 %v10730, %v10729
  %v11130 = vpack.c.b16 %v10732, %v10731
  %v11131 = vpack.c.b16 %v10734, %v10733
  %v11132 = vpack.c.b16 %v10736, %v10735
  %v11133 = vpack.c.b16 %v10738, %v10737
  %v11134 = vpack.c.b16 %v10740, %v10739
  %v11135 = vpack.c.b16 %v10742, %v10741
  %v11136 = vpack.c.b16 %v10744, %v10743
  %v11137 = vpack.c.b16 %v10746, %v10745
  %v11138 = vpack.c.b16 %v10748, %v10747
  %v11139 = vpack.c.b16 %v10750, %v10749
  %v11140 = vpack.c.b16 %v10752, %v10751
  %v11141 = vpack.c.b16 %v10754, %v10753
  %v11142 = vpack.c.b16 %v10756, %v10755
  %v11143 = vpack.c.b16 %v10758, %v10757
  %v11144 = vpack.c.b16 %v10760, %v10759
  %v11145 = vpack.c.b16 %v10762, %v10761
  %v11146 = vpack.c.b16 %v10764, %v10763
  %v11147 = vpack.c.b16 %v10766, %v10765
  %v11148 = vpack.c.b16 %v10768, %v10767
  %v11149 = vpack.c.b16 %v10770, %v10769
  %v11150 = vpack.c.b16 %v10772, %v10771
  %v11151 = vpack.c.b16 %v10774, %v10773
  %v11152 = vpack.c.b16 %v10776, %v10775
  %v11153 = vpack.c.b16 %v10778, %v10777
  %v11154 = vpack.c.b16 %v10780, %v10779
  %v11155 = vpack.c.b16 %v10782, %v10781
  %v11156 = vpack.c.b16 %v10784, %v10783
  %v11157 = vpack.c.b16 %v10786, %v10785
  %v11158 = vpack.c.b16 %v10788, %v10787
  %v11159 = vpack.c.b16 %v10790, %v10789
  %v11160 = vpack.c.b16 %v10792, %v10791
  %v11161 = vpack.c.b16 %v10794, %v10793
  %v11162 = vpack.c.b16 %v10796, %v10795
  %v11163 = vpack.c.b16 %v10798, %v10797
  %v11164 = vpack.c.b16 %v10800, %v10799
  %v11165 = vpack.c.b16 %v10802, %v10801
  %v11166 = vpack.c.b16 %v10804, %v10803
  %v11167 = vpack.c.b16 %v10806, %v10805
  %v11168 = vpack.c.b16 %v10808, %v10807
  %v11169 = vpack.c.b16 %v10810, %v10809
  %v11170 = vpack.c.b16 %v10812, %v10811
  %v11171 = vpack.c.b16 %v10814, %v10813
  %v11172 = vpack.c.b16 %v10816, %v10815
  %v11173 = vpack.c.b16 %v10818, %v10817
  %v11174 = vpack.c.b16 %v10820, %v10819
  %v11175 = vpack.c.b16 %v10822, %v10821
  %v11176 = vpack.c.b16 %v10824, %v10823
  %v11177 = vpack.c.b16 %v10826, %v10825
  %v11178 = vpack.c.b16 %v10828, %v10827
  %v11179 = vpack.c.b16 %v10830, %v10829
  %v11180 = vpack.c.b16 %v10832, %v10831
  %v11181 = vpack.c.b16 %v10834, %v10833
  %v11182 = vpack.c.b16 %v10836, %v10835
  %v11183 = vpack.c.b16 %v10838, %v10837
  %v11184 = vpack.c.b16 %v10840, %v10839
  %v11185 = vpack.c.b16 %v10842, %v10841
  %v11186 = vpack.c.b16 %v10844, %v10843
  %v11187 = vpack.c.b16 %v10846, %v10845
  %v11188 = vpack.c.b16 %v10848, %v10847
  %v11189 = vpack.c.b16 %v10850, %v10849
  %v11190 = vpack.c.b16 %v10852, %v10851
  %v11191 = vpack.c.b16 %v10854, %v10853
  %v11192 = vpack.c.b16 %v10856, %v10855
  %v11193 = vpack.c.b16 %v10858, %v10857
  %v11194 = vpack.c.b16 %v10860, %v10859
  %v11195 = vpack.c.b16 %v10862, %v10861
  %v11196 = vpack.c.b16 %v10864, %v10863
  %v11197 = vpack.c.b16 %v10866, %v10865
  %v11198 = vpack.c.b16 %v10868, %v10867
  %v11199 = vpack.c.b16 %v10870, %v10869
  %v11200 = vpack.c.b16 %v10872, %v10871
  %v11201 = vpack.c.b16 %v10874, %v10873
  %v11202 = vpack.c.b16 %v10876, %v10875
  %v11203 = vpack.c.b16 %v10878, %v10877
  %v11204 = vpack.c.b16 %v10880, %v10879
  %v11205 = vpack.c.b16 %v10882, %v10881
  %v11206 = vpack.c.b16 %v10884, %v10883
  %v11207 = vpack.c.b16 %v10886, %v10885
  %v11208 = vpack.c.b16 %v10888, %v10887
  %v11209 = vpack.c.b16 %v10890, %v10889
  %v11210 = vpack.c.b16 %v10892, %v10891
  %v11211 = vpack.c.b16 %v10894, %v10893
  %v11212 = vpack.c.b16 %v10896, %v10895
  %v11213 = vpack.c.b16 %v10898, %v10897
  %v11214 = vpack.c.b16 %v10900, %v10899
  %v11215 = vpack.c.b16 %v10902, %v10901
  %v11216 = vpack.c.b16 %v10904, %v10903
  %v11217 = vpack.c.b16 %v10906, %v10905
  %v11218 = vpack.c.b16 %v10908, %v10907
  %v11219 = vpack.c.b16 %v10910, %v10909
  %v11220 = vpack.c.b16 %v10912, %v10911
  %v11221 = vpack.c.b16 %v10914, %v10913
  %v11222 = vpack.c.b16 %v10916, %v10915
  %v11223 = vpack.c.b16 %v10918, %v10917
  %v11224 = vpack.c.b16 %v10920, %v10919
  %v11225 = vpack.c.b16 %v10922, %v10921
  %v11226 = vpack.c.b16 %v10924, %v10923
  %v11227 = vpack.c.b16 %v10926, %v10925
  %v11228 = vpack.c.b16 %v10928, %v10927
  %v11229 = vpack.c.b16 %v10930, %v10929
  %v11230 = vpack.c.b16 %v10932, %v10931
  %v11231 = vpack.c.b16 %v10934, %v10933
  %v11232 = vpack.c.b16 %v10936, %v10935
  %v11233 = vpack.c.b16 %v10938, %v10937
  %v11234 = vpack.c.b16 %v10940, %v10939
  %v11235 = vpack.c.b16 %v10942, %v10941
  %v11236 = vpack.c.b16 %v10944, %v10943
  %v11237 = vpack.c.b16 %v10946, %v10945
  %v11238 = vpack.c.b16 %v10948, %v10947
  %v11239 = vpack.c.b16 %v10950, %v10949
  %v11240 = vpack.c.b16 %v10952, %v10951
  %v11241 = vpack.c.b16 %v10954, %v10953
  %v11242 = vpack.c.b16 %v10956, %v10955
  %v11243 = vpack.c.b16 %v10958, %v10957
  %v11244 = vpack.c.b16 %v10960, %v10959
  %v11245 = vpack.c.b16 %v10962, %v10961
  %v11246 = vpack.c.b16 %v10964, %v10963
  %v11247 = vpack.c.b16 %v10966, %v10965
  %v11248 = vpack.c.b16 %v10968, %v10967
  %v11249 = vpack.c.b16 %v10970, %v10969
  %v11250 = vpack.c.b16 %v10972, %v10971
  %v11251 = vpack.c.b16 %v10974, %v10973
  %v11252 = vpack.c.b16 %v10976, %v10975
  %v11253 = vpack.c.b16 %v10978, %v10977
  %v11254 = vpack.c.b16 %v10980, %v10979
  %v11255 = vpack.c.b16 %v10982, %v10981
  %v11256 = vpack.c.b16 %v10984, %v10983
  %v11257 = vpack.c.b16 %v10986, %v10985
  %v11258 = vpack.c.b16 %v10988, %v10987
  %v11259 = vpack.c.b16 %v10990, %v10989
  %v11260 = vpack.c.b16 %v10992, %v10991
  %v11261 = vpack.c.b16 %v10994, %v10993
  %v11262 = vpack.c.b16 %v10996, %v10995
  %v11263 = vpack.c.b16 %v10998, %v10997
  %v11264 = vpack.c.b16 %v11000, %v10999
  %v11265 = vpack.c.b16 %v11002, %v11001
  %v11266 = vpack.c.b16 %v11004, %v11003
  %v11267 = vpack.c.b16 %v11006, %v11005
  %v11268 = vpack.c.b16 %v11008, %v11007
  %v11269 = vpack.c.b16 %v11010, %v11009
  %v11270 = vpack.c.b16 %v11012, %v11011
  %v11271 = vpack.c.b16 %v11014, %v11013
  %v11272 = vpack.c.b16 %v11016, %v11015
  %v11273 = vpack.c.b16 %v11018, %v11017
  %v11274 = vpack.c.b16 %v11020, %v11019
  %v11275 = vpack.c.b16 %v11022, %v11021
  %v11276 = vpack.c.b16 %v11024, %v11023
  %v11277 = vpack.c.b16 %v11026, %v11025
  %v11278 = vpack.c.b16 %v11028, %v11027
  %v11279 = vpack.c.b16 %v11030, %v11029
  %v11280 = vpack.c.b16 %v11032, %v11031
  %v11281 = vpack.c.b16 %v11034, %v11033
  %v11282 = vpack.c.b16 %v11036, %v11035
  %v11283 = vpack.c.b16 %v11038, %v11037
  %v11284 = vpack.c.b16 %v11040, %v11039
  %v11285 = vpack.c.b16 %v11042, %v11041
  %v11286 = vpack.c.b16 %v11044, %v11043
  %v11287 = vpack.c.b16 %v11046, %v11045
  %v11288 = vpack.c.b16 %v11048, %v11047
  %v11289 = vpack.c.b16 %v11050, %v11049
  %v11290 = vpack.c.b16 %v11052, %v11051
  %v11291 = vpack.c.b16 %v11054, %v11053
  %v11292 = vpack.c.b16 %v11056, %v11055
  %v11293 = vpack.c.b16 %v11058, %v11057
  %v11294 = vpack.c.b16 %v11060, %v11059
  %v11295 = vpack.c.b16 %v11062, %v11061
  %v11296 = vpack.c.b16 %v11064, %v11063
  %v11297 = vpack.c.b16 %v11066, %v11065
  %v11298 = vpack.c.b16 %v11068, %v11067
  %v11299 = vpack.c.b16 %v11070, %v11069
  %v11300 = vpack.c.b16 %v11072, %v11071
  %v11301 = vpack.c.b16 %v11074, %v11073
  %v11302 = vpack.c.b16 %v11076, %v11075
  %v11303 = vpack.c.b16 %v11078, %v11077
  %v11304 = vpack.c.b16 %v11080, %v11079
  %v11305 = vpack.c.b16 %v11082, %v11081
  %v11306 = vpack.c.b16 %v11084, %v11083
  %v11307 = vpack.c.b16 %v11086, %v11085
  %v11308 = vpack.c.b16 %v11088, %v11087
  %v11309 = vpack.c.b16 %v11090, %v11089
  %v11310 = vpack.c.b16 %v11092, %v11091
  %v11311 = vpack.c.b16 %v11094, %v11093
  %v11312 = vpack.c.b16 %v11096, %v11095
  %v11313 = vpack.c.b16 %v11098, %v11097
  %v11314 = vpack.c.b16 %v11100, %v11099
  %v11315 = vpack.c.b16 %v11102, %v11101
  %v11316 = vpack.c.b16 %v11104, %v11103
  %v11317 = vpack.c.b16 %v11106, %v11105
  %v11318 = vpack.c.b16 %v11108, %v11107
  %v11319 = vpack.c.b16 %v11110, %v11109
  %v11320 = vpack.c.b16 %v11112, %v11111
  %11529 = vmatpush.bf16.msra.mxu0 %v11120
  %11530 = vmatpush.bf16.msra.mxu0 %v11119
  %11531 = vmatpush.bf16.msra.mxu0 %v11118
  %11532 = vmatpush.bf16.msra.mxu0 %v11117
  %11533 = vmatpush.bf16.msra.mxu0 %v11116
  %11534 = vmatpush.bf16.msra.mxu0 %v11115
  %11535 = vmatpush.bf16.msra.mxu0 %v11114
  %11536 = vmatpush.bf16.msra.mxu0 %v11113
  %11537 = vmatmul.bf16.gmra.mxu0 %v10229
  %v11538 = vpop.f32.mrf.mxu0
  %v11539 = vadd.f32 %v10149, %v11538
  %v11540 = vpop.f32.mrf.mxu0
  %v11541 = vadd.f32 %v10149, %v11540
  %11542 = vdwg.mxu0
  %11543 = vmatpush.bf16.msra.mxu0 %v11128
  %11544 = vmatpush.bf16.msra.mxu0 %v11127
  %11545 = vmatpush.bf16.msra.mxu0 %v11126
  %11546 = vmatpush.bf16.msra.mxu0 %v11125
  %11547 = vmatpush.bf16.msra.mxu0 %v11124
  %11548 = vmatpush.bf16.msra.mxu0 %v11123
  %11549 = vmatpush.bf16.msra.mxu0 %v11122
  %11550 = vmatpush.bf16.msra.mxu0 %v11121
  %11551 = vmatmul.bf16.gmra.mxu0 %v10230
  %v11552 = vpop.f32.mrf.mxu0
  %v11553 = vadd.f32 %v11539, %v11552
  %v11554 = vpop.f32.mrf.mxu0
  %v11555 = vadd.f32 %v11541, %v11554
  %11556 = vdwg.mxu0
  %11557 = vmatpush.bf16.msra.mxu0 %v11136
  %11558 = vmatpush.bf16.msra.mxu0 %v11135
  %11559 = vmatpush.bf16.msra.mxu0 %v11134
  %11560 = vmatpush.bf16.msra.mxu0 %v11133
  %11561 = vmatpush.bf16.msra.mxu0 %v11132
  %11562 = vmatpush.bf16.msra.mxu0 %v11131
  %11563 = vmatpush.bf16.msra.mxu0 %v11130
  %11564 = vmatpush.bf16.msra.mxu0 %v11129
  %11565 = vmatmul.bf16.gmra.mxu0 %v10231
  %v11566 = vpop.f32.mrf.mxu0
  %v11567 = vadd.f32 %v11553, %v11566
  %v11568 = vpop.f32.mrf.mxu0
  %v11569 = vadd.f32 %v11555, %v11568
  %11570 = vdwg.mxu0
  %11571 = vmatpush.bf16.msra.mxu0 %v11144
  %11572 = vmatpush.bf16.msra.mxu0 %v11143
  %11573 = vmatpush.bf16.msra.mxu0 %v11142
  %11574 = vmatpush.bf16.msra.mxu0 %v11141
  %11575 = vmatpush.bf16.msra.mxu0 %v11140
  %11576 = vmatpush.bf16.msra.mxu0 %v11139
  %11577 = vmatpush.bf16.msra.mxu0 %v11138
  %11578 = vmatpush.bf16.msra.mxu0 %v11137
  %11579 = vmatmul.bf16.gmra.mxu0 %v10232
  %v11580 = vpop.f32.mrf.mxu0
  %v11581 = vadd.f32 %v11567, %v11580
  %v11582 = vpop.f32.mrf.mxu0
  %v11583 = vadd.f32 %v11569, %v11582
  %11584 = vdwg.mxu0
  %11585 = vmatpush.bf16.msra.mxu0 %v11152
  %11586 = vmatpush.bf16.msra.mxu0 %v11151
  %11587 = vmatpush.bf16.msra.mxu0 %v11150
  %11588 = vmatpush.bf16.msra.mxu0 %v11149
  %11589 = vmatpush.bf16.msra.mxu0 %v11148
  %11590 = vmatpush.bf16.msra.mxu0 %v11147
  %11591 = vmatpush.bf16.msra.mxu0 %v11146
  %11592 = vmatpush.bf16.msra.mxu0 %v11145
  %11593 = vmatmul.bf16.gmra.mxu0 %v10233
  %v11594 = vpop.f32.mrf.mxu0
  %v11595 = vadd.f32 %v11581, %v11594
  %v11596 = vpop.f32.mrf.mxu0
  %v11597 = vadd.f32 %v11583, %v11596
  %11598 = vdwg.mxu0
  %11599 = vmatpush.bf16.msra.mxu0 %v11160
  %11600 = vmatpush.bf16.msra.mxu0 %v11159
  %11601 = vmatpush.bf16.msra.mxu0 %v11158
  %11602 = vmatpush.bf16.msra.mxu0 %v11157
  %11603 = vmatpush.bf16.msra.mxu0 %v11156
  %11604 = vmatpush.bf16.msra.mxu0 %v11155
  %11605 = vmatpush.bf16.msra.mxu0 %v11154
  %11606 = vmatpush.bf16.msra.mxu0 %v11153
  %11607 = vmatmul.bf16.gmra.mxu0 %v10234
  %v11608 = vpop.f32.mrf.mxu0
  %v11609 = vadd.f32 %v11595, %v11608
  %v11610 = vpop.f32.mrf.mxu0
  %v11611 = vadd.f32 %v11597, %v11610
  %11612 = vdwg.mxu0
  %11613 = vmatpush.bf16.msra.mxu0 %v11168
  %11614 = vmatpush.bf16.msra.mxu0 %v11167
  %11615 = vmatpush.bf16.msra.mxu0 %v11166
  %11616 = vmatpush.bf16.msra.mxu0 %v11165
  %11617 = vmatpush.bf16.msra.mxu0 %v11164
  %11618 = vmatpush.bf16.msra.mxu0 %v11163
  %11619 = vmatpush.bf16.msra.mxu0 %v11162
  %11620 = vmatpush.bf16.msra.mxu0 %v11161
  %11621 = vmatmul.bf16.gmra.mxu0 %v10235
  %v11622 = vpop.f32.mrf.mxu0
  %v11623 = vadd.f32 %v11609, %v11622
  %v11624 = vpop.f32.mrf.mxu0
  %v11625 = vadd.f32 %v11611, %v11624
  %11626 = vdwg.mxu0
  %11627 = vmatpush.bf16.msra.mxu0 %v11176
  %11628 = vmatpush.bf16.msra.mxu0 %v11175
  %11629 = vmatpush.bf16.msra.mxu0 %v11174
  %11630 = vmatpush.bf16.msra.mxu0 %v11173
  %11631 = vmatpush.bf16.msra.mxu0 %v11172
  %11632 = vmatpush.bf16.msra.mxu0 %v11171
  %11633 = vmatpush.bf16.msra.mxu0 %v11170
  %11634 = vmatpush.bf16.msra.mxu0 %v11169
  %11635 = vmatmul.bf16.gmra.mxu0 %v10236
  %v11636 = vpop.f32.mrf.mxu0
  %v11637 = vadd.f32 %v11623, %v11636
  %v11638 = vpop.f32.mrf.mxu0
  %v11639 = vadd.f32 %v11625, %v11638
  %11640 = vdwg.mxu0
  %11641 = vmatpush.bf16.msra.mxu0 %v11184
  %11642 = vmatpush.bf16.msra.mxu0 %v11183
  %11643 = vmatpush.bf16.msra.mxu0 %v11182
  %11644 = vmatpush.bf16.msra.mxu0 %v11181
  %11645 = vmatpush.bf16.msra.mxu0 %v11180
  %11646 = vmatpush.bf16.msra.mxu0 %v11179
  %11647 = vmatpush.bf16.msra.mxu0 %v11178
  %11648 = vmatpush.bf16.msra.mxu0 %v11177
  %11649 = vmatmul.bf16.gmra.mxu0 %v10237
  %v11650 = vpop.f32.mrf.mxu0
  %v11651 = vadd.f32 %v11637, %v11650
  %v11652 = vpop.f32.mrf.mxu0
  %v11653 = vadd.f32 %v11639, %v11652
  %11654 = vdwg.mxu0
  %11655 = vmatpush.bf16.msra.mxu0 %v11192
  %11656 = vmatpush.bf16.msra.mxu0 %v11191
  %11657 = vmatpush.bf16.msra.mxu0 %v11190
  %11658 = vmatpush.bf16.msra.mxu0 %v11189
  %11659 = vmatpush.bf16.msra.mxu0 %v11188
  %11660 = vmatpush.bf16.msra.mxu0 %v11187
  %11661 = vmatpush.bf16.msra.mxu0 %v11186
  %11662 = vmatpush.bf16.msra.mxu0 %v11185
  %11663 = vmatmul.bf16.gmra.mxu0 %v10238
  %v11664 = vpop.f32.mrf.mxu0
  %v11665 = vadd.f32 %v11651, %v11664
  %v11666 = vpop.f32.mrf.mxu0
  %v11667 = vadd.f32 %v11653, %v11666
  %11668 = vdwg.mxu0
  %11669 = vmatpush.bf16.msra.mxu0 %v11200
  %11670 = vmatpush.bf16.msra.mxu0 %v11199
  %11671 = vmatpush.bf16.msra.mxu0 %v11198
  %11672 = vmatpush.bf16.msra.mxu0 %v11197
  %11673 = vmatpush.bf16.msra.mxu0 %v11196
  %11674 = vmatpush.bf16.msra.mxu0 %v11195
  %11675 = vmatpush.bf16.msra.mxu0 %v11194
  %11676 = vmatpush.bf16.msra.mxu0 %v11193
  %11677 = vmatmul.bf16.gmra.mxu0 %v10239
  %v11678 = vpop.f32.mrf.mxu0
  %v11679 = vadd.f32 %v11665, %v11678
  %v11680 = vpop.f32.mrf.mxu0
  %v11681 = vadd.f32 %v11667, %v11680
  %11682 = vdwg.mxu0
  %11683 = vmatpush.bf16.msra.mxu0 %v11208
  %11684 = vmatpush.bf16.msra.mxu0 %v11207
  %11685 = vmatpush.bf16.msra.mxu0 %v11206
  %11686 = vmatpush.bf16.msra.mxu0 %v11205
  %11687 = vmatpush.bf16.msra.mxu0 %v11204
  %11688 = vmatpush.bf16.msra.mxu0 %v11203
  %11689 = vmatpush.bf16.msra.mxu0 %v11202
  %11690 = vmatpush.bf16.msra.mxu0 %v11201
  %11691 = vmatmul.bf16.gmra.mxu0 %v10240
  %v11692 = vpop.f32.mrf.mxu0
  %v11693 = vadd.f32 %v11679, %v11692
  %v11694 = vpop.f32.mrf.mxu0
  %v11695 = vadd.f32 %v11681, %v11694
  %11696 = vdwg.mxu0
  %11697 = vmatpush.bf16.msra.mxu0 %v11216
  %11698 = vmatpush.bf16.msra.mxu0 %v11215
  %11699 = vmatpush.bf16.msra.mxu0 %v11214
  %11700 = vmatpush.bf16.msra.mxu0 %v11213
  %11701 = vmatpush.bf16.msra.mxu0 %v11212
  %11702 = vmatpush.bf16.msra.mxu0 %v11211
  %11703 = vmatpush.bf16.msra.mxu0 %v11210
  %11704 = vmatpush.bf16.msra.mxu0 %v11209
  %11705 = vmatmul.bf16.gmra.mxu0 %v10241
  %v11706 = vpop.f32.mrf.mxu0
  %v11707 = vadd.f32 %v11693, %v11706
  %v11708 = vpop.f32.mrf.mxu0
  %v11709 = vadd.f32 %v11695, %v11708
  %11710 = vdwg.mxu0
  %11711 = vmatpush.bf16.msra.mxu0 %v11224
  %11712 = vmatpush.bf16.msra.mxu0 %v11223
  %11713 = vmatpush.bf16.msra.mxu0 %v11222
  %11714 = vmatpush.bf16.msra.mxu0 %v11221
  %11715 = vmatpush.bf16.msra.mxu0 %v11220
  %11716 = vmatpush.bf16.msra.mxu0 %v11219
  %11717 = vmatpush.bf16.msra.mxu0 %v11218
  %11718 = vmatpush.bf16.msra.mxu0 %v11217
  %11719 = vmatmul.bf16.gmra.mxu0 %v10242
  %v11720 = vpop.f32.mrf.mxu0
  %v11721 = vadd.f32 %v11707, %v11720
  %v11722 = vpop.f32.mrf.mxu0
  %v11723 = vadd.f32 %v11709, %v11722
  %11724 = vdwg.mxu0
  %11725 = vmatpush.bf16.msra.mxu0 %v11232
  %11726 = vmatpush.bf16.msra.mxu0 %v11231
  %11727 = vmatpush.bf16.msra.mxu0 %v11230
  %11728 = vmatpush.bf16.msra.mxu0 %v11229
  %11729 = vmatpush.bf16.msra.mxu0 %v11228
  %11730 = vmatpush.bf16.msra.mxu0 %v11227
  %11731 = vmatpush.bf16.msra.mxu0 %v11226
  %11732 = vmatpush.bf16.msra.mxu0 %v11225
  %11733 = vmatmul.bf16.gmra.mxu0 %v10243
  %v11734 = vpop.f32.mrf.mxu0
  %v11735 = vadd.f32 %v11721, %v11734
  %v11736 = vpop.f32.mrf.mxu0
  %v11737 = vadd.f32 %v11723, %v11736
  %11738 = vdwg.mxu0
  %11739 = vmatpush.bf16.msra.mxu0 %v11240
  %11740 = vmatpush.bf16.msra.mxu0 %v11239
  %11741 = vmatpush.bf16.msra.mxu0 %v11238
  %11742 = vmatpush.bf16.msra.mxu0 %v11237
  %11743 = vmatpush.bf16.msra.mxu0 %v11236
  %11744 = vmatpush.bf16.msra.mxu0 %v11235
  %11745 = vmatpush.bf16.msra.mxu0 %v11234
  %11746 = vmatpush.bf16.msra.mxu0 %v11233
  %11747 = vmatmul.bf16.gmra.mxu0 %v10244
  %v11748 = vpop.f32.mrf.mxu0
  %v11749 = vadd.f32 %v11735, %v11748
  %v11750 = vpop.f32.mrf.mxu0
  %v11751 = vadd.f32 %v11737, %v11750
  %11752 = vdwg.mxu0
  %11753 = vmatpush.bf16.msra.mxu0 %v11248
  %11754 = vmatpush.bf16.msra.mxu0 %v11247
  %11755 = vmatpush.bf16.msra.mxu0 %v11246
  %11756 = vmatpush.bf16.msra.mxu0 %v11245
  %11757 = vmatpush.bf16.msra.mxu0 %v11244
  %11758 = vmatpush.bf16.msra.mxu0 %v11243
  %11759 = vmatpush.bf16.msra.mxu0 %v11242
  %11760 = vmatpush.bf16.msra.mxu0 %v11241
  %11761 = vmatmul.bf16.gmra.mxu0 %v10245
  %v11762 = vpop.f32.mrf.mxu0
  %v11763 = vadd.f32 %v11749, %v11762
  %v11764 = vpop.f32.mrf.mxu0
  %v11765 = vadd.f32 %v11751, %v11764
  %11766 = vdwg.mxu0
  %11767 = vmatpush.bf16.msra.mxu0 %v11256
  %11768 = vmatpush.bf16.msra.mxu0 %v11255
  %11769 = vmatpush.bf16.msra.mxu0 %v11254
  %11770 = vmatpush.bf16.msra.mxu0 %v11253
  %11771 = vmatpush.bf16.msra.mxu0 %v11252
  %11772 = vmatpush.bf16.msra.mxu0 %v11251
  %11773 = vmatpush.bf16.msra.mxu0 %v11250
  %11774 = vmatpush.bf16.msra.mxu0 %v11249
  %11775 = vmatmul.bf16.gmra.mxu0 %v10246
  %v11776 = vpop.f32.mrf.mxu0
  %v11777 = vadd.f32 %v11763, %v11776
  %v11778 = vpop.f32.mrf.mxu0
  %v11779 = vadd.f32 %v11765, %v11778
  %11780 = vdwg.mxu0
  %11781 = vmatpush.bf16.msra.mxu0 %v11264
  %11782 = vmatpush.bf16.msra.mxu0 %v11263
  %11783 = vmatpush.bf16.msra.mxu0 %v11262
  %11784 = vmatpush.bf16.msra.mxu0 %v11261
  %11785 = vmatpush.bf16.msra.mxu0 %v11260
  %11786 = vmatpush.bf16.msra.mxu0 %v11259
  %11787 = vmatpush.bf16.msra.mxu0 %v11258
  %11788 = vmatpush.bf16.msra.mxu0 %v11257
  %11789 = vmatmul.bf16.gmra.mxu0 %v10247
  %v11790 = vpop.f32.mrf.mxu0
  %v11791 = vadd.f32 %v11777, %v11790
  %v11792 = vpop.f32.mrf.mxu0
  %v11793 = vadd.f32 %v11779, %v11792
  %11794 = vdwg.mxu0
  %11795 = vmatpush.bf16.msra.mxu0 %v11272
  %11796 = vmatpush.bf16.msra.mxu0 %v11271
  %11797 = vmatpush.bf16.msra.mxu0 %v11270
  %11798 = vmatpush.bf16.msra.mxu0 %v11269
  %11799 = vmatpush.bf16.msra.mxu0 %v11268
  %11800 = vmatpush.bf16.msra.mxu0 %v11267
  %11801 = vmatpush.bf16.msra.mxu0 %v11266
  %11802 = vmatpush.bf16.msra.mxu0 %v11265
  %11803 = vmatmul.bf16.gmra.mxu0 %v10248
  %v11804 = vpop.f32.mrf.mxu0
  %v11805 = vadd.f32 %v11791, %v11804
  %v11806 = vpop.f32.mrf.mxu0
  %v11807 = vadd.f32 %v11793, %v11806
  %11808 = vdwg.mxu0
  %11809 = vmatpush.bf16.msra.mxu0 %v11280
  %11810 = vmatpush.bf16.msra.mxu0 %v11279
  %11811 = vmatpush.bf16.msra.mxu0 %v11278
  %11812 = vmatpush.bf16.msra.mxu0 %v11277
  %11813 = vmatpush.bf16.msra.mxu0 %v11276
  %11814 = vmatpush.bf16.msra.mxu0 %v11275
  %11815 = vmatpush.bf16.msra.mxu0 %v11274
  %11816 = vmatpush.bf16.msra.mxu0 %v11273
  %11817 = vmatmul.bf16.gmra.mxu0 %v10249
  %v11818 = vpop.f32.mrf.mxu0
  %v11819 = vadd.f32 %v11805, %v11818
  %v11820 = vpop.f32.mrf.mxu0
  %v11821 = vadd.f32 %v11807, %v11820
  %11822 = vdwg.mxu0
  %11823 = vmatpush.bf16.msra.mxu0 %v11288
  %11824 = vmatpush.bf16.msra.mxu0 %v11287
  %11825 = vmatpush.bf16.msra.mxu0 %v11286
  %11826 = vmatpush.bf16.msra.mxu0 %v11285
  %11827 = vmatpush.bf16.msra.mxu0 %v11284
  %11828 = vmatpush.bf16.msra.mxu0 %v11283
  %11829 = vmatpush.bf16.msra.mxu0 %v11282
  %11830 = vmatpush.bf16.msra.mxu0 %v11281
  %11831 = vmatmul.bf16.gmra.mxu0 %v10250
  %v11832 = vpop.f32.mrf.mxu0
  %v11833 = vadd.f32 %v11819, %v11832
  %v11834 = vpop.f32.mrf.mxu0
  %v11835 = vadd.f32 %v11821, %v11834
  %11836 = vdwg.mxu0
  %11837 = vmatpush.bf16.msra.mxu0 %v11296
  %11838 = vmatpush.bf16.msra.mxu0 %v11295
  %11839 = vmatpush.bf16.msra.mxu0 %v11294
  %11840 = vmatpush.bf16.msra.mxu0 %v11293
  %11841 = vmatpush.bf16.msra.mxu0 %v11292
  %11842 = vmatpush.bf16.msra.mxu0 %v11291
  %11843 = vmatpush.bf16.msra.mxu0 %v11290
  %11844 = vmatpush.bf16.msra.mxu0 %v11289
  %11845 = vmatmul.bf16.gmra.mxu0 %v10251
  %v11846 = vpop.f32.mrf.mxu0
  %v11847 = vadd.f32 %v11833, %v11846
  %v11848 = vpop.f32.mrf.mxu0
  %v11849 = vadd.f32 %v11835, %v11848
  %11850 = vdwg.mxu0
  %11851 = vmatpush.bf16.msra.mxu0 %v11304
  %11852 = vmatpush.bf16.msra.mxu0 %v11303
  %11853 = vmatpush.bf16.msra.mxu0 %v11302
  %11854 = vmatpush.bf16.msra.mxu0 %v11301
  %11855 = vmatpush.bf16.msra.mxu0 %v11300
  %11856 = vmatpush.bf16.msra.mxu0 %v11299
  %11857 = vmatpush.bf16.msra.mxu0 %v11298
  %11858 = vmatpush.bf16.msra.mxu0 %v11297
  %11859 = vmatmul.bf16.gmra.mxu0 %v10252
  %v11860 = vpop.f32.mrf.mxu0
  %v11861 = vadd.f32 %v11847, %v11860
  %v11862 = vpop.f32.mrf.mxu0
  %v11863 = vadd.f32 %v11849, %v11862
  %11864 = vdwg.mxu0
  %11865 = vmatpush.bf16.msra.mxu0 %v11312
  %11866 = vmatpush.bf16.msra.mxu0 %v11311
  %11867 = vmatpush.bf16.msra.mxu0 %v11310
  %11868 = vmatpush.bf16.msra.mxu0 %v11309
  %11869 = vmatpush.bf16.msra.mxu0 %v11308
  %11870 = vmatpush.bf16.msra.mxu0 %v11307
  %11871 = vmatpush.bf16.msra.mxu0 %v11306
  %11872 = vmatpush.bf16.msra.mxu0 %v11305
  %11873 = vmatmul.bf16.gmra.mxu0 %v10253
  %v11874 = vpop.f32.mrf.mxu0
  %v11875 = vadd.f32 %v11861, %v11874
  %v11876 = vpop.f32.mrf.mxu0
  %v11877 = vadd.f32 %v11863, %v11876
  %11878 = vdwg.mxu0
  %11879 = vmatpush.bf16.msra.mxu0 %v11320
  %11880 = vmatpush.bf16.msra.mxu0 %v11319
  %11881 = vmatpush.bf16.msra.mxu0 %v11318
  %11882 = vmatpush.bf16.msra.mxu0 %v11317
  %11883 = vmatpush.bf16.msra.mxu0 %v11316
  %11884 = vmatpush.bf16.msra.mxu0 %v11315
  %11885 = vmatpush.bf16.msra.mxu0 %v11314
  %11886 = vmatpush.bf16.msra.mxu0 %v11313
  %11887 = vmatmul.bf16.gmra.mxu0 %v10254
  %v11888 = vpop.f32.mrf.mxu0
  %v11889 = vadd.f32 %v11875, %v11888
  %v11890 = vpop.f32.mrf.mxu0
  %v11891 = vadd.f32 %v11877, %v11890
  %11892 = vdwg.mxu0
  %vm11893 = vcmp.gt.f32.partialorder %v11889, 0.0
  %vm11894 = vcmp.gt.f32.partialorder %v11891, 0.0
  %v11895 = vmul.f32 %v11889, 0.2
  %v11896 = vmul.f32 %v11891, 0.2
  %v11897 = vsel %vm11893, %v11889, %v11895
  %v11898 = vsel %vm11894, %v11891, %v11896
  %v11899 = vpack.c.bf16 %v11898, %v11897
  %v11900 = vld [vmem:[%s10] sm:$0xf]
  %v11901 = vld [vmem:[%s10 + $0x4] sm:$0xf]
  %v11902 = vld [vmem:[%s10 + $0x8] sm:$0xf]
  %v11903 = vld [vmem:[%s10 + $0xc] sm:$0xf]
  %v11904 = vld [vmem:[%s10 + $0x10] sm:$0xf]
  %v11905 = vld [vmem:[%s10 + $0x14] sm:$0xf]
  %v11906 = vld [vmem:[%s10 + $0x18] sm:$0xf]
  %v11907 = vld [vmem:[%s10 + $0x1c] sm:$0xf]
  %v11908 = vld [vmem:[%s11] sm:$0x1]
  %v11910 = vperm.slane %v11908, 0
  %v11920 = vunpack.c.l.b16 %v11900
  %v11921 = vunpack.c.l.b16 %v11901
  %v11922 = vunpack.c.l.b16 %v11902
  %v11923 = vunpack.c.l.b16 %v11903
  %v11924 = vunpack.c.l.b16 %v11904
  %v11925 = vunpack.c.l.b16 %v11905
  %v11926 = vunpack.c.l.b16 %v11906
  %v11927 = vunpack.c.l.b16 %v11907
  %v11928 = vpack.c.b16 %v11921, %v11920
  %v11929 = vpack.c.b16 %v11923, %v11922
  %v11930 = vpack.c.b16 %v11925, %v11924
  %v11931 = vpack.c.b16 %v11927, %v11926
  %v11937 = vsel %vm2652, %v11899, 0
  %11939 = vmatpush.bf16.msra.mxu0 0
  %11940 = vmatpush.bf16.msra.mxu0 0
  %11941 = vmatpush.bf16.msra.mxu0 0
  %11942 = vmatpush.bf16.msra.mxu0 0
  %11943 = vmatpush.bf16.msra.mxu0 %v11931
  %11944 = vmatpush.bf16.msra.mxu0 %v11930
  %11945 = vmatpush.bf16.msra.mxu0 %v11929
  %11946 = vmatpush.bf16.msra.mxu0 %v11928
  %11947 = vmatmul.bf16.gmra.mxu0 %v11937
  %v11948 = vpop.f32.mrf.mxu0
  %v11949 = vadd.f32 %v11910, %v11948
  %v11950 = vpop.f32.mrf.mxu0
  %v11951 = vadd.f32 %v11910, %v11950
  %11952 = vdwg.mxu0
  %11953 = vst [vmem:[%s12] sm:$0xff] %v11949
  %11954 = vst [vmem:[%s12 + $0x8] sm:$0xff] %v11951
  // Predicated region
  $region50: #{discriminator_forward.1} parent=0 // pred_check
    _
  $region51: #{discriminator_forward.1} parent=0 // pred_check_branch
    %11956 = sbr.rel (0) target = $region53
  $region52: #{discriminator_forward.1} parent=0 // pred_region
    _
  $region53: #{discriminator_forward.1} parent=0 // pred_fallthru
    _
  // Predicated region
  $region54: #{discriminator_forward.1} parent=0 // pred_check
    _
  $region55: #{discriminator_forward.1} parent=0 // pred_check_branch
    %11958 = sbr.rel (0) target = $region57
  $region56: #{discriminator_forward.1} parent=0 // pred_region
    _
  $region57: #{discriminator_forward.1} parent=0 // pred_fallthru
    _

</llo_original>
